<compile_context>
chip_gen: v5e
topology: v5e:2x2
jax: 0.10.0
libtpu: 0.0.40
codegen_flags: <defaults>
</compile_context>

<pallas_src>
import functools
import inspect

import jax
import jax.numpy as jnp
import numpy as np
from jax.experimental import pallas as pl
from jax.experimental.pallas import tpu as pltpu


def _kpn_kernel(fpad_ref, core_ref, out_ref, *, kernel_size, height, block_h,
                width):
    """One (batch, burst, row-tile) step of kernel-prediction filtering.

    fpad_ref : (C, H+K-1, W+K-1)   zero-padded frame, VMEM-resident per (b, n)
    core_ref : (K*K, C, TH, W)     raw softmax logits for this row tile
    out_ref  : (C, TH, W)
    """
    K = kernel_size
    KK = K * K
    TH, W = block_h, width
    C = out_ref.shape[0]

    # ---- Pass 1: streaming per-pixel max over the K*K taps.
    # Run in the core's native dtype (max is exact in bf16) and cast only the
    # final result: removes ~KK per-tap casts where VALU is the binding slot
    # (v6e/v7x); identical math for f32 inputs.
    m = core_ref[0]
    for t in range(1, KK):
        m = jnp.maximum(m, core_ref[t])
    m = m.astype(jnp.float32)

    # Rows of the padded frame covering this output row tile (+ K-1 halo).
    if TH == height:
        h0 = 0
    else:
        h0 = pl.multiple_of(pl.program_id(2) * TH, TH)

    # ---- Pass 2: streaming exp + unnormalized weighted accumulation.
    # j (lane shift) is the OUTER loop so only one lane-shifted column of the
    # padded frame is live at a time (no hoisted list of K shifted copies).
    s = jnp.zeros((C, TH, W), jnp.float32)
    acc = jnp.zeros((C, TH, W), jnp.float32)
    for j in range(K):
        col = fpad_ref[:, pl.ds(h0, TH + K - 1), j:j + W].astype(jnp.float32)
        for i in range(K):
            e = jnp.exp(core_ref[i * K + j].astype(jnp.float32) - m)
            s = s + e
            acc = acc + e * col[:, i:i + TH, :]

    # Normalize once: one reciprocal + one multiply instead of K*K per-pixel
    # divides. approx=False keeps us within 1e-5 of the f32 reference.
    out_ref[...] = (acc * pl.reciprocal(s, approx=False)).astype(out_ref.dtype)


_DEFAULT_VMEM_BUDGET = 48 * 1024 * 1024  # safe everywhere (v7x: 64 MiB per TC)


def _vmem_budget_bytes():
    """~75% of physical VMEM (≈96 MiB v5e/v6e, ≈48 MiB v7x), safe fallback."""
    try:
        info = pltpu.get_tpu_info()
        cap = getattr(info, "vmem_capacity_bytes", None)
        if cap:
            return int(cap) * 3 // 4
    except Exception:
        pass
    return _DEFAULT_VMEM_BUDGET


def _frames_pipeline_options():
    """BlockSpec kwargs to single-buffer the resident frames slab (its block
    index is constant across the inner h axis, so double-buffering it only
    wastes VMEM). Falls back to default buffering if unsupported."""
    opts = []
    try:
        if (hasattr(pl, "Buffered") and
                "pipeline_mode" in inspect.signature(pl.BlockSpec).parameters):
            opts.append({"pipeline_mode": pl.Buffered(1)})
    except Exception:
        pass
    opts.append({})
    return opts


def _pick_block_h(H, W, C, KK, core_itemsize, out_itemsize, frames_slab_bytes,
                  vmem_budget, align, bn):
    """Largest divisor of H (aligned to the dtype min-tile, or == H) whose
    per-step VMEM footprint fits the budget; also keeps >= 2 row tiles when
    B*N < 2 so both v7x TensorCores get work."""
    per_row = (2 * KK * C * W * core_itemsize   # double-buffered core tile
               + 2 * C * W * out_itemsize       # double-buffered output tile
               + 8 * C * W * 4)                 # in-kernel f32 temps (m,s,acc,e,col,..)
    avail = vmem_budget - 2 * frames_slab_bytes  # conservative: frames may 2x-buffer
    max_rows = max(align, avail // per_row) if avail > 0 else align
    if bn < 2:  # give the second TensorCore something to do
        max_rows = min(max_rows, max(align, H // 2))

    best = None
    for d in range(1, H + 1):
        if H % d:
            continue
        if (d == H or d % align == 0) and d <= max_rows:
            best = d
    if best is not None:
        return best
    # Nothing aligned fits the budget: smallest legal divisor; the raised vmem
    # limit absorbs the overshoot.
    for d in range(1, H + 1):
        if H % d == 0 and (d == H or d % align == 0):
            return d
    return H


def kernel_conv(frames, core, kernel_size=7, block_h=None):
    """JAX/Pallas equivalent of KernelConv.forward.

    frames: (B, N, C, H, W)  (or the 4-D PyTorch fallback path)
    core:   (B, N*K*K*C, H, W) raw kernel-prediction logits (f32 or bf16;
            feeding bf16 halves the dominant HBM stream on v5e/v6e)
    returns (pred_img_i, pred_img) = ((B, N, C, H, W), (B, C, H, W))
    """
    K = kernel_size
    if frames.ndim == 4:
        # PyTorch fallback: view(batch, 1, 3, H, W). Color hard-coded to 3
        # exactly like the torch module (only valid when frames.shape[1] == 3).
        B = frames.shape[0]
        H, W = frames.shape[-2], frames.shape[-1]
        N, C = 1, 3
        frames = frames.reshape(B, N, C, H, W)
    else:
        B, N, C, H, W = frames.shape

    KK = K * K
    core = core.reshape(B, N, KK, C, H, W)

    p = K // 2
    frames_pad = jnp.pad(frames, ((0, 0), (0, 0), (0, 0), (p, p), (p, p)))
    Hp, Wp = H + 2 * p, W + 2 * p

    out_dtype = jnp.promote_types(frames.dtype, core.dtype)
    core_itemsize = jnp.dtype(core.dtype).itemsize
    out_itemsize = jnp.dtype(out_dtype).itemsize
    frames_itemsize = jnp.dtype(frames_pad.dtype).itemsize
    # Sublane alignment of the dtype min-tile: 8 (f32), 16 (bf16), 32 (int8).
    align = 8 * (4 // max(1, min(4, core_itemsize)))
    vmem_budget = _vmem_budget_bytes()
    frames_slab = C * Hp * Wp * frames_itemsize

    if block_h is None:
        block_h = _pick_block_h(H, W, C, KK, core_itemsize, out_itemsize,
                                frames_slab, vmem_budget, align, B * N)
    assert H % block_h == 0, "block_h must divide H"
    assert block_h == H or block_h % align == 0, (
        f"block_h must be a multiple of {align} for this core dtype")
    h_tiles = H // block_h

    kern = functools.partial(_kpn_kernel, kernel_size=K, height=H,
                             block_h=block_h, width=W)

    def build(frames_spec_kwargs):
        return pl.pallas_call(
            kern,
            out_shape=jax.ShapeDtypeStruct((B, N, C, H, W), out_dtype),
            grid_spec=pltpu.PrefetchScalarGridSpec(
                num_scalar_prefetch=0,
                grid=(B, N, h_tiles),
                in_specs=[
                    # Padded frames: one (C, Hp, Wp) slab per (b, n); block
                    # index constant across the inner h axis -> VMEM-resident,
                    # no re-DMA; single-buffered where supported.
                    pl.BlockSpec((None, None, C, Hp, Wp),
                                 lambda b, n, h: (b, n, 0, 0, 0),
                                 **frames_spec_kwargs),
                    # Core logits: (K*K, C, block_h, W) row tile — the dominant
                    # HBM stream, double-buffered by the pipeline.
                    pl.BlockSpec((None, None, KK, C, block_h, W),
                                 lambda b, n, h: (b, n, 0, 0, h, 0)),
                ],
                out_specs=pl.BlockSpec((None, None, C, block_h, W),
                                       lambda b, n, h: (b, n, 0, h, 0)),
            ),
            compiler_params=pltpu.CompilerParams(
                dimension_semantics=("parallel", "parallel", "parallel"),
                vmem_limit_bytes=int(vmem_budget)),
        )

    pred_img_i = None
    last_err = None
    for fp_kwargs in _frames_pipeline_options():
        try:
            pred_img_i = build(fp_kwargs)(frames_pad, core)
            break
        except Exception as e:  # fall back if Buffered(1) is unsupported here
            last_err = e
            pred_img_i = None
    if pred_img_i is None:
        raise last_err

    # Burst mean (cheap: ~2/(K*K) of the core traffic).
    # TODO(synk): could be fused into the kernel as an 'arbitrary' N reduction
    # axis for a ~3-5% win on mem-bound v5e/v6e.
    pred_img = jnp.mean(pred_img_i, axis=1)
    return pred_img_i, pred_img


def _reference(frames, core, kernel_size=7):
    """Pure-JAX reference mirroring the PyTorch forward, for verification."""
    K = kernel_size
    B, N, C, H, W = frames.shape
    core = core.reshape(B, N, K * K, C, H, W).astype(jnp.float32)
    core = jax.nn.softmax(core, axis=2)
    p = K // 2
    fpad = jnp.pad(frames.astype(jnp.float32),
                   ((0, 0), (0, 0), (0, 0), (p, p), (p, p)))
    stack = jnp.stack(
        [fpad[..., i:i + H, j:j + W] for i in range(K) for j in range(K)],
        axis=2)
    pred_i = jnp.sum(core * stack, axis=2)
    return pred_i, jnp.mean(pred_i, axis=1)


if __name__ == "__main__":
    # KernelConv has no trainable parameters (only kernel_size); frames/core
    # are runtime inputs, built deterministically here.
    B, N, C, H, W = 2, 1, 3, 16, 16
    K = 7
    key = jax.random.PRNGKey(0)
    k1, k2 = jax.random.split(key)
    frames = jax.random.uniform(k1, (B, N, C, H, W), dtype=jnp.float32)
    core = jax.random.normal(k2, (B, N * K * K * C, H, W), dtype=jnp.float32)

    ref_i, ref = _reference(frames, core, kernel_size=K)

    # f32 path, auto-derived block_h (full plane at this tiny size).
    pred_img_i, pred_img = kernel_conv(frames, core, kernel_size=K)
    jax.block_until_ready((pred_img_i, pred_img))
    assert pred_img_i.shape == (B, N, C, H, W)
    assert pred_img.shape == (B, C, H, W)
    np.testing.assert_allclose(np.asarray(pred_img_i), np.asarray(ref_i),
                               rtol=1e-5, atol=1e-5)
    np.testing.assert_allclose(np.asarray(pred_img), np.asarray(ref),
                               rtol=1e-5, atol=1e-5)

    # Spatially tiled path (row tiles read a K-1 halo from the resident pad).
    tiled_i, tiled = kernel_conv(frames, core, kernel_size=K, block_h=8)
    jax.block_until_ready((tiled_i, tiled))
    np.testing.assert_allclose(np.asarray(tiled_i), np.asarray(ref_i),
                               rtol=1e-5, atol=1e-5)

    # bf16 core path (core stays bf16 in HBM; max pass in bf16, f32 accumulate).
    bf_i, _ = kernel_conv(frames, core.astype(jnp.bfloat16), kernel_size=K)
    jax.block_until_ready(bf_i)
    np.testing.assert_allclose(np.asarray(bf_i), np.asarray(ref_i),
                               rtol=0, atol=5e-2)

    print("KERNEL_OK")
</pallas_src>

<mosaic_0001>
module attributes {stable_mosaic.version = 11 : i64} {
  func.func @_kpn_kernel(%arg0: i32, %arg1: i32, %arg2: i32, %arg3: memref<1x1x3x22x22xf32, #tpu.memory_space<vmem>>, %arg4: memref<1x1x49x3x16x16xf32, #tpu.memory_space<vmem>>, %arg5: memref<1x1x3x16x16xf32, #tpu.memory_space<vmem>>) attributes {dimension_semantics = [#tpu.dimension_semantics<parallel>, #tpu.dimension_semantics<parallel>, #tpu.dimension_semantics<parallel>], iteration_bounds = array<i64: 2, 1, 1>, scalar_prefetch = 0 : i64, scratch_operands = 0 : i64, tpu.core_type = #tpu.core_type<tc>, window_params = [{pipeline_mode = #tpu.pipeline_mode<synchronous>, transform_indices = @transform_0, window_bounds = array<i64: 1, 1, 3, 22, 22>}, {transform_indices = @transform_1, window_bounds = array<i64: 1, 1, 49, 3, 16, 16>}, {transform_indices = @transform_2, window_bounds = array<i64: 1, 1, 3, 16, 16>}]} {
    %c0 = arith.constant 0 : index
    %c0_0 = arith.constant 0 : index
    %c0_1 = arith.constant 0 : index
    %c0_2 = arith.constant 0 : index
    %c0_3 = arith.constant 0 : index
    %c0_4 = arith.constant 0 : index
    %0 = vector.load %arg4[%c0, %c0_0, %c0_1, %c0_2, %c0_3, %c0_4] : memref<1x1x49x3x16x16xf32, #tpu.memory_space<vmem>>, vector<1x1x1x3x16x16xf32>
    %1 = vector.shape_cast %0 : vector<1x1x1x3x16x16xf32> to vector<3x16x16xf32>
    %c0_5 = arith.constant 0 : index
    %c0_6 = arith.constant 0 : index
    %c1 = arith.constant 1 : index
    %c0_7 = arith.constant 0 : index
    %c0_8 = arith.constant 0 : index
    %c0_9 = arith.constant 0 : index
    %2 = vector.load %arg4[%c0_5, %c0_6, %c1, %c0_7, %c0_8, %c0_9] : memref<1x1x49x3x16x16xf32, #tpu.memory_space<vmem>>, vector<1x1x1x3x16x16xf32>
    %3 = vector.shape_cast %2 : vector<1x1x1x3x16x16xf32> to vector<3x16x16xf32>
    %4 = arith.maximumf %1, %3 : vector<3x16x16xf32>
    %c0_10 = arith.constant 0 : index
    %c0_11 = arith.constant 0 : index
    %c2 = arith.constant 2 : index
    %c0_12 = arith.constant 0 : index
    %c0_13 = arith.constant 0 : index
    %c0_14 = arith.constant 0 : index
    %5 = vector.load %arg4[%c0_10, %c0_11, %c2, %c0_12, %c0_13, %c0_14] : memref<1x1x49x3x16x16xf32, #tpu.memory_space<vmem>>, vector<1x1x1x3x16x16xf32>
    %6 = vector.shape_cast %5 : vector<1x1x1x3x16x16xf32> to vector<3x16x16xf32>
    %7 = arith.maximumf %4, %6 : vector<3x16x16xf32>
    %c0_15 = arith.constant 0 : index
    %c0_16 = arith.constant 0 : index
    %c3 = arith.constant 3 : index
    %c0_17 = arith.constant 0 : index
    %c0_18 = arith.constant 0 : index
    %c0_19 = arith.constant 0 : index
    %8 = vector.load %arg4[%c0_15, %c0_16, %c3, %c0_17, %c0_18, %c0_19] : memref<1x1x49x3x16x16xf32, #tpu.memory_space<vmem>>, vector<1x1x1x3x16x16xf32>
    %9 = vector.shape_cast %8 : vector<1x1x1x3x16x16xf32> to vector<3x16x16xf32>
    %10 = arith.maximumf %7, %9 : vector<3x16x16xf32>
    %c0_20 = arith.constant 0 : index
    %c0_21 = arith.constant 0 : index
    %c4 = arith.constant 4 : index
    %c0_22 = arith.constant 0 : index
    %c0_23 = arith.constant 0 : index
    %c0_24 = arith.constant 0 : index
    %11 = vector.load %arg4[%c0_20, %c0_21, %c4, %c0_22, %c0_23, %c0_24] : memref<1x1x49x3x16x16xf32, #tpu.memory_space<vmem>>, vector<1x1x1x3x16x16xf32>
    %12 = vector.shape_cast %11 : vector<1x1x1x3x16x16xf32> to vector<3x16x16xf32>
    %13 = arith.maximumf %10, %12 : vector<3x16x16xf32>
    %c0_25 = arith.constant 0 : index
    %c0_26 = arith.constant 0 : index
    %c5 = arith.constant 5 : index
    %c0_27 = arith.constant 0 : index
    %c0_28 = arith.constant 0 : index
    %c0_29 = arith.constant 0 : index
    %14 = vector.load %arg4[%c0_25, %c0_26, %c5, %c0_27, %c0_28, %c0_29] : memref<1x1x49x3x16x16xf32, #tpu.memory_space<vmem>>, vector<1x1x1x3x16x16xf32>
    %15 = vector.shape_cast %14 : vector<1x1x1x3x16x16xf32> to vector<3x16x16xf32>
    %16 = arith.maximumf %13, %15 : vector<3x16x16xf32>
    %c0_30 = arith.constant 0 : index
    %c0_31 = arith.constant 0 : index
    %c6 = arith.constant 6 : index
    %c0_32 = arith.constant 0 : index
    %c0_33 = arith.constant 0 : index
    %c0_34 = arith.constant 0 : index
    %17 = vector.load %arg4[%c0_30, %c0_31, %c6, %c0_32, %c0_33, %c0_34] : memref<1x1x49x3x16x16xf32, #tpu.memory_space<vmem>>, vector<1x1x1x3x16x16xf32>
    %18 = vector.shape_cast %17 : vector<1x1x1x3x16x16xf32> to vector<3x16x16xf32>
    %19 = arith.maximumf %16, %18 : vector<3x16x16xf32>
    %c0_35 = arith.constant 0 : index
    %c0_36 = arith.constant 0 : index
    %c7 = arith.constant 7 : index
    %c0_37 = arith.constant 0 : index
    %c0_38 = arith.constant 0 : index
    %c0_39 = arith.constant 0 : index
    %20 = vector.load %arg4[%c0_35, %c0_36, %c7, %c0_37, %c0_38, %c0_39] : memref<1x1x49x3x16x16xf32, #tpu.memory_space<vmem>>, vector<1x1x1x3x16x16xf32>
    %21 = vector.shape_cast %20 : vector<1x1x1x3x16x16xf32> to vector<3x16x16xf32>
    %22 = arith.maximumf %19, %21 : vector<3x16x16xf32>
    %c0_40 = arith.constant 0 : index
    %c0_41 = arith.constant 0 : index
    %c8 = arith.constant 8 : index
    %c0_42 = arith.constant 0 : index
    %c0_43 = arith.constant 0 : index
    %c0_44 = arith.constant 0 : index
    %23 = vector.load %arg4[%c0_40, %c0_41, %c8, %c0_42, %c0_43, %c0_44] : memref<1x1x49x3x16x16xf32, #tpu.memory_space<vmem>>, vector<1x1x1x3x16x16xf32>
    %24 = vector.shape_cast %23 : vector<1x1x1x3x16x16xf32> to vector<3x16x16xf32>
    %25 = arith.maximumf %22, %24 : vector<3x16x16xf32>
    %c0_45 = arith.constant 0 : index
    %c0_46 = arith.constant 0 : index
    %c9 = arith.constant 9 : index
    %c0_47 = arith.constant 0 : index
    %c0_48 = arith.constant 0 : index
    %c0_49 = arith.constant 0 : index
    %26 = vector.load %arg4[%c0_45, %c0_46, %c9, %c0_47, %c0_48, %c0_49] : memref<1x1x49x3x16x16xf32, #tpu.memory_space<vmem>>, vector<1x1x1x3x16x16xf32>
    %27 = vector.shape_cast %26 : vector<1x1x1x3x16x16xf32> to vector<3x16x16xf32>
    %28 = arith.maximumf %25, %27 : vector<3x16x16xf32>
    %c0_50 = arith.constant 0 : index
    %c0_51 = arith.constant 0 : index
    %c10 = arith.constant 10 : index
    %c0_52 = arith.constant 0 : index
    %c0_53 = arith.constant 0 : index
    %c0_54 = arith.constant 0 : index
    %29 = vector.load %arg4[%c0_50, %c0_51, %c10, %c0_52, %c0_53, %c0_54] : memref<1x1x49x3x16x16xf32, #tpu.memory_space<vmem>>, vector<1x1x1x3x16x16xf32>
    %30 = vector.shape_cast %29 : vector<1x1x1x3x16x16xf32> to vector<3x16x16xf32>
    %31 = arith.maximumf %28, %30 : vector<3x16x16xf32>
    %c0_55 = arith.constant 0 : index
    %c0_56 = arith.constant 0 : index
    %c11 = arith.constant 11 : index
    %c0_57 = arith.constant 0 : index
    %c0_58 = arith.constant 0 : index
    %c0_59 = arith.constant 0 : index
    %32 = vector.load %arg4[%c0_55, %c0_56, %c11, %c0_57, %c0_58, %c0_59] : memref<1x1x49x3x16x16xf32, #tpu.memory_space<vmem>>, vector<1x1x1x3x16x16xf32>
    %33 = vector.shape_cast %32 : vector<1x1x1x3x16x16xf32> to vector<3x16x16xf32>
    %34 = arith.maximumf %31, %33 : vector<3x16x16xf32>
    %c0_60 = arith.constant 0 : index
    %c0_61 = arith.constant 0 : index
    %c12 = arith.constant 12 : index
    %c0_62 = arith.constant 0 : index
    %c0_63 = arith.constant 0 : index
    %c0_64 = arith.constant 0 : index
    %35 = vector.load %arg4[%c0_60, %c0_61, %c12, %c0_62, %c0_63, %c0_64] : memref<1x1x49x3x16x16xf32, #tpu.memory_space<vmem>>, vector<1x1x1x3x16x16xf32>
    %36 = vector.shape_cast %35 : vector<1x1x1x3x16x16xf32> to vector<3x16x16xf32>
    %37 = arith.maximumf %34, %36 : vector<3x16x16xf32>
    %c0_65 = arith.constant 0 : index
    %c0_66 = arith.constant 0 : index
    %c13 = arith.constant 13 : index
    %c0_67 = arith.constant 0 : index
    %c0_68 = arith.constant 0 : index
    %c0_69 = arith.constant 0 : index
    %38 = vector.load %arg4[%c0_65, %c0_66, %c13, %c0_67, %c0_68, %c0_69] : memref<1x1x49x3x16x16xf32, #tpu.memory_space<vmem>>, vector<1x1x1x3x16x16xf32>
    %39 = vector.shape_cast %38 : vector<1x1x1x3x16x16xf32> to vector<3x16x16xf32>
    %40 = arith.maximumf %37, %39 : vector<3x16x16xf32>
    %c0_70 = arith.constant 0 : index
    %c0_71 = arith.constant 0 : index
    %c14 = arith.constant 14 : index
    %c0_72 = arith.constant 0 : index
    %c0_73 = arith.constant 0 : index
    %c0_74 = arith.constant 0 : index
    %41 = vector.load %arg4[%c0_70, %c0_71, %c14, %c0_72, %c0_73, %c0_74] : memref<1x1x49x3x16x16xf32, #tpu.memory_space<vmem>>, vector<1x1x1x3x16x16xf32>
    %42 = vector.shape_cast %41 : vector<1x1x1x3x16x16xf32> to vector<3x16x16xf32>
    %43 = arith.maximumf %40, %42 : vector<3x16x16xf32>
    %c0_75 = arith.constant 0 : index
    %c0_76 = arith.constant 0 : index
    %c15 = arith.constant 15 : index
    %c0_77 = arith.constant 0 : index
    %c0_78 = arith.constant 0 : index
    %c0_79 = arith.constant 0 : index
    %44 = vector.load %arg4[%c0_75, %c0_76, %c15, %c0_77, %c0_78, %c0_79] : memref<1x1x49x3x16x16xf32, #tpu.memory_space<vmem>>, vector<1x1x1x3x16x16xf32>
    %45 = vector.shape_cast %44 : vector<1x1x1x3x16x16xf32> to vector<3x16x16xf32>
    %46 = arith.maximumf %43, %45 : vector<3x16x16xf32>
    %c0_80 = arith.constant 0 : index
    %c0_81 = arith.constant 0 : index
    %c16 = arith.constant 16 : index
    %c0_82 = arith.constant 0 : index
    %c0_83 = arith.constant 0 : index
    %c0_84 = arith.constant 0 : index
    %47 = vector.load %arg4[%c0_80, %c0_81, %c16, %c0_82, %c0_83, %c0_84] : memref<1x1x49x3x16x16xf32, #tpu.memory_space<vmem>>, vector<1x1x1x3x16x16xf32>
    %48 = vector.shape_cast %47 : vector<1x1x1x3x16x16xf32> to vector<3x16x16xf32>
    %49 = arith.maximumf %46, %48 : vector<3x16x16xf32>
    %c0_85 = arith.constant 0 : index
    %c0_86 = arith.constant 0 : index
    %c17 = arith.constant 17 : index
    %c0_87 = arith.constant 0 : index
    %c0_88 = arith.constant 0 : index
    %c0_89 = arith.constant 0 : index
    %50 = vector.load %arg4[%c0_85, %c0_86, %c17, %c0_87, %c0_88, %c0_89] : memref<1x1x49x3x16x16xf32, #tpu.memory_space<vmem>>, vector<1x1x1x3x16x16xf32>
    %51 = vector.shape_cast %50 : vector<1x1x1x3x16x16xf32> to vector<3x16x16xf32>
    %52 = arith.maximumf %49, %51 : vector<3x16x16xf32>
    %c0_90 = arith.constant 0 : index
    %c0_91 = arith.constant 0 : index
    %c18 = arith.constant 18 : index
    %c0_92 = arith.constant 0 : index
    %c0_93 = arith.constant 0 : index
    %c0_94 = arith.constant 0 : index
    %53 = vector.load %arg4[%c0_90, %c0_91, %c18, %c0_92, %c0_93, %c0_94] : memref<1x1x49x3x16x16xf32, #tpu.memory_space<vmem>>, vector<1x1x1x3x16x16xf32>
    %54 = vector.shape_cast %53 : vector<1x1x1x3x16x16xf32> to vector<3x16x16xf32>
    %55 = arith.maximumf %52, %54 : vector<3x16x16xf32>
    %c0_95 = arith.constant 0 : index
    %c0_96 = arith.constant 0 : index
    %c19 = arith.constant 19 : index
    %c0_97 = arith.constant 0 : index
    %c0_98 = arith.constant 0 : index
    %c0_99 = arith.constant 0 : index
    %56 = vector.load %arg4[%c0_95, %c0_96, %c19, %c0_97, %c0_98, %c0_99] : memref<1x1x49x3x16x16xf32, #tpu.memory_space<vmem>>, vector<1x1x1x3x16x16xf32>
    %57 = vector.shape_cast %56 : vector<1x1x1x3x16x16xf32> to vector<3x16x16xf32>
    %58 = arith.maximumf %55, %57 : vector<3x16x16xf32>
    %c0_100 = arith.constant 0 : index
    %c0_101 = arith.constant 0 : index
    %c20 = arith.constant 20 : index
    %c0_102 = arith.constant 0 : index
    %c0_103 = arith.constant 0 : index
    %c0_104 = arith.constant 0 : index
    %59 = vector.load %arg4[%c0_100, %c0_101, %c20, %c0_102, %c0_103, %c0_104] : memref<1x1x49x3x16x16xf32, #tpu.memory_space<vmem>>, vector<1x1x1x3x16x16xf32>
    %60 = vector.shape_cast %59 : vector<1x1x1x3x16x16xf32> to vector<3x16x16xf32>
    %61 = arith.maximumf %58, %60 : vector<3x16x16xf32>
    %c0_105 = arith.constant 0 : index
    %c0_106 = arith.constant 0 : index
    %c21 = arith.constant 21 : index
    %c0_107 = arith.constant 0 : index
    %c0_108 = arith.constant 0 : index
    %c0_109 = arith.constant 0 : index
    %62 = vector.load %arg4[%c0_105, %c0_106, %c21, %c0_107, %c0_108, %c0_109] : memref<1x1x49x3x16x16xf32, #tpu.memory_space<vmem>>, vector<1x1x1x3x16x16xf32>
    %63 = vector.shape_cast %62 : vector<1x1x1x3x16x16xf32> to vector<3x16x16xf32>
    %64 = arith.maximumf %61, %63 : vector<3x16x16xf32>
    %c0_110 = arith.constant 0 : index
    %c0_111 = arith.constant 0 : index
    %c22 = arith.constant 22 : index
    %c0_112 = arith.constant 0 : index
    %c0_113 = arith.constant 0 : index
    %c0_114 = arith.constant 0 : index
    %65 = vector.load %arg4[%c0_110, %c0_111, %c22, %c0_112, %c0_113, %c0_114] : memref<1x1x49x3x16x16xf32, #tpu.memory_space<vmem>>, vector<1x1x1x3x16x16xf32>
    %66 = vector.shape_cast %65 : vector<1x1x1x3x16x16xf32> to vector<3x16x16xf32>
    %67 = arith.maximumf %64, %66 : vector<3x16x16xf32>
    %c0_115 = arith.constant 0 : index
    %c0_116 = arith.constant 0 : index
    %c23 = arith.constant 23 : index
    %c0_117 = arith.constant 0 : index
    %c0_118 = arith.constant 0 : index
    %c0_119 = arith.constant 0 : index
    %68 = vector.load %arg4[%c0_115, %c0_116, %c23, %c0_117, %c0_118, %c0_119] : memref<1x1x49x3x16x16xf32, #tpu.memory_space<vmem>>, vector<1x1x1x3x16x16xf32>
    %69 = vector.shape_cast %68 : vector<1x1x1x3x16x16xf32> to vector<3x16x16xf32>
    %70 = arith.maximumf %67, %69 : vector<3x16x16xf32>
    %c0_120 = arith.constant 0 : index
    %c0_121 = arith.constant 0 : index
    %c24 = arith.constant 24 : index
    %c0_122 = arith.constant 0 : index
    %c0_123 = arith.constant 0 : index
    %c0_124 = arith.constant 0 : index
    %71 = vector.load %arg4[%c0_120, %c0_121, %c24, %c0_122, %c0_123, %c0_124] : memref<1x1x49x3x16x16xf32, #tpu.memory_space<vmem>>, vector<1x1x1x3x16x16xf32>
    %72 = vector.shape_cast %71 : vector<1x1x1x3x16x16xf32> to vector<3x16x16xf32>
    %73 = arith.maximumf %70, %72 : vector<3x16x16xf32>
    %c0_125 = arith.constant 0 : index
    %c0_126 = arith.constant 0 : index
    %c25 = arith.constant 25 : index
    %c0_127 = arith.constant 0 : index
    %c0_128 = arith.constant 0 : index
    %c0_129 = arith.constant 0 : index
    %74 = vector.load %arg4[%c0_125, %c0_126, %c25, %c0_127, %c0_128, %c0_129] : memref<1x1x49x3x16x16xf32, #tpu.memory_space<vmem>>, vector<1x1x1x3x16x16xf32>
    %75 = vector.shape_cast %74 : vector<1x1x1x3x16x16xf32> to vector<3x16x16xf32>
    %76 = arith.maximumf %73, %75 : vector<3x16x16xf32>
    %c0_130 = arith.constant 0 : index
    %c0_131 = arith.constant 0 : index
    %c26 = arith.constant 26 : index
    %c0_132 = arith.constant 0 : index
    %c0_133 = arith.constant 0 : index
    %c0_134 = arith.constant 0 : index
    %77 = vector.load %arg4[%c0_130, %c0_131, %c26, %c0_132, %c0_133, %c0_134] : memref<1x1x49x3x16x16xf32, #tpu.memory_space<vmem>>, vector<1x1x1x3x16x16xf32>
    %78 = vector.shape_cast %77 : vector<1x1x1x3x16x16xf32> to vector<3x16x16xf32>
    %79 = arith.maximumf %76, %78 : vector<3x16x16xf32>
    %c0_135 = arith.constant 0 : index
    %c0_136 = arith.constant 0 : index
    %c27 = arith.constant 27 : index
    %c0_137 = arith.constant 0 : index
    %c0_138 = arith.constant 0 : index
    %c0_139 = arith.constant 0 : index
    %80 = vector.load %arg4[%c0_135, %c0_136, %c27, %c0_137, %c0_138, %c0_139] : memref<1x1x49x3x16x16xf32, #tpu.memory_space<vmem>>, vector<1x1x1x3x16x16xf32>
    %81 = vector.shape_cast %80 : vector<1x1x1x3x16x16xf32> to vector<3x16x16xf32>
    %82 = arith.maximumf %79, %81 : vector<3x16x16xf32>
    %c0_140 = arith.constant 0 : index
    %c0_141 = arith.constant 0 : index
    %c28 = arith.constant 28 : index
    %c0_142 = arith.constant 0 : index
    %c0_143 = arith.constant 0 : index
    %c0_144 = arith.constant 0 : index
    %83 = vector.load %arg4[%c0_140, %c0_141, %c28, %c0_142, %c0_143, %c0_144] : memref<1x1x49x3x16x16xf32, #tpu.memory_space<vmem>>, vector<1x1x1x3x16x16xf32>
    %84 = vector.shape_cast %83 : vector<1x1x1x3x16x16xf32> to vector<3x16x16xf32>
    %85 = arith.maximumf %82, %84 : vector<3x16x16xf32>
    %c0_145 = arith.constant 0 : index
    %c0_146 = arith.constant 0 : index
    %c29 = arith.constant 29 : index
    %c0_147 = arith.constant 0 : index
    %c0_148 = arith.constant 0 : index
    %c0_149 = arith.constant 0 : index
    %86 = vector.load %arg4[%c0_145, %c0_146, %c29, %c0_147, %c0_148, %c0_149] : memref<1x1x49x3x16x16xf32, #tpu.memory_space<vmem>>, vector<1x1x1x3x16x16xf32>
    %87 = vector.shape_cast %86 : vector<1x1x1x3x16x16xf32> to vector<3x16x16xf32>
    %88 = arith.maximumf %85, %87 : vector<3x16x16xf32>
    %c0_150 = arith.constant 0 : index
    %c0_151 = arith.constant 0 : index
    %c30 = arith.constant 30 : index
    %c0_152 = arith.constant 0 : index
    %c0_153 = arith.constant 0 : index
    %c0_154 = arith.constant 0 : index
    %89 = vector.load %arg4[%c0_150, %c0_151, %c30, %c0_152, %c0_153, %c0_154] : memref<1x1x49x3x16x16xf32, #tpu.memory_space<vmem>>, vector<1x1x1x3x16x16xf32>
    %90 = vector.shape_cast %89 : vector<1x1x1x3x16x16xf32> to vector<3x16x16xf32>
    %91 = arith.maximumf %88, %90 : vector<3x16x16xf32>
    %c0_155 = arith.constant 0 : index
    %c0_156 = arith.constant 0 : index
    %c31 = arith.constant 31 : index
    %c0_157 = arith.constant 0 : index
    %c0_158 = arith.constant 0 : index
    %c0_159 = arith.constant 0 : index
    %92 = vector.load %arg4[%c0_155, %c0_156, %c31, %c0_157, %c0_158, %c0_159] : memref<1x1x49x3x16x16xf32, #tpu.memory_space<vmem>>, vector<1x1x1x3x16x16xf32>
    %93 = vector.shape_cast %92 : vector<1x1x1x3x16x16xf32> to vector<3x16x16xf32>
    %94 = arith.maximumf %91, %93 : vector<3x16x16xf32>
    %c0_160 = arith.constant 0 : index
    %c0_161 = arith.constant 0 : index
    %c32 = arith.constant 32 : index
    %c0_162 = arith.constant 0 : index
    %c0_163 = arith.constant 0 : index
    %c0_164 = arith.constant 0 : index
    %95 = vector.load %arg4[%c0_160, %c0_161, %c32, %c0_162, %c0_163, %c0_164] : memref<1x1x49x3x16x16xf32, #tpu.memory_space<vmem>>, vector<1x1x1x3x16x16xf32>
    %96 = vector.shape_cast %95 : vector<1x1x1x3x16x16xf32> to vector<3x16x16xf32>
    %97 = arith.maximumf %94, %96 : vector<3x16x16xf32>
    %c0_165 = arith.constant 0 : index
    %c0_166 = arith.constant 0 : index
    %c33 = arith.constant 33 : index
    %c0_167 = arith.constant 0 : index
    %c0_168 = arith.constant 0 : index
    %c0_169 = arith.constant 0 : index
    %98 = vector.load %arg4[%c0_165, %c0_166, %c33, %c0_167, %c0_168, %c0_169] : memref<1x1x49x3x16x16xf32, #tpu.memory_space<vmem>>, vector<1x1x1x3x16x16xf32>
    %99 = vector.shape_cast %98 : vector<1x1x1x3x16x16xf32> to vector<3x16x16xf32>
    %100 = arith.maximumf %97, %99 : vector<3x16x16xf32>
    %c0_170 = arith.constant 0 : index
    %c0_171 = arith.constant 0 : index
    %c34 = arith.constant 34 : index
    %c0_172 = arith.constant 0 : index
    %c0_173 = arith.constant 0 : index
    %c0_174 = arith.constant 0 : index
    %101 = vector.load %arg4[%c0_170, %c0_171, %c34, %c0_172, %c0_173, %c0_174] : memref<1x1x49x3x16x16xf32, #tpu.memory_space<vmem>>, vector<1x1x1x3x16x16xf32>
    %102 = vector.shape_cast %101 : vector<1x1x1x3x16x16xf32> to vector<3x16x16xf32>
    %103 = arith.maximumf %100, %102 : vector<3x16x16xf32>
    %c0_175 = arith.constant 0 : index
    %c0_176 = arith.constant 0 : index
    %c35 = arith.constant 35 : index
    %c0_177 = arith.constant 0 : index
    %c0_178 = arith.constant 0 : index
    %c0_179 = arith.constant 0 : index
    %104 = vector.load %arg4[%c0_175, %c0_176, %c35, %c0_177, %c0_178, %c0_179] : memref<1x1x49x3x16x16xf32, #tpu.memory_space<vmem>>, vector<1x1x1x3x16x16xf32>
    %105 = vector.shape_cast %104 : vector<1x1x1x3x16x16xf32> to vector<3x16x16xf32>
    %106 = arith.maximumf %103, %105 : vector<3x16x16xf32>
    %c0_180 = arith.constant 0 : index
    %c0_181 = arith.constant 0 : index
    %c36 = arith.constant 36 : index
    %c0_182 = arith.constant 0 : index
    %c0_183 = arith.constant 0 : index
    %c0_184 = arith.constant 0 : index
    %107 = vector.load %arg4[%c0_180, %c0_181, %c36, %c0_182, %c0_183, %c0_184] : memref<1x1x49x3x16x16xf32, #tpu.memory_space<vmem>>, vector<1x1x1x3x16x16xf32>
    %108 = vector.shape_cast %107 : vector<1x1x1x3x16x16xf32> to vector<3x16x16xf32>
    %109 = arith.maximumf %106, %108 : vector<3x16x16xf32>
    %c0_185 = arith.constant 0 : index
    %c0_186 = arith.constant 0 : index
    %c37 = arith.constant 37 : index
    %c0_187 = arith.constant 0 : index
    %c0_188 = arith.constant 0 : index
    %c0_189 = arith.constant 0 : index
    %110 = vector.load %arg4[%c0_185, %c0_186, %c37, %c0_187, %c0_188, %c0_189] : memref<1x1x49x3x16x16xf32, #tpu.memory_space<vmem>>, vector<1x1x1x3x16x16xf32>
    %111 = vector.shape_cast %110 : vector<1x1x1x3x16x16xf32> to vector<3x16x16xf32>
    %112 = arith.maximumf %109, %111 : vector<3x16x16xf32>
    %c0_190 = arith.constant 0 : index
    %c0_191 = arith.constant 0 : index
    %c38 = arith.constant 38 : index
    %c0_192 = arith.constant 0 : index
    %c0_193 = arith.constant 0 : index
    %c0_194 = arith.constant 0 : index
    %113 = vector.load %arg4[%c0_190, %c0_191, %c38, %c0_192, %c0_193, %c0_194] : memref<1x1x49x3x16x16xf32, #tpu.memory_space<vmem>>, vector<1x1x1x3x16x16xf32>
    %114 = vector.shape_cast %113 : vector<1x1x1x3x16x16xf32> to vector<3x16x16xf32>
    %115 = arith.maximumf %112, %114 : vector<3x16x16xf32>
    %c0_195 = arith.constant 0 : index
    %c0_196 = arith.constant 0 : index
    %c39 = arith.constant 39 : index
    %c0_197 = arith.constant 0 : index
    %c0_198 = arith.constant 0 : index
    %c0_199 = arith.constant 0 : index
    %116 = vector.load %arg4[%c0_195, %c0_196, %c39, %c0_197, %c0_198, %c0_199] : memref<1x1x49x3x16x16xf32, #tpu.memory_space<vmem>>, vector<1x1x1x3x16x16xf32>
    %117 = vector.shape_cast %116 : vector<1x1x1x3x16x16xf32> to vector<3x16x16xf32>
    %118 = arith.maximumf %115, %117 : vector<3x16x16xf32>
    %c0_200 = arith.constant 0 : index
    %c0_201 = arith.constant 0 : index
    %c40 = arith.constant 40 : index
    %c0_202 = arith.constant 0 : index
    %c0_203 = arith.constant 0 : index
    %c0_204 = arith.constant 0 : index
    %119 = vector.load %arg4[%c0_200, %c0_201, %c40, %c0_202, %c0_203, %c0_204] : memref<1x1x49x3x16x16xf32, #tpu.memory_space<vmem>>, vector<1x1x1x3x16x16xf32>
    %120 = vector.shape_cast %119 : vector<1x1x1x3x16x16xf32> to vector<3x16x16xf32>
    %121 = arith.maximumf %118, %120 : vector<3x16x16xf32>
    %c0_205 = arith.constant 0 : index
    %c0_206 = arith.constant 0 : index
    %c41 = arith.constant 41 : index
    %c0_207 = arith.constant 0 : index
    %c0_208 = arith.constant 0 : index
    %c0_209 = arith.constant 0 : index
    %122 = vector.load %arg4[%c0_205, %c0_206, %c41, %c0_207, %c0_208, %c0_209] : memref<1x1x49x3x16x16xf32, #tpu.memory_space<vmem>>, vector<1x1x1x3x16x16xf32>
    %123 = vector.shape_cast %122 : vector<1x1x1x3x16x16xf32> to vector<3x16x16xf32>
    %124 = arith.maximumf %121, %123 : vector<3x16x16xf32>
    %c0_210 = arith.constant 0 : index
    %c0_211 = arith.constant 0 : index
    %c42 = arith.constant 42 : index
    %c0_212 = arith.constant 0 : index
    %c0_213 = arith.constant 0 : index
    %c0_214 = arith.constant 0 : index
    %125 = vector.load %arg4[%c0_210, %c0_211, %c42, %c0_212, %c0_213, %c0_214] : memref<1x1x49x3x16x16xf32, #tpu.memory_space<vmem>>, vector<1x1x1x3x16x16xf32>
    %126 = vector.shape_cast %125 : vector<1x1x1x3x16x16xf32> to vector<3x16x16xf32>
    %127 = arith.maximumf %124, %126 : vector<3x16x16xf32>
    %c0_215 = arith.constant 0 : index
    %c0_216 = arith.constant 0 : index
    %c43 = arith.constant 43 : index
    %c0_217 = arith.constant 0 : index
    %c0_218 = arith.constant 0 : index
    %c0_219 = arith.constant 0 : index
    %128 = vector.load %arg4[%c0_215, %c0_216, %c43, %c0_217, %c0_218, %c0_219] : memref<1x1x49x3x16x16xf32, #tpu.memory_space<vmem>>, vector<1x1x1x3x16x16xf32>
    %129 = vector.shape_cast %128 : vector<1x1x1x3x16x16xf32> to vector<3x16x16xf32>
    %130 = arith.maximumf %127, %129 : vector<3x16x16xf32>
    %c0_220 = arith.constant 0 : index
    %c0_221 = arith.constant 0 : index
    %c44 = arith.constant 44 : index
    %c0_222 = arith.constant 0 : index
    %c0_223 = arith.constant 0 : index
    %c0_224 = arith.constant 0 : index
    %131 = vector.load %arg4[%c0_220, %c0_221, %c44, %c0_222, %c0_223, %c0_224] : memref<1x1x49x3x16x16xf32, #tpu.memory_space<vmem>>, vector<1x1x1x3x16x16xf32>
    %132 = vector.shape_cast %131 : vector<1x1x1x3x16x16xf32> to vector<3x16x16xf32>
    %133 = arith.maximumf %130, %132 : vector<3x16x16xf32>
    %c0_225 = arith.constant 0 : index
    %c0_226 = arith.constant 0 : index
    %c45 = arith.constant 45 : index
    %c0_227 = arith.constant 0 : index
    %c0_228 = arith.constant 0 : index
    %c0_229 = arith.constant 0 : index
    %134 = vector.load %arg4[%c0_225, %c0_226, %c45, %c0_227, %c0_228, %c0_229] : memref<1x1x49x3x16x16xf32, #tpu.memory_space<vmem>>, vector<1x1x1x3x16x16xf32>
    %135 = vector.shape_cast %134 : vector<1x1x1x3x16x16xf32> to vector<3x16x16xf32>
    %136 = arith.maximumf %133, %135 : vector<3x16x16xf32>
    %c0_230 = arith.constant 0 : index
    %c0_231 = arith.constant 0 : index
    %c46 = arith.constant 46 : index
    %c0_232 = arith.constant 0 : index
    %c0_233 = arith.constant 0 : index
    %c0_234 = arith.constant 0 : index
    %137 = vector.load %arg4[%c0_230, %c0_231, %c46, %c0_232, %c0_233, %c0_234] : memref<1x1x49x3x16x16xf32, #tpu.memory_space<vmem>>, vector<1x1x1x3x16x16xf32>
    %138 = vector.shape_cast %137 : vector<1x1x1x3x16x16xf32> to vector<3x16x16xf32>
    %139 = arith.maximumf %136, %138 : vector<3x16x16xf32>
    %c0_235 = arith.constant 0 : index
    %c0_236 = arith.constant 0 : index
    %c47 = arith.constant 47 : index
    %c0_237 = arith.constant 0 : index
    %c0_238 = arith.constant 0 : index
    %c0_239 = arith.constant 0 : index
    %140 = vector.load %arg4[%c0_235, %c0_236, %c47, %c0_237, %c0_238, %c0_239] : memref<1x1x49x3x16x16xf32, #tpu.memory_space<vmem>>, vector<1x1x1x3x16x16xf32>
    %141 = vector.shape_cast %140 : vector<1x1x1x3x16x16xf32> to vector<3x16x16xf32>
    %142 = arith.maximumf %139, %141 : vector<3x16x16xf32>
    %c0_240 = arith.constant 0 : index
    %c0_241 = arith.constant 0 : index
    %c48 = arith.constant 48 : index
    %c0_242 = arith.constant 0 : index
    %c0_243 = arith.constant 0 : index
    %c0_244 = arith.constant 0 : index
    %143 = vector.load %arg4[%c0_240, %c0_241, %c48, %c0_242, %c0_243, %c0_244] : memref<1x1x49x3x16x16xf32, #tpu.memory_space<vmem>>, vector<1x1x1x3x16x16xf32>
    %144 = vector.shape_cast %143 : vector<1x1x1x3x16x16xf32> to vector<3x16x16xf32>
    %145 = arith.maximumf %142, %144 : vector<3x16x16xf32>
    %cst = arith.constant 0.000000e+00 : f32
    %146 = vector.broadcast %cst : f32 to vector<3x16x16xf32>
    %cst_245 = arith.constant 0.000000e+00 : f32
    %147 = vector.broadcast %cst_245 : f32 to vector<3x16x16xf32>
    %c0_246 = arith.constant 0 : index
    %c0_247 = arith.constant 0 : index
    %c0_248 = arith.constant 0 : index
    %c0_249 = arith.constant 0 : index
    %c0_250 = arith.constant 0 : index
    %148 = vector.load %arg3[%c0_246, %c0_247, %c0_248, %c0_249, %c0_250] : memref<1x1x3x22x22xf32, #tpu.memory_space<vmem>>, vector<1x1x3x22x16xf32>
    %149 = vector.shape_cast %148 : vector<1x1x3x22x16xf32> to vector<3x22x16xf32>
    %c0_251 = arith.constant 0 : index
    %c0_252 = arith.constant 0 : index
    %c0_253 = arith.constant 0 : index
    %c0_254 = arith.constant 0 : index
    %c0_255 = arith.constant 0 : index
    %c0_256 = arith.constant 0 : index
    %150 = vector.load %arg4[%c0_251, %c0_252, %c0_253, %c0_254, %c0_255, %c0_256] : memref<1x1x49x3x16x16xf32, #tpu.memory_space<vmem>>, vector<1x1x1x3x16x16xf32>
    %151 = vector.shape_cast %150 : vector<1x1x1x3x16x16xf32> to vector<3x16x16xf32>
    %152 = arith.subf %151, %145 : vector<3x16x16xf32>
    %153 = math.exp %152 : vector<3x16x16xf32>
    %154 = arith.addf %146, %153 : vector<3x16x16xf32>
    %155 = vector.extract_strided_slice %149 {offsets = [0, 0, 0], sizes = [3, 16, 16], strides = [1, 1, 1]} : vector<3x22x16xf32> to vector<3x16x16xf32>
    %156 = arith.mulf %153, %155 : vector<3x16x16xf32>
    %157 = arith.addf %147, %156 : vector<3x16x16xf32>
    %c0_257 = arith.constant 0 : index
    %c0_258 = arith.constant 0 : index
    %c7_259 = arith.constant 7 : index
    %c0_260 = arith.constant 0 : index
    %c0_261 = arith.constant 0 : index
    %c0_262 = arith.constant 0 : index
    %158 = vector.load %arg4[%c0_257, %c0_258, %c7_259, %c0_260, %c0_261, %c0_262] : memref<1x1x49x3x16x16xf32, #tpu.memory_space<vmem>>, vector<1x1x1x3x16x16xf32>
    %159 = vector.shape_cast %158 : vector<1x1x1x3x16x16xf32> to vector<3x16x16xf32>
    %160 = arith.subf %159, %145 : vector<3x16x16xf32>
    %161 = math.exp %160 : vector<3x16x16xf32>
    %162 = arith.addf %154, %161 : vector<3x16x16xf32>
    %163 = vector.extract_strided_slice %149 {offsets = [0, 1, 0], sizes = [3, 16, 16], strides = [1, 1, 1]} : vector<3x22x16xf32> to vector<3x16x16xf32>
    %164 = arith.mulf %161, %163 : vector<3x16x16xf32>
    %165 = arith.addf %157, %164 : vector<3x16x16xf32>
    %c0_263 = arith.constant 0 : index
    %c0_264 = arith.constant 0 : index
    %c14_265 = arith.constant 14 : index
    %c0_266 = arith.constant 0 : index
    %c0_267 = arith.constant 0 : index
    %c0_268 = arith.constant 0 : index
    %166 = vector.load %arg4[%c0_263, %c0_264, %c14_265, %c0_266, %c0_267, %c0_268] : memref<1x1x49x3x16x16xf32, #tpu.memory_space<vmem>>, vector<1x1x1x3x16x16xf32>
    %167 = vector.shape_cast %166 : vector<1x1x1x3x16x16xf32> to vector<3x16x16xf32>
    %168 = arith.subf %167, %145 : vector<3x16x16xf32>
    %169 = math.exp %168 : vector<3x16x16xf32>
    %170 = arith.addf %162, %169 : vector<3x16x16xf32>
    %171 = vector.extract_strided_slice %149 {offsets = [0, 2, 0], sizes = [3, 16, 16], strides = [1, 1, 1]} : vector<3x22x16xf32> to vector<3x16x16xf32>
    %172 = arith.mulf %169, %171 : vector<3x16x16xf32>
    %173 = arith.addf %165, %172 : vector<3x16x16xf32>
    %c0_269 = arith.constant 0 : index
    %c0_270 = arith.constant 0 : index
    %c21_271 = arith.constant 21 : index
    %c0_272 = arith.constant 0 : index
    %c0_273 = arith.constant 0 : index
    %c0_274 = arith.constant 0 : index
    %174 = vector.load %arg4[%c0_269, %c0_270, %c21_271, %c0_272, %c0_273, %c0_274] : memref<1x1x49x3x16x16xf32, #tpu.memory_space<vmem>>, vector<1x1x1x3x16x16xf32>
    %175 = vector.shape_cast %174 : vector<1x1x1x3x16x16xf32> to vector<3x16x16xf32>
    %176 = arith.subf %175, %145 : vector<3x16x16xf32>
    %177 = math.exp %176 : vector<3x16x16xf32>
    %178 = arith.addf %170, %177 : vector<3x16x16xf32>
    %179 = vector.extract_strided_slice %149 {offsets = [0, 3, 0], sizes = [3, 16, 16], strides = [1, 1, 1]} : vector<3x22x16xf32> to vector<3x16x16xf32>
    %180 = arith.mulf %177, %179 : vector<3x16x16xf32>
    %181 = arith.addf %173, %180 : vector<3x16x16xf32>
    %c0_275 = arith.constant 0 : index
    %c0_276 = arith.constant 0 : index
    %c28_277 = arith.constant 28 : index
    %c0_278 = arith.constant 0 : index
    %c0_279 = arith.constant 0 : index
    %c0_280 = arith.constant 0 : index
    %182 = vector.load %arg4[%c0_275, %c0_276, %c28_277, %c0_278, %c0_279, %c0_280] : memref<1x1x49x3x16x16xf32, #tpu.memory_space<vmem>>, vector<1x1x1x3x16x16xf32>
    %183 = vector.shape_cast %182 : vector<1x1x1x3x16x16xf32> to vector<3x16x16xf32>
    %184 = arith.subf %183, %145 : vector<3x16x16xf32>
    %185 = math.exp %184 : vector<3x16x16xf32>
    %186 = arith.addf %178, %185 : vector<3x16x16xf32>
    %187 = vector.extract_strided_slice %149 {offsets = [0, 4, 0], sizes = [3, 16, 16], strides = [1, 1, 1]} : vector<3x22x16xf32> to vector<3x16x16xf32>
    %188 = arith.mulf %185, %187 : vector<3x16x16xf32>
    %189 = arith.addf %181, %188 : vector<3x16x16xf32>
    %c0_281 = arith.constant 0 : index
    %c0_282 = arith.constant 0 : index
    %c35_283 = arith.constant 35 : index
    %c0_284 = arith.constant 0 : index
    %c0_285 = arith.constant 0 : index
    %c0_286 = arith.constant 0 : index
    %190 = vector.load %arg4[%c0_281, %c0_282, %c35_283, %c0_284, %c0_285, %c0_286] : memref<1x1x49x3x16x16xf32, #tpu.memory_space<vmem>>, vector<1x1x1x3x16x16xf32>
    %191 = vector.shape_cast %190 : vector<1x1x1x3x16x16xf32> to vector<3x16x16xf32>
    %192 = arith.subf %191, %145 : vector<3x16x16xf32>
    %193 = math.exp %192 : vector<3x16x16xf32>
    %194 = arith.addf %186, %193 : vector<3x16x16xf32>
    %195 = vector.extract_strided_slice %149 {offsets = [0, 5, 0], sizes = [3, 16, 16], strides = [1, 1, 1]} : vector<3x22x16xf32> to vector<3x16x16xf32>
    %196 = arith.mulf %193, %195 : vector<3x16x16xf32>
    %197 = arith.addf %189, %196 : vector<3x16x16xf32>
    %c0_287 = arith.constant 0 : index
    %c0_288 = arith.constant 0 : index
    %c42_289 = arith.constant 42 : index
    %c0_290 = arith.constant 0 : index
    %c0_291 = arith.constant 0 : index
    %c0_292 = arith.constant 0 : index
    %198 = vector.load %arg4[%c0_287, %c0_288, %c42_289, %c0_290, %c0_291, %c0_292] : memref<1x1x49x3x16x16xf32, #tpu.memory_space<vmem>>, vector<1x1x1x3x16x16xf32>
    %199 = vector.shape_cast %198 : vector<1x1x1x3x16x16xf32> to vector<3x16x16xf32>
    %200 = arith.subf %199, %145 : vector<3x16x16xf32>
    %201 = math.exp %200 : vector<3x16x16xf32>
    %202 = arith.addf %194, %201 : vector<3x16x16xf32>
    %203 = vector.extract_strided_slice %149 {offsets = [0, 6, 0], sizes = [3, 16, 16], strides = [1, 1, 1]} : vector<3x22x16xf32> to vector<3x16x16xf32>
    %204 = arith.mulf %201, %203 : vector<3x16x16xf32>
    %205 = arith.addf %197, %204 : vector<3x16x16xf32>
    %c0_293 = arith.constant 0 : index
    %c0_294 = arith.constant 0 : index
    %c0_295 = arith.constant 0 : index
    %c0_296 = arith.constant 0 : index
    %c1_297 = arith.constant 1 : index
    %206 = vector.load %arg3[%c0_293, %c0_294, %c0_295, %c0_296, %c1_297] : memref<1x1x3x22x22xf32, #tpu.memory_space<vmem>>, vector<1x1x3x22x16xf32>
    %207 = vector.shape_cast %206 : vector<1x1x3x22x16xf32> to vector<3x22x16xf32>
    %c0_298 = arith.constant 0 : index
    %c0_299 = arith.constant 0 : index
    %c1_300 = arith.constant 1 : index
    %c0_301 = arith.constant 0 : index
    %c0_302 = arith.constant 0 : index
    %c0_303 = arith.constant 0 : index
    %208 = vector.load %arg4[%c0_298, %c0_299, %c1_300, %c0_301, %c0_302, %c0_303] : memref<1x1x49x3x16x16xf32, #tpu.memory_space<vmem>>, vector<1x1x1x3x16x16xf32>
    %209 = vector.shape_cast %208 : vector<1x1x1x3x16x16xf32> to vector<3x16x16xf32>
    %210 = arith.subf %209, %145 : vector<3x16x16xf32>
    %211 = math.exp %210 : vector<3x16x16xf32>
    %212 = arith.addf %202, %211 : vector<3x16x16xf32>
    %213 = vector.extract_strided_slice %207 {offsets = [0, 0, 0], sizes = [3, 16, 16], strides = [1, 1, 1]} : vector<3x22x16xf32> to vector<3x16x16xf32>
    %214 = arith.mulf %211, %213 : vector<3x16x16xf32>
    %215 = arith.addf %205, %214 : vector<3x16x16xf32>
    %c0_304 = arith.constant 0 : index
    %c0_305 = arith.constant 0 : index
    %c8_306 = arith.constant 8 : index
    %c0_307 = arith.constant 0 : index
    %c0_308 = arith.constant 0 : index
    %c0_309 = arith.constant 0 : index
    %216 = vector.load %arg4[%c0_304, %c0_305, %c8_306, %c0_307, %c0_308, %c0_309] : memref<1x1x49x3x16x16xf32, #tpu.memory_space<vmem>>, vector<1x1x1x3x16x16xf32>
    %217 = vector.shape_cast %216 : vector<1x1x1x3x16x16xf32> to vector<3x16x16xf32>
    %218 = arith.subf %217, %145 : vector<3x16x16xf32>
    %219 = math.exp %218 : vector<3x16x16xf32>
    %220 = arith.addf %212, %219 : vector<3x16x16xf32>
    %221 = vector.extract_strided_slice %207 {offsets = [0, 1, 0], sizes = [3, 16, 16], strides = [1, 1, 1]} : vector<3x22x16xf32> to vector<3x16x16xf32>
    %222 = arith.mulf %219, %221 : vector<3x16x16xf32>
    %223 = arith.addf %215, %222 : vector<3x16x16xf32>
    %c0_310 = arith.constant 0 : index
    %c0_311 = arith.constant 0 : index
    %c15_312 = arith.constant 15 : index
    %c0_313 = arith.constant 0 : index
    %c0_314 = arith.constant 0 : index
    %c0_315 = arith.constant 0 : index
    %224 = vector.load %arg4[%c0_310, %c0_311, %c15_312, %c0_313, %c0_314, %c0_315] : memref<1x1x49x3x16x16xf32, #tpu.memory_space<vmem>>, vector<1x1x1x3x16x16xf32>
    %225 = vector.shape_cast %224 : vector<1x1x1x3x16x16xf32> to vector<3x16x16xf32>
    %226 = arith.subf %225, %145 : vector<3x16x16xf32>
    %227 = math.exp %226 : vector<3x16x16xf32>
    %228 = arith.addf %220, %227 : vector<3x16x16xf32>
    %229 = vector.extract_strided_slice %207 {offsets = [0, 2, 0], sizes = [3, 16, 16], strides = [1, 1, 1]} : vector<3x22x16xf32> to vector<3x16x16xf32>
    %230 = arith.mulf %227, %229 : vector<3x16x16xf32>
    %231 = arith.addf %223, %230 : vector<3x16x16xf32>
    %c0_316 = arith.constant 0 : index
    %c0_317 = arith.constant 0 : index
    %c22_318 = arith.constant 22 : index
    %c0_319 = arith.constant 0 : index
    %c0_320 = arith.constant 0 : index
    %c0_321 = arith.constant 0 : index
    %232 = vector.load %arg4[%c0_316, %c0_317, %c22_318, %c0_319, %c0_320, %c0_321] : memref<1x1x49x3x16x16xf32, #tpu.memory_space<vmem>>, vector<1x1x1x3x16x16xf32>
    %233 = vector.shape_cast %232 : vector<1x1x1x3x16x16xf32> to vector<3x16x16xf32>
    %234 = arith.subf %233, %145 : vector<3x16x16xf32>
    %235 = math.exp %234 : vector<3x16x16xf32>
    %236 = arith.addf %228, %235 : vector<3x16x16xf32>
    %237 = vector.extract_strided_slice %207 {offsets = [0, 3, 0], sizes = [3, 16, 16], strides = [1, 1, 1]} : vector<3x22x16xf32> to vector<3x16x16xf32>
    %238 = arith.mulf %235, %237 : vector<3x16x16xf32>
    %239 = arith.addf %231, %238 : vector<3x16x16xf32>
    %c0_322 = arith.constant 0 : index
    %c0_323 = arith.constant 0 : index
    %c29_324 = arith.constant 29 : index
    %c0_325 = arith.constant 0 : index
    %c0_326 = arith.constant 0 : index
    %c0_327 = arith.constant 0 : index
    %240 = vector.load %arg4[%c0_322, %c0_323, %c29_324, %c0_325, %c0_326, %c0_327] : memref<1x1x49x3x16x16xf32, #tpu.memory_space<vmem>>, vector<1x1x1x3x16x16xf32>
    %241 = vector.shape_cast %240 : vector<1x1x1x3x16x16xf32> to vector<3x16x16xf32>
    %242 = arith.subf %241, %145 : vector<3x16x16xf32>
    %243 = math.exp %242 : vector<3x16x16xf32>
    %244 = arith.addf %236, %243 : vector<3x16x16xf32>
    %245 = vector.extract_strided_slice %207 {offsets = [0, 4, 0], sizes = [3, 16, 16], strides = [1, 1, 1]} : vector<3x22x16xf32> to vector<3x16x16xf32>
    %246 = arith.mulf %243, %245 : vector<3x16x16xf32>
    %247 = arith.addf %239, %246 : vector<3x16x16xf32>
    %c0_328 = arith.constant 0 : index
    %c0_329 = arith.constant 0 : index
    %c36_330 = arith.constant 36 : index
    %c0_331 = arith.constant 0 : index
    %c0_332 = arith.constant 0 : index
    %c0_333 = arith.constant 0 : index
    %248 = vector.load %arg4[%c0_328, %c0_329, %c36_330, %c0_331, %c0_332, %c0_333] : memref<1x1x49x3x16x16xf32, #tpu.memory_space<vmem>>, vector<1x1x1x3x16x16xf32>
    %249 = vector.shape_cast %248 : vector<1x1x1x3x16x16xf32> to vector<3x16x16xf32>
    %250 = arith.subf %249, %145 : vector<3x16x16xf32>
    %251 = math.exp %250 : vector<3x16x16xf32>
    %252 = arith.addf %244, %251 : vector<3x16x16xf32>
    %253 = vector.extract_strided_slice %207 {offsets = [0, 5, 0], sizes = [3, 16, 16], strides = [1, 1, 1]} : vector<3x22x16xf32> to vector<3x16x16xf32>
    %254 = arith.mulf %251, %253 : vector<3x16x16xf32>
    %255 = arith.addf %247, %254 : vector<3x16x16xf32>
    %c0_334 = arith.constant 0 : index
    %c0_335 = arith.constant 0 : index
    %c43_336 = arith.constant 43 : index
    %c0_337 = arith.constant 0 : index
    %c0_338 = arith.constant 0 : index
    %c0_339 = arith.constant 0 : index
    %256 = vector.load %arg4[%c0_334, %c0_335, %c43_336, %c0_337, %c0_338, %c0_339] : memref<1x1x49x3x16x16xf32, #tpu.memory_space<vmem>>, vector<1x1x1x3x16x16xf32>
    %257 = vector.shape_cast %256 : vector<1x1x1x3x16x16xf32> to vector<3x16x16xf32>
    %258 = arith.subf %257, %145 : vector<3x16x16xf32>
    %259 = math.exp %258 : vector<3x16x16xf32>
    %260 = arith.addf %252, %259 : vector<3x16x16xf32>
    %261 = vector.extract_strided_slice %207 {offsets = [0, 6, 0], sizes = [3, 16, 16], strides = [1, 1, 1]} : vector<3x22x16xf32> to vector<3x16x16xf32>
    %262 = arith.mulf %259, %261 : vector<3x16x16xf32>
    %263 = arith.addf %255, %262 : vector<3x16x16xf32>
    %c0_340 = arith.constant 0 : index
    %c0_341 = arith.constant 0 : index
    %c0_342 = arith.constant 0 : index
    %c0_343 = arith.constant 0 : index
    %c2_344 = arith.constant 2 : index
    %264 = vector.load %arg3[%c0_340, %c0_341, %c0_342, %c0_343, %c2_344] : memref<1x1x3x22x22xf32, #tpu.memory_space<vmem>>, vector<1x1x3x22x16xf32>
    %265 = vector.shape_cast %264 : vector<1x1x3x22x16xf32> to vector<3x22x16xf32>
    %c0_345 = arith.constant 0 : index
    %c0_346 = arith.constant 0 : index
    %c2_347 = arith.constant 2 : index
    %c0_348 = arith.constant 0 : index
    %c0_349 = arith.constant 0 : index
    %c0_350 = arith.constant 0 : index
    %266 = vector.load %arg4[%c0_345, %c0_346, %c2_347, %c0_348, %c0_349, %c0_350] : memref<1x1x49x3x16x16xf32, #tpu.memory_space<vmem>>, vector<1x1x1x3x16x16xf32>
    %267 = vector.shape_cast %266 : vector<1x1x1x3x16x16xf32> to vector<3x16x16xf32>
    %268 = arith.subf %267, %145 : vector<3x16x16xf32>
    %269 = math.exp %268 : vector<3x16x16xf32>
    %270 = arith.addf %260, %269 : vector<3x16x16xf32>
    %271 = vector.extract_strided_slice %265 {offsets = [0, 0, 0], sizes = [3, 16, 16], strides = [1, 1, 1]} : vector<3x22x16xf32> to vector<3x16x16xf32>
    %272 = arith.mulf %269, %271 : vector<3x16x16xf32>
    %273 = arith.addf %263, %272 : vector<3x16x16xf32>
    %c0_351 = arith.constant 0 : index
    %c0_352 = arith.constant 0 : index
    %c9_353 = arith.constant 9 : index
    %c0_354 = arith.constant 0 : index
    %c0_355 = arith.constant 0 : index
    %c0_356 = arith.constant 0 : index
    %274 = vector.load %arg4[%c0_351, %c0_352, %c9_353, %c0_354, %c0_355, %c0_356] : memref<1x1x49x3x16x16xf32, #tpu.memory_space<vmem>>, vector<1x1x1x3x16x16xf32>
    %275 = vector.shape_cast %274 : vector<1x1x1x3x16x16xf32> to vector<3x16x16xf32>
    %276 = arith.subf %275, %145 : vector<3x16x16xf32>
    %277 = math.exp %276 : vector<3x16x16xf32>
    %278 = arith.addf %270, %277 : vector<3x16x16xf32>
    %279 = vector.extract_strided_slice %265 {offsets = [0, 1, 0], sizes = [3, 16, 16], strides = [1, 1, 1]} : vector<3x22x16xf32> to vector<3x16x16xf32>
    %280 = arith.mulf %277, %279 : vector<3x16x16xf32>
    %281 = arith.addf %273, %280 : vector<3x16x16xf32>
    %c0_357 = arith.constant 0 : index
    %c0_358 = arith.constant 0 : index
    %c16_359 = arith.constant 16 : index
    %c0_360 = arith.constant 0 : index
    %c0_361 = arith.constant 0 : index
    %c0_362 = arith.constant 0 : index
    %282 = vector.load %arg4[%c0_357, %c0_358, %c16_359, %c0_360, %c0_361, %c0_362] : memref<1x1x49x3x16x16xf32, #tpu.memory_space<vmem>>, vector<1x1x1x3x16x16xf32>
    %283 = vector.shape_cast %282 : vector<1x1x1x3x16x16xf32> to vector<3x16x16xf32>
    %284 = arith.subf %283, %145 : vector<3x16x16xf32>
    %285 = math.exp %284 : vector<3x16x16xf32>
    %286 = arith.addf %278, %285 : vector<3x16x16xf32>
    %287 = vector.extract_strided_slice %265 {offsets = [0, 2, 0], sizes = [3, 16, 16], strides = [1, 1, 1]} : vector<3x22x16xf32> to vector<3x16x16xf32>
    %288 = arith.mulf %285, %287 : vector<3x16x16xf32>
    %289 = arith.addf %281, %288 : vector<3x16x16xf32>
    %c0_363 = arith.constant 0 : index
    %c0_364 = arith.constant 0 : index
    %c23_365 = arith.constant 23 : index
    %c0_366 = arith.constant 0 : index
    %c0_367 = arith.constant 0 : index
    %c0_368 = arith.constant 0 : index
    %290 = vector.load %arg4[%c0_363, %c0_364, %c23_365, %c0_366, %c0_367, %c0_368] : memref<1x1x49x3x16x16xf32, #tpu.memory_space<vmem>>, vector<1x1x1x3x16x16xf32>
    %291 = vector.shape_cast %290 : vector<1x1x1x3x16x16xf32> to vector<3x16x16xf32>
    %292 = arith.subf %291, %145 : vector<3x16x16xf32>
    %293 = math.exp %292 : vector<3x16x16xf32>
    %294 = arith.addf %286, %293 : vector<3x16x16xf32>
    %295 = vector.extract_strided_slice %265 {offsets = [0, 3, 0], sizes = [3, 16, 16], strides = [1, 1, 1]} : vector<3x22x16xf32> to vector<3x16x16xf32>
    %296 = arith.mulf %293, %295 : vector<3x16x16xf32>
    %297 = arith.addf %289, %296 : vector<3x16x16xf32>
    %c0_369 = arith.constant 0 : index
    %c0_370 = arith.constant 0 : index
    %c30_371 = arith.constant 30 : index
    %c0_372 = arith.constant 0 : index
    %c0_373 = arith.constant 0 : index
    %c0_374 = arith.constant 0 : index
    %298 = vector.load %arg4[%c0_369, %c0_370, %c30_371, %c0_372, %c0_373, %c0_374] : memref<1x1x49x3x16x16xf32, #tpu.memory_space<vmem>>, vector<1x1x1x3x16x16xf32>
    %299 = vector.shape_cast %298 : vector<1x1x1x3x16x16xf32> to vector<3x16x16xf32>
    %300 = arith.subf %299, %145 : vector<3x16x16xf32>
    %301 = math.exp %300 : vector<3x16x16xf32>
    %302 = arith.addf %294, %301 : vector<3x16x16xf32>
    %303 = vector.extract_strided_slice %265 {offsets = [0, 4, 0], sizes = [3, 16, 16], strides = [1, 1, 1]} : vector<3x22x16xf32> to vector<3x16x16xf32>
    %304 = arith.mulf %301, %303 : vector<3x16x16xf32>
    %305 = arith.addf %297, %304 : vector<3x16x16xf32>
    %c0_375 = arith.constant 0 : index
    %c0_376 = arith.constant 0 : index
    %c37_377 = arith.constant 37 : index
    %c0_378 = arith.constant 0 : index
    %c0_379 = arith.constant 0 : index
    %c0_380 = arith.constant 0 : index
    %306 = vector.load %arg4[%c0_375, %c0_376, %c37_377, %c0_378, %c0_379, %c0_380] : memref<1x1x49x3x16x16xf32, #tpu.memory_space<vmem>>, vector<1x1x1x3x16x16xf32>
    %307 = vector.shape_cast %306 : vector<1x1x1x3x16x16xf32> to vector<3x16x16xf32>
    %308 = arith.subf %307, %145 : vector<3x16x16xf32>
    %309 = math.exp %308 : vector<3x16x16xf32>
    %310 = arith.addf %302, %309 : vector<3x16x16xf32>
    %311 = vector.extract_strided_slice %265 {offsets = [0, 5, 0], sizes = [3, 16, 16], strides = [1, 1, 1]} : vector<3x22x16xf32> to vector<3x16x16xf32>
    %312 = arith.mulf %309, %311 : vector<3x16x16xf32>
    %313 = arith.addf %305, %312 : vector<3x16x16xf32>
    %c0_381 = arith.constant 0 : index
    %c0_382 = arith.constant 0 : index
    %c44_383 = arith.constant 44 : index
    %c0_384 = arith.constant 0 : index
    %c0_385 = arith.constant 0 : index
    %c0_386 = arith.constant 0 : index
    %314 = vector.load %arg4[%c0_381, %c0_382, %c44_383, %c0_384, %c0_385, %c0_386] : memref<1x1x49x3x16x16xf32, #tpu.memory_space<vmem>>, vector<1x1x1x3x16x16xf32>
    %315 = vector.shape_cast %314 : vector<1x1x1x3x16x16xf32> to vector<3x16x16xf32>
    %316 = arith.subf %315, %145 : vector<3x16x16xf32>
    %317 = math.exp %316 : vector<3x16x16xf32>
    %318 = arith.addf %310, %317 : vector<3x16x16xf32>
    %319 = vector.extract_strided_slice %265 {offsets = [0, 6, 0], sizes = [3, 16, 16], strides = [1, 1, 1]} : vector<3x22x16xf32> to vector<3x16x16xf32>
    %320 = arith.mulf %317, %319 : vector<3x16x16xf32>
    %321 = arith.addf %313, %320 : vector<3x16x16xf32>
    %c0_387 = arith.constant 0 : index
    %c0_388 = arith.constant 0 : index
    %c0_389 = arith.constant 0 : index
    %c0_390 = arith.constant 0 : index
    %c3_391 = arith.constant 3 : index
    %322 = vector.load %arg3[%c0_387, %c0_388, %c0_389, %c0_390, %c3_391] : memref<1x1x3x22x22xf32, #tpu.memory_space<vmem>>, vector<1x1x3x22x16xf32>
    %323 = vector.shape_cast %322 : vector<1x1x3x22x16xf32> to vector<3x22x16xf32>
    %c0_392 = arith.constant 0 : index
    %c0_393 = arith.constant 0 : index
    %c3_394 = arith.constant 3 : index
    %c0_395 = arith.constant 0 : index
    %c0_396 = arith.constant 0 : index
    %c0_397 = arith.constant 0 : index
    %324 = vector.load %arg4[%c0_392, %c0_393, %c3_394, %c0_395, %c0_396, %c0_397] : memref<1x1x49x3x16x16xf32, #tpu.memory_space<vmem>>, vector<1x1x1x3x16x16xf32>
    %325 = vector.shape_cast %324 : vector<1x1x1x3x16x16xf32> to vector<3x16x16xf32>
    %326 = arith.subf %325, %145 : vector<3x16x16xf32>
    %327 = math.exp %326 : vector<3x16x16xf32>
    %328 = arith.addf %318, %327 : vector<3x16x16xf32>
    %329 = vector.extract_strided_slice %323 {offsets = [0, 0, 0], sizes = [3, 16, 16], strides = [1, 1, 1]} : vector<3x22x16xf32> to vector<3x16x16xf32>
    %330 = arith.mulf %327, %329 : vector<3x16x16xf32>
    %331 = arith.addf %321, %330 : vector<3x16x16xf32>
    %c0_398 = arith.constant 0 : index
    %c0_399 = arith.constant 0 : index
    %c10_400 = arith.constant 10 : index
    %c0_401 = arith.constant 0 : index
    %c0_402 = arith.constant 0 : index
    %c0_403 = arith.constant 0 : index
    %332 = vector.load %arg4[%c0_398, %c0_399, %c10_400, %c0_401, %c0_402, %c0_403] : memref<1x1x49x3x16x16xf32, #tpu.memory_space<vmem>>, vector<1x1x1x3x16x16xf32>
    %333 = vector.shape_cast %332 : vector<1x1x1x3x16x16xf32> to vector<3x16x16xf32>
    %334 = arith.subf %333, %145 : vector<3x16x16xf32>
    %335 = math.exp %334 : vector<3x16x16xf32>
    %336 = arith.addf %328, %335 : vector<3x16x16xf32>
    %337 = vector.extract_strided_slice %323 {offsets = [0, 1, 0], sizes = [3, 16, 16], strides = [1, 1, 1]} : vector<3x22x16xf32> to vector<3x16x16xf32>
    %338 = arith.mulf %335, %337 : vector<3x16x16xf32>
    %339 = arith.addf %331, %338 : vector<3x16x16xf32>
    %c0_404 = arith.constant 0 : index
    %c0_405 = arith.constant 0 : index
    %c17_406 = arith.constant 17 : index
    %c0_407 = arith.constant 0 : index
    %c0_408 = arith.constant 0 : index
    %c0_409 = arith.constant 0 : index
    %340 = vector.load %arg4[%c0_404, %c0_405, %c17_406, %c0_407, %c0_408, %c0_409] : memref<1x1x49x3x16x16xf32, #tpu.memory_space<vmem>>, vector<1x1x1x3x16x16xf32>
    %341 = vector.shape_cast %340 : vector<1x1x1x3x16x16xf32> to vector<3x16x16xf32>
    %342 = arith.subf %341, %145 : vector<3x16x16xf32>
    %343 = math.exp %342 : vector<3x16x16xf32>
    %344 = arith.addf %336, %343 : vector<3x16x16xf32>
    %345 = vector.extract_strided_slice %323 {offsets = [0, 2, 0], sizes = [3, 16, 16], strides = [1, 1, 1]} : vector<3x22x16xf32> to vector<3x16x16xf32>
    %346 = arith.mulf %343, %345 : vector<3x16x16xf32>
    %347 = arith.addf %339, %346 : vector<3x16x16xf32>
    %c0_410 = arith.constant 0 : index
    %c0_411 = arith.constant 0 : index
    %c24_412 = arith.constant 24 : index
    %c0_413 = arith.constant 0 : index
    %c0_414 = arith.constant 0 : index
    %c0_415 = arith.constant 0 : index
    %348 = vector.load %arg4[%c0_410, %c0_411, %c24_412, %c0_413, %c0_414, %c0_415] : memref<1x1x49x3x16x16xf32, #tpu.memory_space<vmem>>, vector<1x1x1x3x16x16xf32>
    %349 = vector.shape_cast %348 : vector<1x1x1x3x16x16xf32> to vector<3x16x16xf32>
    %350 = arith.subf %349, %145 : vector<3x16x16xf32>
    %351 = math.exp %350 : vector<3x16x16xf32>
    %352 = arith.addf %344, %351 : vector<3x16x16xf32>
    %353 = vector.extract_strided_slice %323 {offsets = [0, 3, 0], sizes = [3, 16, 16], strides = [1, 1, 1]} : vector<3x22x16xf32> to vector<3x16x16xf32>
    %354 = arith.mulf %351, %353 : vector<3x16x16xf32>
    %355 = arith.addf %347, %354 : vector<3x16x16xf32>
    %c0_416 = arith.constant 0 : index
    %c0_417 = arith.constant 0 : index
    %c31_418 = arith.constant 31 : index
    %c0_419 = arith.constant 0 : index
    %c0_420 = arith.constant 0 : index
    %c0_421 = arith.constant 0 : index
    %356 = vector.load %arg4[%c0_416, %c0_417, %c31_418, %c0_419, %c0_420, %c0_421] : memref<1x1x49x3x16x16xf32, #tpu.memory_space<vmem>>, vector<1x1x1x3x16x16xf32>
    %357 = vector.shape_cast %356 : vector<1x1x1x3x16x16xf32> to vector<3x16x16xf32>
    %358 = arith.subf %357, %145 : vector<3x16x16xf32>
    %359 = math.exp %358 : vector<3x16x16xf32>
    %360 = arith.addf %352, %359 : vector<3x16x16xf32>
    %361 = vector.extract_strided_slice %323 {offsets = [0, 4, 0], sizes = [3, 16, 16], strides = [1, 1, 1]} : vector<3x22x16xf32> to vector<3x16x16xf32>
    %362 = arith.mulf %359, %361 : vector<3x16x16xf32>
    %363 = arith.addf %355, %362 : vector<3x16x16xf32>
    %c0_422 = arith.constant 0 : index
    %c0_423 = arith.constant 0 : index
    %c38_424 = arith.constant 38 : index
    %c0_425 = arith.constant 0 : index
    %c0_426 = arith.constant 0 : index
    %c0_427 = arith.constant 0 : index
    %364 = vector.load %arg4[%c0_422, %c0_423, %c38_424, %c0_425, %c0_426, %c0_427] : memref<1x1x49x3x16x16xf32, #tpu.memory_space<vmem>>, vector<1x1x1x3x16x16xf32>
    %365 = vector.shape_cast %364 : vector<1x1x1x3x16x16xf32> to vector<3x16x16xf32>
    %366 = arith.subf %365, %145 : vector<3x16x16xf32>
    %367 = math.exp %366 : vector<3x16x16xf32>
    %368 = arith.addf %360, %367 : vector<3x16x16xf32>
    %369 = vector.extract_strided_slice %323 {offsets = [0, 5, 0], sizes = [3, 16, 16], strides = [1, 1, 1]} : vector<3x22x16xf32> to vector<3x16x16xf32>
    %370 = arith.mulf %367, %369 : vector<3x16x16xf32>
    %371 = arith.addf %363, %370 : vector<3x16x16xf32>
    %c0_428 = arith.constant 0 : index
    %c0_429 = arith.constant 0 : index
    %c45_430 = arith.constant 45 : index
    %c0_431 = arith.constant 0 : index
    %c0_432 = arith.constant 0 : index
    %c0_433 = arith.constant 0 : index
    %372 = vector.load %arg4[%c0_428, %c0_429, %c45_430, %c0_431, %c0_432, %c0_433] : memref<1x1x49x3x16x16xf32, #tpu.memory_space<vmem>>, vector<1x1x1x3x16x16xf32>
    %373 = vector.shape_cast %372 : vector<1x1x1x3x16x16xf32> to vector<3x16x16xf32>
    %374 = arith.subf %373, %145 : vector<3x16x16xf32>
    %375 = math.exp %374 : vector<3x16x16xf32>
    %376 = arith.addf %368, %375 : vector<3x16x16xf32>
    %377 = vector.extract_strided_slice %323 {offsets = [0, 6, 0], sizes = [3, 16, 16], strides = [1, 1, 1]} : vector<3x22x16xf32> to vector<3x16x16xf32>
    %378 = arith.mulf %375, %377 : vector<3x16x16xf32>
    %379 = arith.addf %371, %378 : vector<3x16x16xf32>
    %c0_434 = arith.constant 0 : index
    %c0_435 = arith.constant 0 : index
    %c0_436 = arith.constant 0 : index
    %c0_437 = arith.constant 0 : index
    %c4_438 = arith.constant 4 : index
    %380 = vector.load %arg3[%c0_434, %c0_435, %c0_436, %c0_437, %c4_438] : memref<1x1x3x22x22xf32, #tpu.memory_space<vmem>>, vector<1x1x3x22x16xf32>
    %381 = vector.shape_cast %380 : vector<1x1x3x22x16xf32> to vector<3x22x16xf32>
    %c0_439 = arith.constant 0 : index
    %c0_440 = arith.constant 0 : index
    %c4_441 = arith.constant 4 : index
    %c0_442 = arith.constant 0 : index
    %c0_443 = arith.constant 0 : index
    %c0_444 = arith.constant 0 : index
    %382 = vector.load %arg4[%c0_439, %c0_440, %c4_441, %c0_442, %c0_443, %c0_444] : memref<1x1x49x3x16x16xf32, #tpu.memory_space<vmem>>, vector<1x1x1x3x16x16xf32>
    %383 = vector.shape_cast %382 : vector<1x1x1x3x16x16xf32> to vector<3x16x16xf32>
    %384 = arith.subf %383, %145 : vector<3x16x16xf32>
    %385 = math.exp %384 : vector<3x16x16xf32>
    %386 = arith.addf %376, %385 : vector<3x16x16xf32>
    %387 = vector.extract_strided_slice %381 {offsets = [0, 0, 0], sizes = [3, 16, 16], strides = [1, 1, 1]} : vector<3x22x16xf32> to vector<3x16x16xf32>
    %388 = arith.mulf %385, %387 : vector<3x16x16xf32>
    %389 = arith.addf %379, %388 : vector<3x16x16xf32>
    %c0_445 = arith.constant 0 : index
    %c0_446 = arith.constant 0 : index
    %c11_447 = arith.constant 11 : index
    %c0_448 = arith.constant 0 : index
    %c0_449 = arith.constant 0 : index
    %c0_450 = arith.constant 0 : index
    %390 = vector.load %arg4[%c0_445, %c0_446, %c11_447, %c0_448, %c0_449, %c0_450] : memref<1x1x49x3x16x16xf32, #tpu.memory_space<vmem>>, vector<1x1x1x3x16x16xf32>
    %391 = vector.shape_cast %390 : vector<1x1x1x3x16x16xf32> to vector<3x16x16xf32>
    %392 = arith.subf %391, %145 : vector<3x16x16xf32>
    %393 = math.exp %392 : vector<3x16x16xf32>
    %394 = arith.addf %386, %393 : vector<3x16x16xf32>
    %395 = vector.extract_strided_slice %381 {offsets = [0, 1, 0], sizes = [3, 16, 16], strides = [1, 1, 1]} : vector<3x22x16xf32> to vector<3x16x16xf32>
    %396 = arith.mulf %393, %395 : vector<3x16x16xf32>
    %397 = arith.addf %389, %396 : vector<3x16x16xf32>
    %c0_451 = arith.constant 0 : index
    %c0_452 = arith.constant 0 : index
    %c18_453 = arith.constant 18 : index
    %c0_454 = arith.constant 0 : index
    %c0_455 = arith.constant 0 : index
    %c0_456 = arith.constant 0 : index
    %398 = vector.load %arg4[%c0_451, %c0_452, %c18_453, %c0_454, %c0_455, %c0_456] : memref<1x1x49x3x16x16xf32, #tpu.memory_space<vmem>>, vector<1x1x1x3x16x16xf32>
    %399 = vector.shape_cast %398 : vector<1x1x1x3x16x16xf32> to vector<3x16x16xf32>
    %400 = arith.subf %399, %145 : vector<3x16x16xf32>
    %401 = math.exp %400 : vector<3x16x16xf32>
    %402 = arith.addf %394, %401 : vector<3x16x16xf32>
    %403 = vector.extract_strided_slice %381 {offsets = [0, 2, 0], sizes = [3, 16, 16], strides = [1, 1, 1]} : vector<3x22x16xf32> to vector<3x16x16xf32>
    %404 = arith.mulf %401, %403 : vector<3x16x16xf32>
    %405 = arith.addf %397, %404 : vector<3x16x16xf32>
    %c0_457 = arith.constant 0 : index
    %c0_458 = arith.constant 0 : index
    %c25_459 = arith.constant 25 : index
    %c0_460 = arith.constant 0 : index
    %c0_461 = arith.constant 0 : index
    %c0_462 = arith.constant 0 : index
    %406 = vector.load %arg4[%c0_457, %c0_458, %c25_459, %c0_460, %c0_461, %c0_462] : memref<1x1x49x3x16x16xf32, #tpu.memory_space<vmem>>, vector<1x1x1x3x16x16xf32>
    %407 = vector.shape_cast %406 : vector<1x1x1x3x16x16xf32> to vector<3x16x16xf32>
    %408 = arith.subf %407, %145 : vector<3x16x16xf32>
    %409 = math.exp %408 : vector<3x16x16xf32>
    %410 = arith.addf %402, %409 : vector<3x16x16xf32>
    %411 = vector.extract_strided_slice %381 {offsets = [0, 3, 0], sizes = [3, 16, 16], strides = [1, 1, 1]} : vector<3x22x16xf32> to vector<3x16x16xf32>
    %412 = arith.mulf %409, %411 : vector<3x16x16xf32>
    %413 = arith.addf %405, %412 : vector<3x16x16xf32>
    %c0_463 = arith.constant 0 : index
    %c0_464 = arith.constant 0 : index
    %c32_465 = arith.constant 32 : index
    %c0_466 = arith.constant 0 : index
    %c0_467 = arith.constant 0 : index
    %c0_468 = arith.constant 0 : index
    %414 = vector.load %arg4[%c0_463, %c0_464, %c32_465, %c0_466, %c0_467, %c0_468] : memref<1x1x49x3x16x16xf32, #tpu.memory_space<vmem>>, vector<1x1x1x3x16x16xf32>
    %415 = vector.shape_cast %414 : vector<1x1x1x3x16x16xf32> to vector<3x16x16xf32>
    %416 = arith.subf %415, %145 : vector<3x16x16xf32>
    %417 = math.exp %416 : vector<3x16x16xf32>
    %418 = arith.addf %410, %417 : vector<3x16x16xf32>
    %419 = vector.extract_strided_slice %381 {offsets = [0, 4, 0], sizes = [3, 16, 16], strides = [1, 1, 1]} : vector<3x22x16xf32> to vector<3x16x16xf32>
    %420 = arith.mulf %417, %419 : vector<3x16x16xf32>
    %421 = arith.addf %413, %420 : vector<3x16x16xf32>
    %c0_469 = arith.constant 0 : index
    %c0_470 = arith.constant 0 : index
    %c39_471 = arith.constant 39 : index
    %c0_472 = arith.constant 0 : index
    %c0_473 = arith.constant 0 : index
    %c0_474 = arith.constant 0 : index
    %422 = vector.load %arg4[%c0_469, %c0_470, %c39_471, %c0_472, %c0_473, %c0_474] : memref<1x1x49x3x16x16xf32, #tpu.memory_space<vmem>>, vector<1x1x1x3x16x16xf32>
    %423 = vector.shape_cast %422 : vector<1x1x1x3x16x16xf32> to vector<3x16x16xf32>
    %424 = arith.subf %423, %145 : vector<3x16x16xf32>
    %425 = math.exp %424 : vector<3x16x16xf32>
    %426 = arith.addf %418, %425 : vector<3x16x16xf32>
    %427 = vector.extract_strided_slice %381 {offsets = [0, 5, 0], sizes = [3, 16, 16], strides = [1, 1, 1]} : vector<3x22x16xf32> to vector<3x16x16xf32>
    %428 = arith.mulf %425, %427 : vector<3x16x16xf32>
    %429 = arith.addf %421, %428 : vector<3x16x16xf32>
    %c0_475 = arith.constant 0 : index
    %c0_476 = arith.constant 0 : index
    %c46_477 = arith.constant 46 : index
    %c0_478 = arith.constant 0 : index
    %c0_479 = arith.constant 0 : index
    %c0_480 = arith.constant 0 : index
    %430 = vector.load %arg4[%c0_475, %c0_476, %c46_477, %c0_478, %c0_479, %c0_480] : memref<1x1x49x3x16x16xf32, #tpu.memory_space<vmem>>, vector<1x1x1x3x16x16xf32>
    %431 = vector.shape_cast %430 : vector<1x1x1x3x16x16xf32> to vector<3x16x16xf32>
    %432 = arith.subf %431, %145 : vector<3x16x16xf32>
    %433 = math.exp %432 : vector<3x16x16xf32>
    %434 = arith.addf %426, %433 : vector<3x16x16xf32>
    %435 = vector.extract_strided_slice %381 {offsets = [0, 6, 0], sizes = [3, 16, 16], strides = [1, 1, 1]} : vector<3x22x16xf32> to vector<3x16x16xf32>
    %436 = arith.mulf %433, %435 : vector<3x16x16xf32>
    %437 = arith.addf %429, %436 : vector<3x16x16xf32>
    %c0_481 = arith.constant 0 : index
    %c0_482 = arith.constant 0 : index
    %c0_483 = arith.constant 0 : index
    %c0_484 = arith.constant 0 : index
    %c5_485 = arith.constant 5 : index
    %438 = vector.load %arg3[%c0_481, %c0_482, %c0_483, %c0_484, %c5_485] : memref<1x1x3x22x22xf32, #tpu.memory_space<vmem>>, vector<1x1x3x22x16xf32>
    %439 = vector.shape_cast %438 : vector<1x1x3x22x16xf32> to vector<3x22x16xf32>
    %c0_486 = arith.constant 0 : index
    %c0_487 = arith.constant 0 : index
    %c5_488 = arith.constant 5 : index
    %c0_489 = arith.constant 0 : index
    %c0_490 = arith.constant 0 : index
    %c0_491 = arith.constant 0 : index
    %440 = vector.load %arg4[%c0_486, %c0_487, %c5_488, %c0_489, %c0_490, %c0_491] : memref<1x1x49x3x16x16xf32, #tpu.memory_space<vmem>>, vector<1x1x1x3x16x16xf32>
    %441 = vector.shape_cast %440 : vector<1x1x1x3x16x16xf32> to vector<3x16x16xf32>
    %442 = arith.subf %441, %145 : vector<3x16x16xf32>
    %443 = math.exp %442 : vector<3x16x16xf32>
    %444 = arith.addf %434, %443 : vector<3x16x16xf32>
    %445 = vector.extract_strided_slice %439 {offsets = [0, 0, 0], sizes = [3, 16, 16], strides = [1, 1, 1]} : vector<3x22x16xf32> to vector<3x16x16xf32>
    %446 = arith.mulf %443, %445 : vector<3x16x16xf32>
    %447 = arith.addf %437, %446 : vector<3x16x16xf32>
    %c0_492 = arith.constant 0 : index
    %c0_493 = arith.constant 0 : index
    %c12_494 = arith.constant 12 : index
    %c0_495 = arith.constant 0 : index
    %c0_496 = arith.constant 0 : index
    %c0_497 = arith.constant 0 : index
    %448 = vector.load %arg4[%c0_492, %c0_493, %c12_494, %c0_495, %c0_496, %c0_497] : memref<1x1x49x3x16x16xf32, #tpu.memory_space<vmem>>, vector<1x1x1x3x16x16xf32>
    %449 = vector.shape_cast %448 : vector<1x1x1x3x16x16xf32> to vector<3x16x16xf32>
    %450 = arith.subf %449, %145 : vector<3x16x16xf32>
    %451 = math.exp %450 : vector<3x16x16xf32>
    %452 = arith.addf %444, %451 : vector<3x16x16xf32>
    %453 = vector.extract_strided_slice %439 {offsets = [0, 1, 0], sizes = [3, 16, 16], strides = [1, 1, 1]} : vector<3x22x16xf32> to vector<3x16x16xf32>
    %454 = arith.mulf %451, %453 : vector<3x16x16xf32>
    %455 = arith.addf %447, %454 : vector<3x16x16xf32>
    %c0_498 = arith.constant 0 : index
    %c0_499 = arith.constant 0 : index
    %c19_500 = arith.constant 19 : index
    %c0_501 = arith.constant 0 : index
    %c0_502 = arith.constant 0 : index
    %c0_503 = arith.constant 0 : index
    %456 = vector.load %arg4[%c0_498, %c0_499, %c19_500, %c0_501, %c0_502, %c0_503] : memref<1x1x49x3x16x16xf32, #tpu.memory_space<vmem>>, vector<1x1x1x3x16x16xf32>
    %457 = vector.shape_cast %456 : vector<1x1x1x3x16x16xf32> to vector<3x16x16xf32>
    %458 = arith.subf %457, %145 : vector<3x16x16xf32>
    %459 = math.exp %458 : vector<3x16x16xf32>
    %460 = arith.addf %452, %459 : vector<3x16x16xf32>
    %461 = vector.extract_strided_slice %439 {offsets = [0, 2, 0], sizes = [3, 16, 16], strides = [1, 1, 1]} : vector<3x22x16xf32> to vector<3x16x16xf32>
    %462 = arith.mulf %459, %461 : vector<3x16x16xf32>
    %463 = arith.addf %455, %462 : vector<3x16x16xf32>
    %c0_504 = arith.constant 0 : index
    %c0_505 = arith.constant 0 : index
    %c26_506 = arith.constant 26 : index
    %c0_507 = arith.constant 0 : index
    %c0_508 = arith.constant 0 : index
    %c0_509 = arith.constant 0 : index
    %464 = vector.load %arg4[%c0_504, %c0_505, %c26_506, %c0_507, %c0_508, %c0_509] : memref<1x1x49x3x16x16xf32, #tpu.memory_space<vmem>>, vector<1x1x1x3x16x16xf32>
    %465 = vector.shape_cast %464 : vector<1x1x1x3x16x16xf32> to vector<3x16x16xf32>
    %466 = arith.subf %465, %145 : vector<3x16x16xf32>
    %467 = math.exp %466 : vector<3x16x16xf32>
    %468 = arith.addf %460, %467 : vector<3x16x16xf32>
    %469 = vector.extract_strided_slice %439 {offsets = [0, 3, 0], sizes = [3, 16, 16], strides = [1, 1, 1]} : vector<3x22x16xf32> to vector<3x16x16xf32>
    %470 = arith.mulf %467, %469 : vector<3x16x16xf32>
    %471 = arith.addf %463, %470 : vector<3x16x16xf32>
    %c0_510 = arith.constant 0 : index
    %c0_511 = arith.constant 0 : index
    %c33_512 = arith.constant 33 : index
    %c0_513 = arith.constant 0 : index
    %c0_514 = arith.constant 0 : index
    %c0_515 = arith.constant 0 : index
    %472 = vector.load %arg4[%c0_510, %c0_511, %c33_512, %c0_513, %c0_514, %c0_515] : memref<1x1x49x3x16x16xf32, #tpu.memory_space<vmem>>, vector<1x1x1x3x16x16xf32>
    %473 = vector.shape_cast %472 : vector<1x1x1x3x16x16xf32> to vector<3x16x16xf32>
    %474 = arith.subf %473, %145 : vector<3x16x16xf32>
    %475 = math.exp %474 : vector<3x16x16xf32>
    %476 = arith.addf %468, %475 : vector<3x16x16xf32>
    %477 = vector.extract_strided_slice %439 {offsets = [0, 4, 0], sizes = [3, 16, 16], strides = [1, 1, 1]} : vector<3x22x16xf32> to vector<3x16x16xf32>
    %478 = arith.mulf %475, %477 : vector<3x16x16xf32>
    %479 = arith.addf %471, %478 : vector<3x16x16xf32>
    %c0_516 = arith.constant 0 : index
    %c0_517 = arith.constant 0 : index
    %c40_518 = arith.constant 40 : index
    %c0_519 = arith.constant 0 : index
    %c0_520 = arith.constant 0 : index
    %c0_521 = arith.constant 0 : index
    %480 = vector.load %arg4[%c0_516, %c0_517, %c40_518, %c0_519, %c0_520, %c0_521] : memref<1x1x49x3x16x16xf32, #tpu.memory_space<vmem>>, vector<1x1x1x3x16x16xf32>
    %481 = vector.shape_cast %480 : vector<1x1x1x3x16x16xf32> to vector<3x16x16xf32>
    %482 = arith.subf %481, %145 : vector<3x16x16xf32>
    %483 = math.exp %482 : vector<3x16x16xf32>
    %484 = arith.addf %476, %483 : vector<3x16x16xf32>
    %485 = vector.extract_strided_slice %439 {offsets = [0, 5, 0], sizes = [3, 16, 16], strides = [1, 1, 1]} : vector<3x22x16xf32> to vector<3x16x16xf32>
    %486 = arith.mulf %483, %485 : vector<3x16x16xf32>
    %487 = arith.addf %479, %486 : vector<3x16x16xf32>
    %c0_522 = arith.constant 0 : index
    %c0_523 = arith.constant 0 : index
    %c47_524 = arith.constant 47 : index
    %c0_525 = arith.constant 0 : index
    %c0_526 = arith.constant 0 : index
    %c0_527 = arith.constant 0 : index
    %488 = vector.load %arg4[%c0_522, %c0_523, %c47_524, %c0_525, %c0_526, %c0_527] : memref<1x1x49x3x16x16xf32, #tpu.memory_space<vmem>>, vector<1x1x1x3x16x16xf32>
    %489 = vector.shape_cast %488 : vector<1x1x1x3x16x16xf32> to vector<3x16x16xf32>
    %490 = arith.subf %489, %145 : vector<3x16x16xf32>
    %491 = math.exp %490 : vector<3x16x16xf32>
    %492 = arith.addf %484, %491 : vector<3x16x16xf32>
    %493 = vector.extract_strided_slice %439 {offsets = [0, 6, 0], sizes = [3, 16, 16], strides = [1, 1, 1]} : vector<3x22x16xf32> to vector<3x16x16xf32>
    %494 = arith.mulf %491, %493 : vector<3x16x16xf32>
    %495 = arith.addf %487, %494 : vector<3x16x16xf32>
    %c0_528 = arith.constant 0 : index
    %c0_529 = arith.constant 0 : index
    %c0_530 = arith.constant 0 : index
    %c0_531 = arith.constant 0 : index
    %c6_532 = arith.constant 6 : index
    %496 = vector.load %arg3[%c0_528, %c0_529, %c0_530, %c0_531, %c6_532] : memref<1x1x3x22x22xf32, #tpu.memory_space<vmem>>, vector<1x1x3x22x16xf32>
    %497 = vector.shape_cast %496 : vector<1x1x3x22x16xf32> to vector<3x22x16xf32>
    %c0_533 = arith.constant 0 : index
    %c0_534 = arith.constant 0 : index
    %c6_535 = arith.constant 6 : index
    %c0_536 = arith.constant 0 : index
    %c0_537 = arith.constant 0 : index
    %c0_538 = arith.constant 0 : index
    %498 = vector.load %arg4[%c0_533, %c0_534, %c6_535, %c0_536, %c0_537, %c0_538] : memref<1x1x49x3x16x16xf32, #tpu.memory_space<vmem>>, vector<1x1x1x3x16x16xf32>
    %499 = vector.shape_cast %498 : vector<1x1x1x3x16x16xf32> to vector<3x16x16xf32>
    %500 = arith.subf %499, %145 : vector<3x16x16xf32>
    %501 = math.exp %500 : vector<3x16x16xf32>
    %502 = arith.addf %492, %501 : vector<3x16x16xf32>
    %503 = vector.extract_strided_slice %497 {offsets = [0, 0, 0], sizes = [3, 16, 16], strides = [1, 1, 1]} : vector<3x22x16xf32> to vector<3x16x16xf32>
    %504 = arith.mulf %501, %503 : vector<3x16x16xf32>
    %505 = arith.addf %495, %504 : vector<3x16x16xf32>
    %c0_539 = arith.constant 0 : index
    %c0_540 = arith.constant 0 : index
    %c13_541 = arith.constant 13 : index
    %c0_542 = arith.constant 0 : index
    %c0_543 = arith.constant 0 : index
    %c0_544 = arith.constant 0 : index
    %506 = vector.load %arg4[%c0_539, %c0_540, %c13_541, %c0_542, %c0_543, %c0_544] : memref<1x1x49x3x16x16xf32, #tpu.memory_space<vmem>>, vector<1x1x1x3x16x16xf32>
    %507 = vector.shape_cast %506 : vector<1x1x1x3x16x16xf32> to vector<3x16x16xf32>
    %508 = arith.subf %507, %145 : vector<3x16x16xf32>
    %509 = math.exp %508 : vector<3x16x16xf32>
    %510 = arith.addf %502, %509 : vector<3x16x16xf32>
    %511 = vector.extract_strided_slice %497 {offsets = [0, 1, 0], sizes = [3, 16, 16], strides = [1, 1, 1]} : vector<3x22x16xf32> to vector<3x16x16xf32>
    %512 = arith.mulf %509, %511 : vector<3x16x16xf32>
    %513 = arith.addf %505, %512 : vector<3x16x16xf32>
    %c0_545 = arith.constant 0 : index
    %c0_546 = arith.constant 0 : index
    %c20_547 = arith.constant 20 : index
    %c0_548 = arith.constant 0 : index
    %c0_549 = arith.constant 0 : index
    %c0_550 = arith.constant 0 : index
    %514 = vector.load %arg4[%c0_545, %c0_546, %c20_547, %c0_548, %c0_549, %c0_550] : memref<1x1x49x3x16x16xf32, #tpu.memory_space<vmem>>, vector<1x1x1x3x16x16xf32>
    %515 = vector.shape_cast %514 : vector<1x1x1x3x16x16xf32> to vector<3x16x16xf32>
    %516 = arith.subf %515, %145 : vector<3x16x16xf32>
    %517 = math.exp %516 : vector<3x16x16xf32>
    %518 = arith.addf %510, %517 : vector<3x16x16xf32>
    %519 = vector.extract_strided_slice %497 {offsets = [0, 2, 0], sizes = [3, 16, 16], strides = [1, 1, 1]} : vector<3x22x16xf32> to vector<3x16x16xf32>
    %520 = arith.mulf %517, %519 : vector<3x16x16xf32>
    %521 = arith.addf %513, %520 : vector<3x16x16xf32>
    %c0_551 = arith.constant 0 : index
    %c0_552 = arith.constant 0 : index
    %c27_553 = arith.constant 27 : index
    %c0_554 = arith.constant 0 : index
    %c0_555 = arith.constant 0 : index
    %c0_556 = arith.constant 0 : index
    %522 = vector.load %arg4[%c0_551, %c0_552, %c27_553, %c0_554, %c0_555, %c0_556] : memref<1x1x49x3x16x16xf32, #tpu.memory_space<vmem>>, vector<1x1x1x3x16x16xf32>
    %523 = vector.shape_cast %522 : vector<1x1x1x3x16x16xf32> to vector<3x16x16xf32>
    %524 = arith.subf %523, %145 : vector<3x16x16xf32>
    %525 = math.exp %524 : vector<3x16x16xf32>
    %526 = arith.addf %518, %525 : vector<3x16x16xf32>
    %527 = vector.extract_strided_slice %497 {offsets = [0, 3, 0], sizes = [3, 16, 16], strides = [1, 1, 1]} : vector<3x22x16xf32> to vector<3x16x16xf32>
    %528 = arith.mulf %525, %527 : vector<3x16x16xf32>
    %529 = arith.addf %521, %528 : vector<3x16x16xf32>
    %c0_557 = arith.constant 0 : index
    %c0_558 = arith.constant 0 : index
    %c34_559 = arith.constant 34 : index
    %c0_560 = arith.constant 0 : index
    %c0_561 = arith.constant 0 : index
    %c0_562 = arith.constant 0 : index
    %530 = vector.load %arg4[%c0_557, %c0_558, %c34_559, %c0_560, %c0_561, %c0_562] : memref<1x1x49x3x16x16xf32, #tpu.memory_space<vmem>>, vector<1x1x1x3x16x16xf32>
    %531 = vector.shape_cast %530 : vector<1x1x1x3x16x16xf32> to vector<3x16x16xf32>
    %532 = arith.subf %531, %145 : vector<3x16x16xf32>
    %533 = math.exp %532 : vector<3x16x16xf32>
    %534 = arith.addf %526, %533 : vector<3x16x16xf32>
    %535 = vector.extract_strided_slice %497 {offsets = [0, 4, 0], sizes = [3, 16, 16], strides = [1, 1, 1]} : vector<3x22x16xf32> to vector<3x16x16xf32>
    %536 = arith.mulf %533, %535 : vector<3x16x16xf32>
    %537 = arith.addf %529, %536 : vector<3x16x16xf32>
    %c0_563 = arith.constant 0 : index
    %c0_564 = arith.constant 0 : index
    %c41_565 = arith.constant 41 : index
    %c0_566 = arith.constant 0 : index
    %c0_567 = arith.constant 0 : index
    %c0_568 = arith.constant 0 : index
    %538 = vector.load %arg4[%c0_563, %c0_564, %c41_565, %c0_566, %c0_567, %c0_568] : memref<1x1x49x3x16x16xf32, #tpu.memory_space<vmem>>, vector<1x1x1x3x16x16xf32>
    %539 = vector.shape_cast %538 : vector<1x1x1x3x16x16xf32> to vector<3x16x16xf32>
    %540 = arith.subf %539, %145 : vector<3x16x16xf32>
    %541 = math.exp %540 : vector<3x16x16xf32>
    %542 = arith.addf %534, %541 : vector<3x16x16xf32>
    %543 = vector.extract_strided_slice %497 {offsets = [0, 5, 0], sizes = [3, 16, 16], strides = [1, 1, 1]} : vector<3x22x16xf32> to vector<3x16x16xf32>
    %544 = arith.mulf %541, %543 : vector<3x16x16xf32>
    %545 = arith.addf %537, %544 : vector<3x16x16xf32>
    %c0_569 = arith.constant 0 : index
    %c0_570 = arith.constant 0 : index
    %c48_571 = arith.constant 48 : index
    %c0_572 = arith.constant 0 : index
    %c0_573 = arith.constant 0 : index
    %c0_574 = arith.constant 0 : index
    %546 = vector.load %arg4[%c0_569, %c0_570, %c48_571, %c0_572, %c0_573, %c0_574] : memref<1x1x49x3x16x16xf32, #tpu.memory_space<vmem>>, vector<1x1x1x3x16x16xf32>
    %547 = vector.shape_cast %546 : vector<1x1x1x3x16x16xf32> to vector<3x16x16xf32>
    %548 = arith.subf %547, %145 : vector<3x16x16xf32>
    %549 = math.exp %548 : vector<3x16x16xf32>
    %550 = arith.addf %542, %549 : vector<3x16x16xf32>
    %551 = vector.extract_strided_slice %497 {offsets = [0, 6, 0], sizes = [3, 16, 16], strides = [1, 1, 1]} : vector<3x22x16xf32> to vector<3x16x16xf32>
    %552 = arith.mulf %549, %551 : vector<3x16x16xf32>
    %553 = arith.addf %545, %552 : vector<3x16x16xf32>
    %554 = tpu.reciprocal %550 : vector<3x16x16xf32> -> vector<3x16x16xf32>
    %555 = arith.mulf %553, %554 : vector<3x16x16xf32>
    %c0_575 = arith.constant 0 : index
    %c0_576 = arith.constant 0 : index
    %c0_577 = arith.constant 0 : index
    %c0_578 = arith.constant 0 : index
    %c0_579 = arith.constant 0 : index
    %556 = vector.load %arg5[%c0_575, %c0_576, %c0_577, %c0_578, %c0_579] : memref<1x1x3x16x16xf32, #tpu.memory_space<vmem>>, vector<1x1x3x16x16xf32>
    %557 = vector.shape_cast %556 : vector<1x1x3x16x16xf32> to vector<3x16x16xf32>
    %558 = vector.shape_cast %555 : vector<3x16x16xf32> to vector<1x1x3x16x16xf32>
    tpu.vector_store %arg5[%c0_575, %c0_576, %c0_577, %c0_578, %c0_579], %558 {strides = array<i32>} : memref<1x1x3x16x16xf32, #tpu.memory_space<vmem>>, vector<1x1x3x16x16xf32>,
    return
  }
  func.func @transform_0(%arg0: i32, %arg1: i32, %arg2: i32) -> (i32, i32, i32, i32, i32) {
    %c0_i32 = arith.constant 0 : i32
    %c0_i32_0 = arith.constant 0 : i32
    %c0_i32_1 = arith.constant 0 : i32
    %c0_i32_2 = arith.constant 0 : i32
    return %arg0, %arg1, %c0_i32, %c0_i32_0, %c0_i32_1 : i32, i32, i32, i32, i32
  }
  func.func @transform_1(%arg0: i32, %arg1: i32, %arg2: i32) -> (i32, i32, i32, i32, i32, i32) {
    %c0_i32 = arith.constant 0 : i32
    %c0_i32_0 = arith.constant 0 : i32
    %c0_i32_1 = arith.constant 0 : i32
    %c0_i32_2 = arith.constant 0 : i32
    return %arg0, %arg1, %c0_i32, %c0_i32_0, %arg2, %c0_i32_1 : i32, i32, i32, i32, i32, i32
  }
  func.func @transform_2(%arg0: i32, %arg1: i32, %arg2: i32) -> (i32, i32, i32, i32, i32) {
    %c0_i32 = arith.constant 0 : i32
    %c0_i32_0 = arith.constant 0 : i32
    %c0_i32_1 = arith.constant 0 : i32
    return %arg0, %arg1, %c0_i32, %arg2, %c0_i32_0 : i32, i32, i32, i32, i32
  }
}

module attributes {stable_mosaic.version = 11 : i64} {
  func.func @_kpn_kernel(%arg0: i32, %arg1: i32, %arg2: i32, %arg3: memref<1x1x3x22x22xf32, #tpu.memory_space<vmem>>, %arg4: memref<1x1x49x3x16x16xf32, #tpu.memory_space<vmem>>, %arg5: memref<1x1x3x16x16xf32, #tpu.memory_space<vmem>>) attributes {dimension_semantics = [#tpu.dimension_semantics<parallel>, #tpu.dimension_semantics<parallel>, #tpu.dimension_semantics<parallel>], iteration_bounds = array<i64: 2, 1, 1>, scalar_prefetch = 0 : i64, scratch_operands = 0 : i64, tpu.core_type = #tpu.core_type<tc>, window_params = [{transform_indices = @transform_0, window_bounds = array<i64: 1, 1, 3, 22, 22>}, {transform_indices = @transform_1, window_bounds = array<i64: 1, 1, 49, 3, 16, 16>}, {transform_indices = @transform_2, window_bounds = array<i64: 1, 1, 3, 16, 16>}]} {
    %c0 = arith.constant 0 : index
    %c0_0 = arith.constant 0 : index
    %c0_1 = arith.constant 0 : index
    %c0_2 = arith.constant 0 : index
    %c0_3 = arith.constant 0 : index
    %c0_4 = arith.constant 0 : index
    %0 = vector.load %arg4[%c0, %c0_0, %c0_1, %c0_2, %c0_3, %c0_4] : memref<1x1x49x3x16x16xf32, #tpu.memory_space<vmem>>, vector<1x1x1x3x16x16xf32>
    %1 = vector.shape_cast %0 : vector<1x1x1x3x16x16xf32> to vector<3x16x16xf32>
    %c0_5 = arith.constant 0 : index
    %c0_6 = arith.constant 0 : index
    %c1 = arith.constant 1 : index
    %c0_7 = arith.constant 0 : index
    %c0_8 = arith.constant 0 : index
    %c0_9 = arith.constant 0 : index
    %2 = vector.load %arg4[%c0_5, %c0_6, %c1, %c0_7, %c0_8, %c0_9] : memref<1x1x49x3x16x16xf32, #tpu.memory_space<vmem>>, vector<1x1x1x3x16x16xf32>
    %3 = vector.shape_cast %2 : vector<1x1x1x3x16x16xf32> to vector<3x16x16xf32>
    %4 = arith.maximumf %1, %3 : vector<3x16x16xf32>
    %c0_10 = arith.constant 0 : index
    %c0_11 = arith.constant 0 : index
    %c2 = arith.constant 2 : index
    %c0_12 = arith.constant 0 : index
    %c0_13 = arith.constant 0 : index
    %c0_14 = arith.constant 0 : index
    %5 = vector.load %arg4[%c0_10, %c0_11, %c2, %c0_12, %c0_13, %c0_14] : memref<1x1x49x3x16x16xf32, #tpu.memory_space<vmem>>, vector<1x1x1x3x16x16xf32>
    %6 = vector.shape_cast %5 : vector<1x1x1x3x16x16xf32> to vector<3x16x16xf32>
    %7 = arith.maximumf %4, %6 : vector<3x16x16xf32>
    %c0_15 = arith.constant 0 : index
    %c0_16 = arith.constant 0 : index
    %c3 = arith.constant 3 : index
    %c0_17 = arith.constant 0 : index
    %c0_18 = arith.constant 0 : index
    %c0_19 = arith.constant 0 : index
    %8 = vector.load %arg4[%c0_15, %c0_16, %c3, %c0_17, %c0_18, %c0_19] : memref<1x1x49x3x16x16xf32, #tpu.memory_space<vmem>>, vector<1x1x1x3x16x16xf32>
    %9 = vector.shape_cast %8 : vector<1x1x1x3x16x16xf32> to vector<3x16x16xf32>
    %10 = arith.maximumf %7, %9 : vector<3x16x16xf32>
    %c0_20 = arith.constant 0 : index
    %c0_21 = arith.constant 0 : index
    %c4 = arith.constant 4 : index
    %c0_22 = arith.constant 0 : index
    %c0_23 = arith.constant 0 : index
    %c0_24 = arith.constant 0 : index
    %11 = vector.load %arg4[%c0_20, %c0_21, %c4, %c0_22, %c0_23, %c0_24] : memref<1x1x49x3x16x16xf32, #tpu.memory_space<vmem>>, vector<1x1x1x3x16x16xf32>
    %12 = vector.shape_cast %11 : vector<1x1x1x3x16x16xf32> to vector<3x16x16xf32>
    %13 = arith.maximumf %10, %12 : vector<3x16x16xf32>
    %c0_25 = arith.constant 0 : index
    %c0_26 = arith.constant 0 : index
    %c5 = arith.constant 5 : index
    %c0_27 = arith.constant 0 : index
    %c0_28 = arith.constant 0 : index
    %c0_29 = arith.constant 0 : index
    %14 = vector.load %arg4[%c0_25, %c0_26, %c5, %c0_27, %c0_28, %c0_29] : memref<1x1x49x3x16x16xf32, #tpu.memory_space<vmem>>, vector<1x1x1x3x16x16xf32>
    %15 = vector.shape_cast %14 : vector<1x1x1x3x16x16xf32> to vector<3x16x16xf32>
    %16 = arith.maximumf %13, %15 : vector<3x16x16xf32>
    %c0_30 = arith.constant 0 : index
    %c0_31 = arith.constant 0 : index
    %c6 = arith.constant 6 : index
    %c0_32 = arith.constant 0 : index
    %c0_33 = arith.constant 0 : index
    %c0_34 = arith.constant 0 : index
    %17 = vector.load %arg4[%c0_30, %c0_31, %c6, %c0_32, %c0_33, %c0_34] : memref<1x1x49x3x16x16xf32, #tpu.memory_space<vmem>>, vector<1x1x1x3x16x16xf32>
    %18 = vector.shape_cast %17 : vector<1x1x1x3x16x16xf32> to vector<3x16x16xf32>
    %19 = arith.maximumf %16, %18 : vector<3x16x16xf32>
    %c0_35 = arith.constant 0 : index
    %c0_36 = arith.constant 0 : index
    %c7 = arith.constant 7 : index
    %c0_37 = arith.constant 0 : index
    %c0_38 = arith.constant 0 : index
    %c0_39 = arith.constant 0 : index
    %20 = vector.load %arg4[%c0_35, %c0_36, %c7, %c0_37, %c0_38, %c0_39] : memref<1x1x49x3x16x16xf32, #tpu.memory_space<vmem>>, vector<1x1x1x3x16x16xf32>
    %21 = vector.shape_cast %20 : vector<1x1x1x3x16x16xf32> to vector<3x16x16xf32>
    %22 = arith.maximumf %19, %21 : vector<3x16x16xf32>
    %c0_40 = arith.constant 0 : index
    %c0_41 = arith.constant 0 : index
    %c8 = arith.constant 8 : index
    %c0_42 = arith.constant 0 : index
    %c0_43 = arith.constant 0 : index
    %c0_44 = arith.constant 0 : index
    %23 = vector.load %arg4[%c0_40, %c0_41, %c8, %c0_42, %c0_43, %c0_44] : memref<1x1x49x3x16x16xf32, #tpu.memory_space<vmem>>, vector<1x1x1x3x16x16xf32>
    %24 = vector.shape_cast %23 : vector<1x1x1x3x16x16xf32> to vector<3x16x16xf32>
    %25 = arith.maximumf %22, %24 : vector<3x16x16xf32>
    %c0_45 = arith.constant 0 : index
    %c0_46 = arith.constant 0 : index
    %c9 = arith.constant 9 : index
    %c0_47 = arith.constant 0 : index
    %c0_48 = arith.constant 0 : index
    %c0_49 = arith.constant 0 : index
    %26 = vector.load %arg4[%c0_45, %c0_46, %c9, %c0_47, %c0_48, %c0_49] : memref<1x1x49x3x16x16xf32, #tpu.memory_space<vmem>>, vector<1x1x1x3x16x16xf32>
    %27 = vector.shape_cast %26 : vector<1x1x1x3x16x16xf32> to vector<3x16x16xf32>
    %28 = arith.maximumf %25, %27 : vector<3x16x16xf32>
    %c0_50 = arith.constant 0 : index
    %c0_51 = arith.constant 0 : index
    %c10 = arith.constant 10 : index
    %c0_52 = arith.constant 0 : index
    %c0_53 = arith.constant 0 : index
    %c0_54 = arith.constant 0 : index
    %29 = vector.load %arg4[%c0_50, %c0_51, %c10, %c0_52, %c0_53, %c0_54] : memref<1x1x49x3x16x16xf32, #tpu.memory_space<vmem>>, vector<1x1x1x3x16x16xf32>
    %30 = vector.shape_cast %29 : vector<1x1x1x3x16x16xf32> to vector<3x16x16xf32>
    %31 = arith.maximumf %28, %30 : vector<3x16x16xf32>
    %c0_55 = arith.constant 0 : index
    %c0_56 = arith.constant 0 : index
    %c11 = arith.constant 11 : index
    %c0_57 = arith.constant 0 : index
    %c0_58 = arith.constant 0 : index
    %c0_59 = arith.constant 0 : index
    %32 = vector.load %arg4[%c0_55, %c0_56, %c11, %c0_57, %c0_58, %c0_59] : memref<1x1x49x3x16x16xf32, #tpu.memory_space<vmem>>, vector<1x1x1x3x16x16xf32>
    %33 = vector.shape_cast %32 : vector<1x1x1x3x16x16xf32> to vector<3x16x16xf32>
    %34 = arith.maximumf %31, %33 : vector<3x16x16xf32>
    %c0_60 = arith.constant 0 : index
    %c0_61 = arith.constant 0 : index
    %c12 = arith.constant 12 : index
    %c0_62 = arith.constant 0 : index
    %c0_63 = arith.constant 0 : index
    %c0_64 = arith.constant 0 : index
    %35 = vector.load %arg4[%c0_60, %c0_61, %c12, %c0_62, %c0_63, %c0_64] : memref<1x1x49x3x16x16xf32, #tpu.memory_space<vmem>>, vector<1x1x1x3x16x16xf32>
    %36 = vector.shape_cast %35 : vector<1x1x1x3x16x16xf32> to vector<3x16x16xf32>
    %37 = arith.maximumf %34, %36 : vector<3x16x16xf32>
    %c0_65 = arith.constant 0 : index
    %c0_66 = arith.constant 0 : index
    %c13 = arith.constant 13 : index
    %c0_67 = arith.constant 0 : index
    %c0_68 = arith.constant 0 : index
    %c0_69 = arith.constant 0 : index
    %38 = vector.load %arg4[%c0_65, %c0_66, %c13, %c0_67, %c0_68, %c0_69] : memref<1x1x49x3x16x16xf32, #tpu.memory_space<vmem>>, vector<1x1x1x3x16x16xf32>
    %39 = vector.shape_cast %38 : vector<1x1x1x3x16x16xf32> to vector<3x16x16xf32>
    %40 = arith.maximumf %37, %39 : vector<3x16x16xf32>
    %c0_70 = arith.constant 0 : index
    %c0_71 = arith.constant 0 : index
    %c14 = arith.constant 14 : index
    %c0_72 = arith.constant 0 : index
    %c0_73 = arith.constant 0 : index
    %c0_74 = arith.constant 0 : index
    %41 = vector.load %arg4[%c0_70, %c0_71, %c14, %c0_72, %c0_73, %c0_74] : memref<1x1x49x3x16x16xf32, #tpu.memory_space<vmem>>, vector<1x1x1x3x16x16xf32>
    %42 = vector.shape_cast %41 : vector<1x1x1x3x16x16xf32> to vector<3x16x16xf32>
    %43 = arith.maximumf %40, %42 : vector<3x16x16xf32>
    %c0_75 = arith.constant 0 : index
    %c0_76 = arith.constant 0 : index
    %c15 = arith.constant 15 : index
    %c0_77 = arith.constant 0 : index
    %c0_78 = arith.constant 0 : index
    %c0_79 = arith.constant 0 : index
    %44 = vector.load %arg4[%c0_75, %c0_76, %c15, %c0_77, %c0_78, %c0_79] : memref<1x1x49x3x16x16xf32, #tpu.memory_space<vmem>>, vector<1x1x1x3x16x16xf32>
    %45 = vector.shape_cast %44 : vector<1x1x1x3x16x16xf32> to vector<3x16x16xf32>
    %46 = arith.maximumf %43, %45 : vector<3x16x16xf32>
    %c0_80 = arith.constant 0 : index
    %c0_81 = arith.constant 0 : index
    %c16 = arith.constant 16 : index
    %c0_82 = arith.constant 0 : index
    %c0_83 = arith.constant 0 : index
    %c0_84 = arith.constant 0 : index
    %47 = vector.load %arg4[%c0_80, %c0_81, %c16, %c0_82, %c0_83, %c0_84] : memref<1x1x49x3x16x16xf32, #tpu.memory_space<vmem>>, vector<1x1x1x3x16x16xf32>
    %48 = vector.shape_cast %47 : vector<1x1x1x3x16x16xf32> to vector<3x16x16xf32>
    %49 = arith.maximumf %46, %48 : vector<3x16x16xf32>
    %c0_85 = arith.constant 0 : index
    %c0_86 = arith.constant 0 : index
    %c17 = arith.constant 17 : index
    %c0_87 = arith.constant 0 : index
    %c0_88 = arith.constant 0 : index
    %c0_89 = arith.constant 0 : index
    %50 = vector.load %arg4[%c0_85, %c0_86, %c17, %c0_87, %c0_88, %c0_89] : memref<1x1x49x3x16x16xf32, #tpu.memory_space<vmem>>, vector<1x1x1x3x16x16xf32>
    %51 = vector.shape_cast %50 : vector<1x1x1x3x16x16xf32> to vector<3x16x16xf32>
    %52 = arith.maximumf %49, %51 : vector<3x16x16xf32>
    %c0_90 = arith.constant 0 : index
    %c0_91 = arith.constant 0 : index
    %c18 = arith.constant 18 : index
    %c0_92 = arith.constant 0 : index
    %c0_93 = arith.constant 0 : index
    %c0_94 = arith.constant 0 : index
    %53 = vector.load %arg4[%c0_90, %c0_91, %c18, %c0_92, %c0_93, %c0_94] : memref<1x1x49x3x16x16xf32, #tpu.memory_space<vmem>>, vector<1x1x1x3x16x16xf32>
    %54 = vector.shape_cast %53 : vector<1x1x1x3x16x16xf32> to vector<3x16x16xf32>
    %55 = arith.maximumf %52, %54 : vector<3x16x16xf32>
    %c0_95 = arith.constant 0 : index
    %c0_96 = arith.constant 0 : index
    %c19 = arith.constant 19 : index
    %c0_97 = arith.constant 0 : index
    %c0_98 = arith.constant 0 : index
    %c0_99 = arith.constant 0 : index
    %56 = vector.load %arg4[%c0_95, %c0_96, %c19, %c0_97, %c0_98, %c0_99] : memref<1x1x49x3x16x16xf32, #tpu.memory_space<vmem>>, vector<1x1x1x3x16x16xf32>
    %57 = vector.shape_cast %56 : vector<1x1x1x3x16x16xf32> to vector<3x16x16xf32>
    %58 = arith.maximumf %55, %57 : vector<3x16x16xf32>
    %c0_100 = arith.constant 0 : index
    %c0_101 = arith.constant 0 : index
    %c20 = arith.constant 20 : index
    %c0_102 = arith.constant 0 : index
    %c0_103 = arith.constant 0 : index
    %c0_104 = arith.constant 0 : index
    %59 = vector.load %arg4[%c0_100, %c0_101, %c20, %c0_102, %c0_103, %c0_104] : memref<1x1x49x3x16x16xf32, #tpu.memory_space<vmem>>, vector<1x1x1x3x16x16xf32>
    %60 = vector.shape_cast %59 : vector<1x1x1x3x16x16xf32> to vector<3x16x16xf32>
    %61 = arith.maximumf %58, %60 : vector<3x16x16xf32>
    %c0_105 = arith.constant 0 : index
    %c0_106 = arith.constant 0 : index
    %c21 = arith.constant 21 : index
    %c0_107 = arith.constant 0 : index
    %c0_108 = arith.constant 0 : index
    %c0_109 = arith.constant 0 : index
    %62 = vector.load %arg4[%c0_105, %c0_106, %c21, %c0_107, %c0_108, %c0_109] : memref<1x1x49x3x16x16xf32, #tpu.memory_space<vmem>>, vector<1x1x1x3x16x16xf32>
    %63 = vector.shape_cast %62 : vector<1x1x1x3x16x16xf32> to vector<3x16x16xf32>
    %64 = arith.maximumf %61, %63 : vector<3x16x16xf32>
    %c0_110 = arith.constant 0 : index
    %c0_111 = arith.constant 0 : index
    %c22 = arith.constant 22 : index
    %c0_112 = arith.constant 0 : index
    %c0_113 = arith.constant 0 : index
    %c0_114 = arith.constant 0 : index
    %65 = vector.load %arg4[%c0_110, %c0_111, %c22, %c0_112, %c0_113, %c0_114] : memref<1x1x49x3x16x16xf32, #tpu.memory_space<vmem>>, vector<1x1x1x3x16x16xf32>
    %66 = vector.shape_cast %65 : vector<1x1x1x3x16x16xf32> to vector<3x16x16xf32>
    %67 = arith.maximumf %64, %66 : vector<3x16x16xf32>
    %c0_115 = arith.constant 0 : index
    %c0_116 = arith.constant 0 : index
    %c23 = arith.constant 23 : index
    %c0_117 = arith.constant 0 : index
    %c0_118 = arith.constant 0 : index
    %c0_119 = arith.constant 0 : index
    %68 = vector.load %arg4[%c0_115, %c0_116, %c23, %c0_117, %c0_118, %c0_119] : memref<1x1x49x3x16x16xf32, #tpu.memory_space<vmem>>, vector<1x1x1x3x16x16xf32>
    %69 = vector.shape_cast %68 : vector<1x1x1x3x16x16xf32> to vector<3x16x16xf32>
    %70 = arith.maximumf %67, %69 : vector<3x16x16xf32>
    %c0_120 = arith.constant 0 : index
    %c0_121 = arith.constant 0 : index
    %c24 = arith.constant 24 : index
    %c0_122 = arith.constant 0 : index
    %c0_123 = arith.constant 0 : index
    %c0_124 = arith.constant 0 : index
    %71 = vector.load %arg4[%c0_120, %c0_121, %c24, %c0_122, %c0_123, %c0_124] : memref<1x1x49x3x16x16xf32, #tpu.memory_space<vmem>>, vector<1x1x1x3x16x16xf32>
    %72 = vector.shape_cast %71 : vector<1x1x1x3x16x16xf32> to vector<3x16x16xf32>
    %73 = arith.maximumf %70, %72 : vector<3x16x16xf32>
    %c0_125 = arith.constant 0 : index
    %c0_126 = arith.constant 0 : index
    %c25 = arith.constant 25 : index
    %c0_127 = arith.constant 0 : index
    %c0_128 = arith.constant 0 : index
    %c0_129 = arith.constant 0 : index
    %74 = vector.load %arg4[%c0_125, %c0_126, %c25, %c0_127, %c0_128, %c0_129] : memref<1x1x49x3x16x16xf32, #tpu.memory_space<vmem>>, vector<1x1x1x3x16x16xf32>
    %75 = vector.shape_cast %74 : vector<1x1x1x3x16x16xf32> to vector<3x16x16xf32>
    %76 = arith.maximumf %73, %75 : vector<3x16x16xf32>
    %c0_130 = arith.constant 0 : index
    %c0_131 = arith.constant 0 : index
    %c26 = arith.constant 26 : index
    %c0_132 = arith.constant 0 : index
    %c0_133 = arith.constant 0 : index
    %c0_134 = arith.constant 0 : index
    %77 = vector.load %arg4[%c0_130, %c0_131, %c26, %c0_132, %c0_133, %c0_134] : memref<1x1x49x3x16x16xf32, #tpu.memory_space<vmem>>, vector<1x1x1x3x16x16xf32>
    %78 = vector.shape_cast %77 : vector<1x1x1x3x16x16xf32> to vector<3x16x16xf32>
    %79 = arith.maximumf %76, %78 : vector<3x16x16xf32>
    %c0_135 = arith.constant 0 : index
    %c0_136 = arith.constant 0 : index
    %c27 = arith.constant 27 : index
    %c0_137 = arith.constant 0 : index
    %c0_138 = arith.constant 0 : index
    %c0_139 = arith.constant 0 : index
    %80 = vector.load %arg4[%c0_135, %c0_136, %c27, %c0_137, %c0_138, %c0_139] : memref<1x1x49x3x16x16xf32, #tpu.memory_space<vmem>>, vector<1x1x1x3x16x16xf32>
    %81 = vector.shape_cast %80 : vector<1x1x1x3x16x16xf32> to vector<3x16x16xf32>
    %82 = arith.maximumf %79, %81 : vector<3x16x16xf32>
    %c0_140 = arith.constant 0 : index
    %c0_141 = arith.constant 0 : index
    %c28 = arith.constant 28 : index
    %c0_142 = arith.constant 0 : index
    %c0_143 = arith.constant 0 : index
    %c0_144 = arith.constant 0 : index
    %83 = vector.load %arg4[%c0_140, %c0_141, %c28, %c0_142, %c0_143, %c0_144] : memref<1x1x49x3x16x16xf32, #tpu.memory_space<vmem>>, vector<1x1x1x3x16x16xf32>
    %84 = vector.shape_cast %83 : vector<1x1x1x3x16x16xf32> to vector<3x16x16xf32>
    %85 = arith.maximumf %82, %84 : vector<3x16x16xf32>
    %c0_145 = arith.constant 0 : index
    %c0_146 = arith.constant 0 : index
    %c29 = arith.constant 29 : index
    %c0_147 = arith.constant 0 : index
    %c0_148 = arith.constant 0 : index
    %c0_149 = arith.constant 0 : index
    %86 = vector.load %arg4[%c0_145, %c0_146, %c29, %c0_147, %c0_148, %c0_149] : memref<1x1x49x3x16x16xf32, #tpu.memory_space<vmem>>, vector<1x1x1x3x16x16xf32>
    %87 = vector.shape_cast %86 : vector<1x1x1x3x16x16xf32> to vector<3x16x16xf32>
    %88 = arith.maximumf %85, %87 : vector<3x16x16xf32>
    %c0_150 = arith.constant 0 : index
    %c0_151 = arith.constant 0 : index
    %c30 = arith.constant 30 : index
    %c0_152 = arith.constant 0 : index
    %c0_153 = arith.constant 0 : index
    %c0_154 = arith.constant 0 : index
    %89 = vector.load %arg4[%c0_150, %c0_151, %c30, %c0_152, %c0_153, %c0_154] : memref<1x1x49x3x16x16xf32, #tpu.memory_space<vmem>>, vector<1x1x1x3x16x16xf32>
    %90 = vector.shape_cast %89 : vector<1x1x1x3x16x16xf32> to vector<3x16x16xf32>
    %91 = arith.maximumf %88, %90 : vector<3x16x16xf32>
    %c0_155 = arith.constant 0 : index
    %c0_156 = arith.constant 0 : index
    %c31 = arith.constant 31 : index
    %c0_157 = arith.constant 0 : index
    %c0_158 = arith.constant 0 : index
    %c0_159 = arith.constant 0 : index
    %92 = vector.load %arg4[%c0_155, %c0_156, %c31, %c0_157, %c0_158, %c0_159] : memref<1x1x49x3x16x16xf32, #tpu.memory_space<vmem>>, vector<1x1x1x3x16x16xf32>
    %93 = vector.shape_cast %92 : vector<1x1x1x3x16x16xf32> to vector<3x16x16xf32>
    %94 = arith.maximumf %91, %93 : vector<3x16x16xf32>
    %c0_160 = arith.constant 0 : index
    %c0_161 = arith.constant 0 : index
    %c32 = arith.constant 32 : index
    %c0_162 = arith.constant 0 : index
    %c0_163 = arith.constant 0 : index
    %c0_164 = arith.constant 0 : index
    %95 = vector.load %arg4[%c0_160, %c0_161, %c32, %c0_162, %c0_163, %c0_164] : memref<1x1x49x3x16x16xf32, #tpu.memory_space<vmem>>, vector<1x1x1x3x16x16xf32>
    %96 = vector.shape_cast %95 : vector<1x1x1x3x16x16xf32> to vector<3x16x16xf32>
    %97 = arith.maximumf %94, %96 : vector<3x16x16xf32>
    %c0_165 = arith.constant 0 : index
    %c0_166 = arith.constant 0 : index
    %c33 = arith.constant 33 : index
    %c0_167 = arith.constant 0 : index
    %c0_168 = arith.constant 0 : index
    %c0_169 = arith.constant 0 : index
    %98 = vector.load %arg4[%c0_165, %c0_166, %c33, %c0_167, %c0_168, %c0_169] : memref<1x1x49x3x16x16xf32, #tpu.memory_space<vmem>>, vector<1x1x1x3x16x16xf32>
    %99 = vector.shape_cast %98 : vector<1x1x1x3x16x16xf32> to vector<3x16x16xf32>
    %100 = arith.maximumf %97, %99 : vector<3x16x16xf32>
    %c0_170 = arith.constant 0 : index
    %c0_171 = arith.constant 0 : index
    %c34 = arith.constant 34 : index
    %c0_172 = arith.constant 0 : index
    %c0_173 = arith.constant 0 : index
    %c0_174 = arith.constant 0 : index
    %101 = vector.load %arg4[%c0_170, %c0_171, %c34, %c0_172, %c0_173, %c0_174] : memref<1x1x49x3x16x16xf32, #tpu.memory_space<vmem>>, vector<1x1x1x3x16x16xf32>
    %102 = vector.shape_cast %101 : vector<1x1x1x3x16x16xf32> to vector<3x16x16xf32>
    %103 = arith.maximumf %100, %102 : vector<3x16x16xf32>
    %c0_175 = arith.constant 0 : index
    %c0_176 = arith.constant 0 : index
    %c35 = arith.constant 35 : index
    %c0_177 = arith.constant 0 : index
    %c0_178 = arith.constant 0 : index
    %c0_179 = arith.constant 0 : index
    %104 = vector.load %arg4[%c0_175, %c0_176, %c35, %c0_177, %c0_178, %c0_179] : memref<1x1x49x3x16x16xf32, #tpu.memory_space<vmem>>, vector<1x1x1x3x16x16xf32>
    %105 = vector.shape_cast %104 : vector<1x1x1x3x16x16xf32> to vector<3x16x16xf32>
    %106 = arith.maximumf %103, %105 : vector<3x16x16xf32>
    %c0_180 = arith.constant 0 : index
    %c0_181 = arith.constant 0 : index
    %c36 = arith.constant 36 : index
    %c0_182 = arith.constant 0 : index
    %c0_183 = arith.constant 0 : index
    %c0_184 = arith.constant 0 : index
    %107 = vector.load %arg4[%c0_180, %c0_181, %c36, %c0_182, %c0_183, %c0_184] : memref<1x1x49x3x16x16xf32, #tpu.memory_space<vmem>>, vector<1x1x1x3x16x16xf32>
    %108 = vector.shape_cast %107 : vector<1x1x1x3x16x16xf32> to vector<3x16x16xf32>
    %109 = arith.maximumf %106, %108 : vector<3x16x16xf32>
    %c0_185 = arith.constant 0 : index
    %c0_186 = arith.constant 0 : index
    %c37 = arith.constant 37 : index
    %c0_187 = arith.constant 0 : index
    %c0_188 = arith.constant 0 : index
    %c0_189 = arith.constant 0 : index
    %110 = vector.load %arg4[%c0_185, %c0_186, %c37, %c0_187, %c0_188, %c0_189] : memref<1x1x49x3x16x16xf32, #tpu.memory_space<vmem>>, vector<1x1x1x3x16x16xf32>
    %111 = vector.shape_cast %110 : vector<1x1x1x3x16x16xf32> to vector<3x16x16xf32>
    %112 = arith.maximumf %109, %111 : vector<3x16x16xf32>
    %c0_190 = arith.constant 0 : index
    %c0_191 = arith.constant 0 : index
    %c38 = arith.constant 38 : index
    %c0_192 = arith.constant 0 : index
    %c0_193 = arith.constant 0 : index
    %c0_194 = arith.constant 0 : index
    %113 = vector.load %arg4[%c0_190, %c0_191, %c38, %c0_192, %c0_193, %c0_194] : memref<1x1x49x3x16x16xf32, #tpu.memory_space<vmem>>, vector<1x1x1x3x16x16xf32>
    %114 = vector.shape_cast %113 : vector<1x1x1x3x16x16xf32> to vector<3x16x16xf32>
    %115 = arith.maximumf %112, %114 : vector<3x16x16xf32>
    %c0_195 = arith.constant 0 : index
    %c0_196 = arith.constant 0 : index
    %c39 = arith.constant 39 : index
    %c0_197 = arith.constant 0 : index
    %c0_198 = arith.constant 0 : index
    %c0_199 = arith.constant 0 : index
    %116 = vector.load %arg4[%c0_195, %c0_196, %c39, %c0_197, %c0_198, %c0_199] : memref<1x1x49x3x16x16xf32, #tpu.memory_space<vmem>>, vector<1x1x1x3x16x16xf32>
    %117 = vector.shape_cast %116 : vector<1x1x1x3x16x16xf32> to vector<3x16x16xf32>
    %118 = arith.maximumf %115, %117 : vector<3x16x16xf32>
    %c0_200 = arith.constant 0 : index
    %c0_201 = arith.constant 0 : index
    %c40 = arith.constant 40 : index
    %c0_202 = arith.constant 0 : index
    %c0_203 = arith.constant 0 : index
    %c0_204 = arith.constant 0 : index
    %119 = vector.load %arg4[%c0_200, %c0_201, %c40, %c0_202, %c0_203, %c0_204] : memref<1x1x49x3x16x16xf32, #tpu.memory_space<vmem>>, vector<1x1x1x3x16x16xf32>
    %120 = vector.shape_cast %119 : vector<1x1x1x3x16x16xf32> to vector<3x16x16xf32>
    %121 = arith.maximumf %118, %120 : vector<3x16x16xf32>
    %c0_205 = arith.constant 0 : index
    %c0_206 = arith.constant 0 : index
    %c41 = arith.constant 41 : index
    %c0_207 = arith.constant 0 : index
    %c0_208 = arith.constant 0 : index
    %c0_209 = arith.constant 0 : index
    %122 = vector.load %arg4[%c0_205, %c0_206, %c41, %c0_207, %c0_208, %c0_209] : memref<1x1x49x3x16x16xf32, #tpu.memory_space<vmem>>, vector<1x1x1x3x16x16xf32>
    %123 = vector.shape_cast %122 : vector<1x1x1x3x16x16xf32> to vector<3x16x16xf32>
    %124 = arith.maximumf %121, %123 : vector<3x16x16xf32>
    %c0_210 = arith.constant 0 : index
    %c0_211 = arith.constant 0 : index
    %c42 = arith.constant 42 : index
    %c0_212 = arith.constant 0 : index
    %c0_213 = arith.constant 0 : index
    %c0_214 = arith.constant 0 : index
    %125 = vector.load %arg4[%c0_210, %c0_211, %c42, %c0_212, %c0_213, %c0_214] : memref<1x1x49x3x16x16xf32, #tpu.memory_space<vmem>>, vector<1x1x1x3x16x16xf32>
    %126 = vector.shape_cast %125 : vector<1x1x1x3x16x16xf32> to vector<3x16x16xf32>
    %127 = arith.maximumf %124, %126 : vector<3x16x16xf32>
    %c0_215 = arith.constant 0 : index
    %c0_216 = arith.constant 0 : index
    %c43 = arith.constant 43 : index
    %c0_217 = arith.constant 0 : index
    %c0_218 = arith.constant 0 : index
    %c0_219 = arith.constant 0 : index
    %128 = vector.load %arg4[%c0_215, %c0_216, %c43, %c0_217, %c0_218, %c0_219] : memref<1x1x49x3x16x16xf32, #tpu.memory_space<vmem>>, vector<1x1x1x3x16x16xf32>
    %129 = vector.shape_cast %128 : vector<1x1x1x3x16x16xf32> to vector<3x16x16xf32>
    %130 = arith.maximumf %127, %129 : vector<3x16x16xf32>
    %c0_220 = arith.constant 0 : index
    %c0_221 = arith.constant 0 : index
    %c44 = arith.constant 44 : index
    %c0_222 = arith.constant 0 : index
    %c0_223 = arith.constant 0 : index
    %c0_224 = arith.constant 0 : index
    %131 = vector.load %arg4[%c0_220, %c0_221, %c44, %c0_222, %c0_223, %c0_224] : memref<1x1x49x3x16x16xf32, #tpu.memory_space<vmem>>, vector<1x1x1x3x16x16xf32>
    %132 = vector.shape_cast %131 : vector<1x1x1x3x16x16xf32> to vector<3x16x16xf32>
    %133 = arith.maximumf %130, %132 : vector<3x16x16xf32>
    %c0_225 = arith.constant 0 : index
    %c0_226 = arith.constant 0 : index
    %c45 = arith.constant 45 : index
    %c0_227 = arith.constant 0 : index
    %c0_228 = arith.constant 0 : index
    %c0_229 = arith.constant 0 : index
    %134 = vector.load %arg4[%c0_225, %c0_226, %c45, %c0_227, %c0_228, %c0_229] : memref<1x1x49x3x16x16xf32, #tpu.memory_space<vmem>>, vector<1x1x1x3x16x16xf32>
    %135 = vector.shape_cast %134 : vector<1x1x1x3x16x16xf32> to vector<3x16x16xf32>
    %136 = arith.maximumf %133, %135 : vector<3x16x16xf32>
    %c0_230 = arith.constant 0 : index
    %c0_231 = arith.constant 0 : index
    %c46 = arith.constant 46 : index
    %c0_232 = arith.constant 0 : index
    %c0_233 = arith.constant 0 : index
    %c0_234 = arith.constant 0 : index
    %137 = vector.load %arg4[%c0_230, %c0_231, %c46, %c0_232, %c0_233, %c0_234] : memref<1x1x49x3x16x16xf32, #tpu.memory_space<vmem>>, vector<1x1x1x3x16x16xf32>
    %138 = vector.shape_cast %137 : vector<1x1x1x3x16x16xf32> to vector<3x16x16xf32>
    %139 = arith.maximumf %136, %138 : vector<3x16x16xf32>
    %c0_235 = arith.constant 0 : index
    %c0_236 = arith.constant 0 : index
    %c47 = arith.constant 47 : index
    %c0_237 = arith.constant 0 : index
    %c0_238 = arith.constant 0 : index
    %c0_239 = arith.constant 0 : index
    %140 = vector.load %arg4[%c0_235, %c0_236, %c47, %c0_237, %c0_238, %c0_239] : memref<1x1x49x3x16x16xf32, #tpu.memory_space<vmem>>, vector<1x1x1x3x16x16xf32>
    %141 = vector.shape_cast %140 : vector<1x1x1x3x16x16xf32> to vector<3x16x16xf32>
    %142 = arith.maximumf %139, %141 : vector<3x16x16xf32>
    %c0_240 = arith.constant 0 : index
    %c0_241 = arith.constant 0 : index
    %c48 = arith.constant 48 : index
    %c0_242 = arith.constant 0 : index
    %c0_243 = arith.constant 0 : index
    %c0_244 = arith.constant 0 : index
    %143 = vector.load %arg4[%c0_240, %c0_241, %c48, %c0_242, %c0_243, %c0_244] : memref<1x1x49x3x16x16xf32, #tpu.memory_space<vmem>>, vector<1x1x1x3x16x16xf32>
    %144 = vector.shape_cast %143 : vector<1x1x1x3x16x16xf32> to vector<3x16x16xf32>
    %145 = arith.maximumf %142, %144 : vector<3x16x16xf32>
    %cst = arith.constant 0.000000e+00 : f32
    %146 = vector.broadcast %cst : f32 to vector<3x16x16xf32>
    %cst_245 = arith.constant 0.000000e+00 : f32
    %147 = vector.broadcast %cst_245 : f32 to vector<3x16x16xf32>
    %c0_246 = arith.constant 0 : index
    %c0_247 = arith.constant 0 : index
    %c0_248 = arith.constant 0 : index
    %c0_249 = arith.constant 0 : index
    %c0_250 = arith.constant 0 : index
    %148 = vector.load %arg3[%c0_246, %c0_247, %c0_248, %c0_249, %c0_250] : memref<1x1x3x22x22xf32, #tpu.memory_space<vmem>>, vector<1x1x3x22x16xf32>
    %149 = vector.shape_cast %148 : vector<1x1x3x22x16xf32> to vector<3x22x16xf32>
    %c0_251 = arith.constant 0 : index
    %c0_252 = arith.constant 0 : index
    %c0_253 = arith.constant 0 : index
    %c0_254 = arith.constant 0 : index
    %c0_255 = arith.constant 0 : index
    %c0_256 = arith.constant 0 : index
    %150 = vector.load %arg4[%c0_251, %c0_252, %c0_253, %c0_254, %c0_255, %c0_256] : memref<1x1x49x3x16x16xf32, #tpu.memory_space<vmem>>, vector<1x1x1x3x16x16xf32>
    %151 = vector.shape_cast %150 : vector<1x1x1x3x16x16xf32> to vector<3x16x16xf32>
    %152 = arith.subf %151, %145 : vector<3x16x16xf32>
    %153 = math.exp %152 : vector<3x16x16xf32>
    %154 = arith.addf %146, %153 : vector<3x16x16xf32>
    %155 = vector.extract_strided_slice %149 {offsets = [0, 0, 0], sizes = [3, 16, 16], strides = [1, 1, 1]} : vector<3x22x16xf32> to vector<3x16x16xf32>
    %156 = arith.mulf %153, %155 : vector<3x16x16xf32>
    %157 = arith.addf %147, %156 : vector<3x16x16xf32>
    %c0_257 = arith.constant 0 : index
    %c0_258 = arith.constant 0 : index
    %c7_259 = arith.constant 7 : index
    %c0_260 = arith.constant 0 : index
    %c0_261 = arith.constant 0 : index
    %c0_262 = arith.constant 0 : index
    %158 = vector.load %arg4[%c0_257, %c0_258, %c7_259, %c0_260, %c0_261, %c0_262] : memref<1x1x49x3x16x16xf32, #tpu.memory_space<vmem>>, vector<1x1x1x3x16x16xf32>
    %159 = vector.shape_cast %158 : vector<1x1x1x3x16x16xf32> to vector<3x16x16xf32>
    %160 = arith.subf %159, %145 : vector<3x16x16xf32>
    %161 = math.exp %160 : vector<3x16x16xf32>
    %162 = arith.addf %154, %161 : vector<3x16x16xf32>
    %163 = vector.extract_strided_slice %149 {offsets = [0, 1, 0], sizes = [3, 16, 16], strides = [1, 1, 1]} : vector<3x22x16xf32> to vector<3x16x16xf32>
    %164 = arith.mulf %161, %163 : vector<3x16x16xf32>
    %165 = arith.addf %157, %164 : vector<3x16x16xf32>
    %c0_263 = arith.constant 0 : index
    %c0_264 = arith.constant 0 : index
    %c14_265 = arith.constant 14 : index
    %c0_266 = arith.constant 0 : index
    %c0_267 = arith.constant 0 : index
    %c0_268 = arith.constant 0 : index
    %166 = vector.load %arg4[%c0_263, %c0_264, %c14_265, %c0_266, %c0_267, %c0_268] : memref<1x1x49x3x16x16xf32, #tpu.memory_space<vmem>>, vector<1x1x1x3x16x16xf32>
    %167 = vector.shape_cast %166 : vector<1x1x1x3x16x16xf32> to vector<3x16x16xf32>
    %168 = arith.subf %167, %145 : vector<3x16x16xf32>
    %169 = math.exp %168 : vector<3x16x16xf32>
    %170 = arith.addf %162, %169 : vector<3x16x16xf32>
    %171 = vector.extract_strided_slice %149 {offsets = [0, 2, 0], sizes = [3, 16, 16], strides = [1, 1, 1]} : vector<3x22x16xf32> to vector<3x16x16xf32>
    %172 = arith.mulf %169, %171 : vector<3x16x16xf32>
    %173 = arith.addf %165, %172 : vector<3x16x16xf32>
    %c0_269 = arith.constant 0 : index
    %c0_270 = arith.constant 0 : index
    %c21_271 = arith.constant 21 : index
    %c0_272 = arith.constant 0 : index
    %c0_273 = arith.constant 0 : index
    %c0_274 = arith.constant 0 : index
    %174 = vector.load %arg4[%c0_269, %c0_270, %c21_271, %c0_272, %c0_273, %c0_274] : memref<1x1x49x3x16x16xf32, #tpu.memory_space<vmem>>, vector<1x1x1x3x16x16xf32>
    %175 = vector.shape_cast %174 : vector<1x1x1x3x16x16xf32> to vector<3x16x16xf32>
    %176 = arith.subf %175, %145 : vector<3x16x16xf32>
    %177 = math.exp %176 : vector<3x16x16xf32>
    %178 = arith.addf %170, %177 : vector<3x16x16xf32>
    %179 = vector.extract_strided_slice %149 {offsets = [0, 3, 0], sizes = [3, 16, 16], strides = [1, 1, 1]} : vector<3x22x16xf32> to vector<3x16x16xf32>
    %180 = arith.mulf %177, %179 : vector<3x16x16xf32>
    %181 = arith.addf %173, %180 : vector<3x16x16xf32>
    %c0_275 = arith.constant 0 : index
    %c0_276 = arith.constant 0 : index
    %c28_277 = arith.constant 28 : index
    %c0_278 = arith.constant 0 : index
    %c0_279 = arith.constant 0 : index
    %c0_280 = arith.constant 0 : index
    %182 = vector.load %arg4[%c0_275, %c0_276, %c28_277, %c0_278, %c0_279, %c0_280] : memref<1x1x49x3x16x16xf32, #tpu.memory_space<vmem>>, vector<1x1x1x3x16x16xf32>
    %183 = vector.shape_cast %182 : vector<1x1x1x3x16x16xf32> to vector<3x16x16xf32>
    %184 = arith.subf %183, %145 : vector<3x16x16xf32>
    %185 = math.exp %184 : vector<3x16x16xf32>
    %186 = arith.addf %178, %185 : vector<3x16x16xf32>
    %187 = vector.extract_strided_slice %149 {offsets = [0, 4, 0], sizes = [3, 16, 16], strides = [1, 1, 1]} : vector<3x22x16xf32> to vector<3x16x16xf32>
    %188 = arith.mulf %185, %187 : vector<3x16x16xf32>
    %189 = arith.addf %181, %188 : vector<3x16x16xf32>
    %c0_281 = arith.constant 0 : index
    %c0_282 = arith.constant 0 : index
    %c35_283 = arith.constant 35 : index
    %c0_284 = arith.constant 0 : index
    %c0_285 = arith.constant 0 : index
    %c0_286 = arith.constant 0 : index
    %190 = vector.load %arg4[%c0_281, %c0_282, %c35_283, %c0_284, %c0_285, %c0_286] : memref<1x1x49x3x16x16xf32, #tpu.memory_space<vmem>>, vector<1x1x1x3x16x16xf32>
    %191 = vector.shape_cast %190 : vector<1x1x1x3x16x16xf32> to vector<3x16x16xf32>
    %192 = arith.subf %191, %145 : vector<3x16x16xf32>
    %193 = math.exp %192 : vector<3x16x16xf32>
    %194 = arith.addf %186, %193 : vector<3x16x16xf32>
    %195 = vector.extract_strided_slice %149 {offsets = [0, 5, 0], sizes = [3, 16, 16], strides = [1, 1, 1]} : vector<3x22x16xf32> to vector<3x16x16xf32>
    %196 = arith.mulf %193, %195 : vector<3x16x16xf32>
    %197 = arith.addf %189, %196 : vector<3x16x16xf32>
    %c0_287 = arith.constant 0 : index
    %c0_288 = arith.constant 0 : index
    %c42_289 = arith.constant 42 : index
    %c0_290 = arith.constant 0 : index
    %c0_291 = arith.constant 0 : index
    %c0_292 = arith.constant 0 : index
    %198 = vector.load %arg4[%c0_287, %c0_288, %c42_289, %c0_290, %c0_291, %c0_292] : memref<1x1x49x3x16x16xf32, #tpu.memory_space<vmem>>, vector<1x1x1x3x16x16xf32>
    %199 = vector.shape_cast %198 : vector<1x1x1x3x16x16xf32> to vector<3x16x16xf32>
    %200 = arith.subf %199, %145 : vector<3x16x16xf32>
    %201 = math.exp %200 : vector<3x16x16xf32>
    %202 = arith.addf %194, %201 : vector<3x16x16xf32>
    %203 = vector.extract_strided_slice %149 {offsets = [0, 6, 0], sizes = [3, 16, 16], strides = [1, 1, 1]} : vector<3x22x16xf32> to vector<3x16x16xf32>
    %204 = arith.mulf %201, %203 : vector<3x16x16xf32>
    %205 = arith.addf %197, %204 : vector<3x16x16xf32>
    %c0_293 = arith.constant 0 : index
    %c0_294 = arith.constant 0 : index
    %c0_295 = arith.constant 0 : index
    %c0_296 = arith.constant 0 : index
    %c1_297 = arith.constant 1 : index
    %206 = vector.load %arg3[%c0_293, %c0_294, %c0_295, %c0_296, %c1_297] : memref<1x1x3x22x22xf32, #tpu.memory_space<vmem>>, vector<1x1x3x22x16xf32>
    %207 = vector.shape_cast %206 : vector<1x1x3x22x16xf32> to vector<3x22x16xf32>
    %c0_298 = arith.constant 0 : index
    %c0_299 = arith.constant 0 : index
    %c1_300 = arith.constant 1 : index
    %c0_301 = arith.constant 0 : index
    %c0_302 = arith.constant 0 : index
    %c0_303 = arith.constant 0 : index
    %208 = vector.load %arg4[%c0_298, %c0_299, %c1_300, %c0_301, %c0_302, %c0_303] : memref<1x1x49x3x16x16xf32, #tpu.memory_space<vmem>>, vector<1x1x1x3x16x16xf32>
    %209 = vector.shape_cast %208 : vector<1x1x1x3x16x16xf32> to vector<3x16x16xf32>
    %210 = arith.subf %209, %145 : vector<3x16x16xf32>
    %211 = math.exp %210 : vector<3x16x16xf32>
    %212 = arith.addf %202, %211 : vector<3x16x16xf32>
    %213 = vector.extract_strided_slice %207 {offsets = [0, 0, 0], sizes = [3, 16, 16], strides = [1, 1, 1]} : vector<3x22x16xf32> to vector<3x16x16xf32>
    %214 = arith.mulf %211, %213 : vector<3x16x16xf32>
    %215 = arith.addf %205, %214 : vector<3x16x16xf32>
    %c0_304 = arith.constant 0 : index
    %c0_305 = arith.constant 0 : index
    %c8_306 = arith.constant 8 : index
    %c0_307 = arith.constant 0 : index
    %c0_308 = arith.constant 0 : index
    %c0_309 = arith.constant 0 : index
    %216 = vector.load %arg4[%c0_304, %c0_305, %c8_306, %c0_307, %c0_308, %c0_309] : memref<1x1x49x3x16x16xf32, #tpu.memory_space<vmem>>, vector<1x1x1x3x16x16xf32>
    %217 = vector.shape_cast %216 : vector<1x1x1x3x16x16xf32> to vector<3x16x16xf32>
    %218 = arith.subf %217, %145 : vector<3x16x16xf32>
    %219 = math.exp %218 : vector<3x16x16xf32>
    %220 = arith.addf %212, %219 : vector<3x16x16xf32>
    %221 = vector.extract_strided_slice %207 {offsets = [0, 1, 0], sizes = [3, 16, 16], strides = [1, 1, 1]} : vector<3x22x16xf32> to vector<3x16x16xf32>
    %222 = arith.mulf %219, %221 : vector<3x16x16xf32>
    %223 = arith.addf %215, %222 : vector<3x16x16xf32>
    %c0_310 = arith.constant 0 : index
    %c0_311 = arith.constant 0 : index
    %c15_312 = arith.constant 15 : index
    %c0_313 = arith.constant 0 : index
    %c0_314 = arith.constant 0 : index
    %c0_315 = arith.constant 0 : index
    %224 = vector.load %arg4[%c0_310, %c0_311, %c15_312, %c0_313, %c0_314, %c0_315] : memref<1x1x49x3x16x16xf32, #tpu.memory_space<vmem>>, vector<1x1x1x3x16x16xf32>
    %225 = vector.shape_cast %224 : vector<1x1x1x3x16x16xf32> to vector<3x16x16xf32>
    %226 = arith.subf %225, %145 : vector<3x16x16xf32>
    %227 = math.exp %226 : vector<3x16x16xf32>
    %228 = arith.addf %220, %227 : vector<3x16x16xf32>
    %229 = vector.extract_strided_slice %207 {offsets = [0, 2, 0], sizes = [3, 16, 16], strides = [1, 1, 1]} : vector<3x22x16xf32> to vector<3x16x16xf32>
    %230 = arith.mulf %227, %229 : vector<3x16x16xf32>
    %231 = arith.addf %223, %230 : vector<3x16x16xf32>
    %c0_316 = arith.constant 0 : index
    %c0_317 = arith.constant 0 : index
    %c22_318 = arith.constant 22 : index
    %c0_319 = arith.constant 0 : index
    %c0_320 = arith.constant 0 : index
    %c0_321 = arith.constant 0 : index
    %232 = vector.load %arg4[%c0_316, %c0_317, %c22_318, %c0_319, %c0_320, %c0_321] : memref<1x1x49x3x16x16xf32, #tpu.memory_space<vmem>>, vector<1x1x1x3x16x16xf32>
    %233 = vector.shape_cast %232 : vector<1x1x1x3x16x16xf32> to vector<3x16x16xf32>
    %234 = arith.subf %233, %145 : vector<3x16x16xf32>
    %235 = math.exp %234 : vector<3x16x16xf32>
    %236 = arith.addf %228, %235 : vector<3x16x16xf32>
    %237 = vector.extract_strided_slice %207 {offsets = [0, 3, 0], sizes = [3, 16, 16], strides = [1, 1, 1]} : vector<3x22x16xf32> to vector<3x16x16xf32>
    %238 = arith.mulf %235, %237 : vector<3x16x16xf32>
    %239 = arith.addf %231, %238 : vector<3x16x16xf32>
    %c0_322 = arith.constant 0 : index
    %c0_323 = arith.constant 0 : index
    %c29_324 = arith.constant 29 : index
    %c0_325 = arith.constant 0 : index
    %c0_326 = arith.constant 0 : index
    %c0_327 = arith.constant 0 : index
    %240 = vector.load %arg4[%c0_322, %c0_323, %c29_324, %c0_325, %c0_326, %c0_327] : memref<1x1x49x3x16x16xf32, #tpu.memory_space<vmem>>, vector<1x1x1x3x16x16xf32>
    %241 = vector.shape_cast %240 : vector<1x1x1x3x16x16xf32> to vector<3x16x16xf32>
    %242 = arith.subf %241, %145 : vector<3x16x16xf32>
    %243 = math.exp %242 : vector<3x16x16xf32>
    %244 = arith.addf %236, %243 : vector<3x16x16xf32>
    %245 = vector.extract_strided_slice %207 {offsets = [0, 4, 0], sizes = [3, 16, 16], strides = [1, 1, 1]} : vector<3x22x16xf32> to vector<3x16x16xf32>
    %246 = arith.mulf %243, %245 : vector<3x16x16xf32>
    %247 = arith.addf %239, %246 : vector<3x16x16xf32>
    %c0_328 = arith.constant 0 : index
    %c0_329 = arith.constant 0 : index
    %c36_330 = arith.constant 36 : index
    %c0_331 = arith.constant 0 : index
    %c0_332 = arith.constant 0 : index
    %c0_333 = arith.constant 0 : index
    %248 = vector.load %arg4[%c0_328, %c0_329, %c36_330, %c0_331, %c0_332, %c0_333] : memref<1x1x49x3x16x16xf32, #tpu.memory_space<vmem>>, vector<1x1x1x3x16x16xf32>
    %249 = vector.shape_cast %248 : vector<1x1x1x3x16x16xf32> to vector<3x16x16xf32>
    %250 = arith.subf %249, %145 : vector<3x16x16xf32>
    %251 = math.exp %250 : vector<3x16x16xf32>
    %252 = arith.addf %244, %251 : vector<3x16x16xf32>
    %253 = vector.extract_strided_slice %207 {offsets = [0, 5, 0], sizes = [3, 16, 16], strides = [1, 1, 1]} : vector<3x22x16xf32> to vector<3x16x16xf32>
    %254 = arith.mulf %251, %253 : vector<3x16x16xf32>
    %255 = arith.addf %247, %254 : vector<3x16x16xf32>
    %c0_334 = arith.constant 0 : index
    %c0_335 = arith.constant 0 : index
    %c43_336 = arith.constant 43 : index
    %c0_337 = arith.constant 0 : index
    %c0_338 = arith.constant 0 : index
    %c0_339 = arith.constant 0 : index
    %256 = vector.load %arg4[%c0_334, %c0_335, %c43_336, %c0_337, %c0_338, %c0_339] : memref<1x1x49x3x16x16xf32, #tpu.memory_space<vmem>>, vector<1x1x1x3x16x16xf32>
    %257 = vector.shape_cast %256 : vector<1x1x1x3x16x16xf32> to vector<3x16x16xf32>
    %258 = arith.subf %257, %145 : vector<3x16x16xf32>
    %259 = math.exp %258 : vector<3x16x16xf32>
    %260 = arith.addf %252, %259 : vector<3x16x16xf32>
    %261 = vector.extract_strided_slice %207 {offsets = [0, 6, 0], sizes = [3, 16, 16], strides = [1, 1, 1]} : vector<3x22x16xf32> to vector<3x16x16xf32>
    %262 = arith.mulf %259, %261 : vector<3x16x16xf32>
    %263 = arith.addf %255, %262 : vector<3x16x16xf32>
    %c0_340 = arith.constant 0 : index
    %c0_341 = arith.constant 0 : index
    %c0_342 = arith.constant 0 : index
    %c0_343 = arith.constant 0 : index
    %c2_344 = arith.constant 2 : index
    %264 = vector.load %arg3[%c0_340, %c0_341, %c0_342, %c0_343, %c2_344] : memref<1x1x3x22x22xf32, #tpu.memory_space<vmem>>, vector<1x1x3x22x16xf32>
    %265 = vector.shape_cast %264 : vector<1x1x3x22x16xf32> to vector<3x22x16xf32>
    %c0_345 = arith.constant 0 : index
    %c0_346 = arith.constant 0 : index
    %c2_347 = arith.constant 2 : index
    %c0_348 = arith.constant 0 : index
    %c0_349 = arith.constant 0 : index
    %c0_350 = arith.constant 0 : index
    %266 = vector.load %arg4[%c0_345, %c0_346, %c2_347, %c0_348, %c0_349, %c0_350] : memref<1x1x49x3x16x16xf32, #tpu.memory_space<vmem>>, vector<1x1x1x3x16x16xf32>
    %267 = vector.shape_cast %266 : vector<1x1x1x3x16x16xf32> to vector<3x16x16xf32>
    %268 = arith.subf %267, %145 : vector<3x16x16xf32>
    %269 = math.exp %268 : vector<3x16x16xf32>
    %270 = arith.addf %260, %269 : vector<3x16x16xf32>
    %271 = vector.extract_strided_slice %265 {offsets = [0, 0, 0], sizes = [3, 16, 16], strides = [1, 1, 1]} : vector<3x22x16xf32> to vector<3x16x16xf32>
    %272 = arith.mulf %269, %271 : vector<3x16x16xf32>
    %273 = arith.addf %263, %272 : vector<3x16x16xf32>
    %c0_351 = arith.constant 0 : index
    %c0_352 = arith.constant 0 : index
    %c9_353 = arith.constant 9 : index
    %c0_354 = arith.constant 0 : index
    %c0_355 = arith.constant 0 : index
    %c0_356 = arith.constant 0 : index
    %274 = vector.load %arg4[%c0_351, %c0_352, %c9_353, %c0_354, %c0_355, %c0_356] : memref<1x1x49x3x16x16xf32, #tpu.memory_space<vmem>>, vector<1x1x1x3x16x16xf32>
    %275 = vector.shape_cast %274 : vector<1x1x1x3x16x16xf32> to vector<3x16x16xf32>
    %276 = arith.subf %275, %145 : vector<3x16x16xf32>
    %277 = math.exp %276 : vector<3x16x16xf32>
    %278 = arith.addf %270, %277 : vector<3x16x16xf32>
    %279 = vector.extract_strided_slice %265 {offsets = [0, 1, 0], sizes = [3, 16, 16], strides = [1, 1, 1]} : vector<3x22x16xf32> to vector<3x16x16xf32>
    %280 = arith.mulf %277, %279 : vector<3x16x16xf32>
    %281 = arith.addf %273, %280 : vector<3x16x16xf32>
    %c0_357 = arith.constant 0 : index
    %c0_358 = arith.constant 0 : index
    %c16_359 = arith.constant 16 : index
    %c0_360 = arith.constant 0 : index
    %c0_361 = arith.constant 0 : index
    %c0_362 = arith.constant 0 : index
    %282 = vector.load %arg4[%c0_357, %c0_358, %c16_359, %c0_360, %c0_361, %c0_362] : memref<1x1x49x3x16x16xf32, #tpu.memory_space<vmem>>, vector<1x1x1x3x16x16xf32>
    %283 = vector.shape_cast %282 : vector<1x1x1x3x16x16xf32> to vector<3x16x16xf32>
    %284 = arith.subf %283, %145 : vector<3x16x16xf32>
    %285 = math.exp %284 : vector<3x16x16xf32>
    %286 = arith.addf %278, %285 : vector<3x16x16xf32>
    %287 = vector.extract_strided_slice %265 {offsets = [0, 2, 0], sizes = [3, 16, 16], strides = [1, 1, 1]} : vector<3x22x16xf32> to vector<3x16x16xf32>
    %288 = arith.mulf %285, %287 : vector<3x16x16xf32>
    %289 = arith.addf %281, %288 : vector<3x16x16xf32>
    %c0_363 = arith.constant 0 : index
    %c0_364 = arith.constant 0 : index
    %c23_365 = arith.constant 23 : index
    %c0_366 = arith.constant 0 : index
    %c0_367 = arith.constant 0 : index
    %c0_368 = arith.constant 0 : index
    %290 = vector.load %arg4[%c0_363, %c0_364, %c23_365, %c0_366, %c0_367, %c0_368] : memref<1x1x49x3x16x16xf32, #tpu.memory_space<vmem>>, vector<1x1x1x3x16x16xf32>
    %291 = vector.shape_cast %290 : vector<1x1x1x3x16x16xf32> to vector<3x16x16xf32>
    %292 = arith.subf %291, %145 : vector<3x16x16xf32>
    %293 = math.exp %292 : vector<3x16x16xf32>
    %294 = arith.addf %286, %293 : vector<3x16x16xf32>
    %295 = vector.extract_strided_slice %265 {offsets = [0, 3, 0], sizes = [3, 16, 16], strides = [1, 1, 1]} : vector<3x22x16xf32> to vector<3x16x16xf32>
    %296 = arith.mulf %293, %295 : vector<3x16x16xf32>
    %297 = arith.addf %289, %296 : vector<3x16x16xf32>
    %c0_369 = arith.constant 0 : index
    %c0_370 = arith.constant 0 : index
    %c30_371 = arith.constant 30 : index
    %c0_372 = arith.constant 0 : index
    %c0_373 = arith.constant 0 : index
    %c0_374 = arith.constant 0 : index
    %298 = vector.load %arg4[%c0_369, %c0_370, %c30_371, %c0_372, %c0_373, %c0_374] : memref<1x1x49x3x16x16xf32, #tpu.memory_space<vmem>>, vector<1x1x1x3x16x16xf32>
    %299 = vector.shape_cast %298 : vector<1x1x1x3x16x16xf32> to vector<3x16x16xf32>
    %300 = arith.subf %299, %145 : vector<3x16x16xf32>
    %301 = math.exp %300 : vector<3x16x16xf32>
    %302 = arith.addf %294, %301 : vector<3x16x16xf32>
    %303 = vector.extract_strided_slice %265 {offsets = [0, 4, 0], sizes = [3, 16, 16], strides = [1, 1, 1]} : vector<3x22x16xf32> to vector<3x16x16xf32>
    %304 = arith.mulf %301, %303 : vector<3x16x16xf32>
    %305 = arith.addf %297, %304 : vector<3x16x16xf32>
    %c0_375 = arith.constant 0 : index
    %c0_376 = arith.constant 0 : index
    %c37_377 = arith.constant 37 : index
    %c0_378 = arith.constant 0 : index
    %c0_379 = arith.constant 0 : index
    %c0_380 = arith.constant 0 : index
    %306 = vector.load %arg4[%c0_375, %c0_376, %c37_377, %c0_378, %c0_379, %c0_380] : memref<1x1x49x3x16x16xf32, #tpu.memory_space<vmem>>, vector<1x1x1x3x16x16xf32>
    %307 = vector.shape_cast %306 : vector<1x1x1x3x16x16xf32> to vector<3x16x16xf32>
    %308 = arith.subf %307, %145 : vector<3x16x16xf32>
    %309 = math.exp %308 : vector<3x16x16xf32>
    %310 = arith.addf %302, %309 : vector<3x16x16xf32>
    %311 = vector.extract_strided_slice %265 {offsets = [0, 5, 0], sizes = [3, 16, 16], strides = [1, 1, 1]} : vector<3x22x16xf32> to vector<3x16x16xf32>
    %312 = arith.mulf %309, %311 : vector<3x16x16xf32>
    %313 = arith.addf %305, %312 : vector<3x16x16xf32>
    %c0_381 = arith.constant 0 : index
    %c0_382 = arith.constant 0 : index
    %c44_383 = arith.constant 44 : index
    %c0_384 = arith.constant 0 : index
    %c0_385 = arith.constant 0 : index
    %c0_386 = arith.constant 0 : index
    %314 = vector.load %arg4[%c0_381, %c0_382, %c44_383, %c0_384, %c0_385, %c0_386] : memref<1x1x49x3x16x16xf32, #tpu.memory_space<vmem>>, vector<1x1x1x3x16x16xf32>
    %315 = vector.shape_cast %314 : vector<1x1x1x3x16x16xf32> to vector<3x16x16xf32>
    %316 = arith.subf %315, %145 : vector<3x16x16xf32>
    %317 = math.exp %316 : vector<3x16x16xf32>
    %318 = arith.addf %310, %317 : vector<3x16x16xf32>
    %319 = vector.extract_strided_slice %265 {offsets = [0, 6, 0], sizes = [3, 16, 16], strides = [1, 1, 1]} : vector<3x22x16xf32> to vector<3x16x16xf32>
    %320 = arith.mulf %317, %319 : vector<3x16x16xf32>
    %321 = arith.addf %313, %320 : vector<3x16x16xf32>
    %c0_387 = arith.constant 0 : index
    %c0_388 = arith.constant 0 : index
    %c0_389 = arith.constant 0 : index
    %c0_390 = arith.constant 0 : index
    %c3_391 = arith.constant 3 : index
    %322 = vector.load %arg3[%c0_387, %c0_388, %c0_389, %c0_390, %c3_391] : memref<1x1x3x22x22xf32, #tpu.memory_space<vmem>>, vector<1x1x3x22x16xf32>
    %323 = vector.shape_cast %322 : vector<1x1x3x22x16xf32> to vector<3x22x16xf32>
    %c0_392 = arith.constant 0 : index
    %c0_393 = arith.constant 0 : index
    %c3_394 = arith.constant 3 : index
    %c0_395 = arith.constant 0 : index
    %c0_396 = arith.constant 0 : index
    %c0_397 = arith.constant 0 : index
    %324 = vector.load %arg4[%c0_392, %c0_393, %c3_394, %c0_395, %c0_396, %c0_397] : memref<1x1x49x3x16x16xf32, #tpu.memory_space<vmem>>, vector<1x1x1x3x16x16xf32>
    %325 = vector.shape_cast %324 : vector<1x1x1x3x16x16xf32> to vector<3x16x16xf32>
    %326 = arith.subf %325, %145 : vector<3x16x16xf32>
    %327 = math.exp %326 : vector<3x16x16xf32>
    %328 = arith.addf %318, %327 : vector<3x16x16xf32>
    %329 = vector.extract_strided_slice %323 {offsets = [0, 0, 0], sizes = [3, 16, 16], strides = [1, 1, 1]} : vector<3x22x16xf32> to vector<3x16x16xf32>
    %330 = arith.mulf %327, %329 : vector<3x16x16xf32>
    %331 = arith.addf %321, %330 : vector<3x16x16xf32>
    %c0_398 = arith.constant 0 : index
    %c0_399 = arith.constant 0 : index
    %c10_400 = arith.constant 10 : index
    %c0_401 = arith.constant 0 : index
    %c0_402 = arith.constant 0 : index
    %c0_403 = arith.constant 0 : index
    %332 = vector.load %arg4[%c0_398, %c0_399, %c10_400, %c0_401, %c0_402, %c0_403] : memref<1x1x49x3x16x16xf32, #tpu.memory_space<vmem>>, vector<1x1x1x3x16x16xf32>
    %333 = vector.shape_cast %332 : vector<1x1x1x3x16x16xf32> to vector<3x16x16xf32>
    %334 = arith.subf %333, %145 : vector<3x16x16xf32>
    %335 = math.exp %334 : vector<3x16x16xf32>
    %336 = arith.addf %328, %335 : vector<3x16x16xf32>
    %337 = vector.extract_strided_slice %323 {offsets = [0, 1, 0], sizes = [3, 16, 16], strides = [1, 1, 1]} : vector<3x22x16xf32> to vector<3x16x16xf32>
    %338 = arith.mulf %335, %337 : vector<3x16x16xf32>
    %339 = arith.addf %331, %338 : vector<3x16x16xf32>
    %c0_404 = arith.constant 0 : index
    %c0_405 = arith.constant 0 : index
    %c17_406 = arith.constant 17 : index
    %c0_407 = arith.constant 0 : index
    %c0_408 = arith.constant 0 : index
    %c0_409 = arith.constant 0 : index
    %340 = vector.load %arg4[%c0_404, %c0_405, %c17_406, %c0_407, %c0_408, %c0_409] : memref<1x1x49x3x16x16xf32, #tpu.memory_space<vmem>>, vector<1x1x1x3x16x16xf32>
    %341 = vector.shape_cast %340 : vector<1x1x1x3x16x16xf32> to vector<3x16x16xf32>
    %342 = arith.subf %341, %145 : vector<3x16x16xf32>
    %343 = math.exp %342 : vector<3x16x16xf32>
    %344 = arith.addf %336, %343 : vector<3x16x16xf32>
    %345 = vector.extract_strided_slice %323 {offsets = [0, 2, 0], sizes = [3, 16, 16], strides = [1, 1, 1]} : vector<3x22x16xf32> to vector<3x16x16xf32>
    %346 = arith.mulf %343, %345 : vector<3x16x16xf32>
    %347 = arith.addf %339, %346 : vector<3x16x16xf32>
    %c0_410 = arith.constant 0 : index
    %c0_411 = arith.constant 0 : index
    %c24_412 = arith.constant 24 : index
    %c0_413 = arith.constant 0 : index
    %c0_414 = arith.constant 0 : index
    %c0_415 = arith.constant 0 : index
    %348 = vector.load %arg4[%c0_410, %c0_411, %c24_412, %c0_413, %c0_414, %c0_415] : memref<1x1x49x3x16x16xf32, #tpu.memory_space<vmem>>, vector<1x1x1x3x16x16xf32>
    %349 = vector.shape_cast %348 : vector<1x1x1x3x16x16xf32> to vector<3x16x16xf32>
    %350 = arith.subf %349, %145 : vector<3x16x16xf32>
    %351 = math.exp %350 : vector<3x16x16xf32>
    %352 = arith.addf %344, %351 : vector<3x16x16xf32>
    %353 = vector.extract_strided_slice %323 {offsets = [0, 3, 0], sizes = [3, 16, 16], strides = [1, 1, 1]} : vector<3x22x16xf32> to vector<3x16x16xf32>
    %354 = arith.mulf %351, %353 : vector<3x16x16xf32>
    %355 = arith.addf %347, %354 : vector<3x16x16xf32>
    %c0_416 = arith.constant 0 : index
    %c0_417 = arith.constant 0 : index
    %c31_418 = arith.constant 31 : index
    %c0_419 = arith.constant 0 : index
    %c0_420 = arith.constant 0 : index
    %c0_421 = arith.constant 0 : index
    %356 = vector.load %arg4[%c0_416, %c0_417, %c31_418, %c0_419, %c0_420, %c0_421] : memref<1x1x49x3x16x16xf32, #tpu.memory_space<vmem>>, vector<1x1x1x3x16x16xf32>
    %357 = vector.shape_cast %356 : vector<1x1x1x3x16x16xf32> to vector<3x16x16xf32>
    %358 = arith.subf %357, %145 : vector<3x16x16xf32>
    %359 = math.exp %358 : vector<3x16x16xf32>
    %360 = arith.addf %352, %359 : vector<3x16x16xf32>
    %361 = vector.extract_strided_slice %323 {offsets = [0, 4, 0], sizes = [3, 16, 16], strides = [1, 1, 1]} : vector<3x22x16xf32> to vector<3x16x16xf32>
    %362 = arith.mulf %359, %361 : vector<3x16x16xf32>
    %363 = arith.addf %355, %362 : vector<3x16x16xf32>
    %c0_422 = arith.constant 0 : index
    %c0_423 = arith.constant 0 : index
    %c38_424 = arith.constant 38 : index
    %c0_425 = arith.constant 0 : index
    %c0_426 = arith.constant 0 : index
    %c0_427 = arith.constant 0 : index
    %364 = vector.load %arg4[%c0_422, %c0_423, %c38_424, %c0_425, %c0_426, %c0_427] : memref<1x1x49x3x16x16xf32, #tpu.memory_space<vmem>>, vector<1x1x1x3x16x16xf32>
    %365 = vector.shape_cast %364 : vector<1x1x1x3x16x16xf32> to vector<3x16x16xf32>
    %366 = arith.subf %365, %145 : vector<3x16x16xf32>
    %367 = math.exp %366 : vector<3x16x16xf32>
    %368 = arith.addf %360, %367 : vector<3x16x16xf32>
    %369 = vector.extract_strided_slice %323 {offsets = [0, 5, 0], sizes = [3, 16, 16], strides = [1, 1, 1]} : vector<3x22x16xf32> to vector<3x16x16xf32>
    %370 = arith.mulf %367, %369 : vector<3x16x16xf32>
    %371 = arith.addf %363, %370 : vector<3x16x16xf32>
    %c0_428 = arith.constant 0 : index
    %c0_429 = arith.constant 0 : index
    %c45_430 = arith.constant 45 : index
    %c0_431 = arith.constant 0 : index
    %c0_432 = arith.constant 0 : index
    %c0_433 = arith.constant 0 : index
    %372 = vector.load %arg4[%c0_428, %c0_429, %c45_430, %c0_431, %c0_432, %c0_433] : memref<1x1x49x3x16x16xf32, #tpu.memory_space<vmem>>, vector<1x1x1x3x16x16xf32>
    %373 = vector.shape_cast %372 : vector<1x1x1x3x16x16xf32> to vector<3x16x16xf32>
    %374 = arith.subf %373, %145 : vector<3x16x16xf32>
    %375 = math.exp %374 : vector<3x16x16xf32>
    %376 = arith.addf %368, %375 : vector<3x16x16xf32>
    %377 = vector.extract_strided_slice %323 {offsets = [0, 6, 0], sizes = [3, 16, 16], strides = [1, 1, 1]} : vector<3x22x16xf32> to vector<3x16x16xf32>
    %378 = arith.mulf %375, %377 : vector<3x16x16xf32>
    %379 = arith.addf %371, %378 : vector<3x16x16xf32>
    %c0_434 = arith.constant 0 : index
    %c0_435 = arith.constant 0 : index
    %c0_436 = arith.constant 0 : index
    %c0_437 = arith.constant 0 : index
    %c4_438 = arith.constant 4 : index
    %380 = vector.load %arg3[%c0_434, %c0_435, %c0_436, %c0_437, %c4_438] : memref<1x1x3x22x22xf32, #tpu.memory_space<vmem>>, vector<1x1x3x22x16xf32>
    %381 = vector.shape_cast %380 : vector<1x1x3x22x16xf32> to vector<3x22x16xf32>
    %c0_439 = arith.constant 0 : index
    %c0_440 = arith.constant 0 : index
    %c4_441 = arith.constant 4 : index
    %c0_442 = arith.constant 0 : index
    %c0_443 = arith.constant 0 : index
    %c0_444 = arith.constant 0 : index
    %382 = vector.load %arg4[%c0_439, %c0_440, %c4_441, %c0_442, %c0_443, %c0_444] : memref<1x1x49x3x16x16xf32, #tpu.memory_space<vmem>>, vector<1x1x1x3x16x16xf32>
    %383 = vector.shape_cast %382 : vector<1x1x1x3x16x16xf32> to vector<3x16x16xf32>
    %384 = arith.subf %383, %145 : vector<3x16x16xf32>
    %385 = math.exp %384 : vector<3x16x16xf32>
    %386 = arith.addf %376, %385 : vector<3x16x16xf32>
    %387 = vector.extract_strided_slice %381 {offsets = [0, 0, 0], sizes = [3, 16, 16], strides = [1, 1, 1]} : vector<3x22x16xf32> to vector<3x16x16xf32>
    %388 = arith.mulf %385, %387 : vector<3x16x16xf32>
    %389 = arith.addf %379, %388 : vector<3x16x16xf32>
    %c0_445 = arith.constant 0 : index
    %c0_446 = arith.constant 0 : index
    %c11_447 = arith.constant 11 : index
    %c0_448 = arith.constant 0 : index
    %c0_449 = arith.constant 0 : index
    %c0_450 = arith.constant 0 : index
    %390 = vector.load %arg4[%c0_445, %c0_446, %c11_447, %c0_448, %c0_449, %c0_450] : memref<1x1x49x3x16x16xf32, #tpu.memory_space<vmem>>, vector<1x1x1x3x16x16xf32>
    %391 = vector.shape_cast %390 : vector<1x1x1x3x16x16xf32> to vector<3x16x16xf32>
    %392 = arith.subf %391, %145 : vector<3x16x16xf32>
    %393 = math.exp %392 : vector<3x16x16xf32>
    %394 = arith.addf %386, %393 : vector<3x16x16xf32>
    %395 = vector.extract_strided_slice %381 {offsets = [0, 1, 0], sizes = [3, 16, 16], strides = [1, 1, 1]} : vector<3x22x16xf32> to vector<3x16x16xf32>
    %396 = arith.mulf %393, %395 : vector<3x16x16xf32>
    %397 = arith.addf %389, %396 : vector<3x16x16xf32>
    %c0_451 = arith.constant 0 : index
    %c0_452 = arith.constant 0 : index
    %c18_453 = arith.constant 18 : index
    %c0_454 = arith.constant 0 : index
    %c0_455 = arith.constant 0 : index
    %c0_456 = arith.constant 0 : index
    %398 = vector.load %arg4[%c0_451, %c0_452, %c18_453, %c0_454, %c0_455, %c0_456] : memref<1x1x49x3x16x16xf32, #tpu.memory_space<vmem>>, vector<1x1x1x3x16x16xf32>
    %399 = vector.shape_cast %398 : vector<1x1x1x3x16x16xf32> to vector<3x16x16xf32>
    %400 = arith.subf %399, %145 : vector<3x16x16xf32>
    %401 = math.exp %400 : vector<3x16x16xf32>
    %402 = arith.addf %394, %401 : vector<3x16x16xf32>
    %403 = vector.extract_strided_slice %381 {offsets = [0, 2, 0], sizes = [3, 16, 16], strides = [1, 1, 1]} : vector<3x22x16xf32> to vector<3x16x16xf32>
    %404 = arith.mulf %401, %403 : vector<3x16x16xf32>
    %405 = arith.addf %397, %404 : vector<3x16x16xf32>
    %c0_457 = arith.constant 0 : index
    %c0_458 = arith.constant 0 : index
    %c25_459 = arith.constant 25 : index
    %c0_460 = arith.constant 0 : index
    %c0_461 = arith.constant 0 : index
    %c0_462 = arith.constant 0 : index
    %406 = vector.load %arg4[%c0_457, %c0_458, %c25_459, %c0_460, %c0_461, %c0_462] : memref<1x1x49x3x16x16xf32, #tpu.memory_space<vmem>>, vector<1x1x1x3x16x16xf32>
    %407 = vector.shape_cast %406 : vector<1x1x1x3x16x16xf32> to vector<3x16x16xf32>
    %408 = arith.subf %407, %145 : vector<3x16x16xf32>
    %409 = math.exp %408 : vector<3x16x16xf32>
    %410 = arith.addf %402, %409 : vector<3x16x16xf32>
    %411 = vector.extract_strided_slice %381 {offsets = [0, 3, 0], sizes = [3, 16, 16], strides = [1, 1, 1]} : vector<3x22x16xf32> to vector<3x16x16xf32>
    %412 = arith.mulf %409, %411 : vector<3x16x16xf32>
    %413 = arith.addf %405, %412 : vector<3x16x16xf32>
    %c0_463 = arith.constant 0 : index
    %c0_464 = arith.constant 0 : index
    %c32_465 = arith.constant 32 : index
    %c0_466 = arith.constant 0 : index
    %c0_467 = arith.constant 0 : index
    %c0_468 = arith.constant 0 : index
    %414 = vector.load %arg4[%c0_463, %c0_464, %c32_465, %c0_466, %c0_467, %c0_468] : memref<1x1x49x3x16x16xf32, #tpu.memory_space<vmem>>, vector<1x1x1x3x16x16xf32>
    %415 = vector.shape_cast %414 : vector<1x1x1x3x16x16xf32> to vector<3x16x16xf32>
    %416 = arith.subf %415, %145 : vector<3x16x16xf32>
    %417 = math.exp %416 : vector<3x16x16xf32>
    %418 = arith.addf %410, %417 : vector<3x16x16xf32>
    %419 = vector.extract_strided_slice %381 {offsets = [0, 4, 0], sizes = [3, 16, 16], strides = [1, 1, 1]} : vector<3x22x16xf32> to vector<3x16x16xf32>
    %420 = arith.mulf %417, %419 : vector<3x16x16xf32>
    %421 = arith.addf %413, %420 : vector<3x16x16xf32>
    %c0_469 = arith.constant 0 : index
    %c0_470 = arith.constant 0 : index
    %c39_471 = arith.constant 39 : index
    %c0_472 = arith.constant 0 : index
    %c0_473 = arith.constant 0 : index
    %c0_474 = arith.constant 0 : index
    %422 = vector.load %arg4[%c0_469, %c0_470, %c39_471, %c0_472, %c0_473, %c0_474] : memref<1x1x49x3x16x16xf32, #tpu.memory_space<vmem>>, vector<1x1x1x3x16x16xf32>
    %423 = vector.shape_cast %422 : vector<1x1x1x3x16x16xf32> to vector<3x16x16xf32>
    %424 = arith.subf %423, %145 : vector<3x16x16xf32>
    %425 = math.exp %424 : vector<3x16x16xf32>
    %426 = arith.addf %418, %425 : vector<3x16x16xf32>
    %427 = vector.extract_strided_slice %381 {offsets = [0, 5, 0], sizes = [3, 16, 16], strides = [1, 1, 1]} : vector<3x22x16xf32> to vector<3x16x16xf32>
    %428 = arith.mulf %425, %427 : vector<3x16x16xf32>
    %429 = arith.addf %421, %428 : vector<3x16x16xf32>
    %c0_475 = arith.constant 0 : index
    %c0_476 = arith.constant 0 : index
    %c46_477 = arith.constant 46 : index
    %c0_478 = arith.constant 0 : index
    %c0_479 = arith.constant 0 : index
    %c0_480 = arith.constant 0 : index
    %430 = vector.load %arg4[%c0_475, %c0_476, %c46_477, %c0_478, %c0_479, %c0_480] : memref<1x1x49x3x16x16xf32, #tpu.memory_space<vmem>>, vector<1x1x1x3x16x16xf32>
    %431 = vector.shape_cast %430 : vector<1x1x1x3x16x16xf32> to vector<3x16x16xf32>
    %432 = arith.subf %431, %145 : vector<3x16x16xf32>
    %433 = math.exp %432 : vector<3x16x16xf32>
    %434 = arith.addf %426, %433 : vector<3x16x16xf32>
    %435 = vector.extract_strided_slice %381 {offsets = [0, 6, 0], sizes = [3, 16, 16], strides = [1, 1, 1]} : vector<3x22x16xf32> to vector<3x16x16xf32>
    %436 = arith.mulf %433, %435 : vector<3x16x16xf32>
    %437 = arith.addf %429, %436 : vector<3x16x16xf32>
    %c0_481 = arith.constant 0 : index
    %c0_482 = arith.constant 0 : index
    %c0_483 = arith.constant 0 : index
    %c0_484 = arith.constant 0 : index
    %c5_485 = arith.constant 5 : index
    %438 = vector.load %arg3[%c0_481, %c0_482, %c0_483, %c0_484, %c5_485] : memref<1x1x3x22x22xf32, #tpu.memory_space<vmem>>, vector<1x1x3x22x16xf32>
    %439 = vector.shape_cast %438 : vector<1x1x3x22x16xf32> to vector<3x22x16xf32>
    %c0_486 = arith.constant 0 : index
    %c0_487 = arith.constant 0 : index
    %c5_488 = arith.constant 5 : index
    %c0_489 = arith.constant 0 : index
    %c0_490 = arith.constant 0 : index
    %c0_491 = arith.constant 0 : index
    %440 = vector.load %arg4[%c0_486, %c0_487, %c5_488, %c0_489, %c0_490, %c0_491] : memref<1x1x49x3x16x16xf32, #tpu.memory_space<vmem>>, vector<1x1x1x3x16x16xf32>
    %441 = vector.shape_cast %440 : vector<1x1x1x3x16x16xf32> to vector<3x16x16xf32>
    %442 = arith.subf %441, %145 : vector<3x16x16xf32>
    %443 = math.exp %442 : vector<3x16x16xf32>
    %444 = arith.addf %434, %443 : vector<3x16x16xf32>
    %445 = vector.extract_strided_slice %439 {offsets = [0, 0, 0], sizes = [3, 16, 16], strides = [1, 1, 1]} : vector<3x22x16xf32> to vector<3x16x16xf32>
    %446 = arith.mulf %443, %445 : vector<3x16x16xf32>
    %447 = arith.addf %437, %446 : vector<3x16x16xf32>
    %c0_492 = arith.constant 0 : index
    %c0_493 = arith.constant 0 : index
    %c12_494 = arith.constant 12 : index
    %c0_495 = arith.constant 0 : index
    %c0_496 = arith.constant 0 : index
    %c0_497 = arith.constant 0 : index
    %448 = vector.load %arg4[%c0_492, %c0_493, %c12_494, %c0_495, %c0_496, %c0_497] : memref<1x1x49x3x16x16xf32, #tpu.memory_space<vmem>>, vector<1x1x1x3x16x16xf32>
    %449 = vector.shape_cast %448 : vector<1x1x1x3x16x16xf32> to vector<3x16x16xf32>
    %450 = arith.subf %449, %145 : vector<3x16x16xf32>
    %451 = math.exp %450 : vector<3x16x16xf32>
    %452 = arith.addf %444, %451 : vector<3x16x16xf32>
    %453 = vector.extract_strided_slice %439 {offsets = [0, 1, 0], sizes = [3, 16, 16], strides = [1, 1, 1]} : vector<3x22x16xf32> to vector<3x16x16xf32>
    %454 = arith.mulf %451, %453 : vector<3x16x16xf32>
    %455 = arith.addf %447, %454 : vector<3x16x16xf32>
    %c0_498 = arith.constant 0 : index
    %c0_499 = arith.constant 0 : index
    %c19_500 = arith.constant 19 : index
    %c0_501 = arith.constant 0 : index
    %c0_502 = arith.constant 0 : index
    %c0_503 = arith.constant 0 : index
    %456 = vector.load %arg4[%c0_498, %c0_499, %c19_500, %c0_501, %c0_502, %c0_503] : memref<1x1x49x3x16x16xf32, #tpu.memory_space<vmem>>, vector<1x1x1x3x16x16xf32>
    %457 = vector.shape_cast %456 : vector<1x1x1x3x16x16xf32> to vector<3x16x16xf32>
    %458 = arith.subf %457, %145 : vector<3x16x16xf32>
    %459 = math.exp %458 : vector<3x16x16xf32>
    %460 = arith.addf %452, %459 : vector<3x16x16xf32>
    %461 = vector.extract_strided_slice %439 {offsets = [0, 2, 0], sizes = [3, 16, 16], strides = [1, 1, 1]} : vector<3x22x16xf32> to vector<3x16x16xf32>
    %462 = arith.mulf %459, %461 : vector<3x16x16xf32>
    %463 = arith.addf %455, %462 : vector<3x16x16xf32>
    %c0_504 = arith.constant 0 : index
    %c0_505 = arith.constant 0 : index
    %c26_506 = arith.constant 26 : index
    %c0_507 = arith.constant 0 : index
    %c0_508 = arith.constant 0 : index
    %c0_509 = arith.constant 0 : index
    %464 = vector.load %arg4[%c0_504, %c0_505, %c26_506, %c0_507, %c0_508, %c0_509] : memref<1x1x49x3x16x16xf32, #tpu.memory_space<vmem>>, vector<1x1x1x3x16x16xf32>
    %465 = vector.shape_cast %464 : vector<1x1x1x3x16x16xf32> to vector<3x16x16xf32>
    %466 = arith.subf %465, %145 : vector<3x16x16xf32>
    %467 = math.exp %466 : vector<3x16x16xf32>
    %468 = arith.addf %460, %467 : vector<3x16x16xf32>
    %469 = vector.extract_strided_slice %439 {offsets = [0, 3, 0], sizes = [3, 16, 16], strides = [1, 1, 1]} : vector<3x22x16xf32> to vector<3x16x16xf32>
    %470 = arith.mulf %467, %469 : vector<3x16x16xf32>
    %471 = arith.addf %463, %470 : vector<3x16x16xf32>
    %c0_510 = arith.constant 0 : index
    %c0_511 = arith.constant 0 : index
    %c33_512 = arith.constant 33 : index
    %c0_513 = arith.constant 0 : index
    %c0_514 = arith.constant 0 : index
    %c0_515 = arith.constant 0 : index
    %472 = vector.load %arg4[%c0_510, %c0_511, %c33_512, %c0_513, %c0_514, %c0_515] : memref<1x1x49x3x16x16xf32, #tpu.memory_space<vmem>>, vector<1x1x1x3x16x16xf32>
    %473 = vector.shape_cast %472 : vector<1x1x1x3x16x16xf32> to vector<3x16x16xf32>
    %474 = arith.subf %473, %145 : vector<3x16x16xf32>
    %475 = math.exp %474 : vector<3x16x16xf32>
    %476 = arith.addf %468, %475 : vector<3x16x16xf32>
    %477 = vector.extract_strided_slice %439 {offsets = [0, 4, 0], sizes = [3, 16, 16], strides = [1, 1, 1]} : vector<3x22x16xf32> to vector<3x16x16xf32>
    %478 = arith.mulf %475, %477 : vector<3x16x16xf32>
    %479 = arith.addf %471, %478 : vector<3x16x16xf32>
    %c0_516 = arith.constant 0 : index
    %c0_517 = arith.constant 0 : index
    %c40_518 = arith.constant 40 : index
    %c0_519 = arith.constant 0 : index
    %c0_520 = arith.constant 0 : index
    %c0_521 = arith.constant 0 : index
    %480 = vector.load %arg4[%c0_516, %c0_517, %c40_518, %c0_519, %c0_520, %c0_521] : memref<1x1x49x3x16x16xf32, #tpu.memory_space<vmem>>, vector<1x1x1x3x16x16xf32>
    %481 = vector.shape_cast %480 : vector<1x1x1x3x16x16xf32> to vector<3x16x16xf32>
    %482 = arith.subf %481, %145 : vector<3x16x16xf32>
    %483 = math.exp %482 : vector<3x16x16xf32>
    %484 = arith.addf %476, %483 : vector<3x16x16xf32>
    %485 = vector.extract_strided_slice %439 {offsets = [0, 5, 0], sizes = [3, 16, 16], strides = [1, 1, 1]} : vector<3x22x16xf32> to vector<3x16x16xf32>
    %486 = arith.mulf %483, %485 : vector<3x16x16xf32>
    %487 = arith.addf %479, %486 : vector<3x16x16xf32>
    %c0_522 = arith.constant 0 : index
    %c0_523 = arith.constant 0 : index
    %c47_524 = arith.constant 47 : index
    %c0_525 = arith.constant 0 : index
    %c0_526 = arith.constant 0 : index
    %c0_527 = arith.constant 0 : index
    %488 = vector.load %arg4[%c0_522, %c0_523, %c47_524, %c0_525, %c0_526, %c0_527] : memref<1x1x49x3x16x16xf32, #tpu.memory_space<vmem>>, vector<1x1x1x3x16x16xf32>
    %489 = vector.shape_cast %488 : vector<1x1x1x3x16x16xf32> to vector<3x16x16xf32>
    %490 = arith.subf %489, %145 : vector<3x16x16xf32>
    %491 = math.exp %490 : vector<3x16x16xf32>
    %492 = arith.addf %484, %491 : vector<3x16x16xf32>
    %493 = vector.extract_strided_slice %439 {offsets = [0, 6, 0], sizes = [3, 16, 16], strides = [1, 1, 1]} : vector<3x22x16xf32> to vector<3x16x16xf32>
    %494 = arith.mulf %491, %493 : vector<3x16x16xf32>
    %495 = arith.addf %487, %494 : vector<3x16x16xf32>
    %c0_528 = arith.constant 0 : index
    %c0_529 = arith.constant 0 : index
    %c0_530 = arith.constant 0 : index
    %c0_531 = arith.constant 0 : index
    %c6_532 = arith.constant 6 : index
    %496 = vector.load %arg3[%c0_528, %c0_529, %c0_530, %c0_531, %c6_532] : memref<1x1x3x22x22xf32, #tpu.memory_space<vmem>>, vector<1x1x3x22x16xf32>
    %497 = vector.shape_cast %496 : vector<1x1x3x22x16xf32> to vector<3x22x16xf32>
    %c0_533 = arith.constant 0 : index
    %c0_534 = arith.constant 0 : index
    %c6_535 = arith.constant 6 : index
    %c0_536 = arith.constant 0 : index
    %c0_537 = arith.constant 0 : index
    %c0_538 = arith.constant 0 : index
    %498 = vector.load %arg4[%c0_533, %c0_534, %c6_535, %c0_536, %c0_537, %c0_538] : memref<1x1x49x3x16x16xf32, #tpu.memory_space<vmem>>, vector<1x1x1x3x16x16xf32>
    %499 = vector.shape_cast %498 : vector<1x1x1x3x16x16xf32> to vector<3x16x16xf32>
    %500 = arith.subf %499, %145 : vector<3x16x16xf32>
    %501 = math.exp %500 : vector<3x16x16xf32>
    %502 = arith.addf %492, %501 : vector<3x16x16xf32>
    %503 = vector.extract_strided_slice %497 {offsets = [0, 0, 0], sizes = [3, 16, 16], strides = [1, 1, 1]} : vector<3x22x16xf32> to vector<3x16x16xf32>
    %504 = arith.mulf %501, %503 : vector<3x16x16xf32>
    %505 = arith.addf %495, %504 : vector<3x16x16xf32>
    %c0_539 = arith.constant 0 : index
    %c0_540 = arith.constant 0 : index
    %c13_541 = arith.constant 13 : index
    %c0_542 = arith.constant 0 : index
    %c0_543 = arith.constant 0 : index
    %c0_544 = arith.constant 0 : index
    %506 = vector.load %arg4[%c0_539, %c0_540, %c13_541, %c0_542, %c0_543, %c0_544] : memref<1x1x49x3x16x16xf32, #tpu.memory_space<vmem>>, vector<1x1x1x3x16x16xf32>
    %507 = vector.shape_cast %506 : vector<1x1x1x3x16x16xf32> to vector<3x16x16xf32>
    %508 = arith.subf %507, %145 : vector<3x16x16xf32>
    %509 = math.exp %508 : vector<3x16x16xf32>
    %510 = arith.addf %502, %509 : vector<3x16x16xf32>
    %511 = vector.extract_strided_slice %497 {offsets = [0, 1, 0], sizes = [3, 16, 16], strides = [1, 1, 1]} : vector<3x22x16xf32> to vector<3x16x16xf32>
    %512 = arith.mulf %509, %511 : vector<3x16x16xf32>
    %513 = arith.addf %505, %512 : vector<3x16x16xf32>
    %c0_545 = arith.constant 0 : index
    %c0_546 = arith.constant 0 : index
    %c20_547 = arith.constant 20 : index
    %c0_548 = arith.constant 0 : index
    %c0_549 = arith.constant 0 : index
    %c0_550 = arith.constant 0 : index
    %514 = vector.load %arg4[%c0_545, %c0_546, %c20_547, %c0_548, %c0_549, %c0_550] : memref<1x1x49x3x16x16xf32, #tpu.memory_space<vmem>>, vector<1x1x1x3x16x16xf32>
    %515 = vector.shape_cast %514 : vector<1x1x1x3x16x16xf32> to vector<3x16x16xf32>
    %516 = arith.subf %515, %145 : vector<3x16x16xf32>
    %517 = math.exp %516 : vector<3x16x16xf32>
    %518 = arith.addf %510, %517 : vector<3x16x16xf32>
    %519 = vector.extract_strided_slice %497 {offsets = [0, 2, 0], sizes = [3, 16, 16], strides = [1, 1, 1]} : vector<3x22x16xf32> to vector<3x16x16xf32>
    %520 = arith.mulf %517, %519 : vector<3x16x16xf32>
    %521 = arith.addf %513, %520 : vector<3x16x16xf32>
    %c0_551 = arith.constant 0 : index
    %c0_552 = arith.constant 0 : index
    %c27_553 = arith.constant 27 : index
    %c0_554 = arith.constant 0 : index
    %c0_555 = arith.constant 0 : index
    %c0_556 = arith.constant 0 : index
    %522 = vector.load %arg4[%c0_551, %c0_552, %c27_553, %c0_554, %c0_555, %c0_556] : memref<1x1x49x3x16x16xf32, #tpu.memory_space<vmem>>, vector<1x1x1x3x16x16xf32>
    %523 = vector.shape_cast %522 : vector<1x1x1x3x16x16xf32> to vector<3x16x16xf32>
    %524 = arith.subf %523, %145 : vector<3x16x16xf32>
    %525 = math.exp %524 : vector<3x16x16xf32>
    %526 = arith.addf %518, %525 : vector<3x16x16xf32>
    %527 = vector.extract_strided_slice %497 {offsets = [0, 3, 0], sizes = [3, 16, 16], strides = [1, 1, 1]} : vector<3x22x16xf32> to vector<3x16x16xf32>
    %528 = arith.mulf %525, %527 : vector<3x16x16xf32>
    %529 = arith.addf %521, %528 : vector<3x16x16xf32>
    %c0_557 = arith.constant 0 : index
    %c0_558 = arith.constant 0 : index
    %c34_559 = arith.constant 34 : index
    %c0_560 = arith.constant 0 : index
    %c0_561 = arith.constant 0 : index
    %c0_562 = arith.constant 0 : index
    %530 = vector.load %arg4[%c0_557, %c0_558, %c34_559, %c0_560, %c0_561, %c0_562] : memref<1x1x49x3x16x16xf32, #tpu.memory_space<vmem>>, vector<1x1x1x3x16x16xf32>
    %531 = vector.shape_cast %530 : vector<1x1x1x3x16x16xf32> to vector<3x16x16xf32>
    %532 = arith.subf %531, %145 : vector<3x16x16xf32>
    %533 = math.exp %532 : vector<3x16x16xf32>
    %534 = arith.addf %526, %533 : vector<3x16x16xf32>
    %535 = vector.extract_strided_slice %497 {offsets = [0, 4, 0], sizes = [3, 16, 16], strides = [1, 1, 1]} : vector<3x22x16xf32> to vector<3x16x16xf32>
    %536 = arith.mulf %533, %535 : vector<3x16x16xf32>
    %537 = arith.addf %529, %536 : vector<3x16x16xf32>
    %c0_563 = arith.constant 0 : index
    %c0_564 = arith.constant 0 : index
    %c41_565 = arith.constant 41 : index
    %c0_566 = arith.constant 0 : index
    %c0_567 = arith.constant 0 : index
    %c0_568 = arith.constant 0 : index
    %538 = vector.load %arg4[%c0_563, %c0_564, %c41_565, %c0_566, %c0_567, %c0_568] : memref<1x1x49x3x16x16xf32, #tpu.memory_space<vmem>>, vector<1x1x1x3x16x16xf32>
    %539 = vector.shape_cast %538 : vector<1x1x1x3x16x16xf32> to vector<3x16x16xf32>
    %540 = arith.subf %539, %145 : vector<3x16x16xf32>
    %541 = math.exp %540 : vector<3x16x16xf32>
    %542 = arith.addf %534, %541 : vector<3x16x16xf32>
    %543 = vector.extract_strided_slice %497 {offsets = [0, 5, 0], sizes = [3, 16, 16], strides = [1, 1, 1]} : vector<3x22x16xf32> to vector<3x16x16xf32>
    %544 = arith.mulf %541, %543 : vector<3x16x16xf32>
    %545 = arith.addf %537, %544 : vector<3x16x16xf32>
    %c0_569 = arith.constant 0 : index
    %c0_570 = arith.constant 0 : index
    %c48_571 = arith.constant 48 : index
    %c0_572 = arith.constant 0 : index
    %c0_573 = arith.constant 0 : index
    %c0_574 = arith.constant 0 : index
    %546 = vector.load %arg4[%c0_569, %c0_570, %c48_571, %c0_572, %c0_573, %c0_574] : memref<1x1x49x3x16x16xf32, #tpu.memory_space<vmem>>, vector<1x1x1x3x16x16xf32>
    %547 = vector.shape_cast %546 : vector<1x1x1x3x16x16xf32> to vector<3x16x16xf32>
    %548 = arith.subf %547, %145 : vector<3x16x16xf32>
    %549 = math.exp %548 : vector<3x16x16xf32>
    %550 = arith.addf %542, %549 : vector<3x16x16xf32>
    %551 = vector.extract_strided_slice %497 {offsets = [0, 6, 0], sizes = [3, 16, 16], strides = [1, 1, 1]} : vector<3x22x16xf32> to vector<3x16x16xf32>
    %552 = arith.mulf %549, %551 : vector<3x16x16xf32>
    %553 = arith.addf %545, %552 : vector<3x16x16xf32>
    %554 = tpu.reciprocal %550 : vector<3x16x16xf32> -> vector<3x16x16xf32>
    %555 = arith.mulf %553, %554 : vector<3x16x16xf32>
    %c0_575 = arith.constant 0 : index
    %c0_576 = arith.constant 0 : index
    %c0_577 = arith.constant 0 : index
    %c0_578 = arith.constant 0 : index
    %c0_579 = arith.constant 0 : index
    %556 = vector.load %arg5[%c0_575, %c0_576, %c0_577, %c0_578, %c0_579] : memref<1x1x3x16x16xf32, #tpu.memory_space<vmem>>, vector<1x1x3x16x16xf32>
    %557 = vector.shape_cast %556 : vector<1x1x3x16x16xf32> to vector<3x16x16xf32>
    %558 = vector.shape_cast %555 : vector<3x16x16xf32> to vector<1x1x3x16x16xf32>
    tpu.vector_store %arg5[%c0_575, %c0_576, %c0_577, %c0_578, %c0_579], %558 {strides = array<i32>} : memref<1x1x3x16x16xf32, #tpu.memory_space<vmem>>, vector<1x1x3x16x16xf32>,
    return
  }
  func.func @transform_0(%arg0: i32, %arg1: i32, %arg2: i32) -> (i32, i32, i32, i32, i32) {
    %c0_i32 = arith.constant 0 : i32
    %c0_i32_0 = arith.constant 0 : i32
    %c0_i32_1 = arith.constant 0 : i32
    %c0_i32_2 = arith.constant 0 : i32
    return %arg0, %arg1, %c0_i32, %c0_i32_0, %c0_i32_1 : i32, i32, i32, i32, i32
  }
  func.func @transform_1(%arg0: i32, %arg1: i32, %arg2: i32) -> (i32, i32, i32, i32, i32, i32) {
    %c0_i32 = arith.constant 0 : i32
    %c0_i32_0 = arith.constant 0 : i32
    %c0_i32_1 = arith.constant 0 : i32
    %c0_i32_2 = arith.constant 0 : i32
    return %arg0, %arg1, %c0_i32, %c0_i32_0, %arg2, %c0_i32_1 : i32, i32, i32, i32, i32, i32
  }
  func.func @transform_2(%arg0: i32, %arg1: i32, %arg2: i32) -> (i32, i32, i32, i32, i32) {
    %c0_i32 = arith.constant 0 : i32
    %c0_i32_0 = arith.constant 0 : i32
    %c0_i32_1 = arith.constant 0 : i32
    return %arg0, %arg1, %c0_i32, %arg2, %c0_i32_0 : i32, i32, i32, i32, i32
  }
}

</mosaic_0001>

<llo_original>
// kernel: tpu_custom_call.1
$region0: #{tpu_custom_call.1}
  #allocation0 [shape = 'u32[]', space=smem, size = 0x4, offset = 0x4, fixed_abs, tag = 'smem constant byte address 0x4 - core index']
  #allocation1 [shape = 'u32[72,128]{1,0:T(1,128)}', space=vmem, size = 0x9000, scoped, tag = 'internal scratch']
  %s0 = inlined_call_operand.vmem [shape: f32[2,1,3,22,22], index: 0, kind: input, shape index: {}]
  %s1 = inlined_call_operand.vmem [shape: f32[2,1,49,3,16,16], index: 1, kind: input, shape index: {}]
  %s2 = inlined_call_operand.hbm [shape: f32[2,1,3,16,16], index: 2, kind: output, shape index: {}]
  %s3 = sld [smem:[#allocation0]]
  $region41: #{tpu_custom_call.1} parent=0
    _
  %s5 = ssub.s32 1, %s3
  %s6 = scalar_select 0, %s5, %s3
  $region1: #{tpu_custom_call.1} parent=0
    #allocation2 [shape = 'u8[49152]{0}', space=vmem, size = 0xc000, scoped, tag = 'output window, operand 0']
    #allocation3 [shape = 's32[2]{0}', space=sflag, size = 0x8, scoped, tag = 'scoped memory for tpu_custom_call.1']
    %7 = vsyncpa [#allocation3], 0
    %s8 = scalar_lea.sflag [#allocation3], 1
    %9 = vsyncpa %s8, 0
    loop: start=0, step=1, limit=4
    $region2: #{tpu_custom_call.1} parent=1 // loop_pre_header
      _
    $region3: #{tpu_custom_call.1} parent=1 // loop_header
      %s11 = sphi 0, %s15
      %p12 = scmp.ge.s32.totalorder %s11, 4
      %s18 = sphi 0, %s37
      %s19 = sphi 0, %s33
      %s20 = sphi 0, %s29
      %s21 = sphi 0, %s18
      %s22 = sphi 0, %s19
      %s23 = sphi 0, %s20
      %s24 = sphi 0, %s21
      %s25 = sphi 0, %s22
      %s26 = sphi 0, %s23
      %s42 = sphi 0, %s44
      %s45 = sphi 0, %s42
      %s46 = sphi 0, %s45
      %s62 = sphi 0, %s46
      %s72 = sphi 0, %s74
      %s75 = sphi 0, %s72
      %s76 = sphi 0, %s75
      %s92 = sphi 0, %s76
      %s102 = sphi 0, %s104
      %s105 = sphi 0, %s102
      %s106 = sphi 0, %s105
      %s122 = sphi 0, %s106
    $region4: #{tpu_custom_call.1} parent=1 // loop_header_branch
      %14 = sbr.rel (%p12) target = $region8
    $region5: #{tpu_custom_call.1} parent=1 // loop_body
      %s16 = ssub.s32 %s11, 1
      %s17 = ssub.s32 %s11, 2
      %s27 = sadd.s32 1, %s20
      %p28 = scmp.ge.s32.totalorder %s27, 1
      %s29 = scalar_select %p28, 0, %s27
      %s30 = sadd.s32 1, %s19
      %s31 = scalar_select %p28, %s30, %s19
      %p32 = scmp.ge.s32.totalorder %s31, 1
      %s33 = scalar_select %p32, 0, %s31
      %s34 = sadd.s32 1, %s18
      %s35 = scalar_select %p32, %s34, %s18
      %p36 = scmp.ge.s32.totalorder %s35, 2
      %s37 = scalar_select %p36, 0, %s35
      %s38 = ssub.s32 %s18, %s37
      %s39 = ssub.s32 %s19, %s33
      %s40 = sor.u32 %s38, %s39
      %p41 = scmp.eq.s32.totalorder %s40, 0
      %s43 = sadd.s32 %s42, 1
      %s44 = scalar_select %p41, %s42, %s43
      %p47 = pneg %p41
      %p48 = scmp.eq.s32.totalorder %s11, 1
      %p49 = por %p47, %p48
      %p50 = scmp.ne.s32.totalorder %s42, %s45
      %p51 = scmp.eq.s32.totalorder %s11, 0
      %p52 = por %p50, %p51
      %p53 = scmp.ne.s32.totalorder %s42, %s45
      %p54 = scmp.eq.s32.totalorder %s16, 1
      %p55 = por %p53, %p54
      %p56 = scmp.ne.s32.totalorder %s45, %s46
      %p57 = scmp.eq.s32.totalorder %s16, 0
      %p58 = por %p56, %p57
      %p59 = scmp.ne.s32.totalorder %s45, %s46
      %p60 = scmp.eq.s32.totalorder %s17, 1
      %p61 = por %p59, %p60
      %p63 = scmp.ne.s32.totalorder %s46, %s62
      %p64 = scmp.eq.s32.totalorder %s17, 0
      %p65 = por %p63, %p64
      %s66 = ssub.s32 %s18, %s37
      %s67 = ssub.s32 %s19, %s33
      %s68 = sor.u32 %s66, %s67
      %s69 = ssub.s32 %s20, %s29
      %s70 = sor.u32 %s68, %s69
      %p71 = scmp.eq.s32.totalorder %s70, 0
      %s73 = sadd.s32 %s72, 1
      %s74 = scalar_select %p71, %s72, %s73
      %p77 = pneg %p71
      %p78 = scmp.eq.s32.totalorder %s11, 1
      %p79 = por %p77, %p78
      %p80 = scmp.ne.s32.totalorder %s72, %s75
      %p81 = scmp.eq.s32.totalorder %s11, 0
      %p82 = por %p80, %p81
      %p83 = scmp.ne.s32.totalorder %s72, %s75
      %p84 = scmp.eq.s32.totalorder %s16, 1
      %p85 = por %p83, %p84
      %p86 = scmp.ne.s32.totalorder %s75, %s76
      %p87 = scmp.eq.s32.totalorder %s16, 0
      %p88 = por %p86, %p87
      %p89 = scmp.ne.s32.totalorder %s75, %s76
      %p90 = scmp.eq.s32.totalorder %s17, 1
      %p91 = por %p89, %p90
      %p93 = scmp.ne.s32.totalorder %s76, %s92
      %p94 = scmp.eq.s32.totalorder %s17, 0
      %p95 = por %p93, %p94
      %s96 = ssub.s32 %s18, %s37
      %s97 = ssub.s32 %s19, %s33
      %s98 = sor.u32 %s96, %s97
      %s99 = ssub.s32 %s20, %s29
      %s100 = sor.u32 %s98, %s99
      %p101 = scmp.eq.s32.totalorder %s100, 0
      %s103 = sadd.s32 %s102, 1
      %s104 = scalar_select %p101, %s102, %s103
      %p107 = pneg %p101
      %p108 = scmp.eq.s32.totalorder %s11, 1
      %p109 = por %p107, %p108
      %p110 = scmp.ne.s32.totalorder %s102, %s105
      %p111 = scmp.eq.s32.totalorder %s11, 0
      %p112 = por %p110, %p111
      %p113 = scmp.ne.s32.totalorder %s102, %s105
      %p114 = scmp.eq.s32.totalorder %s16, 1
      %p115 = por %p113, %p114
      %p116 = scmp.ne.s32.totalorder %s105, %s106
      %p117 = scmp.eq.s32.totalorder %s16, 0
      %p118 = por %p116, %p117
      %p119 = scmp.ne.s32.totalorder %s105, %s106
      %p120 = scmp.eq.s32.totalorder %s17, 1
      %p121 = por %p119, %p120
      %p123 = scmp.ne.s32.totalorder %s106, %s122
      %p124 = scmp.eq.s32.totalorder %s17, 0
      %p125 = por %p123, %p124
      %p126 = scmp.le.s32.totalorder 1, %s11
      %p127 = scmp.lt.s32.totalorder %s11, 3
      %p128 = pnand %p126, %p127
      %p129 = pneg %p128
      // Predicated region
      $region9: #{tpu_custom_call.1} parent=5 // pred_check
        _
      $region10: #{tpu_custom_call.1} parent=5 // pred_check_branch
        %131 = sbr.rel (%p128) target = $region12
      $region11: #{tpu_custom_call.1} parent=5 // pred_region
        %s132 = ssub.s32 %s11, 1
        // Predicated region
        $region13: #{tpu_custom_call.1} parent=11 // pred_check
          %p133 = pneg %p58
        $region14: #{tpu_custom_call.1} parent=11 // pred_check_branch
          %135 = sbr.rel (%p133) target = $region16
        $region15: #{tpu_custom_call.1} parent=11 // pred_region
          %p136 = scmp.lt.s32.totalorder %s21, 1
          %s137 = scalar_select %p136, %s21, 1
          %p138 = scmp.lt.s32.totalorder %s22, 0
          %s139 = scalar_select %p138, %s22, 0
          %s140 = smul.addr %s139, 9
          %s141 = smul.addr %s137, 9
          %s142 = sadd.s32 %s140, %s141
          %s143 = smul.addr %s142, 8
          %s144 = scalar_lea.vmem %s0, %s143
        $region16: #{tpu_custom_call.1} parent=11 // pred_fallthru
          _
      $region12: #{tpu_custom_call.1} parent=5 // pred_fallthru
        _
      %p145 = scmp.lt.s32.totalorder %s11, 2
      // Predicated region
      $region17: #{tpu_custom_call.1} parent=5 // pred_check
        %p146 = pneg %p145
      $region18: #{tpu_custom_call.1} parent=5 // pred_check_branch
        %148 = sbr.rel (%p146) target = $region20
      $region19: #{tpu_custom_call.1} parent=5 // pred_region
        // Predicated region
        $region21: #{tpu_custom_call.1} parent=19 // pred_check
          %p149 = pneg %p82
        $region22: #{tpu_custom_call.1} parent=19 // pred_check_branch
          %151 = sbr.rel (%p149) target = $region24
        $region23: #{tpu_custom_call.1} parent=19 // pred_region
          %s152 = smul.u32 2, %s20
          %p153 = scmp.lt.s32.totalorder %s18, 1
          %s154 = scalar_select %p153, %s18, 1
          %p155 = scmp.lt.s32.totalorder %s19, 0
          %s156 = scalar_select %p155, %s19, 0
          %p157 = scmp.lt.s32.totalorder %s152, 1
          %s158 = scalar_select %p157, %s152, 1
          %s159 = smul.addr %s156, 294
          %s160 = sadd.s32 %s158, %s159
          %s161 = smul.addr %s154, 294
          %s162 = sadd.s32 %s160, %s161
          %s163 = smul.addr %s162, 8
          %s164 = scalar_lea.vmem %s1, %s163
          %s165 = smul.u32 2, %s20
        $region24: #{tpu_custom_call.1} parent=19 // pred_fallthru
          _
      $region20: #{tpu_custom_call.1} parent=5 // pred_fallthru
        _
      %p166 = scmp.le.s32.totalorder 1, %s11
      %p167 = scmp.lt.s32.totalorder %s11, 3
      %p168 = pnand %p166, %p167
      %p169 = pneg %p168
      // Predicated region
      $region25: #{tpu_custom_call.1} parent=5 // pred_check
        _
      $region26: #{tpu_custom_call.1} parent=5 // pred_check_branch
        %171 = sbr.rel (%p168) target = $region28
      $region27: #{tpu_custom_call.1} parent=5 // pred_region
        %s172 = ssub.s32 %s11, 1
        %p173 = scmp.lt.s32.totalorder %s21, 1
        %s174 = scalar_select %p173, %s21, 1
        %p175 = scmp.lt.s32.totalorder %s22, 0
        %s176 = scalar_select %p175, %s22, 0
        %s177 = smul.addr %s176, 9
        %s178 = smul.addr %s174, 9
        %s179 = sadd.s32 %s177, %s178
        %s180 = smul.addr %s179, 8
        %s181 = scalar_lea.vmem %s0, %s180
        %p182 = pneg %p58
        %p183 = pneg %p55
        %s184 = smul.u32 2, %s23
        %p185 = scmp.lt.s32.totalorder %s21, 1
        %s186 = scalar_select %p185, %s21, 1
        %p187 = scmp.lt.s32.totalorder %s22, 0
        %s188 = scalar_select %p187, %s22, 0
        %p189 = scmp.lt.s32.totalorder %s184, 1
        %s190 = scalar_select %p189, %s184, 1
        %s191 = smul.addr %s188, 294
        %s192 = sadd.s32 %s190, %s191
        %s193 = smul.addr %s186, 294
        %s194 = sadd.s32 %s192, %s193
        %s195 = smul.addr %s194, 8
        %s196 = scalar_lea.vmem %s1, %s195
        %p197 = pneg %p88
        %p198 = pneg %p85
        %p199 = pneg %p118
        %p200 = pneg %p115
        %s201 = sand.u32 %s105, 1
        %s202 = scalar_lea.sflag [#allocation3], %s201
        %s203 = sand.u32 %s105, 1
        %s204 = smul.addr %s203, 48
        %s205 = scalar_lea.vmem [#allocation2], %s204
        %p206 = scmp.lt.s32.totalorder %s21, 1
        %s207 = scalar_select %p206, %s21, 1
        %p208 = scmp.lt.s32.totalorder %s22, 0
        %s209 = scalar_select %p208, %s22, 0
        %s210 = smul.addr %s209, 9
        %s211 = smul.addr %s207, 9
        %s212 = sadd.s32 %s210, %s211
        %s213 = smul.addr %s212, 8
        %s214 = scalar_lea.vmem %s0, %s213
        %s215 = smul.u32 2, %s23
        %p216 = scmp.lt.s32.totalorder %s21, 1
        %s217 = scalar_select %p216, %s21, 1
        %p218 = scmp.lt.s32.totalorder %s22, 0
        %s219 = scalar_select %p218, %s22, 0
        %p220 = scmp.lt.s32.totalorder %s215, 1
        %s221 = scalar_select %p220, %s215, 1
        %s222 = smul.addr %s219, 294
        %s223 = sadd.s32 %s221, %s222
        %s224 = smul.addr %s217, 294
        %s225 = sadd.s32 %s223, %s224
        %s226 = smul.addr %s225, 8
        %s227 = scalar_lea.vmem %s1, %s226
        %s228 = smul.u32 2, %s23
        %s229 = smul.u32 2, %s23
        %v230 = vld [vmem:[%s227] sm:$0xff]
        %v231 = vld [vmem:[%s227 + $0x8] sm:$0xff]
        %v232 = vld [vmem:[%s227 + $0x10] sm:$0xff]
        %v233 = vld [vmem:[%s227 + $0x18] sm:$0xff]
        %v234 = vld [vmem:[%s227 + $0x20] sm:$0xff]
        %v235 = vld [vmem:[%s227 + $0x28] sm:$0xff]
        %s236 = scalar_lea.vmem %s227, 48
        %v237 = vld [vmem:[%s236] sm:$0xff]
        %v238 = vld [vmem:[%s236 + $0x8] sm:$0xff]
        %v239 = vld [vmem:[%s236 + $0x10] sm:$0xff]
        %v240 = vld [vmem:[%s236 + $0x18] sm:$0xff]
        %v241 = vld [vmem:[%s236 + $0x20] sm:$0xff]
        %v242 = vld [vmem:[%s236 + $0x28] sm:$0xff]
        %v243 = vmax.f32 %v230, %v237
        %v244 = vmax.f32 %v231, %v238
        %v245 = vmax.f32 %v232, %v239
        %v246 = vmax.f32 %v233, %v240
        %v247 = vmax.f32 %v234, %v241
        %v248 = vmax.f32 %v235, %v242
        %s249 = scalar_lea.vmem %s227, 96
        %v250 = vld [vmem:[%s249] sm:$0xff]
        %v251 = vld [vmem:[%s249 + $0x8] sm:$0xff]
        %v252 = vld [vmem:[%s249 + $0x10] sm:$0xff]
        %v253 = vld [vmem:[%s249 + $0x18] sm:$0xff]
        %v254 = vld [vmem:[%s249 + $0x20] sm:$0xff]
        %v255 = vld [vmem:[%s249 + $0x28] sm:$0xff]
        %v256 = vmax.f32 %v243, %v250
        %v257 = vmax.f32 %v244, %v251
        %v258 = vmax.f32 %v245, %v252
        %v259 = vmax.f32 %v246, %v253
        %v260 = vmax.f32 %v247, %v254
        %v261 = vmax.f32 %v248, %v255
        %s262 = scalar_lea.vmem %s227, 144
        %v263 = vld [vmem:[%s262] sm:$0xff]
        %v264 = vld [vmem:[%s262 + $0x8] sm:$0xff]
        %v265 = vld [vmem:[%s262 + $0x10] sm:$0xff]
        %v266 = vld [vmem:[%s262 + $0x18] sm:$0xff]
        %v267 = vld [vmem:[%s262 + $0x20] sm:$0xff]
        %v268 = vld [vmem:[%s262 + $0x28] sm:$0xff]
        %v269 = vmax.f32 %v256, %v263
        %v270 = vmax.f32 %v257, %v264
        %v271 = vmax.f32 %v258, %v265
        %v272 = vmax.f32 %v259, %v266
        %v273 = vmax.f32 %v260, %v267
        %v274 = vmax.f32 %v261, %v268
        %s275 = scalar_lea.vmem %s227, 192
        %v276 = vld [vmem:[%s275] sm:$0xff]
        %v277 = vld [vmem:[%s275 + $0x8] sm:$0xff]
        %v278 = vld [vmem:[%s275 + $0x10] sm:$0xff]
        %v279 = vld [vmem:[%s275 + $0x18] sm:$0xff]
        %v280 = vld [vmem:[%s275 + $0x20] sm:$0xff]
        %v281 = vld [vmem:[%s275 + $0x28] sm:$0xff]
        %v282 = vmax.f32 %v269, %v276
        %v283 = vmax.f32 %v270, %v277
        %v284 = vmax.f32 %v271, %v278
        %v285 = vmax.f32 %v272, %v279
        %v286 = vmax.f32 %v273, %v280
        %v287 = vmax.f32 %v274, %v281
        %s288 = scalar_lea.vmem %s227, 240
        %v289 = vld [vmem:[%s288] sm:$0xff]
        %v290 = vld [vmem:[%s288 + $0x8] sm:$0xff]
        %v291 = vld [vmem:[%s288 + $0x10] sm:$0xff]
        %v292 = vld [vmem:[%s288 + $0x18] sm:$0xff]
        %v293 = vld [vmem:[%s288 + $0x20] sm:$0xff]
        %v294 = vld [vmem:[%s288 + $0x28] sm:$0xff]
        %v295 = vmax.f32 %v282, %v289
        %v296 = vmax.f32 %v283, %v290
        %v297 = vmax.f32 %v284, %v291
        %v298 = vmax.f32 %v285, %v292
        %v299 = vmax.f32 %v286, %v293
        %v300 = vmax.f32 %v287, %v294
        %s301 = scalar_lea.vmem %s227, 288
        %v302 = vld [vmem:[%s301] sm:$0xff]
        %v303 = vld [vmem:[%s301 + $0x8] sm:$0xff]
        %v304 = vld [vmem:[%s301 + $0x10] sm:$0xff]
        %v305 = vld [vmem:[%s301 + $0x18] sm:$0xff]
        %v306 = vld [vmem:[%s301 + $0x20] sm:$0xff]
        %v307 = vld [vmem:[%s301 + $0x28] sm:$0xff]
        %v308 = vmax.f32 %v295, %v302
        %v309 = vmax.f32 %v296, %v303
        %v310 = vmax.f32 %v297, %v304
        %v311 = vmax.f32 %v298, %v305
        %v312 = vmax.f32 %v299, %v306
        %v313 = vmax.f32 %v300, %v307
        %s314 = scalar_lea.vmem %s227, 336
        %v315 = vld [vmem:[%s314] sm:$0xff]
        %v316 = vld [vmem:[%s314 + $0x8] sm:$0xff]
        %v317 = vld [vmem:[%s314 + $0x10] sm:$0xff]
        %v318 = vld [vmem:[%s314 + $0x18] sm:$0xff]
        %v319 = vld [vmem:[%s314 + $0x20] sm:$0xff]
        %v320 = vld [vmem:[%s314 + $0x28] sm:$0xff]
        %v321 = vmax.f32 %v308, %v315
        %v322 = vmax.f32 %v309, %v316
        %v323 = vmax.f32 %v310, %v317
        %v324 = vmax.f32 %v311, %v318
        %v325 = vmax.f32 %v312, %v319
        %v326 = vmax.f32 %v313, %v320
        %s327 = scalar_lea.vmem %s227, 384
        %v328 = vld [vmem:[%s327] sm:$0xff]
        %v329 = vld [vmem:[%s327 + $0x8] sm:$0xff]
        %v330 = vld [vmem:[%s327 + $0x10] sm:$0xff]
        %v331 = vld [vmem:[%s327 + $0x18] sm:$0xff]
        %v332 = vld [vmem:[%s327 + $0x20] sm:$0xff]
        %v333 = vld [vmem:[%s327 + $0x28] sm:$0xff]
        %v334 = vmax.f32 %v321, %v328
        %v335 = vmax.f32 %v322, %v329
        %v336 = vmax.f32 %v323, %v330
        %v337 = vmax.f32 %v324, %v331
        %v338 = vmax.f32 %v325, %v332
        %v339 = vmax.f32 %v326, %v333
        %s340 = scalar_lea.vmem %s227, 432
        %v341 = vld [vmem:[%s340] sm:$0xff]
        %v342 = vld [vmem:[%s340 + $0x8] sm:$0xff]
        %v343 = vld [vmem:[%s340 + $0x10] sm:$0xff]
        %v344 = vld [vmem:[%s340 + $0x18] sm:$0xff]
        %v345 = vld [vmem:[%s340 + $0x20] sm:$0xff]
        %v346 = vld [vmem:[%s340 + $0x28] sm:$0xff]
        %v347 = vmax.f32 %v334, %v341
        %v348 = vmax.f32 %v335, %v342
        %v349 = vmax.f32 %v336, %v343
        %v350 = vmax.f32 %v337, %v344
        %v351 = vmax.f32 %v338, %v345
        %v352 = vmax.f32 %v339, %v346
        %s353 = scalar_lea.vmem %s227, 480
        %v354 = vld [vmem:[%s353] sm:$0xff]
        %v355 = vld [vmem:[%s353 + $0x8] sm:$0xff]
        %v356 = vld [vmem:[%s353 + $0x10] sm:$0xff]
        %v357 = vld [vmem:[%s353 + $0x18] sm:$0xff]
        %v358 = vld [vmem:[%s353 + $0x20] sm:$0xff]
        %v359 = vld [vmem:[%s353 + $0x28] sm:$0xff]
        %v360 = vmax.f32 %v347, %v354
        %v361 = vmax.f32 %v348, %v355
        %v362 = vmax.f32 %v349, %v356
        %v363 = vmax.f32 %v350, %v357
        %v364 = vmax.f32 %v351, %v358
        %v365 = vmax.f32 %v352, %v359
        %s366 = scalar_lea.vmem %s227, 528
        %v367 = vld [vmem:[%s366] sm:$0xff]
        %v368 = vld [vmem:[%s366 + $0x8] sm:$0xff]
        %v369 = vld [vmem:[%s366 + $0x10] sm:$0xff]
        %v370 = vld [vmem:[%s366 + $0x18] sm:$0xff]
        %v371 = vld [vmem:[%s366 + $0x20] sm:$0xff]
        %v372 = vld [vmem:[%s366 + $0x28] sm:$0xff]
        %v373 = vmax.f32 %v360, %v367
        %v374 = vmax.f32 %v361, %v368
        %v375 = vmax.f32 %v362, %v369
        %v376 = vmax.f32 %v363, %v370
        %v377 = vmax.f32 %v364, %v371
        %v378 = vmax.f32 %v365, %v372
        %s379 = scalar_lea.vmem %s227, 576
        %v380 = vld [vmem:[%s379] sm:$0xff]
        %v381 = vld [vmem:[%s379 + $0x8] sm:$0xff]
        %v382 = vld [vmem:[%s379 + $0x10] sm:$0xff]
        %v383 = vld [vmem:[%s379 + $0x18] sm:$0xff]
        %v384 = vld [vmem:[%s379 + $0x20] sm:$0xff]
        %v385 = vld [vmem:[%s379 + $0x28] sm:$0xff]
        %v386 = vmax.f32 %v373, %v380
        %v387 = vmax.f32 %v374, %v381
        %v388 = vmax.f32 %v375, %v382
        %v389 = vmax.f32 %v376, %v383
        %v390 = vmax.f32 %v377, %v384
        %v391 = vmax.f32 %v378, %v385
        %s392 = scalar_lea.vmem %s227, 624
        %v393 = vld [vmem:[%s392] sm:$0xff]
        %v394 = vld [vmem:[%s392 + $0x8] sm:$0xff]
        %v395 = vld [vmem:[%s392 + $0x10] sm:$0xff]
        %v396 = vld [vmem:[%s392 + $0x18] sm:$0xff]
        %v397 = vld [vmem:[%s392 + $0x20] sm:$0xff]
        %v398 = vld [vmem:[%s392 + $0x28] sm:$0xff]
        %v399 = vmax.f32 %v386, %v393
        %v400 = vmax.f32 %v387, %v394
        %v401 = vmax.f32 %v388, %v395
        %v402 = vmax.f32 %v389, %v396
        %v403 = vmax.f32 %v390, %v397
        %v404 = vmax.f32 %v391, %v398
        %s405 = scalar_lea.vmem %s227, 672
        %v406 = vld [vmem:[%s405] sm:$0xff]
        %v407 = vld [vmem:[%s405 + $0x8] sm:$0xff]
        %v408 = vld [vmem:[%s405 + $0x10] sm:$0xff]
        %v409 = vld [vmem:[%s405 + $0x18] sm:$0xff]
        %v410 = vld [vmem:[%s405 + $0x20] sm:$0xff]
        %v411 = vld [vmem:[%s405 + $0x28] sm:$0xff]
        %v412 = vmax.f32 %v399, %v406
        %v413 = vmax.f32 %v400, %v407
        %v414 = vmax.f32 %v401, %v408
        %v415 = vmax.f32 %v402, %v409
        %v416 = vmax.f32 %v403, %v410
        %v417 = vmax.f32 %v404, %v411
        %s418 = scalar_lea.vmem %s227, 720
        %v419 = vld [vmem:[%s418] sm:$0xff]
        %v420 = vld [vmem:[%s418 + $0x8] sm:$0xff]
        %v421 = vld [vmem:[%s418 + $0x10] sm:$0xff]
        %v422 = vld [vmem:[%s418 + $0x18] sm:$0xff]
        %v423 = vld [vmem:[%s418 + $0x20] sm:$0xff]
        %v424 = vld [vmem:[%s418 + $0x28] sm:$0xff]
        %v425 = vmax.f32 %v412, %v419
        %v426 = vmax.f32 %v413, %v420
        %v427 = vmax.f32 %v414, %v421
        %v428 = vmax.f32 %v415, %v422
        %v429 = vmax.f32 %v416, %v423
        %v430 = vmax.f32 %v417, %v424
        %s431 = scalar_lea.vmem %s227, 768
        %v432 = vld [vmem:[%s431] sm:$0xff]
        %v433 = vld [vmem:[%s431 + $0x8] sm:$0xff]
        %v434 = vld [vmem:[%s431 + $0x10] sm:$0xff]
        %v435 = vld [vmem:[%s431 + $0x18] sm:$0xff]
        %v436 = vld [vmem:[%s431 + $0x20] sm:$0xff]
        %v437 = vld [vmem:[%s431 + $0x28] sm:$0xff]
        %v438 = vmax.f32 %v425, %v432
        %v439 = vmax.f32 %v426, %v433
        %v440 = vmax.f32 %v427, %v434
        %v441 = vmax.f32 %v428, %v435
        %v442 = vmax.f32 %v429, %v436
        %v443 = vmax.f32 %v430, %v437
        %s444 = scalar_lea.vmem %s227, 816
        %v445 = vld [vmem:[%s444] sm:$0xff]
        %v446 = vld [vmem:[%s444 + $0x8] sm:$0xff]
        %v447 = vld [vmem:[%s444 + $0x10] sm:$0xff]
        %v448 = vld [vmem:[%s444 + $0x18] sm:$0xff]
        %v449 = vld [vmem:[%s444 + $0x20] sm:$0xff]
        %v450 = vld [vmem:[%s444 + $0x28] sm:$0xff]
        %v451 = vmax.f32 %v438, %v445
        %v452 = vmax.f32 %v439, %v446
        %v453 = vmax.f32 %v440, %v447
        %v454 = vmax.f32 %v441, %v448
        %v455 = vmax.f32 %v442, %v449
        %v456 = vmax.f32 %v443, %v450
        %s457 = scalar_lea.vmem %s227, 864
        %v458 = vld [vmem:[%s457] sm:$0xff]
        %v459 = vld [vmem:[%s457 + $0x8] sm:$0xff]
        %v460 = vld [vmem:[%s457 + $0x10] sm:$0xff]
        %v461 = vld [vmem:[%s457 + $0x18] sm:$0xff]
        %v462 = vld [vmem:[%s457 + $0x20] sm:$0xff]
        %v463 = vld [vmem:[%s457 + $0x28] sm:$0xff]
        %v464 = vmax.f32 %v451, %v458
        %v465 = vmax.f32 %v452, %v459
        %v466 = vmax.f32 %v453, %v460
        %v467 = vmax.f32 %v454, %v461
        %v468 = vmax.f32 %v455, %v462
        %v469 = vmax.f32 %v456, %v463
        %s470 = scalar_lea.vmem %s227, 912
        %v471 = vld [vmem:[%s470] sm:$0xff]
        %v472 = vld [vmem:[%s470 + $0x8] sm:$0xff]
        %v473 = vld [vmem:[%s470 + $0x10] sm:$0xff]
        %v474 = vld [vmem:[%s470 + $0x18] sm:$0xff]
        %v475 = vld [vmem:[%s470 + $0x20] sm:$0xff]
        %v476 = vld [vmem:[%s470 + $0x28] sm:$0xff]
        %v477 = vmax.f32 %v464, %v471
        %v478 = vmax.f32 %v465, %v472
        %v479 = vmax.f32 %v466, %v473
        %v480 = vmax.f32 %v467, %v474
        %v481 = vmax.f32 %v468, %v475
        %v482 = vmax.f32 %v469, %v476
        %s483 = scalar_lea.vmem %s227, 960
        %v484 = vld [vmem:[%s483] sm:$0xff]
        %v485 = vld [vmem:[%s483 + $0x8] sm:$0xff]
        %v486 = vld [vmem:[%s483 + $0x10] sm:$0xff]
        %v487 = vld [vmem:[%s483 + $0x18] sm:$0xff]
        %v488 = vld [vmem:[%s483 + $0x20] sm:$0xff]
        %v489 = vld [vmem:[%s483 + $0x28] sm:$0xff]
        %v490 = vmax.f32 %v477, %v484
        %v491 = vmax.f32 %v478, %v485
        %v492 = vmax.f32 %v479, %v486
        %v493 = vmax.f32 %v480, %v487
        %v494 = vmax.f32 %v481, %v488
        %v495 = vmax.f32 %v482, %v489
        %s496 = scalar_lea.vmem %s227, 1008
        %v497 = vld [vmem:[%s496] sm:$0xff]
        %v498 = vld [vmem:[%s496 + $0x8] sm:$0xff]
        %v499 = vld [vmem:[%s496 + $0x10] sm:$0xff]
        %v500 = vld [vmem:[%s496 + $0x18] sm:$0xff]
        %v501 = vld [vmem:[%s496 + $0x20] sm:$0xff]
        %v502 = vld [vmem:[%s496 + $0x28] sm:$0xff]
        %v503 = vmax.f32 %v490, %v497
        %v504 = vmax.f32 %v491, %v498
        %v505 = vmax.f32 %v492, %v499
        %v506 = vmax.f32 %v493, %v500
        %v507 = vmax.f32 %v494, %v501
        %v508 = vmax.f32 %v495, %v502
        %s509 = scalar_lea.vmem %s227, 1056
        %v510 = vld [vmem:[%s509] sm:$0xff]
        %v511 = vld [vmem:[%s509 + $0x8] sm:$0xff]
        %v512 = vld [vmem:[%s509 + $0x10] sm:$0xff]
        %v513 = vld [vmem:[%s509 + $0x18] sm:$0xff]
        %v514 = vld [vmem:[%s509 + $0x20] sm:$0xff]
        %v515 = vld [vmem:[%s509 + $0x28] sm:$0xff]
        %v516 = vmax.f32 %v503, %v510
        %v517 = vmax.f32 %v504, %v511
        %v518 = vmax.f32 %v505, %v512
        %v519 = vmax.f32 %v506, %v513
        %v520 = vmax.f32 %v507, %v514
        %v521 = vmax.f32 %v508, %v515
        %s522 = scalar_lea.vmem %s227, 1104
        %v523 = vld [vmem:[%s522] sm:$0xff]
        %v524 = vld [vmem:[%s522 + $0x8] sm:$0xff]
        %v525 = vld [vmem:[%s522 + $0x10] sm:$0xff]
        %v526 = vld [vmem:[%s522 + $0x18] sm:$0xff]
        %v527 = vld [vmem:[%s522 + $0x20] sm:$0xff]
        %v528 = vld [vmem:[%s522 + $0x28] sm:$0xff]
        %v529 = vmax.f32 %v516, %v523
        %v530 = vmax.f32 %v517, %v524
        %v531 = vmax.f32 %v518, %v525
        %v532 = vmax.f32 %v519, %v526
        %v533 = vmax.f32 %v520, %v527
        %v534 = vmax.f32 %v521, %v528
        %s535 = scalar_lea.vmem %s227, 1152
        %v536 = vld [vmem:[%s535] sm:$0xff]
        %v537 = vld [vmem:[%s535 + $0x8] sm:$0xff]
        %v538 = vld [vmem:[%s535 + $0x10] sm:$0xff]
        %v539 = vld [vmem:[%s535 + $0x18] sm:$0xff]
        %v540 = vld [vmem:[%s535 + $0x20] sm:$0xff]
        %v541 = vld [vmem:[%s535 + $0x28] sm:$0xff]
        %v542 = vmax.f32 %v529, %v536
        %v543 = vmax.f32 %v530, %v537
        %v544 = vmax.f32 %v531, %v538
        %v545 = vmax.f32 %v532, %v539
        %v546 = vmax.f32 %v533, %v540
        %v547 = vmax.f32 %v534, %v541
        %s548 = scalar_lea.vmem %s227, 1200
        %v549 = vld [vmem:[%s548] sm:$0xff]
        %v550 = vld [vmem:[%s548 + $0x8] sm:$0xff]
        %v551 = vld [vmem:[%s548 + $0x10] sm:$0xff]
        %v552 = vld [vmem:[%s548 + $0x18] sm:$0xff]
        %v553 = vld [vmem:[%s548 + $0x20] sm:$0xff]
        %v554 = vld [vmem:[%s548 + $0x28] sm:$0xff]
        %v555 = vmax.f32 %v542, %v549
        %v556 = vmax.f32 %v543, %v550
        %v557 = vmax.f32 %v544, %v551
        %v558 = vmax.f32 %v545, %v552
        %v559 = vmax.f32 %v546, %v553
        %v560 = vmax.f32 %v547, %v554
        %s561 = scalar_lea.vmem %s227, 1248
        %v562 = vld [vmem:[%s561] sm:$0xff]
        %v563 = vld [vmem:[%s561 + $0x8] sm:$0xff]
        %v564 = vld [vmem:[%s561 + $0x10] sm:$0xff]
        %v565 = vld [vmem:[%s561 + $0x18] sm:$0xff]
        %v566 = vld [vmem:[%s561 + $0x20] sm:$0xff]
        %v567 = vld [vmem:[%s561 + $0x28] sm:$0xff]
        %v568 = vmax.f32 %v555, %v562
        %v569 = vmax.f32 %v556, %v563
        %v570 = vmax.f32 %v557, %v564
        %v571 = vmax.f32 %v558, %v565
        %v572 = vmax.f32 %v559, %v566
        %v573 = vmax.f32 %v560, %v567
        %s574 = scalar_lea.vmem %s227, 1296
        %v575 = vld [vmem:[%s574] sm:$0xff]
        %v576 = vld [vmem:[%s574 + $0x8] sm:$0xff]
        %v577 = vld [vmem:[%s574 + $0x10] sm:$0xff]
        %v578 = vld [vmem:[%s574 + $0x18] sm:$0xff]
        %v579 = vld [vmem:[%s574 + $0x20] sm:$0xff]
        %v580 = vld [vmem:[%s574 + $0x28] sm:$0xff]
        %v581 = vmax.f32 %v568, %v575
        %v582 = vmax.f32 %v569, %v576
        %v583 = vmax.f32 %v570, %v577
        %v584 = vmax.f32 %v571, %v578
        %v585 = vmax.f32 %v572, %v579
        %v586 = vmax.f32 %v573, %v580
        %s587 = scalar_lea.vmem %s227, 1344
        %v588 = vld [vmem:[%s587] sm:$0xff]
        %v589 = vld [vmem:[%s587 + $0x8] sm:$0xff]
        %v590 = vld [vmem:[%s587 + $0x10] sm:$0xff]
        %v591 = vld [vmem:[%s587 + $0x18] sm:$0xff]
        %v592 = vld [vmem:[%s587 + $0x20] sm:$0xff]
        %v593 = vld [vmem:[%s587 + $0x28] sm:$0xff]
        %v594 = vmax.f32 %v581, %v588
        %v595 = vmax.f32 %v582, %v589
        %v596 = vmax.f32 %v583, %v590
        %v597 = vmax.f32 %v584, %v591
        %v598 = vmax.f32 %v585, %v592
        %v599 = vmax.f32 %v586, %v593
        %s600 = scalar_lea.vmem %s227, 1392
        %v601 = vld [vmem:[%s600] sm:$0xff]
        %v602 = vld [vmem:[%s600 + $0x8] sm:$0xff]
        %v603 = vld [vmem:[%s600 + $0x10] sm:$0xff]
        %v604 = vld [vmem:[%s600 + $0x18] sm:$0xff]
        %v605 = vld [vmem:[%s600 + $0x20] sm:$0xff]
        %v606 = vld [vmem:[%s600 + $0x28] sm:$0xff]
        %v607 = vmax.f32 %v594, %v601
        %v608 = vmax.f32 %v595, %v602
        %v609 = vmax.f32 %v596, %v603
        %v610 = vmax.f32 %v597, %v604
        %v611 = vmax.f32 %v598, %v605
        %v612 = vmax.f32 %v599, %v606
        %s613 = scalar_lea.vmem %s227, 1440
        %v614 = vld [vmem:[%s613] sm:$0xff]
        %v615 = vld [vmem:[%s613 + $0x8] sm:$0xff]
        %v616 = vld [vmem:[%s613 + $0x10] sm:$0xff]
        %v617 = vld [vmem:[%s613 + $0x18] sm:$0xff]
        %v618 = vld [vmem:[%s613 + $0x20] sm:$0xff]
        %v619 = vld [vmem:[%s613 + $0x28] sm:$0xff]
        %v620 = vmax.f32 %v607, %v614
        %v621 = vmax.f32 %v608, %v615
        %v622 = vmax.f32 %v609, %v616
        %v623 = vmax.f32 %v610, %v617
        %v624 = vmax.f32 %v611, %v618
        %v625 = vmax.f32 %v612, %v619
        %s626 = scalar_lea.vmem %s227, 1488
        %v627 = vld [vmem:[%s626] sm:$0xff]
        %v628 = vld [vmem:[%s626 + $0x8] sm:$0xff]
        %v629 = vld [vmem:[%s626 + $0x10] sm:$0xff]
        %v630 = vld [vmem:[%s626 + $0x18] sm:$0xff]
        %v631 = vld [vmem:[%s626 + $0x20] sm:$0xff]
        %v632 = vld [vmem:[%s626 + $0x28] sm:$0xff]
        %v633 = vmax.f32 %v620, %v627
        %v634 = vmax.f32 %v621, %v628
        %v635 = vmax.f32 %v622, %v629
        %v636 = vmax.f32 %v623, %v630
        %v637 = vmax.f32 %v624, %v631
        %v638 = vmax.f32 %v625, %v632
        %s639 = scalar_lea.vmem %s227, 1536
        %v640 = vld [vmem:[%s639] sm:$0xff]
        %v641 = vld [vmem:[%s639 + $0x8] sm:$0xff]
        %v642 = vld [vmem:[%s639 + $0x10] sm:$0xff]
        %v643 = vld [vmem:[%s639 + $0x18] sm:$0xff]
        %v644 = vld [vmem:[%s639 + $0x20] sm:$0xff]
        %v645 = vld [vmem:[%s639 + $0x28] sm:$0xff]
        %v646 = vmax.f32 %v633, %v640
        %v647 = vmax.f32 %v634, %v641
        %v648 = vmax.f32 %v635, %v642
        %v649 = vmax.f32 %v636, %v643
        %v650 = vmax.f32 %v637, %v644
        %v651 = vmax.f32 %v638, %v645
        %s652 = scalar_lea.vmem %s227, 1584
        %v653 = vld [vmem:[%s652] sm:$0xff]
        %v654 = vld [vmem:[%s652 + $0x8] sm:$0xff]
        %v655 = vld [vmem:[%s652 + $0x10] sm:$0xff]
        %v656 = vld [vmem:[%s652 + $0x18] sm:$0xff]
        %v657 = vld [vmem:[%s652 + $0x20] sm:$0xff]
        %v658 = vld [vmem:[%s652 + $0x28] sm:$0xff]
        %v659 = vmax.f32 %v646, %v653
        %v660 = vmax.f32 %v647, %v654
        %v661 = vmax.f32 %v648, %v655
        %v662 = vmax.f32 %v649, %v656
        %v663 = vmax.f32 %v650, %v657
        %v664 = vmax.f32 %v651, %v658
        %s665 = scalar_lea.vmem %s227, 1632
        %v666 = vld [vmem:[%s665] sm:$0xff]
        %v667 = vld [vmem:[%s665 + $0x8] sm:$0xff]
        %v668 = vld [vmem:[%s665 + $0x10] sm:$0xff]
        %v669 = vld [vmem:[%s665 + $0x18] sm:$0xff]
        %v670 = vld [vmem:[%s665 + $0x20] sm:$0xff]
        %v671 = vld [vmem:[%s665 + $0x28] sm:$0xff]
        %v672 = vmax.f32 %v659, %v666
        %v673 = vmax.f32 %v660, %v667
        %v674 = vmax.f32 %v661, %v668
        %v675 = vmax.f32 %v662, %v669
        %v676 = vmax.f32 %v663, %v670
        %v677 = vmax.f32 %v664, %v671
        %s678 = scalar_lea.vmem %s227, 1680
        %v679 = vld [vmem:[%s678] sm:$0xff]
        %v680 = vld [vmem:[%s678 + $0x8] sm:$0xff]
        %v681 = vld [vmem:[%s678 + $0x10] sm:$0xff]
        %v682 = vld [vmem:[%s678 + $0x18] sm:$0xff]
        %v683 = vld [vmem:[%s678 + $0x20] sm:$0xff]
        %v684 = vld [vmem:[%s678 + $0x28] sm:$0xff]
        %v685 = vmax.f32 %v672, %v679
        %v686 = vmax.f32 %v673, %v680
        %v687 = vmax.f32 %v674, %v681
        %v688 = vmax.f32 %v675, %v682
        %v689 = vmax.f32 %v676, %v683
        %v690 = vmax.f32 %v677, %v684
        %s691 = scalar_lea.vmem %s227, 1728
        %v692 = vld [vmem:[%s691] sm:$0xff]
        %v693 = vld [vmem:[%s691 + $0x8] sm:$0xff]
        %v694 = vld [vmem:[%s691 + $0x10] sm:$0xff]
        %v695 = vld [vmem:[%s691 + $0x18] sm:$0xff]
        %v696 = vld [vmem:[%s691 + $0x20] sm:$0xff]
        %v697 = vld [vmem:[%s691 + $0x28] sm:$0xff]
        %v698 = vmax.f32 %v685, %v692
        %v699 = vmax.f32 %v686, %v693
        %v700 = vmax.f32 %v687, %v694
        %v701 = vmax.f32 %v688, %v695
        %v702 = vmax.f32 %v689, %v696
        %v703 = vmax.f32 %v690, %v697
        %s704 = scalar_lea.vmem %s227, 1776
        %v705 = vld [vmem:[%s704] sm:$0xff]
        %v706 = vld [vmem:[%s704 + $0x8] sm:$0xff]
        %v707 = vld [vmem:[%s704 + $0x10] sm:$0xff]
        %v708 = vld [vmem:[%s704 + $0x18] sm:$0xff]
        %v709 = vld [vmem:[%s704 + $0x20] sm:$0xff]
        %v710 = vld [vmem:[%s704 + $0x28] sm:$0xff]
        %v711 = vmax.f32 %v698, %v705
        %v712 = vmax.f32 %v699, %v706
        %v713 = vmax.f32 %v700, %v707
        %v714 = vmax.f32 %v701, %v708
        %v715 = vmax.f32 %v702, %v709
        %v716 = vmax.f32 %v703, %v710
        %s717 = scalar_lea.vmem %s227, 1824
        %v718 = vld [vmem:[%s717] sm:$0xff]
        %v719 = vld [vmem:[%s717 + $0x8] sm:$0xff]
        %v720 = vld [vmem:[%s717 + $0x10] sm:$0xff]
        %v721 = vld [vmem:[%s717 + $0x18] sm:$0xff]
        %v722 = vld [vmem:[%s717 + $0x20] sm:$0xff]
        %v723 = vld [vmem:[%s717 + $0x28] sm:$0xff]
        %v724 = vmax.f32 %v711, %v718
        %v725 = vmax.f32 %v712, %v719
        %v726 = vmax.f32 %v713, %v720
        %v727 = vmax.f32 %v714, %v721
        %v728 = vmax.f32 %v715, %v722
        %v729 = vmax.f32 %v716, %v723
        %s730 = scalar_lea.vmem %s227, 1872
        %v731 = vld [vmem:[%s730] sm:$0xff]
        %v732 = vld [vmem:[%s730 + $0x8] sm:$0xff]
        %v733 = vld [vmem:[%s730 + $0x10] sm:$0xff]
        %v734 = vld [vmem:[%s730 + $0x18] sm:$0xff]
        %v735 = vld [vmem:[%s730 + $0x20] sm:$0xff]
        %v736 = vld [vmem:[%s730 + $0x28] sm:$0xff]
        %v737 = vmax.f32 %v724, %v731
        %v738 = vmax.f32 %v725, %v732
        %v739 = vmax.f32 %v726, %v733
        %v740 = vmax.f32 %v727, %v734
        %v741 = vmax.f32 %v728, %v735
        %v742 = vmax.f32 %v729, %v736
        %s743 = scalar_lea.vmem %s227, 1920
        %v744 = vld [vmem:[%s743] sm:$0xff]
        %v745 = vld [vmem:[%s743 + $0x8] sm:$0xff]
        %v746 = vld [vmem:[%s743 + $0x10] sm:$0xff]
        %v747 = vld [vmem:[%s743 + $0x18] sm:$0xff]
        %v748 = vld [vmem:[%s743 + $0x20] sm:$0xff]
        %v749 = vld [vmem:[%s743 + $0x28] sm:$0xff]
        %v750 = vmax.f32 %v737, %v744
        %v751 = vmax.f32 %v738, %v745
        %v752 = vmax.f32 %v739, %v746
        %v753 = vmax.f32 %v740, %v747
        %v754 = vmax.f32 %v741, %v748
        %v755 = vmax.f32 %v742, %v749
        %s756 = scalar_lea.vmem %s227, 1968
        %v757 = vld [vmem:[%s756] sm:$0xff]
        %v758 = vld [vmem:[%s756 + $0x8] sm:$0xff]
        %v759 = vld [vmem:[%s756 + $0x10] sm:$0xff]
        %v760 = vld [vmem:[%s756 + $0x18] sm:$0xff]
        %v761 = vld [vmem:[%s756 + $0x20] sm:$0xff]
        %v762 = vld [vmem:[%s756 + $0x28] sm:$0xff]
        %v763 = vmax.f32 %v750, %v757
        %v764 = vmax.f32 %v751, %v758
        %v765 = vmax.f32 %v752, %v759
        %v766 = vmax.f32 %v753, %v760
        %v767 = vmax.f32 %v754, %v761
        %v768 = vmax.f32 %v755, %v762
        %s769 = scalar_lea.vmem %s227, 2016
        %v770 = vld [vmem:[%s769] sm:$0xff]
        %v771 = vld [vmem:[%s769 + $0x8] sm:$0xff]
        %v772 = vld [vmem:[%s769 + $0x10] sm:$0xff]
        %v773 = vld [vmem:[%s769 + $0x18] sm:$0xff]
        %v774 = vld [vmem:[%s769 + $0x20] sm:$0xff]
        %v775 = vld [vmem:[%s769 + $0x28] sm:$0xff]
        %v776 = vmax.f32 %v763, %v770
        %v777 = vmax.f32 %v764, %v771
        %v778 = vmax.f32 %v765, %v772
        %v779 = vmax.f32 %v766, %v773
        %v780 = vmax.f32 %v767, %v774
        %v781 = vmax.f32 %v768, %v775
        %s782 = scalar_lea.vmem %s227, 2064
        %v783 = vld [vmem:[%s782] sm:$0xff]
        %v784 = vld [vmem:[%s782 + $0x8] sm:$0xff]
        %v785 = vld [vmem:[%s782 + $0x10] sm:$0xff]
        %v786 = vld [vmem:[%s782 + $0x18] sm:$0xff]
        %v787 = vld [vmem:[%s782 + $0x20] sm:$0xff]
        %v788 = vld [vmem:[%s782 + $0x28] sm:$0xff]
        %v789 = vmax.f32 %v776, %v783
        %v790 = vmax.f32 %v777, %v784
        %v791 = vmax.f32 %v778, %v785
        %v792 = vmax.f32 %v779, %v786
        %v793 = vmax.f32 %v780, %v787
        %v794 = vmax.f32 %v781, %v788
        %s795 = scalar_lea.vmem %s227, 2112
        %v796 = vld [vmem:[%s795] sm:$0xff]
        %v797 = vld [vmem:[%s795 + $0x8] sm:$0xff]
        %v798 = vld [vmem:[%s795 + $0x10] sm:$0xff]
        %v799 = vld [vmem:[%s795 + $0x18] sm:$0xff]
        %v800 = vld [vmem:[%s795 + $0x20] sm:$0xff]
        %v801 = vld [vmem:[%s795 + $0x28] sm:$0xff]
        %v802 = vmax.f32 %v789, %v796
        %v803 = vmax.f32 %v790, %v797
        %v804 = vmax.f32 %v791, %v798
        %v805 = vmax.f32 %v792, %v799
        %v806 = vmax.f32 %v793, %v800
        %v807 = vmax.f32 %v794, %v801
        %s808 = scalar_lea.vmem %s227, 2160
        %v809 = vld [vmem:[%s808] sm:$0xff]
        %v810 = vld [vmem:[%s808 + $0x8] sm:$0xff]
        %v811 = vld [vmem:[%s808 + $0x10] sm:$0xff]
        %v812 = vld [vmem:[%s808 + $0x18] sm:$0xff]
        %v813 = vld [vmem:[%s808 + $0x20] sm:$0xff]
        %v814 = vld [vmem:[%s808 + $0x28] sm:$0xff]
        %v815 = vmax.f32 %v802, %v809
        %v816 = vmax.f32 %v803, %v810
        %v817 = vmax.f32 %v804, %v811
        %v818 = vmax.f32 %v805, %v812
        %v819 = vmax.f32 %v806, %v813
        %v820 = vmax.f32 %v807, %v814
        %s821 = scalar_lea.vmem %s227, 2208
        %v822 = vld [vmem:[%s821] sm:$0xff]
        %v823 = vld [vmem:[%s821 + $0x8] sm:$0xff]
        %v824 = vld [vmem:[%s821 + $0x10] sm:$0xff]
        %v825 = vld [vmem:[%s821 + $0x18] sm:$0xff]
        %v826 = vld [vmem:[%s821 + $0x20] sm:$0xff]
        %v827 = vld [vmem:[%s821 + $0x28] sm:$0xff]
        %v828 = vmax.f32 %v815, %v822
        %v829 = vmax.f32 %v816, %v823
        %v830 = vmax.f32 %v817, %v824
        %v831 = vmax.f32 %v818, %v825
        %v832 = vmax.f32 %v819, %v826
        %v833 = vmax.f32 %v820, %v827
        %s834 = scalar_lea.vmem %s227, 2256
        %v835 = vld [vmem:[%s834] sm:$0xff]
        %v836 = vld [vmem:[%s834 + $0x8] sm:$0xff]
        %v837 = vld [vmem:[%s834 + $0x10] sm:$0xff]
        %v838 = vld [vmem:[%s834 + $0x18] sm:$0xff]
        %v839 = vld [vmem:[%s834 + $0x20] sm:$0xff]
        %v840 = vld [vmem:[%s834 + $0x28] sm:$0xff]
        %v841 = vmax.f32 %v828, %v835
        %v842 = vmax.f32 %v829, %v836
        %v843 = vmax.f32 %v830, %v837
        %v844 = vmax.f32 %v831, %v838
        %v845 = vmax.f32 %v832, %v839
        %v846 = vmax.f32 %v833, %v840
        %s847 = scalar_lea.vmem %s227, 2304
        %v848 = vld [vmem:[%s847] sm:$0xff]
        %v849 = vld [vmem:[%s847 + $0x8] sm:$0xff]
        %v850 = vld [vmem:[%s847 + $0x10] sm:$0xff]
        %v851 = vld [vmem:[%s847 + $0x18] sm:$0xff]
        %v852 = vld [vmem:[%s847 + $0x20] sm:$0xff]
        %v853 = vld [vmem:[%s847 + $0x28] sm:$0xff]
        %v854 = vmax.f32 %v841, %v848
        %v855 = vmax.f32 %v842, %v849
        %v856 = vmax.f32 %v843, %v850
        %v857 = vmax.f32 %v844, %v851
        %v858 = vmax.f32 %v845, %v852
        %v859 = vmax.f32 %v846, %v853
        %v860 = vld [vmem:[%s214] sm:$0xff]
        %v861 = vld [vmem:[%s214 + $0x8] sm:$0xff]
        %v862 = vld [vmem:[%s214 + $0x10] sm:$0x3f]
        %v863 = vld [vmem:[%s214 + $0x18] sm:$0xff]
        %v864 = vld [vmem:[%s214 + $0x20] sm:$0xff]
        %v865 = vld [vmem:[%s214 + $0x28] sm:$0x3f]
        %v866 = vld [vmem:[%s214 + $0x30] sm:$0xff]
        %v867 = vld [vmem:[%s214 + $0x38] sm:$0xff]
        %v868 = vld [vmem:[%s214 + $0x40] sm:$0x3f]
        %v869 = vsub.f32 %v230, %v854
        %v870 = vsub.f32 %v231, %v855
        %v871 = vsub.f32 %v232, %v856
        %v872 = vsub.f32 %v233, %v857
        %v873 = vsub.f32 %v234, %v858
        %v874 = vsub.f32 %v235, %v859
        %v875 = vmul.f32 %v869, 1.442695
        %v876 = vpow.pop %v875
        %v877 = vmul.f32 %v870, 1.442695
        %v878 = vpow.pop %v877
        %v879 = vmul.f32 %v871, 1.442695
        %v880 = vpow.pop %v879
        %v881 = vmul.f32 %v872, 1.442695
        %v882 = vpow.pop %v881
        %v883 = vmul.f32 %v873, 1.442695
        %v884 = vpow.pop %v883
        %v885 = vmul.f32 %v874, 1.442695
        %v886 = vpow.pop %v885
        %v887 = vadd.f32 %v876, 0.0
        %v888 = vadd.f32 %v878, 0.0
        %v889 = vadd.f32 %v880, 0.0
        %v890 = vadd.f32 %v882, 0.0
        %v891 = vadd.f32 %v884, 0.0
        %v892 = vadd.f32 %v886, 0.0
        %v893 = vmul.f32 %v876, %v860
        %v894 = vmul.f32 %v878, %v861
        %v895 = vmul.f32 %v880, %v863
        %v896 = vmul.f32 %v882, %v864
        %v897 = vmul.f32 %v884, %v866
        %v898 = vmul.f32 %v886, %v867
        %v899 = vadd.f32 %v893, 0.0
        %v900 = vadd.f32 %v894, 0.0
        %v901 = vadd.f32 %v895, 0.0
        %v902 = vadd.f32 %v896, 0.0
        %v903 = vadd.f32 %v897, 0.0
        %v904 = vadd.f32 %v898, 0.0
        %v905 = vsub.f32 %v315, %v854
        %v906 = vsub.f32 %v316, %v855
        %v907 = vsub.f32 %v317, %v856
        %v908 = vsub.f32 %v318, %v857
        %v909 = vsub.f32 %v319, %v858
        %v910 = vsub.f32 %v320, %v859
        %v911 = vmul.f32 %v905, 1.442695
        %v912 = vpow.pop %v911
        %v913 = vmul.f32 %v906, 1.442695
        %v914 = vpow.pop %v913
        %v915 = vmul.f32 %v907, 1.442695
        %v916 = vpow.pop %v915
        %v917 = vmul.f32 %v908, 1.442695
        %v918 = vpow.pop %v917
        %v919 = vmul.f32 %v909, 1.442695
        %v920 = vpow.pop %v919
        %v921 = vmul.f32 %v910, 1.442695
        %v922 = vpow.pop %v921
        %v923 = vadd.f32 %v887, %v912
        %v924 = vadd.f32 %v888, %v914
        %v925 = vadd.f32 %v889, %v916
        %v926 = vadd.f32 %v890, %v918
        %v927 = vadd.f32 %v891, %v920
        %v928 = vadd.f32 %v892, %v922
        %vm938 = vcmask 1046528
        %v939 = vrot.slane %v860, 1
        %v940 = vrot.slane %v861, 1
        %v941 = vsel %vm938, %v939, %v940
        %v942 = vrot.slane %v862, 1
        %v943 = vsel %vm938, %v940, %v942
        %v944 = vrot.slane %v863, 1
        %v945 = vrot.slane %v864, 1
        %v946 = vsel %vm938, %v944, %v945
        %v947 = vrot.slane %v865, 1
        %v948 = vsel %vm938, %v945, %v947
        %v949 = vrot.slane %v866, 1
        %v950 = vrot.slane %v867, 1
        %v951 = vsel %vm938, %v949, %v950
        %v952 = vrot.slane %v868, 1
        %v953 = vsel %vm938, %v950, %v952
        %v960 = vmul.f32 %v912, %v941
        %v961 = vmul.f32 %v914, %v943
        %v962 = vmul.f32 %v916, %v946
        %v963 = vmul.f32 %v918, %v948
        %v964 = vmul.f32 %v920, %v951
        %v965 = vmul.f32 %v922, %v953
        %v966 = vadd.f32 %v899, %v960
        %v967 = vadd.f32 %v900, %v961
        %v968 = vadd.f32 %v901, %v962
        %v969 = vadd.f32 %v902, %v963
        %v970 = vadd.f32 %v903, %v964
        %v971 = vadd.f32 %v904, %v965
        %v972 = vsub.f32 %v406, %v854
        %v973 = vsub.f32 %v407, %v855
        %v974 = vsub.f32 %v408, %v856
        %v975 = vsub.f32 %v409, %v857
        %v976 = vsub.f32 %v410, %v858
        %v977 = vsub.f32 %v411, %v859
        %v978 = vmul.f32 %v972, 1.442695
        %v979 = vpow.pop %v978
        %v980 = vmul.f32 %v973, 1.442695
        %v981 = vpow.pop %v980
        %v982 = vmul.f32 %v974, 1.442695
        %v983 = vpow.pop %v982
        %v984 = vmul.f32 %v975, 1.442695
        %v985 = vpow.pop %v984
        %v986 = vmul.f32 %v976, 1.442695
        %v987 = vpow.pop %v986
        %v988 = vmul.f32 %v977, 1.442695
        %v989 = vpow.pop %v988
        %v990 = vadd.f32 %v923, %v979
        %v991 = vadd.f32 %v924, %v981
        %v992 = vadd.f32 %v925, %v983
        %v993 = vadd.f32 %v926, %v985
        %v994 = vadd.f32 %v927, %v987
        %v995 = vadd.f32 %v928, %v989
        %vm996 = vcmask 1045504
        %v997 = vrot.slane %v860, 2
        %v998 = vrot.slane %v861, 2
        %v999 = vsel %vm996, %v997, %v998
        %v1000 = vrot.slane %v862, 2
        %v1001 = vsel %vm996, %v998, %v1000
        %v1002 = vrot.slane %v863, 2
        %v1003 = vrot.slane %v864, 2
        %v1004 = vsel %vm996, %v1002, %v1003
        %v1005 = vrot.slane %v865, 2
        %v1006 = vsel %vm996, %v1003, %v1005
        %v1007 = vrot.slane %v866, 2
        %v1008 = vrot.slane %v867, 2
        %v1009 = vsel %vm996, %v1007, %v1008
        %v1010 = vrot.slane %v868, 2
        %v1011 = vsel %vm996, %v1008, %v1010
        %v1018 = vmul.f32 %v979, %v999
        %v1019 = vmul.f32 %v981, %v1001
        %v1020 = vmul.f32 %v983, %v1004
        %v1021 = vmul.f32 %v985, %v1006
        %v1022 = vmul.f32 %v987, %v1009
        %v1023 = vmul.f32 %v989, %v1011
        %v1024 = vadd.f32 %v966, %v1018
        %v1025 = vadd.f32 %v967, %v1019
        %v1026 = vadd.f32 %v968, %v1020
        %v1027 = vadd.f32 %v969, %v1021
        %v1028 = vadd.f32 %v970, %v1022
        %v1029 = vadd.f32 %v971, %v1023
        %v1030 = vsub.f32 %v497, %v854
        %v1031 = vsub.f32 %v498, %v855
        %v1032 = vsub.f32 %v499, %v856
        %v1033 = vsub.f32 %v500, %v857
        %v1034 = vsub.f32 %v501, %v858
        %v1035 = vsub.f32 %v502, %v859
        %v1036 = vmul.f32 %v1030, 1.442695
        %v1037 = vpow.pop %v1036
        %v1038 = vmul.f32 %v1031, 1.442695
        %v1039 = vpow.pop %v1038
        %v1040 = vmul.f32 %v1032, 1.442695
        %v1041 = vpow.pop %v1040
        %v1042 = vmul.f32 %v1033, 1.442695
        %v1043 = vpow.pop %v1042
        %v1044 = vmul.f32 %v1034, 1.442695
        %v1045 = vpow.pop %v1044
        %v1046 = vmul.f32 %v1035, 1.442695
        %v1047 = vpow.pop %v1046
        %v1048 = vadd.f32 %v990, %v1037
        %v1049 = vadd.f32 %v991, %v1039
        %v1050 = vadd.f32 %v992, %v1041
        %v1051 = vadd.f32 %v993, %v1043
        %v1052 = vadd.f32 %v994, %v1045
        %v1053 = vadd.f32 %v995, %v1047
        %vm1054 = vcmask 1044480
        %v1055 = vrot.slane %v860, 3
        %v1056 = vrot.slane %v861, 3
        %v1057 = vsel %vm1054, %v1055, %v1056
        %v1058 = vrot.slane %v862, 3
        %v1059 = vsel %vm1054, %v1056, %v1058
        %v1060 = vrot.slane %v863, 3
        %v1061 = vrot.slane %v864, 3
        %v1062 = vsel %vm1054, %v1060, %v1061
        %v1063 = vrot.slane %v865, 3
        %v1064 = vsel %vm1054, %v1061, %v1063
        %v1065 = vrot.slane %v866, 3
        %v1066 = vrot.slane %v867, 3
        %v1067 = vsel %vm1054, %v1065, %v1066
        %v1068 = vrot.slane %v868, 3
        %v1069 = vsel %vm1054, %v1066, %v1068
        %v1076 = vmul.f32 %v1037, %v1057
        %v1077 = vmul.f32 %v1039, %v1059
        %v1078 = vmul.f32 %v1041, %v1062
        %v1079 = vmul.f32 %v1043, %v1064
        %v1080 = vmul.f32 %v1045, %v1067
        %v1081 = vmul.f32 %v1047, %v1069
        %v1082 = vadd.f32 %v1024, %v1076
        %v1083 = vadd.f32 %v1025, %v1077
        %v1084 = vadd.f32 %v1026, %v1078
        %v1085 = vadd.f32 %v1027, %v1079
        %v1086 = vadd.f32 %v1028, %v1080
        %v1087 = vadd.f32 %v1029, %v1081
        %v1088 = vsub.f32 %v588, %v854
        %v1089 = vsub.f32 %v589, %v855
        %v1090 = vsub.f32 %v590, %v856
        %v1091 = vsub.f32 %v591, %v857
        %v1092 = vsub.f32 %v592, %v858
        %v1093 = vsub.f32 %v593, %v859
        %v1094 = vmul.f32 %v1088, 1.442695
        %v1095 = vpow.pop %v1094
        %v1096 = vmul.f32 %v1089, 1.442695
        %v1097 = vpow.pop %v1096
        %v1098 = vmul.f32 %v1090, 1.442695
        %v1099 = vpow.pop %v1098
        %v1100 = vmul.f32 %v1091, 1.442695
        %v1101 = vpow.pop %v1100
        %v1102 = vmul.f32 %v1092, 1.442695
        %v1103 = vpow.pop %v1102
        %v1104 = vmul.f32 %v1093, 1.442695
        %v1105 = vpow.pop %v1104
        %v1106 = vadd.f32 %v1048, %v1095
        %v1107 = vadd.f32 %v1049, %v1097
        %v1108 = vadd.f32 %v1050, %v1099
        %v1109 = vadd.f32 %v1051, %v1101
        %v1110 = vadd.f32 %v1052, %v1103
        %v1111 = vadd.f32 %v1053, %v1105
        %vm1112 = vcmask 1043456
        %v1113 = vrot.slane %v860, 4
        %v1114 = vrot.slane %v861, 4
        %v1115 = vsel %vm1112, %v1113, %v1114
        %v1116 = vrot.slane %v862, 4
        %v1117 = vsel %vm1112, %v1114, %v1116
        %v1118 = vrot.slane %v863, 4
        %v1119 = vrot.slane %v864, 4
        %v1120 = vsel %vm1112, %v1118, %v1119
        %v1121 = vrot.slane %v865, 4
        %v1122 = vsel %vm1112, %v1119, %v1121
        %v1123 = vrot.slane %v866, 4
        %v1124 = vrot.slane %v867, 4
        %v1125 = vsel %vm1112, %v1123, %v1124
        %v1126 = vrot.slane %v868, 4
        %v1127 = vsel %vm1112, %v1124, %v1126
        %v1134 = vmul.f32 %v1095, %v1115
        %v1135 = vmul.f32 %v1097, %v1117
        %v1136 = vmul.f32 %v1099, %v1120
        %v1137 = vmul.f32 %v1101, %v1122
        %v1138 = vmul.f32 %v1103, %v1125
        %v1139 = vmul.f32 %v1105, %v1127
        %v1140 = vadd.f32 %v1082, %v1134
        %v1141 = vadd.f32 %v1083, %v1135
        %v1142 = vadd.f32 %v1084, %v1136
        %v1143 = vadd.f32 %v1085, %v1137
        %v1144 = vadd.f32 %v1086, %v1138
        %v1145 = vadd.f32 %v1087, %v1139
        %v1146 = vsub.f32 %v679, %v854
        %v1147 = vsub.f32 %v680, %v855
        %v1148 = vsub.f32 %v681, %v856
        %v1149 = vsub.f32 %v682, %v857
        %v1150 = vsub.f32 %v683, %v858
        %v1151 = vsub.f32 %v684, %v859
        %v1152 = vmul.f32 %v1146, 1.442695
        %v1153 = vpow.pop %v1152
        %v1154 = vmul.f32 %v1147, 1.442695
        %v1155 = vpow.pop %v1154
        %v1156 = vmul.f32 %v1148, 1.442695
        %v1157 = vpow.pop %v1156
        %v1158 = vmul.f32 %v1149, 1.442695
        %v1159 = vpow.pop %v1158
        %v1160 = vmul.f32 %v1150, 1.442695
        %v1161 = vpow.pop %v1160
        %v1162 = vmul.f32 %v1151, 1.442695
        %v1163 = vpow.pop %v1162
        %v1164 = vadd.f32 %v1106, %v1153
        %v1165 = vadd.f32 %v1107, %v1155
        %v1166 = vadd.f32 %v1108, %v1157
        %v1167 = vadd.f32 %v1109, %v1159
        %v1168 = vadd.f32 %v1110, %v1161
        %v1169 = vadd.f32 %v1111, %v1163
        %vm1170 = vcmask 1042432
        %v1171 = vrot.slane %v860, 5
        %v1172 = vrot.slane %v861, 5
        %v1173 = vsel %vm1170, %v1171, %v1172
        %v1174 = vrot.slane %v862, 5
        %v1175 = vsel %vm1170, %v1172, %v1174
        %v1176 = vrot.slane %v863, 5
        %v1177 = vrot.slane %v864, 5
        %v1178 = vsel %vm1170, %v1176, %v1177
        %v1179 = vrot.slane %v865, 5
        %v1180 = vsel %vm1170, %v1177, %v1179
        %v1181 = vrot.slane %v866, 5
        %v1182 = vrot.slane %v867, 5
        %v1183 = vsel %vm1170, %v1181, %v1182
        %v1184 = vrot.slane %v868, 5
        %v1185 = vsel %vm1170, %v1182, %v1184
        %v1192 = vmul.f32 %v1153, %v1173
        %v1193 = vmul.f32 %v1155, %v1175
        %v1194 = vmul.f32 %v1157, %v1178
        %v1195 = vmul.f32 %v1159, %v1180
        %v1196 = vmul.f32 %v1161, %v1183
        %v1197 = vmul.f32 %v1163, %v1185
        %v1198 = vadd.f32 %v1140, %v1192
        %v1199 = vadd.f32 %v1141, %v1193
        %v1200 = vadd.f32 %v1142, %v1194
        %v1201 = vadd.f32 %v1143, %v1195
        %v1202 = vadd.f32 %v1144, %v1196
        %v1203 = vadd.f32 %v1145, %v1197
        %v1204 = vsub.f32 %v770, %v854
        %v1205 = vsub.f32 %v771, %v855
        %v1206 = vsub.f32 %v772, %v856
        %v1207 = vsub.f32 %v773, %v857
        %v1208 = vsub.f32 %v774, %v858
        %v1209 = vsub.f32 %v775, %v859
        %v1210 = vmul.f32 %v1204, 1.442695
        %v1211 = vpow.pop %v1210
        %v1212 = vmul.f32 %v1205, 1.442695
        %v1213 = vpow.pop %v1212
        %v1214 = vmul.f32 %v1206, 1.442695
        %v1215 = vpow.pop %v1214
        %v1216 = vmul.f32 %v1207, 1.442695
        %v1217 = vpow.pop %v1216
        %v1218 = vmul.f32 %v1208, 1.442695
        %v1219 = vpow.pop %v1218
        %v1220 = vmul.f32 %v1209, 1.442695
        %v1221 = vpow.pop %v1220
        %v1222 = vadd.f32 %v1164, %v1211
        %v1223 = vadd.f32 %v1165, %v1213
        %v1224 = vadd.f32 %v1166, %v1215
        %v1225 = vadd.f32 %v1167, %v1217
        %v1226 = vadd.f32 %v1168, %v1219
        %v1227 = vadd.f32 %v1169, %v1221
        %vm1228 = vcmask 1041408
        %v1229 = vrot.slane %v860, 6
        %v1230 = vrot.slane %v861, 6
        %v1231 = vsel %vm1228, %v1229, %v1230
        %v1232 = vrot.slane %v862, 6
        %v1233 = vsel %vm1228, %v1230, %v1232
        %v1234 = vrot.slane %v863, 6
        %v1235 = vrot.slane %v864, 6
        %v1236 = vsel %vm1228, %v1234, %v1235
        %v1237 = vrot.slane %v865, 6
        %v1238 = vsel %vm1228, %v1235, %v1237
        %v1239 = vrot.slane %v866, 6
        %v1240 = vrot.slane %v867, 6
        %v1241 = vsel %vm1228, %v1239, %v1240
        %v1242 = vrot.slane %v868, 6
        %v1243 = vsel %vm1228, %v1240, %v1242
        %v1250 = vmul.f32 %v1211, %v1231
        %v1251 = vmul.f32 %v1213, %v1233
        %v1252 = vmul.f32 %v1215, %v1236
        %v1253 = vmul.f32 %v1217, %v1238
        %v1254 = vmul.f32 %v1219, %v1241
        %v1255 = vmul.f32 %v1221, %v1243
        %v1256 = vadd.f32 %v1198, %v1250
        %v1257 = vadd.f32 %v1199, %v1251
        %v1258 = vadd.f32 %v1200, %v1252
        %v1259 = vadd.f32 %v1201, %v1253
        %v1260 = vadd.f32 %v1202, %v1254
        %v1261 = vadd.f32 %v1203, %v1255
        %v1262 = vsub.f32 %v237, %v854
        %v1263 = vsub.f32 %v238, %v855
        %v1264 = vsub.f32 %v239, %v856
        %v1265 = vsub.f32 %v240, %v857
        %v1266 = vsub.f32 %v241, %v858
        %v1267 = vsub.f32 %v242, %v859
        %v1268 = vmul.f32 %v1262, 1.442695
        %v1269 = vpow.pop %v1268
        %v1270 = vmul.f32 %v1263, 1.442695
        %v1271 = vpow.pop %v1270
        %v1272 = vmul.f32 %v1264, 1.442695
        %v1273 = vpow.pop %v1272
        %v1274 = vmul.f32 %v1265, 1.442695
        %v1275 = vpow.pop %v1274
        %v1276 = vmul.f32 %v1266, 1.442695
        %v1277 = vpow.pop %v1276
        %v1278 = vmul.f32 %v1267, 1.442695
        %v1279 = vpow.pop %v1278
        %v1280 = vadd.f32 %v1222, %v1269
        %v1281 = vadd.f32 %v1223, %v1271
        %v1282 = vadd.f32 %v1224, %v1273
        %v1283 = vadd.f32 %v1225, %v1275
        %v1284 = vadd.f32 %v1226, %v1277
        %v1285 = vadd.f32 %v1227, %v1279
        %1286 = vrot.lane.b32.xlu0 %v860, 127
        %v1287 = vpop.permute.xlu0 %1286
        %1288 = vrot.lane.b32.xlu0 %v861, 127
        %v1289 = vpop.permute.xlu0 %1288
        %1290 = vrot.lane.b32.xlu0 %v863, 127
        %v1291 = vpop.permute.xlu0 %1290
        %1292 = vrot.lane.b32.xlu0 %v864, 127
        %v1293 = vpop.permute.xlu0 %1292
        %1294 = vrot.lane.b32.xlu0 %v866, 127
        %v1295 = vpop.permute.xlu0 %1294
        %1296 = vrot.lane.b32.xlu0 %v867, 127
        %v1297 = vpop.permute.xlu0 %1296
        %v1304 = vmul.f32 %v1269, %v1287
        %v1305 = vmul.f32 %v1271, %v1289
        %v1306 = vmul.f32 %v1273, %v1291
        %v1307 = vmul.f32 %v1275, %v1293
        %v1308 = vmul.f32 %v1277, %v1295
        %v1309 = vmul.f32 %v1279, %v1297
        %v1310 = vadd.f32 %v1256, %v1304
        %v1311 = vadd.f32 %v1257, %v1305
        %v1312 = vadd.f32 %v1258, %v1306
        %v1313 = vadd.f32 %v1259, %v1307
        %v1314 = vadd.f32 %v1260, %v1308
        %v1315 = vadd.f32 %v1261, %v1309
        %v1316 = vsub.f32 %v328, %v854
        %v1317 = vsub.f32 %v329, %v855
        %v1318 = vsub.f32 %v330, %v856
        %v1319 = vsub.f32 %v331, %v857
        %v1320 = vsub.f32 %v332, %v858
        %v1321 = vsub.f32 %v333, %v859
        %v1322 = vmul.f32 %v1316, 1.442695
        %v1323 = vpow.pop %v1322
        %v1324 = vmul.f32 %v1317, 1.442695
        %v1325 = vpow.pop %v1324
        %v1326 = vmul.f32 %v1318, 1.442695
        %v1327 = vpow.pop %v1326
        %v1328 = vmul.f32 %v1319, 1.442695
        %v1329 = vpow.pop %v1328
        %v1330 = vmul.f32 %v1320, 1.442695
        %v1331 = vpow.pop %v1330
        %v1332 = vmul.f32 %v1321, 1.442695
        %v1333 = vpow.pop %v1332
        %v1334 = vadd.f32 %v1280, %v1323
        %v1335 = vadd.f32 %v1281, %v1325
        %v1336 = vadd.f32 %v1282, %v1327
        %v1337 = vadd.f32 %v1283, %v1329
        %v1338 = vadd.f32 %v1284, %v1331
        %v1339 = vadd.f32 %v1285, %v1333
        %1340 = vrot.lane.b32.xlu0 %v941, 127
        %v1341 = vpop.permute.xlu0 %1340
        %1342 = vrot.lane.b32.xlu0 %v943, 127
        %v1343 = vpop.permute.xlu0 %1342
        %1344 = vrot.lane.b32.xlu0 %v946, 127
        %v1345 = vpop.permute.xlu0 %1344
        %1346 = vrot.lane.b32.xlu0 %v948, 127
        %v1347 = vpop.permute.xlu0 %1346
        %1348 = vrot.lane.b32.xlu0 %v951, 127
        %v1349 = vpop.permute.xlu0 %1348
        %1350 = vrot.lane.b32.xlu0 %v953, 127
        %v1351 = vpop.permute.xlu0 %1350
        %v1358 = vmul.f32 %v1323, %v1341
        %v1359 = vmul.f32 %v1325, %v1343
        %v1360 = vmul.f32 %v1327, %v1345
        %v1361 = vmul.f32 %v1329, %v1347
        %v1362 = vmul.f32 %v1331, %v1349
        %v1363 = vmul.f32 %v1333, %v1351
        %v1364 = vadd.f32 %v1310, %v1358
        %v1365 = vadd.f32 %v1311, %v1359
        %v1366 = vadd.f32 %v1312, %v1360
        %v1367 = vadd.f32 %v1313, %v1361
        %v1368 = vadd.f32 %v1314, %v1362
        %v1369 = vadd.f32 %v1315, %v1363
        %v1370 = vsub.f32 %v419, %v854
        %v1371 = vsub.f32 %v420, %v855
        %v1372 = vsub.f32 %v421, %v856
        %v1373 = vsub.f32 %v422, %v857
        %v1374 = vsub.f32 %v423, %v858
        %v1375 = vsub.f32 %v424, %v859
        %v1376 = vmul.f32 %v1370, 1.442695
        %v1377 = vpow.pop %v1376
        %v1378 = vmul.f32 %v1371, 1.442695
        %v1379 = vpow.pop %v1378
        %v1380 = vmul.f32 %v1372, 1.442695
        %v1381 = vpow.pop %v1380
        %v1382 = vmul.f32 %v1373, 1.442695
        %v1383 = vpow.pop %v1382
        %v1384 = vmul.f32 %v1374, 1.442695
        %v1385 = vpow.pop %v1384
        %v1386 = vmul.f32 %v1375, 1.442695
        %v1387 = vpow.pop %v1386
        %v1388 = vadd.f32 %v1334, %v1377
        %v1389 = vadd.f32 %v1335, %v1379
        %v1390 = vadd.f32 %v1336, %v1381
        %v1391 = vadd.f32 %v1337, %v1383
        %v1392 = vadd.f32 %v1338, %v1385
        %v1393 = vadd.f32 %v1339, %v1387
        %1394 = vrot.lane.b32.xlu0 %v999, 127
        %v1395 = vpop.permute.xlu0 %1394
        %1396 = vrot.lane.b32.xlu0 %v1001, 127
        %v1397 = vpop.permute.xlu0 %1396
        %1398 = vrot.lane.b32.xlu0 %v1004, 127
        %v1399 = vpop.permute.xlu0 %1398
        %1400 = vrot.lane.b32.xlu0 %v1006, 127
        %v1401 = vpop.permute.xlu0 %1400
        %1402 = vrot.lane.b32.xlu0 %v1009, 127
        %v1403 = vpop.permute.xlu0 %1402
        %1404 = vrot.lane.b32.xlu0 %v1011, 127
        %v1405 = vpop.permute.xlu0 %1404
        %v1412 = vmul.f32 %v1377, %v1395
        %v1413 = vmul.f32 %v1379, %v1397
        %v1414 = vmul.f32 %v1381, %v1399
        %v1415 = vmul.f32 %v1383, %v1401
        %v1416 = vmul.f32 %v1385, %v1403
        %v1417 = vmul.f32 %v1387, %v1405
        %v1418 = vadd.f32 %v1364, %v1412
        %v1419 = vadd.f32 %v1365, %v1413
        %v1420 = vadd.f32 %v1366, %v1414
        %v1421 = vadd.f32 %v1367, %v1415
        %v1422 = vadd.f32 %v1368, %v1416
        %v1423 = vadd.f32 %v1369, %v1417
        %v1424 = vsub.f32 %v510, %v854
        %v1425 = vsub.f32 %v511, %v855
        %v1426 = vsub.f32 %v512, %v856
        %v1427 = vsub.f32 %v513, %v857
        %v1428 = vsub.f32 %v514, %v858
        %v1429 = vsub.f32 %v515, %v859
        %v1430 = vmul.f32 %v1424, 1.442695
        %v1431 = vpow.pop %v1430
        %v1432 = vmul.f32 %v1425, 1.442695
        %v1433 = vpow.pop %v1432
        %v1434 = vmul.f32 %v1426, 1.442695
        %v1435 = vpow.pop %v1434
        %v1436 = vmul.f32 %v1427, 1.442695
        %v1437 = vpow.pop %v1436
        %v1438 = vmul.f32 %v1428, 1.442695
        %v1439 = vpow.pop %v1438
        %v1440 = vmul.f32 %v1429, 1.442695
        %v1441 = vpow.pop %v1440
        %v1442 = vadd.f32 %v1388, %v1431
        %v1443 = vadd.f32 %v1389, %v1433
        %v1444 = vadd.f32 %v1390, %v1435
        %v1445 = vadd.f32 %v1391, %v1437
        %v1446 = vadd.f32 %v1392, %v1439
        %v1447 = vadd.f32 %v1393, %v1441
        %1448 = vrot.lane.b32.xlu0 %v1057, 127
        %v1449 = vpop.permute.xlu0 %1448
        %1450 = vrot.lane.b32.xlu0 %v1059, 127
        %v1451 = vpop.permute.xlu0 %1450
        %1452 = vrot.lane.b32.xlu0 %v1062, 127
        %v1453 = vpop.permute.xlu0 %1452
        %1454 = vrot.lane.b32.xlu0 %v1064, 127
        %v1455 = vpop.permute.xlu0 %1454
        %1456 = vrot.lane.b32.xlu0 %v1067, 127
        %v1457 = vpop.permute.xlu0 %1456
        %1458 = vrot.lane.b32.xlu0 %v1069, 127
        %v1459 = vpop.permute.xlu0 %1458
        %v1466 = vmul.f32 %v1431, %v1449
        %v1467 = vmul.f32 %v1433, %v1451
        %v1468 = vmul.f32 %v1435, %v1453
        %v1469 = vmul.f32 %v1437, %v1455
        %v1470 = vmul.f32 %v1439, %v1457
        %v1471 = vmul.f32 %v1441, %v1459
        %v1472 = vadd.f32 %v1418, %v1466
        %v1473 = vadd.f32 %v1419, %v1467
        %v1474 = vadd.f32 %v1420, %v1468
        %v1475 = vadd.f32 %v1421, %v1469
        %v1476 = vadd.f32 %v1422, %v1470
        %v1477 = vadd.f32 %v1423, %v1471
        %v1478 = vsub.f32 %v601, %v854
        %v1479 = vsub.f32 %v602, %v855
        %v1480 = vsub.f32 %v603, %v856
        %v1481 = vsub.f32 %v604, %v857
        %v1482 = vsub.f32 %v605, %v858
        %v1483 = vsub.f32 %v606, %v859
        %v1484 = vmul.f32 %v1478, 1.442695
        %v1485 = vpow.pop %v1484
        %v1486 = vmul.f32 %v1479, 1.442695
        %v1487 = vpow.pop %v1486
        %v1488 = vmul.f32 %v1480, 1.442695
        %v1489 = vpow.pop %v1488
        %v1490 = vmul.f32 %v1481, 1.442695
        %v1491 = vpow.pop %v1490
        %v1492 = vmul.f32 %v1482, 1.442695
        %v1493 = vpow.pop %v1492
        %v1494 = vmul.f32 %v1483, 1.442695
        %v1495 = vpow.pop %v1494
        %v1496 = vadd.f32 %v1442, %v1485
        %v1497 = vadd.f32 %v1443, %v1487
        %v1498 = vadd.f32 %v1444, %v1489
        %v1499 = vadd.f32 %v1445, %v1491
        %v1500 = vadd.f32 %v1446, %v1493
        %v1501 = vadd.f32 %v1447, %v1495
        %1502 = vrot.lane.b32.xlu0 %v1115, 127
        %v1503 = vpop.permute.xlu0 %1502
        %1504 = vrot.lane.b32.xlu0 %v1117, 127
        %v1505 = vpop.permute.xlu0 %1504
        %1506 = vrot.lane.b32.xlu0 %v1120, 127
        %v1507 = vpop.permute.xlu0 %1506
        %1508 = vrot.lane.b32.xlu0 %v1122, 127
        %v1509 = vpop.permute.xlu0 %1508
        %1510 = vrot.lane.b32.xlu0 %v1125, 127
        %v1511 = vpop.permute.xlu0 %1510
        %1512 = vrot.lane.b32.xlu0 %v1127, 127
        %v1513 = vpop.permute.xlu0 %1512
        %v1520 = vmul.f32 %v1485, %v1503
        %v1521 = vmul.f32 %v1487, %v1505
        %v1522 = vmul.f32 %v1489, %v1507
        %v1523 = vmul.f32 %v1491, %v1509
        %v1524 = vmul.f32 %v1493, %v1511
        %v1525 = vmul.f32 %v1495, %v1513
        %v1526 = vadd.f32 %v1472, %v1520
        %v1527 = vadd.f32 %v1473, %v1521
        %v1528 = vadd.f32 %v1474, %v1522
        %v1529 = vadd.f32 %v1475, %v1523
        %v1530 = vadd.f32 %v1476, %v1524
        %v1531 = vadd.f32 %v1477, %v1525
        %v1532 = vsub.f32 %v692, %v854
        %v1533 = vsub.f32 %v693, %v855
        %v1534 = vsub.f32 %v694, %v856
        %v1535 = vsub.f32 %v695, %v857
        %v1536 = vsub.f32 %v696, %v858
        %v1537 = vsub.f32 %v697, %v859
        %v1538 = vmul.f32 %v1532, 1.442695
        %v1539 = vpow.pop %v1538
        %v1540 = vmul.f32 %v1533, 1.442695
        %v1541 = vpow.pop %v1540
        %v1542 = vmul.f32 %v1534, 1.442695
        %v1543 = vpow.pop %v1542
        %v1544 = vmul.f32 %v1535, 1.442695
        %v1545 = vpow.pop %v1544
        %v1546 = vmul.f32 %v1536, 1.442695
        %v1547 = vpow.pop %v1546
        %v1548 = vmul.f32 %v1537, 1.442695
        %v1549 = vpow.pop %v1548
        %v1550 = vadd.f32 %v1496, %v1539
        %v1551 = vadd.f32 %v1497, %v1541
        %v1552 = vadd.f32 %v1498, %v1543
        %v1553 = vadd.f32 %v1499, %v1545
        %v1554 = vadd.f32 %v1500, %v1547
        %v1555 = vadd.f32 %v1501, %v1549
        %1556 = vrot.lane.b32.xlu0 %v1173, 127
        %v1557 = vpop.permute.xlu0 %1556
        %1558 = vrot.lane.b32.xlu0 %v1175, 127
        %v1559 = vpop.permute.xlu0 %1558
        %1560 = vrot.lane.b32.xlu0 %v1178, 127
        %v1561 = vpop.permute.xlu0 %1560
        %1562 = vrot.lane.b32.xlu0 %v1180, 127
        %v1563 = vpop.permute.xlu0 %1562
        %1564 = vrot.lane.b32.xlu0 %v1183, 127
        %v1565 = vpop.permute.xlu0 %1564
        %1566 = vrot.lane.b32.xlu0 %v1185, 127
        %v1567 = vpop.permute.xlu0 %1566
        %v1574 = vmul.f32 %v1539, %v1557
        %v1575 = vmul.f32 %v1541, %v1559
        %v1576 = vmul.f32 %v1543, %v1561
        %v1577 = vmul.f32 %v1545, %v1563
        %v1578 = vmul.f32 %v1547, %v1565
        %v1579 = vmul.f32 %v1549, %v1567
        %v1580 = vadd.f32 %v1526, %v1574
        %v1581 = vadd.f32 %v1527, %v1575
        %v1582 = vadd.f32 %v1528, %v1576
        %v1583 = vadd.f32 %v1529, %v1577
        %v1584 = vadd.f32 %v1530, %v1578
        %v1585 = vadd.f32 %v1531, %v1579
        %v1586 = vsub.f32 %v783, %v854
        %v1587 = vsub.f32 %v784, %v855
        %v1588 = vsub.f32 %v785, %v856
        %v1589 = vsub.f32 %v786, %v857
        %v1590 = vsub.f32 %v787, %v858
        %v1591 = vsub.f32 %v788, %v859
        %v1592 = vmul.f32 %v1586, 1.442695
        %v1593 = vpow.pop %v1592
        %v1594 = vmul.f32 %v1587, 1.442695
        %v1595 = vpow.pop %v1594
        %v1596 = vmul.f32 %v1588, 1.442695
        %v1597 = vpow.pop %v1596
        %v1598 = vmul.f32 %v1589, 1.442695
        %v1599 = vpow.pop %v1598
        %v1600 = vmul.f32 %v1590, 1.442695
        %v1601 = vpow.pop %v1600
        %v1602 = vmul.f32 %v1591, 1.442695
        %v1603 = vpow.pop %v1602
        %v1604 = vadd.f32 %v1550, %v1593
        %v1605 = vadd.f32 %v1551, %v1595
        %v1606 = vadd.f32 %v1552, %v1597
        %v1607 = vadd.f32 %v1553, %v1599
        %v1608 = vadd.f32 %v1554, %v1601
        %v1609 = vadd.f32 %v1555, %v1603
        %1610 = vrot.lane.b32.xlu0 %v1231, 127
        %v1611 = vpop.permute.xlu0 %1610
        %1612 = vrot.lane.b32.xlu0 %v1233, 127
        %v1613 = vpop.permute.xlu0 %1612
        %1614 = vrot.lane.b32.xlu0 %v1236, 127
        %v1615 = vpop.permute.xlu0 %1614
        %1616 = vrot.lane.b32.xlu0 %v1238, 127
        %v1617 = vpop.permute.xlu0 %1616
        %1618 = vrot.lane.b32.xlu0 %v1241, 127
        %v1619 = vpop.permute.xlu0 %1618
        %1620 = vrot.lane.b32.xlu0 %v1243, 127
        %v1621 = vpop.permute.xlu0 %1620
        %v1628 = vmul.f32 %v1593, %v1611
        %v1629 = vmul.f32 %v1595, %v1613
        %v1630 = vmul.f32 %v1597, %v1615
        %v1631 = vmul.f32 %v1599, %v1617
        %v1632 = vmul.f32 %v1601, %v1619
        %v1633 = vmul.f32 %v1603, %v1621
        %v1634 = vadd.f32 %v1580, %v1628
        %v1635 = vadd.f32 %v1581, %v1629
        %v1636 = vadd.f32 %v1582, %v1630
        %v1637 = vadd.f32 %v1583, %v1631
        %v1638 = vadd.f32 %v1584, %v1632
        %v1639 = vadd.f32 %v1585, %v1633
        %v1640 = vsub.f32 %v250, %v854
        %v1641 = vsub.f32 %v251, %v855
        %v1642 = vsub.f32 %v252, %v856
        %v1643 = vsub.f32 %v253, %v857
        %v1644 = vsub.f32 %v254, %v858
        %v1645 = vsub.f32 %v255, %v859
        %v1646 = vmul.f32 %v1640, 1.442695
        %v1647 = vpow.pop %v1646
        %v1648 = vmul.f32 %v1641, 1.442695
        %v1649 = vpow.pop %v1648
        %v1650 = vmul.f32 %v1642, 1.442695
        %v1651 = vpow.pop %v1650
        %v1652 = vmul.f32 %v1643, 1.442695
        %v1653 = vpow.pop %v1652
        %v1654 = vmul.f32 %v1644, 1.442695
        %v1655 = vpow.pop %v1654
        %v1656 = vmul.f32 %v1645, 1.442695
        %v1657 = vpow.pop %v1656
        %v1658 = vadd.f32 %v1604, %v1647
        %v1659 = vadd.f32 %v1605, %v1649
        %v1660 = vadd.f32 %v1606, %v1651
        %v1661 = vadd.f32 %v1607, %v1653
        %v1662 = vadd.f32 %v1608, %v1655
        %v1663 = vadd.f32 %v1609, %v1657
        %1664 = vrot.lane.b32.xlu0 %v860, 126
        %v1665 = vpop.permute.xlu0 %1664
        %1666 = vrot.lane.b32.xlu0 %v861, 126
        %v1667 = vpop.permute.xlu0 %1666
        %1668 = vrot.lane.b32.xlu0 %v863, 126
        %v1669 = vpop.permute.xlu0 %1668
        %1670 = vrot.lane.b32.xlu0 %v864, 126
        %v1671 = vpop.permute.xlu0 %1670
        %1672 = vrot.lane.b32.xlu0 %v866, 126
        %v1673 = vpop.permute.xlu0 %1672
        %1674 = vrot.lane.b32.xlu0 %v867, 126
        %v1675 = vpop.permute.xlu0 %1674
        %v1682 = vmul.f32 %v1647, %v1665
        %v1683 = vmul.f32 %v1649, %v1667
        %v1684 = vmul.f32 %v1651, %v1669
        %v1685 = vmul.f32 %v1653, %v1671
        %v1686 = vmul.f32 %v1655, %v1673
        %v1687 = vmul.f32 %v1657, %v1675
        %v1688 = vadd.f32 %v1634, %v1682
        %v1689 = vadd.f32 %v1635, %v1683
        %v1690 = vadd.f32 %v1636, %v1684
        %v1691 = vadd.f32 %v1637, %v1685
        %v1692 = vadd.f32 %v1638, %v1686
        %v1693 = vadd.f32 %v1639, %v1687
        %v1694 = vsub.f32 %v341, %v854
        %v1695 = vsub.f32 %v342, %v855
        %v1696 = vsub.f32 %v343, %v856
        %v1697 = vsub.f32 %v344, %v857
        %v1698 = vsub.f32 %v345, %v858
        %v1699 = vsub.f32 %v346, %v859
        %v1700 = vmul.f32 %v1694, 1.442695
        %v1701 = vpow.pop %v1700
        %v1702 = vmul.f32 %v1695, 1.442695
        %v1703 = vpow.pop %v1702
        %v1704 = vmul.f32 %v1696, 1.442695
        %v1705 = vpow.pop %v1704
        %v1706 = vmul.f32 %v1697, 1.442695
        %v1707 = vpow.pop %v1706
        %v1708 = vmul.f32 %v1698, 1.442695
        %v1709 = vpow.pop %v1708
        %v1710 = vmul.f32 %v1699, 1.442695
        %v1711 = vpow.pop %v1710
        %v1712 = vadd.f32 %v1658, %v1701
        %v1713 = vadd.f32 %v1659, %v1703
        %v1714 = vadd.f32 %v1660, %v1705
        %v1715 = vadd.f32 %v1661, %v1707
        %v1716 = vadd.f32 %v1662, %v1709
        %v1717 = vadd.f32 %v1663, %v1711
        %1718 = vrot.lane.b32.xlu0 %v941, 126
        %v1719 = vpop.permute.xlu0 %1718
        %1720 = vrot.lane.b32.xlu0 %v943, 126
        %v1721 = vpop.permute.xlu0 %1720
        %1722 = vrot.lane.b32.xlu0 %v946, 126
        %v1723 = vpop.permute.xlu0 %1722
        %1724 = vrot.lane.b32.xlu0 %v948, 126
        %v1725 = vpop.permute.xlu0 %1724
        %1726 = vrot.lane.b32.xlu0 %v951, 126
        %v1727 = vpop.permute.xlu0 %1726
        %1728 = vrot.lane.b32.xlu0 %v953, 126
        %v1729 = vpop.permute.xlu0 %1728
        %v1736 = vmul.f32 %v1701, %v1719
        %v1737 = vmul.f32 %v1703, %v1721
        %v1738 = vmul.f32 %v1705, %v1723
        %v1739 = vmul.f32 %v1707, %v1725
        %v1740 = vmul.f32 %v1709, %v1727
        %v1741 = vmul.f32 %v1711, %v1729
        %v1742 = vadd.f32 %v1688, %v1736
        %v1743 = vadd.f32 %v1689, %v1737
        %v1744 = vadd.f32 %v1690, %v1738
        %v1745 = vadd.f32 %v1691, %v1739
        %v1746 = vadd.f32 %v1692, %v1740
        %v1747 = vadd.f32 %v1693, %v1741
        %v1748 = vsub.f32 %v432, %v854
        %v1749 = vsub.f32 %v433, %v855
        %v1750 = vsub.f32 %v434, %v856
        %v1751 = vsub.f32 %v435, %v857
        %v1752 = vsub.f32 %v436, %v858
        %v1753 = vsub.f32 %v437, %v859
        %v1754 = vmul.f32 %v1748, 1.442695
        %v1755 = vpow.pop %v1754
        %v1756 = vmul.f32 %v1749, 1.442695
        %v1757 = vpow.pop %v1756
        %v1758 = vmul.f32 %v1750, 1.442695
        %v1759 = vpow.pop %v1758
        %v1760 = vmul.f32 %v1751, 1.442695
        %v1761 = vpow.pop %v1760
        %v1762 = vmul.f32 %v1752, 1.442695
        %v1763 = vpow.pop %v1762
        %v1764 = vmul.f32 %v1753, 1.442695
        %v1765 = vpow.pop %v1764
        %v1766 = vadd.f32 %v1712, %v1755
        %v1767 = vadd.f32 %v1713, %v1757
        %v1768 = vadd.f32 %v1714, %v1759
        %v1769 = vadd.f32 %v1715, %v1761
        %v1770 = vadd.f32 %v1716, %v1763
        %v1771 = vadd.f32 %v1717, %v1765
        %1772 = vrot.lane.b32.xlu0 %v999, 126
        %v1773 = vpop.permute.xlu0 %1772
        %1774 = vrot.lane.b32.xlu0 %v1001, 126
        %v1775 = vpop.permute.xlu0 %1774
        %1776 = vrot.lane.b32.xlu0 %v1004, 126
        %v1777 = vpop.permute.xlu0 %1776
        %1778 = vrot.lane.b32.xlu0 %v1006, 126
        %v1779 = vpop.permute.xlu0 %1778
        %1780 = vrot.lane.b32.xlu0 %v1009, 126
        %v1781 = vpop.permute.xlu0 %1780
        %1782 = vrot.lane.b32.xlu0 %v1011, 126
        %v1783 = vpop.permute.xlu0 %1782
        %v1790 = vmul.f32 %v1755, %v1773
        %v1791 = vmul.f32 %v1757, %v1775
        %v1792 = vmul.f32 %v1759, %v1777
        %v1793 = vmul.f32 %v1761, %v1779
        %v1794 = vmul.f32 %v1763, %v1781
        %v1795 = vmul.f32 %v1765, %v1783
        %v1796 = vadd.f32 %v1742, %v1790
        %v1797 = vadd.f32 %v1743, %v1791
        %v1798 = vadd.f32 %v1744, %v1792
        %v1799 = vadd.f32 %v1745, %v1793
        %v1800 = vadd.f32 %v1746, %v1794
        %v1801 = vadd.f32 %v1747, %v1795
        %v1802 = vsub.f32 %v523, %v854
        %v1803 = vsub.f32 %v524, %v855
        %v1804 = vsub.f32 %v525, %v856
        %v1805 = vsub.f32 %v526, %v857
        %v1806 = vsub.f32 %v527, %v858
        %v1807 = vsub.f32 %v528, %v859
        %v1808 = vmul.f32 %v1802, 1.442695
        %v1809 = vpow.pop %v1808
        %v1810 = vmul.f32 %v1803, 1.442695
        %v1811 = vpow.pop %v1810
        %v1812 = vmul.f32 %v1804, 1.442695
        %v1813 = vpow.pop %v1812
        %v1814 = vmul.f32 %v1805, 1.442695
        %v1815 = vpow.pop %v1814
        %v1816 = vmul.f32 %v1806, 1.442695
        %v1817 = vpow.pop %v1816
        %v1818 = vmul.f32 %v1807, 1.442695
        %v1819 = vpow.pop %v1818
        %v1820 = vadd.f32 %v1766, %v1809
        %v1821 = vadd.f32 %v1767, %v1811
        %v1822 = vadd.f32 %v1768, %v1813
        %v1823 = vadd.f32 %v1769, %v1815
        %v1824 = vadd.f32 %v1770, %v1817
        %v1825 = vadd.f32 %v1771, %v1819
        %1826 = vrot.lane.b32.xlu0 %v1057, 126
        %v1827 = vpop.permute.xlu0 %1826
        %1828 = vrot.lane.b32.xlu0 %v1059, 126
        %v1829 = vpop.permute.xlu0 %1828
        %1830 = vrot.lane.b32.xlu0 %v1062, 126
        %v1831 = vpop.permute.xlu0 %1830
        %1832 = vrot.lane.b32.xlu0 %v1064, 126
        %v1833 = vpop.permute.xlu0 %1832
        %1834 = vrot.lane.b32.xlu0 %v1067, 126
        %v1835 = vpop.permute.xlu0 %1834
        %1836 = vrot.lane.b32.xlu0 %v1069, 126
        %v1837 = vpop.permute.xlu0 %1836
        %v1844 = vmul.f32 %v1809, %v1827
        %v1845 = vmul.f32 %v1811, %v1829
        %v1846 = vmul.f32 %v1813, %v1831
        %v1847 = vmul.f32 %v1815, %v1833
        %v1848 = vmul.f32 %v1817, %v1835
        %v1849 = vmul.f32 %v1819, %v1837
        %v1850 = vadd.f32 %v1796, %v1844
        %v1851 = vadd.f32 %v1797, %v1845
        %v1852 = vadd.f32 %v1798, %v1846
        %v1853 = vadd.f32 %v1799, %v1847
        %v1854 = vadd.f32 %v1800, %v1848
        %v1855 = vadd.f32 %v1801, %v1849
        %v1856 = vsub.f32 %v614, %v854
        %v1857 = vsub.f32 %v615, %v855
        %v1858 = vsub.f32 %v616, %v856
        %v1859 = vsub.f32 %v617, %v857
        %v1860 = vsub.f32 %v618, %v858
        %v1861 = vsub.f32 %v619, %v859
        %v1862 = vmul.f32 %v1856, 1.442695
        %v1863 = vpow.pop %v1862
        %v1864 = vmul.f32 %v1857, 1.442695
        %v1865 = vpow.pop %v1864
        %v1866 = vmul.f32 %v1858, 1.442695
        %v1867 = vpow.pop %v1866
        %v1868 = vmul.f32 %v1859, 1.442695
        %v1869 = vpow.pop %v1868
        %v1870 = vmul.f32 %v1860, 1.442695
        %v1871 = vpow.pop %v1870
        %v1872 = vmul.f32 %v1861, 1.442695
        %v1873 = vpow.pop %v1872
        %v1874 = vadd.f32 %v1820, %v1863
        %v1875 = vadd.f32 %v1821, %v1865
        %v1876 = vadd.f32 %v1822, %v1867
        %v1877 = vadd.f32 %v1823, %v1869
        %v1878 = vadd.f32 %v1824, %v1871
        %v1879 = vadd.f32 %v1825, %v1873
        %1880 = vrot.lane.b32.xlu0 %v1115, 126
        %v1881 = vpop.permute.xlu0 %1880
        %1882 = vrot.lane.b32.xlu0 %v1117, 126
        %v1883 = vpop.permute.xlu0 %1882
        %1884 = vrot.lane.b32.xlu0 %v1120, 126
        %v1885 = vpop.permute.xlu0 %1884
        %1886 = vrot.lane.b32.xlu0 %v1122, 126
        %v1887 = vpop.permute.xlu0 %1886
        %1888 = vrot.lane.b32.xlu0 %v1125, 126
        %v1889 = vpop.permute.xlu0 %1888
        %1890 = vrot.lane.b32.xlu0 %v1127, 126
        %v1891 = vpop.permute.xlu0 %1890
        %v1898 = vmul.f32 %v1863, %v1881
        %v1899 = vmul.f32 %v1865, %v1883
        %v1900 = vmul.f32 %v1867, %v1885
        %v1901 = vmul.f32 %v1869, %v1887
        %v1902 = vmul.f32 %v1871, %v1889
        %v1903 = vmul.f32 %v1873, %v1891
        %v1904 = vadd.f32 %v1850, %v1898
        %v1905 = vadd.f32 %v1851, %v1899
        %v1906 = vadd.f32 %v1852, %v1900
        %v1907 = vadd.f32 %v1853, %v1901
        %v1908 = vadd.f32 %v1854, %v1902
        %v1909 = vadd.f32 %v1855, %v1903
        %v1910 = vsub.f32 %v705, %v854
        %v1911 = vsub.f32 %v706, %v855
        %v1912 = vsub.f32 %v707, %v856
        %v1913 = vsub.f32 %v708, %v857
        %v1914 = vsub.f32 %v709, %v858
        %v1915 = vsub.f32 %v710, %v859
        %v1916 = vmul.f32 %v1910, 1.442695
        %v1917 = vpow.pop %v1916
        %v1918 = vmul.f32 %v1911, 1.442695
        %v1919 = vpow.pop %v1918
        %v1920 = vmul.f32 %v1912, 1.442695
        %v1921 = vpow.pop %v1920
        %v1922 = vmul.f32 %v1913, 1.442695
        %v1923 = vpow.pop %v1922
        %v1924 = vmul.f32 %v1914, 1.442695
        %v1925 = vpow.pop %v1924
        %v1926 = vmul.f32 %v1915, 1.442695
        %v1927 = vpow.pop %v1926
        %v1928 = vadd.f32 %v1874, %v1917
        %v1929 = vadd.f32 %v1875, %v1919
        %v1930 = vadd.f32 %v1876, %v1921
        %v1931 = vadd.f32 %v1877, %v1923
        %v1932 = vadd.f32 %v1878, %v1925
        %v1933 = vadd.f32 %v1879, %v1927
        %1934 = vrot.lane.b32.xlu0 %v1173, 126
        %v1935 = vpop.permute.xlu0 %1934
        %1936 = vrot.lane.b32.xlu0 %v1175, 126
        %v1937 = vpop.permute.xlu0 %1936
        %1938 = vrot.lane.b32.xlu0 %v1178, 126
        %v1939 = vpop.permute.xlu0 %1938
        %1940 = vrot.lane.b32.xlu0 %v1180, 126
        %v1941 = vpop.permute.xlu0 %1940
        %1942 = vrot.lane.b32.xlu0 %v1183, 126
        %v1943 = vpop.permute.xlu0 %1942
        %1944 = vrot.lane.b32.xlu0 %v1185, 126
        %v1945 = vpop.permute.xlu0 %1944
        %v1952 = vmul.f32 %v1917, %v1935
        %v1953 = vmul.f32 %v1919, %v1937
        %v1954 = vmul.f32 %v1921, %v1939
        %v1955 = vmul.f32 %v1923, %v1941
        %v1956 = vmul.f32 %v1925, %v1943
        %v1957 = vmul.f32 %v1927, %v1945
        %v1958 = vadd.f32 %v1904, %v1952
        %v1959 = vadd.f32 %v1905, %v1953
        %v1960 = vadd.f32 %v1906, %v1954
        %v1961 = vadd.f32 %v1907, %v1955
        %v1962 = vadd.f32 %v1908, %v1956
        %v1963 = vadd.f32 %v1909, %v1957
        %v1964 = vsub.f32 %v796, %v854
        %v1965 = vsub.f32 %v797, %v855
        %v1966 = vsub.f32 %v798, %v856
        %v1967 = vsub.f32 %v799, %v857
        %v1968 = vsub.f32 %v800, %v858
        %v1969 = vsub.f32 %v801, %v859
        %v1970 = vmul.f32 %v1964, 1.442695
        %v1971 = vpow.pop %v1970
        %v1972 = vmul.f32 %v1965, 1.442695
        %v1973 = vpow.pop %v1972
        %v1974 = vmul.f32 %v1966, 1.442695
        %v1975 = vpow.pop %v1974
        %v1976 = vmul.f32 %v1967, 1.442695
        %v1977 = vpow.pop %v1976
        %v1978 = vmul.f32 %v1968, 1.442695
        %v1979 = vpow.pop %v1978
        %v1980 = vmul.f32 %v1969, 1.442695
        %v1981 = vpow.pop %v1980
        %v1982 = vadd.f32 %v1928, %v1971
        %v1983 = vadd.f32 %v1929, %v1973
        %v1984 = vadd.f32 %v1930, %v1975
        %v1985 = vadd.f32 %v1931, %v1977
        %v1986 = vadd.f32 %v1932, %v1979
        %v1987 = vadd.f32 %v1933, %v1981
        %1988 = vrot.lane.b32.xlu0 %v1231, 126
        %v1989 = vpop.permute.xlu0 %1988
        %1990 = vrot.lane.b32.xlu0 %v1233, 126
        %v1991 = vpop.permute.xlu0 %1990
        %1992 = vrot.lane.b32.xlu0 %v1236, 126
        %v1993 = vpop.permute.xlu0 %1992
        %1994 = vrot.lane.b32.xlu0 %v1238, 126
        %v1995 = vpop.permute.xlu0 %1994
        %1996 = vrot.lane.b32.xlu0 %v1241, 126
        %v1997 = vpop.permute.xlu0 %1996
        %1998 = vrot.lane.b32.xlu0 %v1243, 126
        %v1999 = vpop.permute.xlu0 %1998
        %v2006 = vmul.f32 %v1971, %v1989
        %v2007 = vmul.f32 %v1973, %v1991
        %v2008 = vmul.f32 %v1975, %v1993
        %v2009 = vmul.f32 %v1977, %v1995
        %v2010 = vmul.f32 %v1979, %v1997
        %v2011 = vmul.f32 %v1981, %v1999
        %v2012 = vadd.f32 %v1958, %v2006
        %v2013 = vadd.f32 %v1959, %v2007
        %v2014 = vadd.f32 %v1960, %v2008
        %v2015 = vadd.f32 %v1961, %v2009
        %v2016 = vadd.f32 %v1962, %v2010
        %v2017 = vadd.f32 %v1963, %v2011
        %v2018 = vsub.f32 %v263, %v854
        %v2019 = vsub.f32 %v264, %v855
        %v2020 = vsub.f32 %v265, %v856
        %v2021 = vsub.f32 %v266, %v857
        %v2022 = vsub.f32 %v267, %v858
        %v2023 = vsub.f32 %v268, %v859
        %v2024 = vmul.f32 %v2018, 1.442695
        %v2025 = vpow.pop %v2024
        %v2026 = vmul.f32 %v2019, 1.442695
        %v2027 = vpow.pop %v2026
        %v2028 = vmul.f32 %v2020, 1.442695
        %v2029 = vpow.pop %v2028
        %v2030 = vmul.f32 %v2021, 1.442695
        %v2031 = vpow.pop %v2030
        %v2032 = vmul.f32 %v2022, 1.442695
        %v2033 = vpow.pop %v2032
        %v2034 = vmul.f32 %v2023, 1.442695
        %v2035 = vpow.pop %v2034
        %v2036 = vadd.f32 %v1982, %v2025
        %v2037 = vadd.f32 %v1983, %v2027
        %v2038 = vadd.f32 %v1984, %v2029
        %v2039 = vadd.f32 %v1985, %v2031
        %v2040 = vadd.f32 %v1986, %v2033
        %v2041 = vadd.f32 %v1987, %v2035
        %2042 = vrot.lane.b32.xlu0 %v860, 125
        %v2043 = vpop.permute.xlu0 %2042
        %2044 = vrot.lane.b32.xlu0 %v861, 125
        %v2045 = vpop.permute.xlu0 %2044
        %2046 = vrot.lane.b32.xlu0 %v863, 125
        %v2047 = vpop.permute.xlu0 %2046
        %2048 = vrot.lane.b32.xlu0 %v864, 125
        %v2049 = vpop.permute.xlu0 %2048
        %2050 = vrot.lane.b32.xlu0 %v866, 125
        %v2051 = vpop.permute.xlu0 %2050
        %2052 = vrot.lane.b32.xlu0 %v867, 125
        %v2053 = vpop.permute.xlu0 %2052
        %v2060 = vmul.f32 %v2025, %v2043
        %v2061 = vmul.f32 %v2027, %v2045
        %v2062 = vmul.f32 %v2029, %v2047
        %v2063 = vmul.f32 %v2031, %v2049
        %v2064 = vmul.f32 %v2033, %v2051
        %v2065 = vmul.f32 %v2035, %v2053
        %v2066 = vadd.f32 %v2012, %v2060
        %v2067 = vadd.f32 %v2013, %v2061
        %v2068 = vadd.f32 %v2014, %v2062
        %v2069 = vadd.f32 %v2015, %v2063
        %v2070 = vadd.f32 %v2016, %v2064
        %v2071 = vadd.f32 %v2017, %v2065
        %v2072 = vsub.f32 %v354, %v854
        %v2073 = vsub.f32 %v355, %v855
        %v2074 = vsub.f32 %v356, %v856
        %v2075 = vsub.f32 %v357, %v857
        %v2076 = vsub.f32 %v358, %v858
        %v2077 = vsub.f32 %v359, %v859
        %v2078 = vmul.f32 %v2072, 1.442695
        %v2079 = vpow.pop %v2078
        %v2080 = vmul.f32 %v2073, 1.442695
        %v2081 = vpow.pop %v2080
        %v2082 = vmul.f32 %v2074, 1.442695
        %v2083 = vpow.pop %v2082
        %v2084 = vmul.f32 %v2075, 1.442695
        %v2085 = vpow.pop %v2084
        %v2086 = vmul.f32 %v2076, 1.442695
        %v2087 = vpow.pop %v2086
        %v2088 = vmul.f32 %v2077, 1.442695
        %v2089 = vpow.pop %v2088
        %v2090 = vadd.f32 %v2036, %v2079
        %v2091 = vadd.f32 %v2037, %v2081
        %v2092 = vadd.f32 %v2038, %v2083
        %v2093 = vadd.f32 %v2039, %v2085
        %v2094 = vadd.f32 %v2040, %v2087
        %v2095 = vadd.f32 %v2041, %v2089
        %2096 = vrot.lane.b32.xlu0 %v941, 125
        %v2097 = vpop.permute.xlu0 %2096
        %2098 = vrot.lane.b32.xlu0 %v943, 125
        %v2099 = vpop.permute.xlu0 %2098
        %2100 = vrot.lane.b32.xlu0 %v946, 125
        %v2101 = vpop.permute.xlu0 %2100
        %2102 = vrot.lane.b32.xlu0 %v948, 125
        %v2103 = vpop.permute.xlu0 %2102
        %2104 = vrot.lane.b32.xlu0 %v951, 125
        %v2105 = vpop.permute.xlu0 %2104
        %2106 = vrot.lane.b32.xlu0 %v953, 125
        %v2107 = vpop.permute.xlu0 %2106
        %v2114 = vmul.f32 %v2079, %v2097
        %v2115 = vmul.f32 %v2081, %v2099
        %v2116 = vmul.f32 %v2083, %v2101
        %v2117 = vmul.f32 %v2085, %v2103
        %v2118 = vmul.f32 %v2087, %v2105
        %v2119 = vmul.f32 %v2089, %v2107
        %v2120 = vadd.f32 %v2066, %v2114
        %v2121 = vadd.f32 %v2067, %v2115
        %v2122 = vadd.f32 %v2068, %v2116
        %v2123 = vadd.f32 %v2069, %v2117
        %v2124 = vadd.f32 %v2070, %v2118
        %v2125 = vadd.f32 %v2071, %v2119
        %v2126 = vsub.f32 %v445, %v854
        %v2127 = vsub.f32 %v446, %v855
        %v2128 = vsub.f32 %v447, %v856
        %v2129 = vsub.f32 %v448, %v857
        %v2130 = vsub.f32 %v449, %v858
        %v2131 = vsub.f32 %v450, %v859
        %v2132 = vmul.f32 %v2126, 1.442695
        %v2133 = vpow.pop %v2132
        %v2134 = vmul.f32 %v2127, 1.442695
        %v2135 = vpow.pop %v2134
        %v2136 = vmul.f32 %v2128, 1.442695
        %v2137 = vpow.pop %v2136
        %v2138 = vmul.f32 %v2129, 1.442695
        %v2139 = vpow.pop %v2138
        %v2140 = vmul.f32 %v2130, 1.442695
        %v2141 = vpow.pop %v2140
        %v2142 = vmul.f32 %v2131, 1.442695
        %v2143 = vpow.pop %v2142
        %v2144 = vadd.f32 %v2090, %v2133
        %v2145 = vadd.f32 %v2091, %v2135
        %v2146 = vadd.f32 %v2092, %v2137
        %v2147 = vadd.f32 %v2093, %v2139
        %v2148 = vadd.f32 %v2094, %v2141
        %v2149 = vadd.f32 %v2095, %v2143
        %2150 = vrot.lane.b32.xlu0 %v999, 125
        %v2151 = vpop.permute.xlu0 %2150
        %2152 = vrot.lane.b32.xlu0 %v1001, 125
        %v2153 = vpop.permute.xlu0 %2152
        %2154 = vrot.lane.b32.xlu0 %v1004, 125
        %v2155 = vpop.permute.xlu0 %2154
        %2156 = vrot.lane.b32.xlu0 %v1006, 125
        %v2157 = vpop.permute.xlu0 %2156
        %2158 = vrot.lane.b32.xlu0 %v1009, 125
        %v2159 = vpop.permute.xlu0 %2158
        %2160 = vrot.lane.b32.xlu0 %v1011, 125
        %v2161 = vpop.permute.xlu0 %2160
        %v2168 = vmul.f32 %v2133, %v2151
        %v2169 = vmul.f32 %v2135, %v2153
        %v2170 = vmul.f32 %v2137, %v2155
        %v2171 = vmul.f32 %v2139, %v2157
        %v2172 = vmul.f32 %v2141, %v2159
        %v2173 = vmul.f32 %v2143, %v2161
        %v2174 = vadd.f32 %v2120, %v2168
        %v2175 = vadd.f32 %v2121, %v2169
        %v2176 = vadd.f32 %v2122, %v2170
        %v2177 = vadd.f32 %v2123, %v2171
        %v2178 = vadd.f32 %v2124, %v2172
        %v2179 = vadd.f32 %v2125, %v2173
        %v2180 = vsub.f32 %v536, %v854
        %v2181 = vsub.f32 %v537, %v855
        %v2182 = vsub.f32 %v538, %v856
        %v2183 = vsub.f32 %v539, %v857
        %v2184 = vsub.f32 %v540, %v858
        %v2185 = vsub.f32 %v541, %v859
        %v2186 = vmul.f32 %v2180, 1.442695
        %v2187 = vpow.pop %v2186
        %v2188 = vmul.f32 %v2181, 1.442695
        %v2189 = vpow.pop %v2188
        %v2190 = vmul.f32 %v2182, 1.442695
        %v2191 = vpow.pop %v2190
        %v2192 = vmul.f32 %v2183, 1.442695
        %v2193 = vpow.pop %v2192
        %v2194 = vmul.f32 %v2184, 1.442695
        %v2195 = vpow.pop %v2194
        %v2196 = vmul.f32 %v2185, 1.442695
        %v2197 = vpow.pop %v2196
        %v2198 = vadd.f32 %v2144, %v2187
        %v2199 = vadd.f32 %v2145, %v2189
        %v2200 = vadd.f32 %v2146, %v2191
        %v2201 = vadd.f32 %v2147, %v2193
        %v2202 = vadd.f32 %v2148, %v2195
        %v2203 = vadd.f32 %v2149, %v2197
        %2204 = vrot.lane.b32.xlu0 %v1057, 125
        %v2205 = vpop.permute.xlu0 %2204
        %2206 = vrot.lane.b32.xlu0 %v1059, 125
        %v2207 = vpop.permute.xlu0 %2206
        %2208 = vrot.lane.b32.xlu0 %v1062, 125
        %v2209 = vpop.permute.xlu0 %2208
        %2210 = vrot.lane.b32.xlu0 %v1064, 125
        %v2211 = vpop.permute.xlu0 %2210
        %2212 = vrot.lane.b32.xlu0 %v1067, 125
        %v2213 = vpop.permute.xlu0 %2212
        %2214 = vrot.lane.b32.xlu0 %v1069, 125
        %v2215 = vpop.permute.xlu0 %2214
        %v2222 = vmul.f32 %v2187, %v2205
        %v2223 = vmul.f32 %v2189, %v2207
        %v2224 = vmul.f32 %v2191, %v2209
        %v2225 = vmul.f32 %v2193, %v2211
        %v2226 = vmul.f32 %v2195, %v2213
        %v2227 = vmul.f32 %v2197, %v2215
        %v2228 = vadd.f32 %v2174, %v2222
        %v2229 = vadd.f32 %v2175, %v2223
        %v2230 = vadd.f32 %v2176, %v2224
        %v2231 = vadd.f32 %v2177, %v2225
        %v2232 = vadd.f32 %v2178, %v2226
        %v2233 = vadd.f32 %v2179, %v2227
        %v2234 = vsub.f32 %v627, %v854
        %v2235 = vsub.f32 %v628, %v855
        %v2236 = vsub.f32 %v629, %v856
        %v2237 = vsub.f32 %v630, %v857
        %v2238 = vsub.f32 %v631, %v858
        %v2239 = vsub.f32 %v632, %v859
        %v2240 = vmul.f32 %v2234, 1.442695
        %v2241 = vpow.pop %v2240
        %v2242 = vmul.f32 %v2235, 1.442695
        %v2243 = vpow.pop %v2242
        %v2244 = vmul.f32 %v2236, 1.442695
        %v2245 = vpow.pop %v2244
        %v2246 = vmul.f32 %v2237, 1.442695
        %v2247 = vpow.pop %v2246
        %v2248 = vmul.f32 %v2238, 1.442695
        %v2249 = vpow.pop %v2248
        %v2250 = vmul.f32 %v2239, 1.442695
        %v2251 = vpow.pop %v2250
        %v2252 = vadd.f32 %v2198, %v2241
        %v2253 = vadd.f32 %v2199, %v2243
        %v2254 = vadd.f32 %v2200, %v2245
        %v2255 = vadd.f32 %v2201, %v2247
        %v2256 = vadd.f32 %v2202, %v2249
        %v2257 = vadd.f32 %v2203, %v2251
        %2258 = vrot.lane.b32.xlu0 %v1115, 125
        %v2259 = vpop.permute.xlu0 %2258
        %2260 = vrot.lane.b32.xlu0 %v1117, 125
        %v2261 = vpop.permute.xlu0 %2260
        %2262 = vrot.lane.b32.xlu0 %v1120, 125
        %v2263 = vpop.permute.xlu0 %2262
        %2264 = vrot.lane.b32.xlu0 %v1122, 125
        %v2265 = vpop.permute.xlu0 %2264
        %2266 = vrot.lane.b32.xlu0 %v1125, 125
        %v2267 = vpop.permute.xlu0 %2266
        %2268 = vrot.lane.b32.xlu0 %v1127, 125
        %v2269 = vpop.permute.xlu0 %2268
        %v2276 = vmul.f32 %v2241, %v2259
        %v2277 = vmul.f32 %v2243, %v2261
        %v2278 = vmul.f32 %v2245, %v2263
        %v2279 = vmul.f32 %v2247, %v2265
        %v2280 = vmul.f32 %v2249, %v2267
        %v2281 = vmul.f32 %v2251, %v2269
        %v2282 = vadd.f32 %v2228, %v2276
        %v2283 = vadd.f32 %v2229, %v2277
        %v2284 = vadd.f32 %v2230, %v2278
        %v2285 = vadd.f32 %v2231, %v2279
        %v2286 = vadd.f32 %v2232, %v2280
        %v2287 = vadd.f32 %v2233, %v2281
        %v2288 = vsub.f32 %v718, %v854
        %v2289 = vsub.f32 %v719, %v855
        %v2290 = vsub.f32 %v720, %v856
        %v2291 = vsub.f32 %v721, %v857
        %v2292 = vsub.f32 %v722, %v858
        %v2293 = vsub.f32 %v723, %v859
        %v2294 = vmul.f32 %v2288, 1.442695
        %v2295 = vpow.pop %v2294
        %v2296 = vmul.f32 %v2289, 1.442695
        %v2297 = vpow.pop %v2296
        %v2298 = vmul.f32 %v2290, 1.442695
        %v2299 = vpow.pop %v2298
        %v2300 = vmul.f32 %v2291, 1.442695
        %v2301 = vpow.pop %v2300
        %v2302 = vmul.f32 %v2292, 1.442695
        %v2303 = vpow.pop %v2302
        %v2304 = vmul.f32 %v2293, 1.442695
        %v2305 = vpow.pop %v2304
        %v2306 = vadd.f32 %v2252, %v2295
        %v2307 = vadd.f32 %v2253, %v2297
        %v2308 = vadd.f32 %v2254, %v2299
        %v2309 = vadd.f32 %v2255, %v2301
        %v2310 = vadd.f32 %v2256, %v2303
        %v2311 = vadd.f32 %v2257, %v2305
        %2312 = vrot.lane.b32.xlu0 %v1173, 125
        %v2313 = vpop.permute.xlu0 %2312
        %2314 = vrot.lane.b32.xlu0 %v1175, 125
        %v2315 = vpop.permute.xlu0 %2314
        %2316 = vrot.lane.b32.xlu0 %v1178, 125
        %v2317 = vpop.permute.xlu0 %2316
        %2318 = vrot.lane.b32.xlu0 %v1180, 125
        %v2319 = vpop.permute.xlu0 %2318
        %2320 = vrot.lane.b32.xlu0 %v1183, 125
        %v2321 = vpop.permute.xlu0 %2320
        %2322 = vrot.lane.b32.xlu0 %v1185, 125
        %v2323 = vpop.permute.xlu0 %2322
        %v2330 = vmul.f32 %v2295, %v2313
        %v2331 = vmul.f32 %v2297, %v2315
        %v2332 = vmul.f32 %v2299, %v2317
        %v2333 = vmul.f32 %v2301, %v2319
        %v2334 = vmul.f32 %v2303, %v2321
        %v2335 = vmul.f32 %v2305, %v2323
        %v2336 = vadd.f32 %v2282, %v2330
        %v2337 = vadd.f32 %v2283, %v2331
        %v2338 = vadd.f32 %v2284, %v2332
        %v2339 = vadd.f32 %v2285, %v2333
        %v2340 = vadd.f32 %v2286, %v2334
        %v2341 = vadd.f32 %v2287, %v2335
        %v2342 = vsub.f32 %v809, %v854
        %v2343 = vsub.f32 %v810, %v855
        %v2344 = vsub.f32 %v811, %v856
        %v2345 = vsub.f32 %v812, %v857
        %v2346 = vsub.f32 %v813, %v858
        %v2347 = vsub.f32 %v814, %v859
        %v2348 = vmul.f32 %v2342, 1.442695
        %v2349 = vpow.pop %v2348
        %v2350 = vmul.f32 %v2343, 1.442695
        %v2351 = vpow.pop %v2350
        %v2352 = vmul.f32 %v2344, 1.442695
        %v2353 = vpow.pop %v2352
        %v2354 = vmul.f32 %v2345, 1.442695
        %v2355 = vpow.pop %v2354
        %v2356 = vmul.f32 %v2346, 1.442695
        %v2357 = vpow.pop %v2356
        %v2358 = vmul.f32 %v2347, 1.442695
        %v2359 = vpow.pop %v2358
        %v2360 = vadd.f32 %v2306, %v2349
        %v2361 = vadd.f32 %v2307, %v2351
        %v2362 = vadd.f32 %v2308, %v2353
        %v2363 = vadd.f32 %v2309, %v2355
        %v2364 = vadd.f32 %v2310, %v2357
        %v2365 = vadd.f32 %v2311, %v2359
        %2366 = vrot.lane.b32.xlu0 %v1231, 125
        %v2367 = vpop.permute.xlu0 %2366
        %2368 = vrot.lane.b32.xlu0 %v1233, 125
        %v2369 = vpop.permute.xlu0 %2368
        %2370 = vrot.lane.b32.xlu0 %v1236, 125
        %v2371 = vpop.permute.xlu0 %2370
        %2372 = vrot.lane.b32.xlu0 %v1238, 125
        %v2373 = vpop.permute.xlu0 %2372
        %2374 = vrot.lane.b32.xlu0 %v1241, 125
        %v2375 = vpop.permute.xlu0 %2374
        %2376 = vrot.lane.b32.xlu0 %v1243, 125
        %v2377 = vpop.permute.xlu0 %2376
        %v2384 = vmul.f32 %v2349, %v2367
        %v2385 = vmul.f32 %v2351, %v2369
        %v2386 = vmul.f32 %v2353, %v2371
        %v2387 = vmul.f32 %v2355, %v2373
        %v2388 = vmul.f32 %v2357, %v2375
        %v2389 = vmul.f32 %v2359, %v2377
        %v2390 = vadd.f32 %v2336, %v2384
        %v2391 = vadd.f32 %v2337, %v2385
        %v2392 = vadd.f32 %v2338, %v2386
        %v2393 = vadd.f32 %v2339, %v2387
        %v2394 = vadd.f32 %v2340, %v2388
        %v2395 = vadd.f32 %v2341, %v2389
        %v2396 = vsub.f32 %v276, %v854
        %v2397 = vsub.f32 %v277, %v855
        %v2398 = vsub.f32 %v278, %v856
        %v2399 = vsub.f32 %v279, %v857
        %v2400 = vsub.f32 %v280, %v858
        %v2401 = vsub.f32 %v281, %v859
        %v2402 = vmul.f32 %v2396, 1.442695
        %v2403 = vpow.pop %v2402
        %v2404 = vmul.f32 %v2397, 1.442695
        %v2405 = vpow.pop %v2404
        %v2406 = vmul.f32 %v2398, 1.442695
        %v2407 = vpow.pop %v2406
        %v2408 = vmul.f32 %v2399, 1.442695
        %v2409 = vpow.pop %v2408
        %v2410 = vmul.f32 %v2400, 1.442695
        %v2411 = vpow.pop %v2410
        %v2412 = vmul.f32 %v2401, 1.442695
        %v2413 = vpow.pop %v2412
        %v2414 = vadd.f32 %v2360, %v2403
        %v2415 = vadd.f32 %v2361, %v2405
        %v2416 = vadd.f32 %v2362, %v2407
        %v2417 = vadd.f32 %v2363, %v2409
        %v2418 = vadd.f32 %v2364, %v2411
        %v2419 = vadd.f32 %v2365, %v2413
        %2420 = vrot.lane.b32.xlu0 %v860, 124
        %v2421 = vpop.permute.xlu0 %2420
        %2422 = vrot.lane.b32.xlu0 %v861, 124
        %v2423 = vpop.permute.xlu0 %2422
        %2424 = vrot.lane.b32.xlu0 %v863, 124
        %v2425 = vpop.permute.xlu0 %2424
        %2426 = vrot.lane.b32.xlu0 %v864, 124
        %v2427 = vpop.permute.xlu0 %2426
        %2428 = vrot.lane.b32.xlu0 %v866, 124
        %v2429 = vpop.permute.xlu0 %2428
        %2430 = vrot.lane.b32.xlu0 %v867, 124
        %v2431 = vpop.permute.xlu0 %2430
        %v2438 = vmul.f32 %v2403, %v2421
        %v2439 = vmul.f32 %v2405, %v2423
        %v2440 = vmul.f32 %v2407, %v2425
        %v2441 = vmul.f32 %v2409, %v2427
        %v2442 = vmul.f32 %v2411, %v2429
        %v2443 = vmul.f32 %v2413, %v2431
        %v2444 = vadd.f32 %v2390, %v2438
        %v2445 = vadd.f32 %v2391, %v2439
        %v2446 = vadd.f32 %v2392, %v2440
        %v2447 = vadd.f32 %v2393, %v2441
        %v2448 = vadd.f32 %v2394, %v2442
        %v2449 = vadd.f32 %v2395, %v2443
        %v2450 = vsub.f32 %v367, %v854
        %v2451 = vsub.f32 %v368, %v855
        %v2452 = vsub.f32 %v369, %v856
        %v2453 = vsub.f32 %v370, %v857
        %v2454 = vsub.f32 %v371, %v858
        %v2455 = vsub.f32 %v372, %v859
        %v2456 = vmul.f32 %v2450, 1.442695
        %v2457 = vpow.pop %v2456
        %v2458 = vmul.f32 %v2451, 1.442695
        %v2459 = vpow.pop %v2458
        %v2460 = vmul.f32 %v2452, 1.442695
        %v2461 = vpow.pop %v2460
        %v2462 = vmul.f32 %v2453, 1.442695
        %v2463 = vpow.pop %v2462
        %v2464 = vmul.f32 %v2454, 1.442695
        %v2465 = vpow.pop %v2464
        %v2466 = vmul.f32 %v2455, 1.442695
        %v2467 = vpow.pop %v2466
        %v2468 = vadd.f32 %v2414, %v2457
        %v2469 = vadd.f32 %v2415, %v2459
        %v2470 = vadd.f32 %v2416, %v2461
        %v2471 = vadd.f32 %v2417, %v2463
        %v2472 = vadd.f32 %v2418, %v2465
        %v2473 = vadd.f32 %v2419, %v2467
        %2474 = vrot.lane.b32.xlu0 %v941, 124
        %v2475 = vpop.permute.xlu0 %2474
        %2476 = vrot.lane.b32.xlu0 %v943, 124
        %v2477 = vpop.permute.xlu0 %2476
        %2478 = vrot.lane.b32.xlu0 %v946, 124
        %v2479 = vpop.permute.xlu0 %2478
        %2480 = vrot.lane.b32.xlu0 %v948, 124
        %v2481 = vpop.permute.xlu0 %2480
        %2482 = vrot.lane.b32.xlu0 %v951, 124
        %v2483 = vpop.permute.xlu0 %2482
        %2484 = vrot.lane.b32.xlu0 %v953, 124
        %v2485 = vpop.permute.xlu0 %2484
        %v2492 = vmul.f32 %v2457, %v2475
        %v2493 = vmul.f32 %v2459, %v2477
        %v2494 = vmul.f32 %v2461, %v2479
        %v2495 = vmul.f32 %v2463, %v2481
        %v2496 = vmul.f32 %v2465, %v2483
        %v2497 = vmul.f32 %v2467, %v2485
        %v2498 = vadd.f32 %v2444, %v2492
        %v2499 = vadd.f32 %v2445, %v2493
        %v2500 = vadd.f32 %v2446, %v2494
        %v2501 = vadd.f32 %v2447, %v2495
        %v2502 = vadd.f32 %v2448, %v2496
        %v2503 = vadd.f32 %v2449, %v2497
        %v2504 = vsub.f32 %v458, %v854
        %v2505 = vsub.f32 %v459, %v855
        %v2506 = vsub.f32 %v460, %v856
        %v2507 = vsub.f32 %v461, %v857
        %v2508 = vsub.f32 %v462, %v858
        %v2509 = vsub.f32 %v463, %v859
        %v2510 = vmul.f32 %v2504, 1.442695
        %v2511 = vpow.pop %v2510
        %v2512 = vmul.f32 %v2505, 1.442695
        %v2513 = vpow.pop %v2512
        %v2514 = vmul.f32 %v2506, 1.442695
        %v2515 = vpow.pop %v2514
        %v2516 = vmul.f32 %v2507, 1.442695
        %v2517 = vpow.pop %v2516
        %v2518 = vmul.f32 %v2508, 1.442695
        %v2519 = vpow.pop %v2518
        %v2520 = vmul.f32 %v2509, 1.442695
        %v2521 = vpow.pop %v2520
        %v2522 = vadd.f32 %v2468, %v2511
        %v2523 = vadd.f32 %v2469, %v2513
        %v2524 = vadd.f32 %v2470, %v2515
        %v2525 = vadd.f32 %v2471, %v2517
        %v2526 = vadd.f32 %v2472, %v2519
        %v2527 = vadd.f32 %v2473, %v2521
        %2528 = vrot.lane.b32.xlu0 %v999, 124
        %v2529 = vpop.permute.xlu0 %2528
        %2530 = vrot.lane.b32.xlu0 %v1001, 124
        %v2531 = vpop.permute.xlu0 %2530
        %2532 = vrot.lane.b32.xlu0 %v1004, 124
        %v2533 = vpop.permute.xlu0 %2532
        %2534 = vrot.lane.b32.xlu0 %v1006, 124
        %v2535 = vpop.permute.xlu0 %2534
        %2536 = vrot.lane.b32.xlu0 %v1009, 124
        %v2537 = vpop.permute.xlu0 %2536
        %2538 = vrot.lane.b32.xlu0 %v1011, 124
        %v2539 = vpop.permute.xlu0 %2538
        %v2546 = vmul.f32 %v2511, %v2529
        %v2547 = vmul.f32 %v2513, %v2531
        %v2548 = vmul.f32 %v2515, %v2533
        %v2549 = vmul.f32 %v2517, %v2535
        %v2550 = vmul.f32 %v2519, %v2537
        %v2551 = vmul.f32 %v2521, %v2539
        %v2552 = vadd.f32 %v2498, %v2546
        %v2553 = vadd.f32 %v2499, %v2547
        %v2554 = vadd.f32 %v2500, %v2548
        %v2555 = vadd.f32 %v2501, %v2549
        %v2556 = vadd.f32 %v2502, %v2550
        %v2557 = vadd.f32 %v2503, %v2551
        %v2558 = vsub.f32 %v549, %v854
        %v2559 = vsub.f32 %v550, %v855
        %v2560 = vsub.f32 %v551, %v856
        %v2561 = vsub.f32 %v552, %v857
        %v2562 = vsub.f32 %v553, %v858
        %v2563 = vsub.f32 %v554, %v859
        %v2564 = vmul.f32 %v2558, 1.442695
        %v2565 = vpow.pop %v2564
        %v2566 = vmul.f32 %v2559, 1.442695
        %v2567 = vpow.pop %v2566
        %v2568 = vmul.f32 %v2560, 1.442695
        %v2569 = vpow.pop %v2568
        %v2570 = vmul.f32 %v2561, 1.442695
        %v2571 = vpow.pop %v2570
        %v2572 = vmul.f32 %v2562, 1.442695
        %v2573 = vpow.pop %v2572
        %v2574 = vmul.f32 %v2563, 1.442695
        %v2575 = vpow.pop %v2574
        %v2576 = vadd.f32 %v2522, %v2565
        %v2577 = vadd.f32 %v2523, %v2567
        %v2578 = vadd.f32 %v2524, %v2569
        %v2579 = vadd.f32 %v2525, %v2571
        %v2580 = vadd.f32 %v2526, %v2573
        %v2581 = vadd.f32 %v2527, %v2575
        %2582 = vrot.lane.b32.xlu0 %v1057, 124
        %v2583 = vpop.permute.xlu0 %2582
        %2584 = vrot.lane.b32.xlu0 %v1059, 124
        %v2585 = vpop.permute.xlu0 %2584
        %2586 = vrot.lane.b32.xlu0 %v1062, 124
        %v2587 = vpop.permute.xlu0 %2586
        %2588 = vrot.lane.b32.xlu0 %v1064, 124
        %v2589 = vpop.permute.xlu0 %2588
        %2590 = vrot.lane.b32.xlu0 %v1067, 124
        %v2591 = vpop.permute.xlu0 %2590
        %2592 = vrot.lane.b32.xlu0 %v1069, 124
        %v2593 = vpop.permute.xlu0 %2592
        %v2600 = vmul.f32 %v2565, %v2583
        %v2601 = vmul.f32 %v2567, %v2585
        %v2602 = vmul.f32 %v2569, %v2587
        %v2603 = vmul.f32 %v2571, %v2589
        %v2604 = vmul.f32 %v2573, %v2591
        %v2605 = vmul.f32 %v2575, %v2593
        %v2606 = vadd.f32 %v2552, %v2600
        %v2607 = vadd.f32 %v2553, %v2601
        %v2608 = vadd.f32 %v2554, %v2602
        %v2609 = vadd.f32 %v2555, %v2603
        %v2610 = vadd.f32 %v2556, %v2604
        %v2611 = vadd.f32 %v2557, %v2605
        %v2612 = vsub.f32 %v640, %v854
        %v2613 = vsub.f32 %v641, %v855
        %v2614 = vsub.f32 %v642, %v856
        %v2615 = vsub.f32 %v643, %v857
        %v2616 = vsub.f32 %v644, %v858
        %v2617 = vsub.f32 %v645, %v859
        %v2618 = vmul.f32 %v2612, 1.442695
        %v2619 = vpow.pop %v2618
        %v2620 = vmul.f32 %v2613, 1.442695
        %v2621 = vpow.pop %v2620
        %v2622 = vmul.f32 %v2614, 1.442695
        %v2623 = vpow.pop %v2622
        %v2624 = vmul.f32 %v2615, 1.442695
        %v2625 = vpow.pop %v2624
        %v2626 = vmul.f32 %v2616, 1.442695
        %v2627 = vpow.pop %v2626
        %v2628 = vmul.f32 %v2617, 1.442695
        %v2629 = vpow.pop %v2628
        %v2630 = vadd.f32 %v2576, %v2619
        %v2631 = vadd.f32 %v2577, %v2621
        %v2632 = vadd.f32 %v2578, %v2623
        %v2633 = vadd.f32 %v2579, %v2625
        %v2634 = vadd.f32 %v2580, %v2627
        %v2635 = vadd.f32 %v2581, %v2629
        %2636 = vrot.lane.b32.xlu0 %v1115, 124
        %v2637 = vpop.permute.xlu0 %2636
        %2638 = vrot.lane.b32.xlu0 %v1117, 124
        %v2639 = vpop.permute.xlu0 %2638
        %2640 = vrot.lane.b32.xlu0 %v1120, 124
        %v2641 = vpop.permute.xlu0 %2640
        %2642 = vrot.lane.b32.xlu0 %v1122, 124
        %v2643 = vpop.permute.xlu0 %2642
        %2644 = vrot.lane.b32.xlu0 %v1125, 124
        %v2645 = vpop.permute.xlu0 %2644
        %2646 = vrot.lane.b32.xlu0 %v1127, 124
        %v2647 = vpop.permute.xlu0 %2646
        %v2654 = vmul.f32 %v2619, %v2637
        %v2655 = vmul.f32 %v2621, %v2639
        %v2656 = vmul.f32 %v2623, %v2641
        %v2657 = vmul.f32 %v2625, %v2643
        %v2658 = vmul.f32 %v2627, %v2645
        %v2659 = vmul.f32 %v2629, %v2647
        %v2660 = vadd.f32 %v2606, %v2654
        %v2661 = vadd.f32 %v2607, %v2655
        %v2662 = vadd.f32 %v2608, %v2656
        %v2663 = vadd.f32 %v2609, %v2657
        %v2664 = vadd.f32 %v2610, %v2658
        %v2665 = vadd.f32 %v2611, %v2659
        %v2666 = vsub.f32 %v731, %v854
        %v2667 = vsub.f32 %v732, %v855
        %v2668 = vsub.f32 %v733, %v856
        %v2669 = vsub.f32 %v734, %v857
        %v2670 = vsub.f32 %v735, %v858
        %v2671 = vsub.f32 %v736, %v859
        %v2672 = vmul.f32 %v2666, 1.442695
        %v2673 = vpow.pop %v2672
        %v2674 = vmul.f32 %v2667, 1.442695
        %v2675 = vpow.pop %v2674
        %v2676 = vmul.f32 %v2668, 1.442695
        %v2677 = vpow.pop %v2676
        %v2678 = vmul.f32 %v2669, 1.442695
        %v2679 = vpow.pop %v2678
        %v2680 = vmul.f32 %v2670, 1.442695
        %v2681 = vpow.pop %v2680
        %v2682 = vmul.f32 %v2671, 1.442695
        %v2683 = vpow.pop %v2682
        %v2684 = vadd.f32 %v2630, %v2673
        %v2685 = vadd.f32 %v2631, %v2675
        %v2686 = vadd.f32 %v2632, %v2677
        %v2687 = vadd.f32 %v2633, %v2679
        %v2688 = vadd.f32 %v2634, %v2681
        %v2689 = vadd.f32 %v2635, %v2683
        %2690 = vrot.lane.b32.xlu0 %v1173, 124
        %v2691 = vpop.permute.xlu0 %2690
        %2692 = vrot.lane.b32.xlu0 %v1175, 124
        %v2693 = vpop.permute.xlu0 %2692
        %2694 = vrot.lane.b32.xlu0 %v1178, 124
        %v2695 = vpop.permute.xlu0 %2694
        %2696 = vrot.lane.b32.xlu0 %v1180, 124
        %v2697 = vpop.permute.xlu0 %2696
        %2698 = vrot.lane.b32.xlu0 %v1183, 124
        %v2699 = vpop.permute.xlu0 %2698
        %2700 = vrot.lane.b32.xlu0 %v1185, 124
        %v2701 = vpop.permute.xlu0 %2700
        %v2708 = vmul.f32 %v2673, %v2691
        %v2709 = vmul.f32 %v2675, %v2693
        %v2710 = vmul.f32 %v2677, %v2695
        %v2711 = vmul.f32 %v2679, %v2697
        %v2712 = vmul.f32 %v2681, %v2699
        %v2713 = vmul.f32 %v2683, %v2701
        %v2714 = vadd.f32 %v2660, %v2708
        %v2715 = vadd.f32 %v2661, %v2709
        %v2716 = vadd.f32 %v2662, %v2710
        %v2717 = vadd.f32 %v2663, %v2711
        %v2718 = vadd.f32 %v2664, %v2712
        %v2719 = vadd.f32 %v2665, %v2713
        %v2720 = vsub.f32 %v822, %v854
        %v2721 = vsub.f32 %v823, %v855
        %v2722 = vsub.f32 %v824, %v856
        %v2723 = vsub.f32 %v825, %v857
        %v2724 = vsub.f32 %v826, %v858
        %v2725 = vsub.f32 %v827, %v859
        %v2726 = vmul.f32 %v2720, 1.442695
        %v2727 = vpow.pop %v2726
        %v2728 = vmul.f32 %v2721, 1.442695
        %v2729 = vpow.pop %v2728
        %v2730 = vmul.f32 %v2722, 1.442695
        %v2731 = vpow.pop %v2730
        %v2732 = vmul.f32 %v2723, 1.442695
        %v2733 = vpow.pop %v2732
        %v2734 = vmul.f32 %v2724, 1.442695
        %v2735 = vpow.pop %v2734
        %v2736 = vmul.f32 %v2725, 1.442695
        %v2737 = vpow.pop %v2736
        %v2738 = vadd.f32 %v2684, %v2727
        %v2739 = vadd.f32 %v2685, %v2729
        %v2740 = vadd.f32 %v2686, %v2731
        %v2741 = vadd.f32 %v2687, %v2733
        %v2742 = vadd.f32 %v2688, %v2735
        %v2743 = vadd.f32 %v2689, %v2737
        %2744 = vrot.lane.b32.xlu0 %v1231, 124
        %v2745 = vpop.permute.xlu0 %2744
        %2746 = vrot.lane.b32.xlu0 %v1233, 124
        %v2747 = vpop.permute.xlu0 %2746
        %2748 = vrot.lane.b32.xlu0 %v1236, 124
        %v2749 = vpop.permute.xlu0 %2748
        %2750 = vrot.lane.b32.xlu0 %v1238, 124
        %v2751 = vpop.permute.xlu0 %2750
        %2752 = vrot.lane.b32.xlu0 %v1241, 124
        %v2753 = vpop.permute.xlu0 %2752
        %2754 = vrot.lane.b32.xlu0 %v1243, 124
        %v2755 = vpop.permute.xlu0 %2754
        %v2762 = vmul.f32 %v2727, %v2745
        %v2763 = vmul.f32 %v2729, %v2747
        %v2764 = vmul.f32 %v2731, %v2749
        %v2765 = vmul.f32 %v2733, %v2751
        %v2766 = vmul.f32 %v2735, %v2753
        %v2767 = vmul.f32 %v2737, %v2755
        %v2768 = vadd.f32 %v2714, %v2762
        %v2769 = vadd.f32 %v2715, %v2763
        %v2770 = vadd.f32 %v2716, %v2764
        %v2771 = vadd.f32 %v2717, %v2765
        %v2772 = vadd.f32 %v2718, %v2766
        %v2773 = vadd.f32 %v2719, %v2767
        %v2774 = vsub.f32 %v289, %v854
        %v2775 = vsub.f32 %v290, %v855
        %v2776 = vsub.f32 %v291, %v856
        %v2777 = vsub.f32 %v292, %v857
        %v2778 = vsub.f32 %v293, %v858
        %v2779 = vsub.f32 %v294, %v859
        %v2780 = vmul.f32 %v2774, 1.442695
        %v2781 = vpow.pop %v2780
        %v2782 = vmul.f32 %v2775, 1.442695
        %v2783 = vpow.pop %v2782
        %v2784 = vmul.f32 %v2776, 1.442695
        %v2785 = vpow.pop %v2784
        %v2786 = vmul.f32 %v2777, 1.442695
        %v2787 = vpow.pop %v2786
        %v2788 = vmul.f32 %v2778, 1.442695
        %v2789 = vpow.pop %v2788
        %v2790 = vmul.f32 %v2779, 1.442695
        %v2791 = vpow.pop %v2790
        %v2792 = vadd.f32 %v2738, %v2781
        %v2793 = vadd.f32 %v2739, %v2783
        %v2794 = vadd.f32 %v2740, %v2785
        %v2795 = vadd.f32 %v2741, %v2787
        %v2796 = vadd.f32 %v2742, %v2789
        %v2797 = vadd.f32 %v2743, %v2791
        %2798 = vrot.lane.b32.xlu0 %v860, 123
        %v2799 = vpop.permute.xlu0 %2798
        %2800 = vrot.lane.b32.xlu0 %v861, 123
        %v2801 = vpop.permute.xlu0 %2800
        %2802 = vrot.lane.b32.xlu0 %v863, 123
        %v2803 = vpop.permute.xlu0 %2802
        %2804 = vrot.lane.b32.xlu0 %v864, 123
        %v2805 = vpop.permute.xlu0 %2804
        %2806 = vrot.lane.b32.xlu0 %v866, 123
        %v2807 = vpop.permute.xlu0 %2806
        %2808 = vrot.lane.b32.xlu0 %v867, 123
        %v2809 = vpop.permute.xlu0 %2808
        %v2816 = vmul.f32 %v2781, %v2799
        %v2817 = vmul.f32 %v2783, %v2801
        %v2818 = vmul.f32 %v2785, %v2803
        %v2819 = vmul.f32 %v2787, %v2805
        %v2820 = vmul.f32 %v2789, %v2807
        %v2821 = vmul.f32 %v2791, %v2809
        %v2822 = vadd.f32 %v2768, %v2816
        %v2823 = vadd.f32 %v2769, %v2817
        %v2824 = vadd.f32 %v2770, %v2818
        %v2825 = vadd.f32 %v2771, %v2819
        %v2826 = vadd.f32 %v2772, %v2820
        %v2827 = vadd.f32 %v2773, %v2821
        %v2828 = vsub.f32 %v380, %v854
        %v2829 = vsub.f32 %v381, %v855
        %v2830 = vsub.f32 %v382, %v856
        %v2831 = vsub.f32 %v383, %v857
        %v2832 = vsub.f32 %v384, %v858
        %v2833 = vsub.f32 %v385, %v859
        %v2834 = vmul.f32 %v2828, 1.442695
        %v2835 = vpow.pop %v2834
        %v2836 = vmul.f32 %v2829, 1.442695
        %v2837 = vpow.pop %v2836
        %v2838 = vmul.f32 %v2830, 1.442695
        %v2839 = vpow.pop %v2838
        %v2840 = vmul.f32 %v2831, 1.442695
        %v2841 = vpow.pop %v2840
        %v2842 = vmul.f32 %v2832, 1.442695
        %v2843 = vpow.pop %v2842
        %v2844 = vmul.f32 %v2833, 1.442695
        %v2845 = vpow.pop %v2844
        %v2846 = vadd.f32 %v2792, %v2835
        %v2847 = vadd.f32 %v2793, %v2837
        %v2848 = vadd.f32 %v2794, %v2839
        %v2849 = vadd.f32 %v2795, %v2841
        %v2850 = vadd.f32 %v2796, %v2843
        %v2851 = vadd.f32 %v2797, %v2845
        %2852 = vrot.lane.b32.xlu0 %v941, 123
        %v2853 = vpop.permute.xlu0 %2852
        %2854 = vrot.lane.b32.xlu0 %v943, 123
        %v2855 = vpop.permute.xlu0 %2854
        %2856 = vrot.lane.b32.xlu0 %v946, 123
        %v2857 = vpop.permute.xlu0 %2856
        %2858 = vrot.lane.b32.xlu0 %v948, 123
        %v2859 = vpop.permute.xlu0 %2858
        %2860 = vrot.lane.b32.xlu0 %v951, 123
        %v2861 = vpop.permute.xlu0 %2860
        %2862 = vrot.lane.b32.xlu0 %v953, 123
        %v2863 = vpop.permute.xlu0 %2862
        %v2870 = vmul.f32 %v2835, %v2853
        %v2871 = vmul.f32 %v2837, %v2855
        %v2872 = vmul.f32 %v2839, %v2857
        %v2873 = vmul.f32 %v2841, %v2859
        %v2874 = vmul.f32 %v2843, %v2861
        %v2875 = vmul.f32 %v2845, %v2863
        %v2876 = vadd.f32 %v2822, %v2870
        %v2877 = vadd.f32 %v2823, %v2871
        %v2878 = vadd.f32 %v2824, %v2872
        %v2879 = vadd.f32 %v2825, %v2873
        %v2880 = vadd.f32 %v2826, %v2874
        %v2881 = vadd.f32 %v2827, %v2875
        %v2882 = vsub.f32 %v471, %v854
        %v2883 = vsub.f32 %v472, %v855
        %v2884 = vsub.f32 %v473, %v856
        %v2885 = vsub.f32 %v474, %v857
        %v2886 = vsub.f32 %v475, %v858
        %v2887 = vsub.f32 %v476, %v859
        %v2888 = vmul.f32 %v2882, 1.442695
        %v2889 = vpow.pop %v2888
        %v2890 = vmul.f32 %v2883, 1.442695
        %v2891 = vpow.pop %v2890
        %v2892 = vmul.f32 %v2884, 1.442695
        %v2893 = vpow.pop %v2892
        %v2894 = vmul.f32 %v2885, 1.442695
        %v2895 = vpow.pop %v2894
        %v2896 = vmul.f32 %v2886, 1.442695
        %v2897 = vpow.pop %v2896
        %v2898 = vmul.f32 %v2887, 1.442695
        %v2899 = vpow.pop %v2898
        %v2900 = vadd.f32 %v2846, %v2889
        %v2901 = vadd.f32 %v2847, %v2891
        %v2902 = vadd.f32 %v2848, %v2893
        %v2903 = vadd.f32 %v2849, %v2895
        %v2904 = vadd.f32 %v2850, %v2897
        %v2905 = vadd.f32 %v2851, %v2899
        %2906 = vrot.lane.b32.xlu0 %v999, 123
        %v2907 = vpop.permute.xlu0 %2906
        %2908 = vrot.lane.b32.xlu0 %v1001, 123
        %v2909 = vpop.permute.xlu0 %2908
        %2910 = vrot.lane.b32.xlu0 %v1004, 123
        %v2911 = vpop.permute.xlu0 %2910
        %2912 = vrot.lane.b32.xlu0 %v1006, 123
        %v2913 = vpop.permute.xlu0 %2912
        %2914 = vrot.lane.b32.xlu0 %v1009, 123
        %v2915 = vpop.permute.xlu0 %2914
        %2916 = vrot.lane.b32.xlu0 %v1011, 123
        %v2917 = vpop.permute.xlu0 %2916
        %v2924 = vmul.f32 %v2889, %v2907
        %v2925 = vmul.f32 %v2891, %v2909
        %v2926 = vmul.f32 %v2893, %v2911
        %v2927 = vmul.f32 %v2895, %v2913
        %v2928 = vmul.f32 %v2897, %v2915
        %v2929 = vmul.f32 %v2899, %v2917
        %v2930 = vadd.f32 %v2876, %v2924
        %v2931 = vadd.f32 %v2877, %v2925
        %v2932 = vadd.f32 %v2878, %v2926
        %v2933 = vadd.f32 %v2879, %v2927
        %v2934 = vadd.f32 %v2880, %v2928
        %v2935 = vadd.f32 %v2881, %v2929
        %v2936 = vsub.f32 %v562, %v854
        %v2937 = vsub.f32 %v563, %v855
        %v2938 = vsub.f32 %v564, %v856
        %v2939 = vsub.f32 %v565, %v857
        %v2940 = vsub.f32 %v566, %v858
        %v2941 = vsub.f32 %v567, %v859
        %v2942 = vmul.f32 %v2936, 1.442695
        %v2943 = vpow.pop %v2942
        %v2944 = vmul.f32 %v2937, 1.442695
        %v2945 = vpow.pop %v2944
        %v2946 = vmul.f32 %v2938, 1.442695
        %v2947 = vpow.pop %v2946
        %v2948 = vmul.f32 %v2939, 1.442695
        %v2949 = vpow.pop %v2948
        %v2950 = vmul.f32 %v2940, 1.442695
        %v2951 = vpow.pop %v2950
        %v2952 = vmul.f32 %v2941, 1.442695
        %v2953 = vpow.pop %v2952
        %v2954 = vadd.f32 %v2900, %v2943
        %v2955 = vadd.f32 %v2901, %v2945
        %v2956 = vadd.f32 %v2902, %v2947
        %v2957 = vadd.f32 %v2903, %v2949
        %v2958 = vadd.f32 %v2904, %v2951
        %v2959 = vadd.f32 %v2905, %v2953
        %2960 = vrot.lane.b32.xlu0 %v1057, 123
        %v2961 = vpop.permute.xlu0 %2960
        %2962 = vrot.lane.b32.xlu0 %v1059, 123
        %v2963 = vpop.permute.xlu0 %2962
        %2964 = vrot.lane.b32.xlu0 %v1062, 123
        %v2965 = vpop.permute.xlu0 %2964
        %2966 = vrot.lane.b32.xlu0 %v1064, 123
        %v2967 = vpop.permute.xlu0 %2966
        %2968 = vrot.lane.b32.xlu0 %v1067, 123
        %v2969 = vpop.permute.xlu0 %2968
        %2970 = vrot.lane.b32.xlu0 %v1069, 123
        %v2971 = vpop.permute.xlu0 %2970
        %v2978 = vmul.f32 %v2943, %v2961
        %v2979 = vmul.f32 %v2945, %v2963
        %v2980 = vmul.f32 %v2947, %v2965
        %v2981 = vmul.f32 %v2949, %v2967
        %v2982 = vmul.f32 %v2951, %v2969
        %v2983 = vmul.f32 %v2953, %v2971
        %v2984 = vadd.f32 %v2930, %v2978
        %v2985 = vadd.f32 %v2931, %v2979
        %v2986 = vadd.f32 %v2932, %v2980
        %v2987 = vadd.f32 %v2933, %v2981
        %v2988 = vadd.f32 %v2934, %v2982
        %v2989 = vadd.f32 %v2935, %v2983
        %v2990 = vsub.f32 %v653, %v854
        %v2991 = vsub.f32 %v654, %v855
        %v2992 = vsub.f32 %v655, %v856
        %v2993 = vsub.f32 %v656, %v857
        %v2994 = vsub.f32 %v657, %v858
        %v2995 = vsub.f32 %v658, %v859
        %v2996 = vmul.f32 %v2990, 1.442695
        %v2997 = vpow.pop %v2996
        %v2998 = vmul.f32 %v2991, 1.442695
        %v2999 = vpow.pop %v2998
        %v3000 = vmul.f32 %v2992, 1.442695
        %v3001 = vpow.pop %v3000
        %v3002 = vmul.f32 %v2993, 1.442695
        %v3003 = vpow.pop %v3002
        %v3004 = vmul.f32 %v2994, 1.442695
        %v3005 = vpow.pop %v3004
        %v3006 = vmul.f32 %v2995, 1.442695
        %v3007 = vpow.pop %v3006
        %v3008 = vadd.f32 %v2954, %v2997
        %v3009 = vadd.f32 %v2955, %v2999
        %v3010 = vadd.f32 %v2956, %v3001
        %v3011 = vadd.f32 %v2957, %v3003
        %v3012 = vadd.f32 %v2958, %v3005
        %v3013 = vadd.f32 %v2959, %v3007
        %3014 = vrot.lane.b32.xlu0 %v1115, 123
        %v3015 = vpop.permute.xlu0 %3014
        %3016 = vrot.lane.b32.xlu0 %v1117, 123
        %v3017 = vpop.permute.xlu0 %3016
        %3018 = vrot.lane.b32.xlu0 %v1120, 123
        %v3019 = vpop.permute.xlu0 %3018
        %3020 = vrot.lane.b32.xlu0 %v1122, 123
        %v3021 = vpop.permute.xlu0 %3020
        %3022 = vrot.lane.b32.xlu0 %v1125, 123
        %v3023 = vpop.permute.xlu0 %3022
        %3024 = vrot.lane.b32.xlu0 %v1127, 123
        %v3025 = vpop.permute.xlu0 %3024
        %v3032 = vmul.f32 %v2997, %v3015
        %v3033 = vmul.f32 %v2999, %v3017
        %v3034 = vmul.f32 %v3001, %v3019
        %v3035 = vmul.f32 %v3003, %v3021
        %v3036 = vmul.f32 %v3005, %v3023
        %v3037 = vmul.f32 %v3007, %v3025
        %v3038 = vadd.f32 %v2984, %v3032
        %v3039 = vadd.f32 %v2985, %v3033
        %v3040 = vadd.f32 %v2986, %v3034
        %v3041 = vadd.f32 %v2987, %v3035
        %v3042 = vadd.f32 %v2988, %v3036
        %v3043 = vadd.f32 %v2989, %v3037
        %v3044 = vsub.f32 %v744, %v854
        %v3045 = vsub.f32 %v745, %v855
        %v3046 = vsub.f32 %v746, %v856
        %v3047 = vsub.f32 %v747, %v857
        %v3048 = vsub.f32 %v748, %v858
        %v3049 = vsub.f32 %v749, %v859
        %v3050 = vmul.f32 %v3044, 1.442695
        %v3051 = vpow.pop %v3050
        %v3052 = vmul.f32 %v3045, 1.442695
        %v3053 = vpow.pop %v3052
        %v3054 = vmul.f32 %v3046, 1.442695
        %v3055 = vpow.pop %v3054
        %v3056 = vmul.f32 %v3047, 1.442695
        %v3057 = vpow.pop %v3056
        %v3058 = vmul.f32 %v3048, 1.442695
        %v3059 = vpow.pop %v3058
        %v3060 = vmul.f32 %v3049, 1.442695
        %v3061 = vpow.pop %v3060
        %v3062 = vadd.f32 %v3008, %v3051
        %v3063 = vadd.f32 %v3009, %v3053
        %v3064 = vadd.f32 %v3010, %v3055
        %v3065 = vadd.f32 %v3011, %v3057
        %v3066 = vadd.f32 %v3012, %v3059
        %v3067 = vadd.f32 %v3013, %v3061
        %3068 = vrot.lane.b32.xlu0 %v1173, 123
        %v3069 = vpop.permute.xlu0 %3068
        %3070 = vrot.lane.b32.xlu0 %v1175, 123
        %v3071 = vpop.permute.xlu0 %3070
        %3072 = vrot.lane.b32.xlu0 %v1178, 123
        %v3073 = vpop.permute.xlu0 %3072
        %3074 = vrot.lane.b32.xlu0 %v1180, 123
        %v3075 = vpop.permute.xlu0 %3074
        %3076 = vrot.lane.b32.xlu0 %v1183, 123
        %v3077 = vpop.permute.xlu0 %3076
        %3078 = vrot.lane.b32.xlu0 %v1185, 123
        %v3079 = vpop.permute.xlu0 %3078
        %v3086 = vmul.f32 %v3051, %v3069
        %v3087 = vmul.f32 %v3053, %v3071
        %v3088 = vmul.f32 %v3055, %v3073
        %v3089 = vmul.f32 %v3057, %v3075
        %v3090 = vmul.f32 %v3059, %v3077
        %v3091 = vmul.f32 %v3061, %v3079
        %v3092 = vadd.f32 %v3038, %v3086
        %v3093 = vadd.f32 %v3039, %v3087
        %v3094 = vadd.f32 %v3040, %v3088
        %v3095 = vadd.f32 %v3041, %v3089
        %v3096 = vadd.f32 %v3042, %v3090
        %v3097 = vadd.f32 %v3043, %v3091
        %v3098 = vsub.f32 %v835, %v854
        %v3099 = vsub.f32 %v836, %v855
        %v3100 = vsub.f32 %v837, %v856
        %v3101 = vsub.f32 %v838, %v857
        %v3102 = vsub.f32 %v839, %v858
        %v3103 = vsub.f32 %v840, %v859
        %v3104 = vmul.f32 %v3098, 1.442695
        %v3105 = vpow.pop %v3104
        %v3106 = vmul.f32 %v3099, 1.442695
        %v3107 = vpow.pop %v3106
        %v3108 = vmul.f32 %v3100, 1.442695
        %v3109 = vpow.pop %v3108
        %v3110 = vmul.f32 %v3101, 1.442695
        %v3111 = vpow.pop %v3110
        %v3112 = vmul.f32 %v3102, 1.442695
        %v3113 = vpow.pop %v3112
        %v3114 = vmul.f32 %v3103, 1.442695
        %v3115 = vpow.pop %v3114
        %v3116 = vadd.f32 %v3062, %v3105
        %v3117 = vadd.f32 %v3063, %v3107
        %v3118 = vadd.f32 %v3064, %v3109
        %v3119 = vadd.f32 %v3065, %v3111
        %v3120 = vadd.f32 %v3066, %v3113
        %v3121 = vadd.f32 %v3067, %v3115
        %3122 = vrot.lane.b32.xlu0 %v1231, 123
        %v3123 = vpop.permute.xlu0 %3122
        %3124 = vrot.lane.b32.xlu0 %v1233, 123
        %v3125 = vpop.permute.xlu0 %3124
        %3126 = vrot.lane.b32.xlu0 %v1236, 123
        %v3127 = vpop.permute.xlu0 %3126
        %3128 = vrot.lane.b32.xlu0 %v1238, 123
        %v3129 = vpop.permute.xlu0 %3128
        %3130 = vrot.lane.b32.xlu0 %v1241, 123
        %v3131 = vpop.permute.xlu0 %3130
        %3132 = vrot.lane.b32.xlu0 %v1243, 123
        %v3133 = vpop.permute.xlu0 %3132
        %v3140 = vmul.f32 %v3105, %v3123
        %v3141 = vmul.f32 %v3107, %v3125
        %v3142 = vmul.f32 %v3109, %v3127
        %v3143 = vmul.f32 %v3111, %v3129
        %v3144 = vmul.f32 %v3113, %v3131
        %v3145 = vmul.f32 %v3115, %v3133
        %v3146 = vadd.f32 %v3092, %v3140
        %v3147 = vadd.f32 %v3093, %v3141
        %v3148 = vadd.f32 %v3094, %v3142
        %v3149 = vadd.f32 %v3095, %v3143
        %v3150 = vadd.f32 %v3096, %v3144
        %v3151 = vadd.f32 %v3097, %v3145
        %v3152 = vsub.f32 %v302, %v854
        %v3153 = vsub.f32 %v303, %v855
        %v3154 = vsub.f32 %v304, %v856
        %v3155 = vsub.f32 %v305, %v857
        %v3156 = vsub.f32 %v306, %v858
        %v3157 = vsub.f32 %v307, %v859
        %v3158 = vmul.f32 %v3152, 1.442695
        %v3159 = vpow.pop %v3158
        %v3160 = vmul.f32 %v3153, 1.442695
        %v3161 = vpow.pop %v3160
        %v3162 = vmul.f32 %v3154, 1.442695
        %v3163 = vpow.pop %v3162
        %v3164 = vmul.f32 %v3155, 1.442695
        %v3165 = vpow.pop %v3164
        %v3166 = vmul.f32 %v3156, 1.442695
        %v3167 = vpow.pop %v3166
        %v3168 = vmul.f32 %v3157, 1.442695
        %v3169 = vpow.pop %v3168
        %v3170 = vadd.f32 %v3116, %v3159
        %v3171 = vadd.f32 %v3117, %v3161
        %v3172 = vadd.f32 %v3118, %v3163
        %v3173 = vadd.f32 %v3119, %v3165
        %v3174 = vadd.f32 %v3120, %v3167
        %v3175 = vadd.f32 %v3121, %v3169
        %3176 = vrot.lane.b32.xlu0 %v860, 122
        %v3177 = vpop.permute.xlu0 %3176
        %3178 = vrot.lane.b32.xlu0 %v861, 122
        %v3179 = vpop.permute.xlu0 %3178
        %3180 = vrot.lane.b32.xlu0 %v863, 122
        %v3181 = vpop.permute.xlu0 %3180
        %3182 = vrot.lane.b32.xlu0 %v864, 122
        %v3183 = vpop.permute.xlu0 %3182
        %3184 = vrot.lane.b32.xlu0 %v866, 122
        %v3185 = vpop.permute.xlu0 %3184
        %3186 = vrot.lane.b32.xlu0 %v867, 122
        %v3187 = vpop.permute.xlu0 %3186
        %v3194 = vmul.f32 %v3159, %v3177
        %v3195 = vmul.f32 %v3161, %v3179
        %v3196 = vmul.f32 %v3163, %v3181
        %v3197 = vmul.f32 %v3165, %v3183
        %v3198 = vmul.f32 %v3167, %v3185
        %v3199 = vmul.f32 %v3169, %v3187
        %v3200 = vadd.f32 %v3146, %v3194
        %v3201 = vadd.f32 %v3147, %v3195
        %v3202 = vadd.f32 %v3148, %v3196
        %v3203 = vadd.f32 %v3149, %v3197
        %v3204 = vadd.f32 %v3150, %v3198
        %v3205 = vadd.f32 %v3151, %v3199
        %v3206 = vsub.f32 %v393, %v854
        %v3207 = vsub.f32 %v394, %v855
        %v3208 = vsub.f32 %v395, %v856
        %v3209 = vsub.f32 %v396, %v857
        %v3210 = vsub.f32 %v397, %v858
        %v3211 = vsub.f32 %v398, %v859
        %v3212 = vmul.f32 %v3206, 1.442695
        %v3213 = vpow.pop %v3212
        %v3214 = vmul.f32 %v3207, 1.442695
        %v3215 = vpow.pop %v3214
        %v3216 = vmul.f32 %v3208, 1.442695
        %v3217 = vpow.pop %v3216
        %v3218 = vmul.f32 %v3209, 1.442695
        %v3219 = vpow.pop %v3218
        %v3220 = vmul.f32 %v3210, 1.442695
        %v3221 = vpow.pop %v3220
        %v3222 = vmul.f32 %v3211, 1.442695
        %v3223 = vpow.pop %v3222
        %v3224 = vadd.f32 %v3170, %v3213
        %v3225 = vadd.f32 %v3171, %v3215
        %v3226 = vadd.f32 %v3172, %v3217
        %v3227 = vadd.f32 %v3173, %v3219
        %v3228 = vadd.f32 %v3174, %v3221
        %v3229 = vadd.f32 %v3175, %v3223
        %3230 = vrot.lane.b32.xlu0 %v941, 122
        %v3231 = vpop.permute.xlu0 %3230
        %3232 = vrot.lane.b32.xlu0 %v943, 122
        %v3233 = vpop.permute.xlu0 %3232
        %3234 = vrot.lane.b32.xlu0 %v946, 122
        %v3235 = vpop.permute.xlu0 %3234
        %3236 = vrot.lane.b32.xlu0 %v948, 122
        %v3237 = vpop.permute.xlu0 %3236
        %3238 = vrot.lane.b32.xlu0 %v951, 122
        %v3239 = vpop.permute.xlu0 %3238
        %3240 = vrot.lane.b32.xlu0 %v953, 122
        %v3241 = vpop.permute.xlu0 %3240
        %v3248 = vmul.f32 %v3213, %v3231
        %v3249 = vmul.f32 %v3215, %v3233
        %v3250 = vmul.f32 %v3217, %v3235
        %v3251 = vmul.f32 %v3219, %v3237
        %v3252 = vmul.f32 %v3221, %v3239
        %v3253 = vmul.f32 %v3223, %v3241
        %v3254 = vadd.f32 %v3200, %v3248
        %v3255 = vadd.f32 %v3201, %v3249
        %v3256 = vadd.f32 %v3202, %v3250
        %v3257 = vadd.f32 %v3203, %v3251
        %v3258 = vadd.f32 %v3204, %v3252
        %v3259 = vadd.f32 %v3205, %v3253
        %v3260 = vsub.f32 %v484, %v854
        %v3261 = vsub.f32 %v485, %v855
        %v3262 = vsub.f32 %v486, %v856
        %v3263 = vsub.f32 %v487, %v857
        %v3264 = vsub.f32 %v488, %v858
        %v3265 = vsub.f32 %v489, %v859
        %v3266 = vmul.f32 %v3260, 1.442695
        %v3267 = vpow.pop %v3266
        %v3268 = vmul.f32 %v3261, 1.442695
        %v3269 = vpow.pop %v3268
        %v3270 = vmul.f32 %v3262, 1.442695
        %v3271 = vpow.pop %v3270
        %v3272 = vmul.f32 %v3263, 1.442695
        %v3273 = vpow.pop %v3272
        %v3274 = vmul.f32 %v3264, 1.442695
        %v3275 = vpow.pop %v3274
        %v3276 = vmul.f32 %v3265, 1.442695
        %v3277 = vpow.pop %v3276
        %v3278 = vadd.f32 %v3224, %v3267
        %v3279 = vadd.f32 %v3225, %v3269
        %v3280 = vadd.f32 %v3226, %v3271
        %v3281 = vadd.f32 %v3227, %v3273
        %v3282 = vadd.f32 %v3228, %v3275
        %v3283 = vadd.f32 %v3229, %v3277
        %3284 = vrot.lane.b32.xlu0 %v999, 122
        %v3285 = vpop.permute.xlu0 %3284
        %3286 = vrot.lane.b32.xlu0 %v1001, 122
        %v3287 = vpop.permute.xlu0 %3286
        %3288 = vrot.lane.b32.xlu0 %v1004, 122
        %v3289 = vpop.permute.xlu0 %3288
        %3290 = vrot.lane.b32.xlu0 %v1006, 122
        %v3291 = vpop.permute.xlu0 %3290
        %3292 = vrot.lane.b32.xlu0 %v1009, 122
        %v3293 = vpop.permute.xlu0 %3292
        %3294 = vrot.lane.b32.xlu0 %v1011, 122
        %v3295 = vpop.permute.xlu0 %3294
        %v3302 = vmul.f32 %v3267, %v3285
        %v3303 = vmul.f32 %v3269, %v3287
        %v3304 = vmul.f32 %v3271, %v3289
        %v3305 = vmul.f32 %v3273, %v3291
        %v3306 = vmul.f32 %v3275, %v3293
        %v3307 = vmul.f32 %v3277, %v3295
        %v3308 = vadd.f32 %v3254, %v3302
        %v3309 = vadd.f32 %v3255, %v3303
        %v3310 = vadd.f32 %v3256, %v3304
        %v3311 = vadd.f32 %v3257, %v3305
        %v3312 = vadd.f32 %v3258, %v3306
        %v3313 = vadd.f32 %v3259, %v3307
        %v3314 = vsub.f32 %v575, %v854
        %v3315 = vsub.f32 %v576, %v855
        %v3316 = vsub.f32 %v577, %v856
        %v3317 = vsub.f32 %v578, %v857
        %v3318 = vsub.f32 %v579, %v858
        %v3319 = vsub.f32 %v580, %v859
        %v3320 = vmul.f32 %v3314, 1.442695
        %v3321 = vpow.pop %v3320
        %v3322 = vmul.f32 %v3315, 1.442695
        %v3323 = vpow.pop %v3322
        %v3324 = vmul.f32 %v3316, 1.442695
        %v3325 = vpow.pop %v3324
        %v3326 = vmul.f32 %v3317, 1.442695
        %v3327 = vpow.pop %v3326
        %v3328 = vmul.f32 %v3318, 1.442695
        %v3329 = vpow.pop %v3328
        %v3330 = vmul.f32 %v3319, 1.442695
        %v3331 = vpow.pop %v3330
        %v3332 = vadd.f32 %v3278, %v3321
        %v3333 = vadd.f32 %v3279, %v3323
        %v3334 = vadd.f32 %v3280, %v3325
        %v3335 = vadd.f32 %v3281, %v3327
        %v3336 = vadd.f32 %v3282, %v3329
        %v3337 = vadd.f32 %v3283, %v3331
        %3338 = vrot.lane.b32.xlu0 %v1057, 122
        %v3339 = vpop.permute.xlu0 %3338
        %3340 = vrot.lane.b32.xlu0 %v1059, 122
        %v3341 = vpop.permute.xlu0 %3340
        %3342 = vrot.lane.b32.xlu0 %v1062, 122
        %v3343 = vpop.permute.xlu0 %3342
        %3344 = vrot.lane.b32.xlu0 %v1064, 122
        %v3345 = vpop.permute.xlu0 %3344
        %3346 = vrot.lane.b32.xlu0 %v1067, 122
        %v3347 = vpop.permute.xlu0 %3346
        %3348 = vrot.lane.b32.xlu0 %v1069, 122
        %v3349 = vpop.permute.xlu0 %3348
        %v3356 = vmul.f32 %v3321, %v3339
        %v3357 = vmul.f32 %v3323, %v3341
        %v3358 = vmul.f32 %v3325, %v3343
        %v3359 = vmul.f32 %v3327, %v3345
        %v3360 = vmul.f32 %v3329, %v3347
        %v3361 = vmul.f32 %v3331, %v3349
        %v3362 = vadd.f32 %v3308, %v3356
        %v3363 = vadd.f32 %v3309, %v3357
        %v3364 = vadd.f32 %v3310, %v3358
        %v3365 = vadd.f32 %v3311, %v3359
        %v3366 = vadd.f32 %v3312, %v3360
        %v3367 = vadd.f32 %v3313, %v3361
        %v3368 = vsub.f32 %v666, %v854
        %v3369 = vsub.f32 %v667, %v855
        %v3370 = vsub.f32 %v668, %v856
        %v3371 = vsub.f32 %v669, %v857
        %v3372 = vsub.f32 %v670, %v858
        %v3373 = vsub.f32 %v671, %v859
        %v3374 = vmul.f32 %v3368, 1.442695
        %v3375 = vpow.pop %v3374
        %v3376 = vmul.f32 %v3369, 1.442695
        %v3377 = vpow.pop %v3376
        %v3378 = vmul.f32 %v3370, 1.442695
        %v3379 = vpow.pop %v3378
        %v3380 = vmul.f32 %v3371, 1.442695
        %v3381 = vpow.pop %v3380
        %v3382 = vmul.f32 %v3372, 1.442695
        %v3383 = vpow.pop %v3382
        %v3384 = vmul.f32 %v3373, 1.442695
        %v3385 = vpow.pop %v3384
        %v3386 = vadd.f32 %v3332, %v3375
        %v3387 = vadd.f32 %v3333, %v3377
        %v3388 = vadd.f32 %v3334, %v3379
        %v3389 = vadd.f32 %v3335, %v3381
        %v3390 = vadd.f32 %v3336, %v3383
        %v3391 = vadd.f32 %v3337, %v3385
        %3392 = vrot.lane.b32.xlu0 %v1115, 122
        %v3393 = vpop.permute.xlu0 %3392
        %3394 = vrot.lane.b32.xlu0 %v1117, 122
        %v3395 = vpop.permute.xlu0 %3394
        %3396 = vrot.lane.b32.xlu0 %v1120, 122
        %v3397 = vpop.permute.xlu0 %3396
        %3398 = vrot.lane.b32.xlu0 %v1122, 122
        %v3399 = vpop.permute.xlu0 %3398
        %3400 = vrot.lane.b32.xlu0 %v1125, 122
        %v3401 = vpop.permute.xlu0 %3400
        %3402 = vrot.lane.b32.xlu0 %v1127, 122
        %v3403 = vpop.permute.xlu0 %3402
        %v3410 = vmul.f32 %v3375, %v3393
        %v3411 = vmul.f32 %v3377, %v3395
        %v3412 = vmul.f32 %v3379, %v3397
        %v3413 = vmul.f32 %v3381, %v3399
        %v3414 = vmul.f32 %v3383, %v3401
        %v3415 = vmul.f32 %v3385, %v3403
        %v3416 = vadd.f32 %v3362, %v3410
        %v3417 = vadd.f32 %v3363, %v3411
        %v3418 = vadd.f32 %v3364, %v3412
        %v3419 = vadd.f32 %v3365, %v3413
        %v3420 = vadd.f32 %v3366, %v3414
        %v3421 = vadd.f32 %v3367, %v3415
        %v3422 = vsub.f32 %v757, %v854
        %v3423 = vsub.f32 %v758, %v855
        %v3424 = vsub.f32 %v759, %v856
        %v3425 = vsub.f32 %v760, %v857
        %v3426 = vsub.f32 %v761, %v858
        %v3427 = vsub.f32 %v762, %v859
        %v3428 = vmul.f32 %v3422, 1.442695
        %v3429 = vpow.pop %v3428
        %v3430 = vmul.f32 %v3423, 1.442695
        %v3431 = vpow.pop %v3430
        %v3432 = vmul.f32 %v3424, 1.442695
        %v3433 = vpow.pop %v3432
        %v3434 = vmul.f32 %v3425, 1.442695
        %v3435 = vpow.pop %v3434
        %v3436 = vmul.f32 %v3426, 1.442695
        %v3437 = vpow.pop %v3436
        %v3438 = vmul.f32 %v3427, 1.442695
        %v3439 = vpow.pop %v3438
        %v3440 = vadd.f32 %v3386, %v3429
        %v3441 = vadd.f32 %v3387, %v3431
        %v3442 = vadd.f32 %v3388, %v3433
        %v3443 = vadd.f32 %v3389, %v3435
        %v3444 = vadd.f32 %v3390, %v3437
        %v3445 = vadd.f32 %v3391, %v3439
        %3446 = vrot.lane.b32.xlu0 %v1173, 122
        %v3447 = vpop.permute.xlu0 %3446
        %3448 = vrot.lane.b32.xlu0 %v1175, 122
        %v3449 = vpop.permute.xlu0 %3448
        %3450 = vrot.lane.b32.xlu0 %v1178, 122
        %v3451 = vpop.permute.xlu0 %3450
        %3452 = vrot.lane.b32.xlu0 %v1180, 122
        %v3453 = vpop.permute.xlu0 %3452
        %3454 = vrot.lane.b32.xlu0 %v1183, 122
        %v3455 = vpop.permute.xlu0 %3454
        %3456 = vrot.lane.b32.xlu0 %v1185, 122
        %v3457 = vpop.permute.xlu0 %3456
        %v3464 = vmul.f32 %v3429, %v3447
        %v3465 = vmul.f32 %v3431, %v3449
        %v3466 = vmul.f32 %v3433, %v3451
        %v3467 = vmul.f32 %v3435, %v3453
        %v3468 = vmul.f32 %v3437, %v3455
        %v3469 = vmul.f32 %v3439, %v3457
        %v3470 = vadd.f32 %v3416, %v3464
        %v3471 = vadd.f32 %v3417, %v3465
        %v3472 = vadd.f32 %v3418, %v3466
        %v3473 = vadd.f32 %v3419, %v3467
        %v3474 = vadd.f32 %v3420, %v3468
        %v3475 = vadd.f32 %v3421, %v3469
        %v3476 = vsub.f32 %v848, %v854
        %v3477 = vsub.f32 %v849, %v855
        %v3478 = vsub.f32 %v850, %v856
        %v3479 = vsub.f32 %v851, %v857
        %v3480 = vsub.f32 %v852, %v858
        %v3481 = vsub.f32 %v853, %v859
        %v3482 = vmul.f32 %v3476, 1.442695
        %v3483 = vpow.pop %v3482
        %v3484 = vmul.f32 %v3477, 1.442695
        %v3485 = vpow.pop %v3484
        %v3486 = vmul.f32 %v3478, 1.442695
        %v3487 = vpow.pop %v3486
        %v3488 = vmul.f32 %v3479, 1.442695
        %v3489 = vpow.pop %v3488
        %v3490 = vmul.f32 %v3480, 1.442695
        %v3491 = vpow.pop %v3490
        %v3492 = vmul.f32 %v3481, 1.442695
        %v3493 = vpow.pop %v3492
        %v3494 = vadd.f32 %v3440, %v3483
        %v3495 = vadd.f32 %v3441, %v3485
        %v3496 = vadd.f32 %v3442, %v3487
        %v3497 = vadd.f32 %v3443, %v3489
        %v3498 = vadd.f32 %v3444, %v3491
        %v3499 = vadd.f32 %v3445, %v3493
        %3500 = vrot.lane.b32.xlu0 %v1231, 122
        %v3501 = vpop.permute.xlu0 %3500
        %3502 = vrot.lane.b32.xlu0 %v1233, 122
        %v3503 = vpop.permute.xlu0 %3502
        %3504 = vrot.lane.b32.xlu0 %v1236, 122
        %v3505 = vpop.permute.xlu0 %3504
        %3506 = vrot.lane.b32.xlu0 %v1238, 122
        %v3507 = vpop.permute.xlu0 %3506
        %3508 = vrot.lane.b32.xlu0 %v1241, 122
        %v3509 = vpop.permute.xlu0 %3508
        %3510 = vrot.lane.b32.xlu0 %v1243, 122
        %v3511 = vpop.permute.xlu0 %3510
        %v3518 = vmul.f32 %v3483, %v3501
        %v3519 = vmul.f32 %v3485, %v3503
        %v3520 = vmul.f32 %v3487, %v3505
        %v3521 = vmul.f32 %v3489, %v3507
        %v3522 = vmul.f32 %v3491, %v3509
        %v3523 = vmul.f32 %v3493, %v3511
        %v3524 = vadd.f32 %v3470, %v3518
        %v3525 = vadd.f32 %v3471, %v3519
        %v3526 = vadd.f32 %v3472, %v3520
        %v3527 = vadd.f32 %v3473, %v3521
        %v3528 = vadd.f32 %v3474, %v3522
        %v3529 = vadd.f32 %v3475, %v3523
        %v3530 = vrcp.pop %v3494
        %v3531 = vmul.f32 %v3494, %v3530
        %v3532 = vsub.f32 1.0, %v3531
        %v3533 = vmul.f32 %v3530, %v3532
        %v3534 = vadd.f32 %v3530, %v3533
        %vm3535 = vweird.f32 %v3494
        %vm3536 = vweird.f32 %v3530
        %vm3537 = vmor %vm3535, %vm3536
        %v3538 = vsel %vm3537, %v3530, %v3534
        %v3539 = vand.u32 2147483647, %v3494
        %vm3540 = vcmp.eq.f32.partialorder %v3539, 8.507059e+37
        %v3541 = vand.u32 %v3494, 2147483648
        %v3542 = vor.u32 1.1754944e-38, %v3541
        %v3543 = vsel %vm3540, %v3542, %v3538
        %v3544 = vrcp.pop %v3495
        %v3545 = vmul.f32 %v3495, %v3544
        %v3546 = vsub.f32 1.0, %v3545
        %v3547 = vmul.f32 %v3544, %v3546
        %v3548 = vadd.f32 %v3544, %v3547
        %vm3549 = vweird.f32 %v3495
        %vm3550 = vweird.f32 %v3544
        %vm3551 = vmor %vm3549, %vm3550
        %v3552 = vsel %vm3551, %v3544, %v3548
        %v3553 = vand.u32 2147483647, %v3495
        %vm3554 = vcmp.eq.f32.partialorder %v3553, 8.507059e+37
        %v3555 = vand.u32 %v3495, 2147483648
        %v3556 = vor.u32 1.1754944e-38, %v3555
        %v3557 = vsel %vm3554, %v3556, %v3552
        %v3558 = vrcp.pop %v3496
        %v3559 = vmul.f32 %v3496, %v3558
        %v3560 = vsub.f32 1.0, %v3559
        %v3561 = vmul.f32 %v3558, %v3560
        %v3562 = vadd.f32 %v3558, %v3561
        %vm3563 = vweird.f32 %v3496
        %vm3564 = vweird.f32 %v3558
        %vm3565 = vmor %vm3563, %vm3564
        %v3566 = vsel %vm3565, %v3558, %v3562
        %v3567 = vand.u32 2147483647, %v3496
        %vm3568 = vcmp.eq.f32.partialorder %v3567, 8.507059e+37
        %v3569 = vand.u32 %v3496, 2147483648
        %v3570 = vor.u32 1.1754944e-38, %v3569
        %v3571 = vsel %vm3568, %v3570, %v3566
        %v3572 = vrcp.pop %v3497
        %v3573 = vmul.f32 %v3497, %v3572
        %v3574 = vsub.f32 1.0, %v3573
        %v3575 = vmul.f32 %v3572, %v3574
        %v3576 = vadd.f32 %v3572, %v3575
        %vm3577 = vweird.f32 %v3497
        %vm3578 = vweird.f32 %v3572
        %vm3579 = vmor %vm3577, %vm3578
        %v3580 = vsel %vm3579, %v3572, %v3576
        %v3581 = vand.u32 2147483647, %v3497
        %vm3582 = vcmp.eq.f32.partialorder %v3581, 8.507059e+37
        %v3583 = vand.u32 %v3497, 2147483648
        %v3584 = vor.u32 1.1754944e-38, %v3583
        %v3585 = vsel %vm3582, %v3584, %v3580
        %v3586 = vrcp.pop %v3498
        %v3587 = vmul.f32 %v3498, %v3586
        %v3588 = vsub.f32 1.0, %v3587
        %v3589 = vmul.f32 %v3586, %v3588
        %v3590 = vadd.f32 %v3586, %v3589
        %vm3591 = vweird.f32 %v3498
        %vm3592 = vweird.f32 %v3586
        %vm3593 = vmor %vm3591, %vm3592
        %v3594 = vsel %vm3593, %v3586, %v3590
        %v3595 = vand.u32 2147483647, %v3498
        %vm3596 = vcmp.eq.f32.partialorder %v3595, 8.507059e+37
        %v3597 = vand.u32 %v3498, 2147483648
        %v3598 = vor.u32 1.1754944e-38, %v3597
        %v3599 = vsel %vm3596, %v3598, %v3594
        %v3600 = vrcp.pop %v3499
        %v3601 = vmul.f32 %v3499, %v3600
        %v3602 = vsub.f32 1.0, %v3601
        %v3603 = vmul.f32 %v3600, %v3602
        %v3604 = vadd.f32 %v3600, %v3603
        %vm3605 = vweird.f32 %v3499
        %vm3606 = vweird.f32 %v3600
        %vm3607 = vmor %vm3605, %vm3606
        %v3608 = vsel %vm3607, %v3600, %v3604
        %v3609 = vand.u32 2147483647, %v3499
        %vm3610 = vcmp.eq.f32.partialorder %v3609, 8.507059e+37
        %v3611 = vand.u32 %v3499, 2147483648
        %v3612 = vor.u32 1.1754944e-38, %v3611
        %v3613 = vsel %vm3610, %v3612, %v3608
        %v3614 = vmul.f32 %v3524, %v3543
        %v3615 = vmul.f32 %v3525, %v3557
        %v3616 = vmul.f32 %v3526, %v3571
        %v3617 = vmul.f32 %v3527, %v3585
        %v3618 = vmul.f32 %v3528, %v3599
        %v3619 = vmul.f32 %v3529, %v3613
        %vm3620 = vcmask 130048
        %3621 = vst.msk [vmem:[%s205] sm:$0xff] %vm3620, %v3614
        %3622 = vst.msk [vmem:[%s205 + $0x8] sm:$0xff] %vm3620, %v3615
        %3623 = vst.msk [vmem:[%s205 + $0x10] sm:$0xff] %vm3620, %v3616
        %3624 = vst.msk [vmem:[%s205 + $0x18] sm:$0xff] %vm3620, %v3617
        %3625 = vst.msk [vmem:[%s205 + $0x20] sm:$0xff] %vm3620, %v3618
        %3626 = vst.msk [vmem:[%s205 + $0x28] sm:$0xff] %vm3620, %v3619
        %s3627 = sand.u32 %s105, 1
        %s3628 = scalar_lea.sflag [#allocation3], %s3627
        %s3629 = sand.u32 %s105, 1
        %s3630 = smul.addr %s3629, 48
        %s3631 = scalar_lea.vmem [#allocation2], %s3630
        // Predicated region
        $region29: #{tpu_custom_call.1} parent=27 // pred_check
          %p3632 = pneg %p115
        $region30: #{tpu_custom_call.1} parent=27 // pred_check_branch
          %3634 = sbr.rel (%p3632) target = $region32
        $region31: #{tpu_custom_call.1} parent=27 // pred_region
          %s3635 = smul.u32 2, %s23
          %3637 = vsyncadd %s3628, 0
          %s3638 = smul.addr %s22, 6
          %s3639 = sadd.s32 %s3635, %s3638
          %s3640 = smul.addr %s21, 6
          %s3641 = sadd.s32 %s3639, %s3640
          %s3642 = smul.addr %s3641, 8
          %s3643 = scalar_lea.hbm %s2, %s3642
          %s3644 = sshll.u32 %s3631, 4
          %s3645 = int_to_ptr.vmem [resolvable:$true] %s3644
          %s3646 = sshll.u32 %s3643, 4
          %s3647 = int_to_ptr.hbm [resolvable:$true] %s3646
          %3652 = dma.vmem_to_hbm [thread:$0]  %s3645, 768, %s3647, %s3628, 128, 128, 8
        $region32: #{tpu_custom_call.1} parent=27 // pred_fallthru
          _
      $region28: #{tpu_custom_call.1} parent=5 // pred_fallthru
        _
      %p3653 = scmp.le.s32.totalorder 2, %s11
      // Predicated region
      $region33: #{tpu_custom_call.1} parent=5 // pred_check
        %p3654 = pneg %p3653
      $region34: #{tpu_custom_call.1} parent=5 // pred_check_branch
        %3656 = sbr.rel (%p3654) target = $region36
      $region35: #{tpu_custom_call.1} parent=5 // pred_region
        %s3657 = ssub.s32 %s11, 2
        // Predicated region
        $region37: #{tpu_custom_call.1} parent=35 // pred_check
          %p3658 = pneg %p121
        $region38: #{tpu_custom_call.1} parent=35 // pred_check_branch
          %3660 = sbr.rel (%p3658) target = $region40
        $region39: #{tpu_custom_call.1} parent=35 // pred_region
          %s3661 = sand.u32 %s106, 1
          %s3662 = scalar_lea.sflag [#allocation3], %s3661
          %s3663 = sand.u32 %s106, 1
          %s3664 = smul.addr %s3663, 48
          %s3665 = scalar_lea.vmem [#allocation2], %s3664
          %3667 = dma.done %s3662, 768
        $region40: #{tpu_custom_call.1} parent=35 // pred_fallthru
          _
      $region36: #{tpu_custom_call.1} parent=5 // pred_fallthru
        _
    $region6: #{tpu_custom_call.1} parent=1 // loop_footer
      %s15 = sadd.s32 1, %s11
    $region7: #{tpu_custom_call.1} parent=1 // loop_footer_branch
      %10 = sbr.rel target = $region3
    $region8: #{tpu_custom_call.1} parent=1 // loop_exit
      _
    %3668 = vsyncpa [#allocation3], 1
    %s3669 = scalar_lea.sflag [#allocation3], 1
    %3670 = vsyncpa %s3669, 1

// kernel: tpu_custom_call.1
$region0: #{tpu_custom_call.1}
  #allocation0 [shape = 'u32[]', space=smem, size = 0x4, offset = 0x4, fixed_abs, tag = 'smem constant byte address 0x4 - core index']
  #allocation1 [shape = 'u32[72,128]{1,0:T(1,128)}', space=vmem, size = 0x9000, scoped, tag = 'internal scratch']
  %s0 = inlined_call_operand.vmem [shape: f32[2,1,3,22,22], index: 0, kind: input, shape index: {}]
  %s1 = inlined_call_operand.vmem [shape: f32[2,1,49,3,16,16], index: 1, kind: input, shape index: {}]
  %s2 = inlined_call_operand.hbm [shape: f32[2,1,3,16,16], index: 2, kind: output, shape index: {}]
  %s3 = sld [smem:[#allocation0]]
  $region41: #{tpu_custom_call.1} parent=0
    _
  %s5 = ssub.s32 1, %s3
  %s6 = scalar_select 0, %s5, %s3
  $region1: #{tpu_custom_call.1} parent=0
    #allocation2 [shape = 'u8[49152]{0}', space=vmem, size = 0xc000, scoped, tag = 'output window, operand 0']
    #allocation3 [shape = 's32[2]{0}', space=sflag, size = 0x8, scoped, tag = 'scoped memory for tpu_custom_call.1']
    %7 = vsyncpa [#allocation3], 0
    %s8 = scalar_lea.sflag [#allocation3], 1
    %9 = vsyncpa %s8, 0
    loop: start=0, step=1, limit=4
    $region2: #{tpu_custom_call.1} parent=1 // loop_pre_header
      _
    $region3: #{tpu_custom_call.1} parent=1 // loop_header
      %s11 = sphi 0, %s15
      %p12 = scmp.ge.s32.totalorder %s11, 4
      %s18 = sphi 0, %s37
      %s19 = sphi 0, %s33
      %s20 = sphi 0, %s29
      %s21 = sphi 0, %s18
      %s22 = sphi 0, %s19
      %s23 = sphi 0, %s20
      %s24 = sphi 0, %s21
      %s25 = sphi 0, %s22
      %s26 = sphi 0, %s23
      %s42 = sphi 0, %s44
      %s45 = sphi 0, %s42
      %s46 = sphi 0, %s45
      %s62 = sphi 0, %s46
      %s72 = sphi 0, %s74
      %s75 = sphi 0, %s72
      %s76 = sphi 0, %s75
      %s92 = sphi 0, %s76
      %s102 = sphi 0, %s104
      %s105 = sphi 0, %s102
      %s106 = sphi 0, %s105
      %s122 = sphi 0, %s106
    $region4: #{tpu_custom_call.1} parent=1 // loop_header_branch
      %14 = sbr.rel (%p12) target = $region8
    $region5: #{tpu_custom_call.1} parent=1 // loop_body
      %s16 = ssub.s32 %s11, 1
      %s17 = ssub.s32 %s11, 2
      %s27 = sadd.s32 1, %s20
      %p28 = scmp.ge.s32.totalorder %s27, 1
      %s29 = scalar_select %p28, 0, %s27
      %s30 = sadd.s32 1, %s19
      %s31 = scalar_select %p28, %s30, %s19
      %p32 = scmp.ge.s32.totalorder %s31, 1
      %s33 = scalar_select %p32, 0, %s31
      %s34 = sadd.s32 1, %s18
      %s35 = scalar_select %p32, %s34, %s18
      %p36 = scmp.ge.s32.totalorder %s35, 2
      %s37 = scalar_select %p36, 0, %s35
      %s38 = ssub.s32 %s18, %s37
      %s39 = ssub.s32 %s19, %s33
      %s40 = sor.u32 %s38, %s39
      %p41 = scmp.eq.s32.totalorder %s40, 0
      %s43 = sadd.s32 %s42, 1
      %s44 = scalar_select %p41, %s42, %s43
      %p47 = pneg %p41
      %p48 = scmp.eq.s32.totalorder %s11, 1
      %p49 = por %p47, %p48
      %p50 = scmp.ne.s32.totalorder %s42, %s45
      %p51 = scmp.eq.s32.totalorder %s11, 0
      %p52 = por %p50, %p51
      %p53 = scmp.ne.s32.totalorder %s42, %s45
      %p54 = scmp.eq.s32.totalorder %s16, 1
      %p55 = por %p53, %p54
      %p56 = scmp.ne.s32.totalorder %s45, %s46
      %p57 = scmp.eq.s32.totalorder %s16, 0
      %p58 = por %p56, %p57
      %p59 = scmp.ne.s32.totalorder %s45, %s46
      %p60 = scmp.eq.s32.totalorder %s17, 1
      %p61 = por %p59, %p60
      %p63 = scmp.ne.s32.totalorder %s46, %s62
      %p64 = scmp.eq.s32.totalorder %s17, 0
      %p65 = por %p63, %p64
      %s66 = ssub.s32 %s18, %s37
      %s67 = ssub.s32 %s19, %s33
      %s68 = sor.u32 %s66, %s67
      %s69 = ssub.s32 %s20, %s29
      %s70 = sor.u32 %s68, %s69
      %p71 = scmp.eq.s32.totalorder %s70, 0
      %s73 = sadd.s32 %s72, 1
      %s74 = scalar_select %p71, %s72, %s73
      %p77 = pneg %p71
      %p78 = scmp.eq.s32.totalorder %s11, 1
      %p79 = por %p77, %p78
      %p80 = scmp.ne.s32.totalorder %s72, %s75
      %p81 = scmp.eq.s32.totalorder %s11, 0
      %p82 = por %p80, %p81
      %p83 = scmp.ne.s32.totalorder %s72, %s75
      %p84 = scmp.eq.s32.totalorder %s16, 1
      %p85 = por %p83, %p84
      %p86 = scmp.ne.s32.totalorder %s75, %s76
      %p87 = scmp.eq.s32.totalorder %s16, 0
      %p88 = por %p86, %p87
      %p89 = scmp.ne.s32.totalorder %s75, %s76
      %p90 = scmp.eq.s32.totalorder %s17, 1
      %p91 = por %p89, %p90
      %p93 = scmp.ne.s32.totalorder %s76, %s92
      %p94 = scmp.eq.s32.totalorder %s17, 0
      %p95 = por %p93, %p94
      %s96 = ssub.s32 %s18, %s37
      %s97 = ssub.s32 %s19, %s33
      %s98 = sor.u32 %s96, %s97
      %s99 = ssub.s32 %s20, %s29
      %s100 = sor.u32 %s98, %s99
      %p101 = scmp.eq.s32.totalorder %s100, 0
      %s103 = sadd.s32 %s102, 1
      %s104 = scalar_select %p101, %s102, %s103
      %p107 = pneg %p101
      %p108 = scmp.eq.s32.totalorder %s11, 1
      %p109 = por %p107, %p108
      %p110 = scmp.ne.s32.totalorder %s102, %s105
      %p111 = scmp.eq.s32.totalorder %s11, 0
      %p112 = por %p110, %p111
      %p113 = scmp.ne.s32.totalorder %s102, %s105
      %p114 = scmp.eq.s32.totalorder %s16, 1
      %p115 = por %p113, %p114
      %p116 = scmp.ne.s32.totalorder %s105, %s106
      %p117 = scmp.eq.s32.totalorder %s16, 0
      %p118 = por %p116, %p117
      %p119 = scmp.ne.s32.totalorder %s105, %s106
      %p120 = scmp.eq.s32.totalorder %s17, 1
      %p121 = por %p119, %p120
      %p123 = scmp.ne.s32.totalorder %s106, %s122
      %p124 = scmp.eq.s32.totalorder %s17, 0
      %p125 = por %p123, %p124
      %p126 = scmp.le.s32.totalorder 1, %s11
      %p127 = scmp.lt.s32.totalorder %s11, 3
      %p128 = pnand %p126, %p127
      %p129 = pneg %p128
      // Predicated region
      $region9: #{tpu_custom_call.1} parent=5 // pred_check
        _
      $region10: #{tpu_custom_call.1} parent=5 // pred_check_branch
        %131 = sbr.rel (%p128) target = $region12
      $region11: #{tpu_custom_call.1} parent=5 // pred_region
        %s132 = ssub.s32 %s11, 1
      $region12: #{tpu_custom_call.1} parent=5 // pred_fallthru
        _
      %p133 = scmp.lt.s32.totalorder %s11, 2
      // Predicated region
      $region13: #{tpu_custom_call.1} parent=5 // pred_check
        %p134 = pneg %p133
      $region14: #{tpu_custom_call.1} parent=5 // pred_check_branch
        %136 = sbr.rel (%p134) target = $region16
      $region15: #{tpu_custom_call.1} parent=5 // pred_region
        // Predicated region
        $region17: #{tpu_custom_call.1} parent=15 // pred_check
          %p137 = pneg %p52
        $region18: #{tpu_custom_call.1} parent=15 // pred_check_branch
          %139 = sbr.rel (%p137) target = $region20
        $region19: #{tpu_custom_call.1} parent=15 // pred_region
          %p140 = scmp.lt.s32.totalorder %s18, 1
          %s141 = scalar_select %p140, %s18, 1
          %p142 = scmp.lt.s32.totalorder %s19, 0
          %s143 = scalar_select %p142, %s19, 0
          %s144 = smul.addr %s143, 9
          %s145 = smul.addr %s141, 9
          %s146 = sadd.s32 %s144, %s145
          %s147 = smul.addr %s146, 8
          %s148 = scalar_lea.vmem %s0, %s147
        $region20: #{tpu_custom_call.1} parent=15 // pred_fallthru
          _
        // Predicated region
        $region21: #{tpu_custom_call.1} parent=15 // pred_check
          %p149 = pneg %p82
        $region22: #{tpu_custom_call.1} parent=15 // pred_check_branch
          %151 = sbr.rel (%p149) target = $region24
        $region23: #{tpu_custom_call.1} parent=15 // pred_region
          %s152 = smul.u32 2, %s20
          %p153 = scmp.lt.s32.totalorder %s18, 1
          %s154 = scalar_select %p153, %s18, 1
          %p155 = scmp.lt.s32.totalorder %s19, 0
          %s156 = scalar_select %p155, %s19, 0
          %p157 = scmp.lt.s32.totalorder %s152, 1
          %s158 = scalar_select %p157, %s152, 1
          %s159 = smul.addr %s156, 294
          %s160 = sadd.s32 %s158, %s159
          %s161 = smul.addr %s154, 294
          %s162 = sadd.s32 %s160, %s161
          %s163 = smul.addr %s162, 8
          %s164 = scalar_lea.vmem %s1, %s163
          %s165 = smul.u32 2, %s20
        $region24: #{tpu_custom_call.1} parent=15 // pred_fallthru
          _
      $region16: #{tpu_custom_call.1} parent=5 // pred_fallthru
        _
      %p166 = scmp.le.s32.totalorder 1, %s11
      %p167 = scmp.lt.s32.totalorder %s11, 3
      %p168 = pnand %p166, %p167
      %p169 = pneg %p168
      // Predicated region
      $region25: #{tpu_custom_call.1} parent=5 // pred_check
        _
      $region26: #{tpu_custom_call.1} parent=5 // pred_check_branch
        %171 = sbr.rel (%p168) target = $region28
      $region27: #{tpu_custom_call.1} parent=5 // pred_region
        %s172 = ssub.s32 %s11, 1
        %p173 = scmp.lt.s32.totalorder %s21, 1
        %s174 = scalar_select %p173, %s21, 1
        %p175 = scmp.lt.s32.totalorder %s22, 0
        %s176 = scalar_select %p175, %s22, 0
        %s177 = smul.addr %s176, 9
        %s178 = smul.addr %s174, 9
        %s179 = sadd.s32 %s177, %s178
        %s180 = smul.addr %s179, 8
        %s181 = scalar_lea.vmem %s0, %s180
        %p182 = pneg %p58
        %p183 = pneg %p55
        %s184 = smul.u32 2, %s23
        %p185 = scmp.lt.s32.totalorder %s21, 1
        %s186 = scalar_select %p185, %s21, 1
        %p187 = scmp.lt.s32.totalorder %s22, 0
        %s188 = scalar_select %p187, %s22, 0
        %p189 = scmp.lt.s32.totalorder %s184, 1
        %s190 = scalar_select %p189, %s184, 1
        %s191 = smul.addr %s188, 294
        %s192 = sadd.s32 %s190, %s191
        %s193 = smul.addr %s186, 294
        %s194 = sadd.s32 %s192, %s193
        %s195 = smul.addr %s194, 8
        %s196 = scalar_lea.vmem %s1, %s195
        %p197 = pneg %p88
        %p198 = pneg %p85
        %p199 = pneg %p118
        %p200 = pneg %p115
        %s201 = sand.u32 %s105, 1
        %s202 = scalar_lea.sflag [#allocation3], %s201
        %s203 = sand.u32 %s105, 1
        %s204 = smul.addr %s203, 48
        %s205 = scalar_lea.vmem [#allocation2], %s204
        %p206 = scmp.lt.s32.totalorder %s21, 1
        %s207 = scalar_select %p206, %s21, 1
        %p208 = scmp.lt.s32.totalorder %s22, 0
        %s209 = scalar_select %p208, %s22, 0
        %s210 = smul.addr %s209, 9
        %s211 = smul.addr %s207, 9
        %s212 = sadd.s32 %s210, %s211
        %s213 = smul.addr %s212, 8
        %s214 = scalar_lea.vmem %s0, %s213
        %s215 = smul.u32 2, %s23
        %p216 = scmp.lt.s32.totalorder %s21, 1
        %s217 = scalar_select %p216, %s21, 1
        %p218 = scmp.lt.s32.totalorder %s22, 0
        %s219 = scalar_select %p218, %s22, 0
        %p220 = scmp.lt.s32.totalorder %s215, 1
        %s221 = scalar_select %p220, %s215, 1
        %s222 = smul.addr %s219, 294
        %s223 = sadd.s32 %s221, %s222
        %s224 = smul.addr %s217, 294
        %s225 = sadd.s32 %s223, %s224
        %s226 = smul.addr %s225, 8
        %s227 = scalar_lea.vmem %s1, %s226
        %s228 = smul.u32 2, %s23
        %s229 = smul.u32 2, %s23
        %v230 = vld [vmem:[%s227] sm:$0xff]
        %v231 = vld [vmem:[%s227 + $0x8] sm:$0xff]
        %v232 = vld [vmem:[%s227 + $0x10] sm:$0xff]
        %v233 = vld [vmem:[%s227 + $0x18] sm:$0xff]
        %v234 = vld [vmem:[%s227 + $0x20] sm:$0xff]
        %v235 = vld [vmem:[%s227 + $0x28] sm:$0xff]
        %s236 = scalar_lea.vmem %s227, 48
        %v237 = vld [vmem:[%s236] sm:$0xff]
        %v238 = vld [vmem:[%s236 + $0x8] sm:$0xff]
        %v239 = vld [vmem:[%s236 + $0x10] sm:$0xff]
        %v240 = vld [vmem:[%s236 + $0x18] sm:$0xff]
        %v241 = vld [vmem:[%s236 + $0x20] sm:$0xff]
        %v242 = vld [vmem:[%s236 + $0x28] sm:$0xff]
        %v243 = vmax.f32 %v230, %v237
        %v244 = vmax.f32 %v231, %v238
        %v245 = vmax.f32 %v232, %v239
        %v246 = vmax.f32 %v233, %v240
        %v247 = vmax.f32 %v234, %v241
        %v248 = vmax.f32 %v235, %v242
        %s249 = scalar_lea.vmem %s227, 96
        %v250 = vld [vmem:[%s249] sm:$0xff]
        %v251 = vld [vmem:[%s249 + $0x8] sm:$0xff]
        %v252 = vld [vmem:[%s249 + $0x10] sm:$0xff]
        %v253 = vld [vmem:[%s249 + $0x18] sm:$0xff]
        %v254 = vld [vmem:[%s249 + $0x20] sm:$0xff]
        %v255 = vld [vmem:[%s249 + $0x28] sm:$0xff]
        %v256 = vmax.f32 %v243, %v250
        %v257 = vmax.f32 %v244, %v251
        %v258 = vmax.f32 %v245, %v252
        %v259 = vmax.f32 %v246, %v253
        %v260 = vmax.f32 %v247, %v254
        %v261 = vmax.f32 %v248, %v255
        %s262 = scalar_lea.vmem %s227, 144
        %v263 = vld [vmem:[%s262] sm:$0xff]
        %v264 = vld [vmem:[%s262 + $0x8] sm:$0xff]
        %v265 = vld [vmem:[%s262 + $0x10] sm:$0xff]
        %v266 = vld [vmem:[%s262 + $0x18] sm:$0xff]
        %v267 = vld [vmem:[%s262 + $0x20] sm:$0xff]
        %v268 = vld [vmem:[%s262 + $0x28] sm:$0xff]
        %v269 = vmax.f32 %v256, %v263
        %v270 = vmax.f32 %v257, %v264
        %v271 = vmax.f32 %v258, %v265
        %v272 = vmax.f32 %v259, %v266
        %v273 = vmax.f32 %v260, %v267
        %v274 = vmax.f32 %v261, %v268
        %s275 = scalar_lea.vmem %s227, 192
        %v276 = vld [vmem:[%s275] sm:$0xff]
        %v277 = vld [vmem:[%s275 + $0x8] sm:$0xff]
        %v278 = vld [vmem:[%s275 + $0x10] sm:$0xff]
        %v279 = vld [vmem:[%s275 + $0x18] sm:$0xff]
        %v280 = vld [vmem:[%s275 + $0x20] sm:$0xff]
        %v281 = vld [vmem:[%s275 + $0x28] sm:$0xff]
        %v282 = vmax.f32 %v269, %v276
        %v283 = vmax.f32 %v270, %v277
        %v284 = vmax.f32 %v271, %v278
        %v285 = vmax.f32 %v272, %v279
        %v286 = vmax.f32 %v273, %v280
        %v287 = vmax.f32 %v274, %v281
        %s288 = scalar_lea.vmem %s227, 240
        %v289 = vld [vmem:[%s288] sm:$0xff]
        %v290 = vld [vmem:[%s288 + $0x8] sm:$0xff]
        %v291 = vld [vmem:[%s288 + $0x10] sm:$0xff]
        %v292 = vld [vmem:[%s288 + $0x18] sm:$0xff]
        %v293 = vld [vmem:[%s288 + $0x20] sm:$0xff]
        %v294 = vld [vmem:[%s288 + $0x28] sm:$0xff]
        %v295 = vmax.f32 %v282, %v289
        %v296 = vmax.f32 %v283, %v290
        %v297 = vmax.f32 %v284, %v291
        %v298 = vmax.f32 %v285, %v292
        %v299 = vmax.f32 %v286, %v293
        %v300 = vmax.f32 %v287, %v294
        %s301 = scalar_lea.vmem %s227, 288
        %v302 = vld [vmem:[%s301] sm:$0xff]
        %v303 = vld [vmem:[%s301 + $0x8] sm:$0xff]
        %v304 = vld [vmem:[%s301 + $0x10] sm:$0xff]
        %v305 = vld [vmem:[%s301 + $0x18] sm:$0xff]
        %v306 = vld [vmem:[%s301 + $0x20] sm:$0xff]
        %v307 = vld [vmem:[%s301 + $0x28] sm:$0xff]
        %v308 = vmax.f32 %v295, %v302
        %v309 = vmax.f32 %v296, %v303
        %v310 = vmax.f32 %v297, %v304
        %v311 = vmax.f32 %v298, %v305
        %v312 = vmax.f32 %v299, %v306
        %v313 = vmax.f32 %v300, %v307
        %s314 = scalar_lea.vmem %s227, 336
        %v315 = vld [vmem:[%s314] sm:$0xff]
        %v316 = vld [vmem:[%s314 + $0x8] sm:$0xff]
        %v317 = vld [vmem:[%s314 + $0x10] sm:$0xff]
        %v318 = vld [vmem:[%s314 + $0x18] sm:$0xff]
        %v319 = vld [vmem:[%s314 + $0x20] sm:$0xff]
        %v320 = vld [vmem:[%s314 + $0x28] sm:$0xff]
        %v321 = vmax.f32 %v308, %v315
        %v322 = vmax.f32 %v309, %v316
        %v323 = vmax.f32 %v310, %v317
        %v324 = vmax.f32 %v311, %v318
        %v325 = vmax.f32 %v312, %v319
        %v326 = vmax.f32 %v313, %v320
        %s327 = scalar_lea.vmem %s227, 384
        %v328 = vld [vmem:[%s327] sm:$0xff]
        %v329 = vld [vmem:[%s327 + $0x8] sm:$0xff]
        %v330 = vld [vmem:[%s327 + $0x10] sm:$0xff]
        %v331 = vld [vmem:[%s327 + $0x18] sm:$0xff]
        %v332 = vld [vmem:[%s327 + $0x20] sm:$0xff]
        %v333 = vld [vmem:[%s327 + $0x28] sm:$0xff]
        %v334 = vmax.f32 %v321, %v328
        %v335 = vmax.f32 %v322, %v329
        %v336 = vmax.f32 %v323, %v330
        %v337 = vmax.f32 %v324, %v331
        %v338 = vmax.f32 %v325, %v332
        %v339 = vmax.f32 %v326, %v333
        %s340 = scalar_lea.vmem %s227, 432
        %v341 = vld [vmem:[%s340] sm:$0xff]
        %v342 = vld [vmem:[%s340 + $0x8] sm:$0xff]
        %v343 = vld [vmem:[%s340 + $0x10] sm:$0xff]
        %v344 = vld [vmem:[%s340 + $0x18] sm:$0xff]
        %v345 = vld [vmem:[%s340 + $0x20] sm:$0xff]
        %v346 = vld [vmem:[%s340 + $0x28] sm:$0xff]
        %v347 = vmax.f32 %v334, %v341
        %v348 = vmax.f32 %v335, %v342
        %v349 = vmax.f32 %v336, %v343
        %v350 = vmax.f32 %v337, %v344
        %v351 = vmax.f32 %v338, %v345
        %v352 = vmax.f32 %v339, %v346
        %s353 = scalar_lea.vmem %s227, 480
        %v354 = vld [vmem:[%s353] sm:$0xff]
        %v355 = vld [vmem:[%s353 + $0x8] sm:$0xff]
        %v356 = vld [vmem:[%s353 + $0x10] sm:$0xff]
        %v357 = vld [vmem:[%s353 + $0x18] sm:$0xff]
        %v358 = vld [vmem:[%s353 + $0x20] sm:$0xff]
        %v359 = vld [vmem:[%s353 + $0x28] sm:$0xff]
        %v360 = vmax.f32 %v347, %v354
        %v361 = vmax.f32 %v348, %v355
        %v362 = vmax.f32 %v349, %v356
        %v363 = vmax.f32 %v350, %v357
        %v364 = vmax.f32 %v351, %v358
        %v365 = vmax.f32 %v352, %v359
        %s366 = scalar_lea.vmem %s227, 528
        %v367 = vld [vmem:[%s366] sm:$0xff]
        %v368 = vld [vmem:[%s366 + $0x8] sm:$0xff]
        %v369 = vld [vmem:[%s366 + $0x10] sm:$0xff]
        %v370 = vld [vmem:[%s366 + $0x18] sm:$0xff]
        %v371 = vld [vmem:[%s366 + $0x20] sm:$0xff]
        %v372 = vld [vmem:[%s366 + $0x28] sm:$0xff]
        %v373 = vmax.f32 %v360, %v367
        %v374 = vmax.f32 %v361, %v368
        %v375 = vmax.f32 %v362, %v369
        %v376 = vmax.f32 %v363, %v370
        %v377 = vmax.f32 %v364, %v371
        %v378 = vmax.f32 %v365, %v372
        %s379 = scalar_lea.vmem %s227, 576
        %v380 = vld [vmem:[%s379] sm:$0xff]
        %v381 = vld [vmem:[%s379 + $0x8] sm:$0xff]
        %v382 = vld [vmem:[%s379 + $0x10] sm:$0xff]
        %v383 = vld [vmem:[%s379 + $0x18] sm:$0xff]
        %v384 = vld [vmem:[%s379 + $0x20] sm:$0xff]
        %v385 = vld [vmem:[%s379 + $0x28] sm:$0xff]
        %v386 = vmax.f32 %v373, %v380
        %v387 = vmax.f32 %v374, %v381
        %v388 = vmax.f32 %v375, %v382
        %v389 = vmax.f32 %v376, %v383
        %v390 = vmax.f32 %v377, %v384
        %v391 = vmax.f32 %v378, %v385
        %s392 = scalar_lea.vmem %s227, 624
        %v393 = vld [vmem:[%s392] sm:$0xff]
        %v394 = vld [vmem:[%s392 + $0x8] sm:$0xff]
        %v395 = vld [vmem:[%s392 + $0x10] sm:$0xff]
        %v396 = vld [vmem:[%s392 + $0x18] sm:$0xff]
        %v397 = vld [vmem:[%s392 + $0x20] sm:$0xff]
        %v398 = vld [vmem:[%s392 + $0x28] sm:$0xff]
        %v399 = vmax.f32 %v386, %v393
        %v400 = vmax.f32 %v387, %v394
        %v401 = vmax.f32 %v388, %v395
        %v402 = vmax.f32 %v389, %v396
        %v403 = vmax.f32 %v390, %v397
        %v404 = vmax.f32 %v391, %v398
        %s405 = scalar_lea.vmem %s227, 672
        %v406 = vld [vmem:[%s405] sm:$0xff]
        %v407 = vld [vmem:[%s405 + $0x8] sm:$0xff]
        %v408 = vld [vmem:[%s405 + $0x10] sm:$0xff]
        %v409 = vld [vmem:[%s405 + $0x18] sm:$0xff]
        %v410 = vld [vmem:[%s405 + $0x20] sm:$0xff]
        %v411 = vld [vmem:[%s405 + $0x28] sm:$0xff]
        %v412 = vmax.f32 %v399, %v406
        %v413 = vmax.f32 %v400, %v407
        %v414 = vmax.f32 %v401, %v408
        %v415 = vmax.f32 %v402, %v409
        %v416 = vmax.f32 %v403, %v410
        %v417 = vmax.f32 %v404, %v411
        %s418 = scalar_lea.vmem %s227, 720
        %v419 = vld [vmem:[%s418] sm:$0xff]
        %v420 = vld [vmem:[%s418 + $0x8] sm:$0xff]
        %v421 = vld [vmem:[%s418 + $0x10] sm:$0xff]
        %v422 = vld [vmem:[%s418 + $0x18] sm:$0xff]
        %v423 = vld [vmem:[%s418 + $0x20] sm:$0xff]
        %v424 = vld [vmem:[%s418 + $0x28] sm:$0xff]
        %v425 = vmax.f32 %v412, %v419
        %v426 = vmax.f32 %v413, %v420
        %v427 = vmax.f32 %v414, %v421
        %v428 = vmax.f32 %v415, %v422
        %v429 = vmax.f32 %v416, %v423
        %v430 = vmax.f32 %v417, %v424
        %s431 = scalar_lea.vmem %s227, 768
        %v432 = vld [vmem:[%s431] sm:$0xff]
        %v433 = vld [vmem:[%s431 + $0x8] sm:$0xff]
        %v434 = vld [vmem:[%s431 + $0x10] sm:$0xff]
        %v435 = vld [vmem:[%s431 + $0x18] sm:$0xff]
        %v436 = vld [vmem:[%s431 + $0x20] sm:$0xff]
        %v437 = vld [vmem:[%s431 + $0x28] sm:$0xff]
        %v438 = vmax.f32 %v425, %v432
        %v439 = vmax.f32 %v426, %v433
        %v440 = vmax.f32 %v427, %v434
        %v441 = vmax.f32 %v428, %v435
        %v442 = vmax.f32 %v429, %v436
        %v443 = vmax.f32 %v430, %v437
        %s444 = scalar_lea.vmem %s227, 816
        %v445 = vld [vmem:[%s444] sm:$0xff]
        %v446 = vld [vmem:[%s444 + $0x8] sm:$0xff]
        %v447 = vld [vmem:[%s444 + $0x10] sm:$0xff]
        %v448 = vld [vmem:[%s444 + $0x18] sm:$0xff]
        %v449 = vld [vmem:[%s444 + $0x20] sm:$0xff]
        %v450 = vld [vmem:[%s444 + $0x28] sm:$0xff]
        %v451 = vmax.f32 %v438, %v445
        %v452 = vmax.f32 %v439, %v446
        %v453 = vmax.f32 %v440, %v447
        %v454 = vmax.f32 %v441, %v448
        %v455 = vmax.f32 %v442, %v449
        %v456 = vmax.f32 %v443, %v450
        %s457 = scalar_lea.vmem %s227, 864
        %v458 = vld [vmem:[%s457] sm:$0xff]
        %v459 = vld [vmem:[%s457 + $0x8] sm:$0xff]
        %v460 = vld [vmem:[%s457 + $0x10] sm:$0xff]
        %v461 = vld [vmem:[%s457 + $0x18] sm:$0xff]
        %v462 = vld [vmem:[%s457 + $0x20] sm:$0xff]
        %v463 = vld [vmem:[%s457 + $0x28] sm:$0xff]
        %v464 = vmax.f32 %v451, %v458
        %v465 = vmax.f32 %v452, %v459
        %v466 = vmax.f32 %v453, %v460
        %v467 = vmax.f32 %v454, %v461
        %v468 = vmax.f32 %v455, %v462
        %v469 = vmax.f32 %v456, %v463
        %s470 = scalar_lea.vmem %s227, 912
        %v471 = vld [vmem:[%s470] sm:$0xff]
        %v472 = vld [vmem:[%s470 + $0x8] sm:$0xff]
        %v473 = vld [vmem:[%s470 + $0x10] sm:$0xff]
        %v474 = vld [vmem:[%s470 + $0x18] sm:$0xff]
        %v475 = vld [vmem:[%s470 + $0x20] sm:$0xff]
        %v476 = vld [vmem:[%s470 + $0x28] sm:$0xff]
        %v477 = vmax.f32 %v464, %v471
        %v478 = vmax.f32 %v465, %v472
        %v479 = vmax.f32 %v466, %v473
        %v480 = vmax.f32 %v467, %v474
        %v481 = vmax.f32 %v468, %v475
        %v482 = vmax.f32 %v469, %v476
        %s483 = scalar_lea.vmem %s227, 960
        %v484 = vld [vmem:[%s483] sm:$0xff]
        %v485 = vld [vmem:[%s483 + $0x8] sm:$0xff]
        %v486 = vld [vmem:[%s483 + $0x10] sm:$0xff]
        %v487 = vld [vmem:[%s483 + $0x18] sm:$0xff]
        %v488 = vld [vmem:[%s483 + $0x20] sm:$0xff]
        %v489 = vld [vmem:[%s483 + $0x28] sm:$0xff]
        %v490 = vmax.f32 %v477, %v484
        %v491 = vmax.f32 %v478, %v485
        %v492 = vmax.f32 %v479, %v486
        %v493 = vmax.f32 %v480, %v487
        %v494 = vmax.f32 %v481, %v488
        %v495 = vmax.f32 %v482, %v489
        %s496 = scalar_lea.vmem %s227, 1008
        %v497 = vld [vmem:[%s496] sm:$0xff]
        %v498 = vld [vmem:[%s496 + $0x8] sm:$0xff]
        %v499 = vld [vmem:[%s496 + $0x10] sm:$0xff]
        %v500 = vld [vmem:[%s496 + $0x18] sm:$0xff]
        %v501 = vld [vmem:[%s496 + $0x20] sm:$0xff]
        %v502 = vld [vmem:[%s496 + $0x28] sm:$0xff]
        %v503 = vmax.f32 %v490, %v497
        %v504 = vmax.f32 %v491, %v498
        %v505 = vmax.f32 %v492, %v499
        %v506 = vmax.f32 %v493, %v500
        %v507 = vmax.f32 %v494, %v501
        %v508 = vmax.f32 %v495, %v502
        %s509 = scalar_lea.vmem %s227, 1056
        %v510 = vld [vmem:[%s509] sm:$0xff]
        %v511 = vld [vmem:[%s509 + $0x8] sm:$0xff]
        %v512 = vld [vmem:[%s509 + $0x10] sm:$0xff]
        %v513 = vld [vmem:[%s509 + $0x18] sm:$0xff]
        %v514 = vld [vmem:[%s509 + $0x20] sm:$0xff]
        %v515 = vld [vmem:[%s509 + $0x28] sm:$0xff]
        %v516 = vmax.f32 %v503, %v510
        %v517 = vmax.f32 %v504, %v511
        %v518 = vmax.f32 %v505, %v512
        %v519 = vmax.f32 %v506, %v513
        %v520 = vmax.f32 %v507, %v514
        %v521 = vmax.f32 %v508, %v515
        %s522 = scalar_lea.vmem %s227, 1104
        %v523 = vld [vmem:[%s522] sm:$0xff]
        %v524 = vld [vmem:[%s522 + $0x8] sm:$0xff]
        %v525 = vld [vmem:[%s522 + $0x10] sm:$0xff]
        %v526 = vld [vmem:[%s522 + $0x18] sm:$0xff]
        %v527 = vld [vmem:[%s522 + $0x20] sm:$0xff]
        %v528 = vld [vmem:[%s522 + $0x28] sm:$0xff]
        %v529 = vmax.f32 %v516, %v523
        %v530 = vmax.f32 %v517, %v524
        %v531 = vmax.f32 %v518, %v525
        %v532 = vmax.f32 %v519, %v526
        %v533 = vmax.f32 %v520, %v527
        %v534 = vmax.f32 %v521, %v528
        %s535 = scalar_lea.vmem %s227, 1152
        %v536 = vld [vmem:[%s535] sm:$0xff]
        %v537 = vld [vmem:[%s535 + $0x8] sm:$0xff]
        %v538 = vld [vmem:[%s535 + $0x10] sm:$0xff]
        %v539 = vld [vmem:[%s535 + $0x18] sm:$0xff]
        %v540 = vld [vmem:[%s535 + $0x20] sm:$0xff]
        %v541 = vld [vmem:[%s535 + $0x28] sm:$0xff]
        %v542 = vmax.f32 %v529, %v536
        %v543 = vmax.f32 %v530, %v537
        %v544 = vmax.f32 %v531, %v538
        %v545 = vmax.f32 %v532, %v539
        %v546 = vmax.f32 %v533, %v540
        %v547 = vmax.f32 %v534, %v541
        %s548 = scalar_lea.vmem %s227, 1200
        %v549 = vld [vmem:[%s548] sm:$0xff]
        %v550 = vld [vmem:[%s548 + $0x8] sm:$0xff]
        %v551 = vld [vmem:[%s548 + $0x10] sm:$0xff]
        %v552 = vld [vmem:[%s548 + $0x18] sm:$0xff]
        %v553 = vld [vmem:[%s548 + $0x20] sm:$0xff]
        %v554 = vld [vmem:[%s548 + $0x28] sm:$0xff]
        %v555 = vmax.f32 %v542, %v549
        %v556 = vmax.f32 %v543, %v550
        %v557 = vmax.f32 %v544, %v551
        %v558 = vmax.f32 %v545, %v552
        %v559 = vmax.f32 %v546, %v553
        %v560 = vmax.f32 %v547, %v554
        %s561 = scalar_lea.vmem %s227, 1248
        %v562 = vld [vmem:[%s561] sm:$0xff]
        %v563 = vld [vmem:[%s561 + $0x8] sm:$0xff]
        %v564 = vld [vmem:[%s561 + $0x10] sm:$0xff]
        %v565 = vld [vmem:[%s561 + $0x18] sm:$0xff]
        %v566 = vld [vmem:[%s561 + $0x20] sm:$0xff]
        %v567 = vld [vmem:[%s561 + $0x28] sm:$0xff]
        %v568 = vmax.f32 %v555, %v562
        %v569 = vmax.f32 %v556, %v563
        %v570 = vmax.f32 %v557, %v564
        %v571 = vmax.f32 %v558, %v565
        %v572 = vmax.f32 %v559, %v566
        %v573 = vmax.f32 %v560, %v567
        %s574 = scalar_lea.vmem %s227, 1296
        %v575 = vld [vmem:[%s574] sm:$0xff]
        %v576 = vld [vmem:[%s574 + $0x8] sm:$0xff]
        %v577 = vld [vmem:[%s574 + $0x10] sm:$0xff]
        %v578 = vld [vmem:[%s574 + $0x18] sm:$0xff]
        %v579 = vld [vmem:[%s574 + $0x20] sm:$0xff]
        %v580 = vld [vmem:[%s574 + $0x28] sm:$0xff]
        %v581 = vmax.f32 %v568, %v575
        %v582 = vmax.f32 %v569, %v576
        %v583 = vmax.f32 %v570, %v577
        %v584 = vmax.f32 %v571, %v578
        %v585 = vmax.f32 %v572, %v579
        %v586 = vmax.f32 %v573, %v580
        %s587 = scalar_lea.vmem %s227, 1344
        %v588 = vld [vmem:[%s587] sm:$0xff]
        %v589 = vld [vmem:[%s587 + $0x8] sm:$0xff]
        %v590 = vld [vmem:[%s587 + $0x10] sm:$0xff]
        %v591 = vld [vmem:[%s587 + $0x18] sm:$0xff]
        %v592 = vld [vmem:[%s587 + $0x20] sm:$0xff]
        %v593 = vld [vmem:[%s587 + $0x28] sm:$0xff]
        %v594 = vmax.f32 %v581, %v588
        %v595 = vmax.f32 %v582, %v589
        %v596 = vmax.f32 %v583, %v590
        %v597 = vmax.f32 %v584, %v591
        %v598 = vmax.f32 %v585, %v592
        %v599 = vmax.f32 %v586, %v593
        %s600 = scalar_lea.vmem %s227, 1392
        %v601 = vld [vmem:[%s600] sm:$0xff]
        %v602 = vld [vmem:[%s600 + $0x8] sm:$0xff]
        %v603 = vld [vmem:[%s600 + $0x10] sm:$0xff]
        %v604 = vld [vmem:[%s600 + $0x18] sm:$0xff]
        %v605 = vld [vmem:[%s600 + $0x20] sm:$0xff]
        %v606 = vld [vmem:[%s600 + $0x28] sm:$0xff]
        %v607 = vmax.f32 %v594, %v601
        %v608 = vmax.f32 %v595, %v602
        %v609 = vmax.f32 %v596, %v603
        %v610 = vmax.f32 %v597, %v604
        %v611 = vmax.f32 %v598, %v605
        %v612 = vmax.f32 %v599, %v606
        %s613 = scalar_lea.vmem %s227, 1440
        %v614 = vld [vmem:[%s613] sm:$0xff]
        %v615 = vld [vmem:[%s613 + $0x8] sm:$0xff]
        %v616 = vld [vmem:[%s613 + $0x10] sm:$0xff]
        %v617 = vld [vmem:[%s613 + $0x18] sm:$0xff]
        %v618 = vld [vmem:[%s613 + $0x20] sm:$0xff]
        %v619 = vld [vmem:[%s613 + $0x28] sm:$0xff]
        %v620 = vmax.f32 %v607, %v614
        %v621 = vmax.f32 %v608, %v615
        %v622 = vmax.f32 %v609, %v616
        %v623 = vmax.f32 %v610, %v617
        %v624 = vmax.f32 %v611, %v618
        %v625 = vmax.f32 %v612, %v619
        %s626 = scalar_lea.vmem %s227, 1488
        %v627 = vld [vmem:[%s626] sm:$0xff]
        %v628 = vld [vmem:[%s626 + $0x8] sm:$0xff]
        %v629 = vld [vmem:[%s626 + $0x10] sm:$0xff]
        %v630 = vld [vmem:[%s626 + $0x18] sm:$0xff]
        %v631 = vld [vmem:[%s626 + $0x20] sm:$0xff]
        %v632 = vld [vmem:[%s626 + $0x28] sm:$0xff]
        %v633 = vmax.f32 %v620, %v627
        %v634 = vmax.f32 %v621, %v628
        %v635 = vmax.f32 %v622, %v629
        %v636 = vmax.f32 %v623, %v630
        %v637 = vmax.f32 %v624, %v631
        %v638 = vmax.f32 %v625, %v632
        %s639 = scalar_lea.vmem %s227, 1536
        %v640 = vld [vmem:[%s639] sm:$0xff]
        %v641 = vld [vmem:[%s639 + $0x8] sm:$0xff]
        %v642 = vld [vmem:[%s639 + $0x10] sm:$0xff]
        %v643 = vld [vmem:[%s639 + $0x18] sm:$0xff]
        %v644 = vld [vmem:[%s639 + $0x20] sm:$0xff]
        %v645 = vld [vmem:[%s639 + $0x28] sm:$0xff]
        %v646 = vmax.f32 %v633, %v640
        %v647 = vmax.f32 %v634, %v641
        %v648 = vmax.f32 %v635, %v642
        %v649 = vmax.f32 %v636, %v643
        %v650 = vmax.f32 %v637, %v644
        %v651 = vmax.f32 %v638, %v645
        %s652 = scalar_lea.vmem %s227, 1584
        %v653 = vld [vmem:[%s652] sm:$0xff]
        %v654 = vld [vmem:[%s652 + $0x8] sm:$0xff]
        %v655 = vld [vmem:[%s652 + $0x10] sm:$0xff]
        %v656 = vld [vmem:[%s652 + $0x18] sm:$0xff]
        %v657 = vld [vmem:[%s652 + $0x20] sm:$0xff]
        %v658 = vld [vmem:[%s652 + $0x28] sm:$0xff]
        %v659 = vmax.f32 %v646, %v653
        %v660 = vmax.f32 %v647, %v654
        %v661 = vmax.f32 %v648, %v655
        %v662 = vmax.f32 %v649, %v656
        %v663 = vmax.f32 %v650, %v657
        %v664 = vmax.f32 %v651, %v658
        %s665 = scalar_lea.vmem %s227, 1632
        %v666 = vld [vmem:[%s665] sm:$0xff]
        %v667 = vld [vmem:[%s665 + $0x8] sm:$0xff]
        %v668 = vld [vmem:[%s665 + $0x10] sm:$0xff]
        %v669 = vld [vmem:[%s665 + $0x18] sm:$0xff]
        %v670 = vld [vmem:[%s665 + $0x20] sm:$0xff]
        %v671 = vld [vmem:[%s665 + $0x28] sm:$0xff]
        %v672 = vmax.f32 %v659, %v666
        %v673 = vmax.f32 %v660, %v667
        %v674 = vmax.f32 %v661, %v668
        %v675 = vmax.f32 %v662, %v669
        %v676 = vmax.f32 %v663, %v670
        %v677 = vmax.f32 %v664, %v671
        %s678 = scalar_lea.vmem %s227, 1680
        %v679 = vld [vmem:[%s678] sm:$0xff]
        %v680 = vld [vmem:[%s678 + $0x8] sm:$0xff]
        %v681 = vld [vmem:[%s678 + $0x10] sm:$0xff]
        %v682 = vld [vmem:[%s678 + $0x18] sm:$0xff]
        %v683 = vld [vmem:[%s678 + $0x20] sm:$0xff]
        %v684 = vld [vmem:[%s678 + $0x28] sm:$0xff]
        %v685 = vmax.f32 %v672, %v679
        %v686 = vmax.f32 %v673, %v680
        %v687 = vmax.f32 %v674, %v681
        %v688 = vmax.f32 %v675, %v682
        %v689 = vmax.f32 %v676, %v683
        %v690 = vmax.f32 %v677, %v684
        %s691 = scalar_lea.vmem %s227, 1728
        %v692 = vld [vmem:[%s691] sm:$0xff]
        %v693 = vld [vmem:[%s691 + $0x8] sm:$0xff]
        %v694 = vld [vmem:[%s691 + $0x10] sm:$0xff]
        %v695 = vld [vmem:[%s691 + $0x18] sm:$0xff]
        %v696 = vld [vmem:[%s691 + $0x20] sm:$0xff]
        %v697 = vld [vmem:[%s691 + $0x28] sm:$0xff]
        %v698 = vmax.f32 %v685, %v692
        %v699 = vmax.f32 %v686, %v693
        %v700 = vmax.f32 %v687, %v694
        %v701 = vmax.f32 %v688, %v695
        %v702 = vmax.f32 %v689, %v696
        %v703 = vmax.f32 %v690, %v697
        %s704 = scalar_lea.vmem %s227, 1776
        %v705 = vld [vmem:[%s704] sm:$0xff]
        %v706 = vld [vmem:[%s704 + $0x8] sm:$0xff]
        %v707 = vld [vmem:[%s704 + $0x10] sm:$0xff]
        %v708 = vld [vmem:[%s704 + $0x18] sm:$0xff]
        %v709 = vld [vmem:[%s704 + $0x20] sm:$0xff]
        %v710 = vld [vmem:[%s704 + $0x28] sm:$0xff]
        %v711 = vmax.f32 %v698, %v705
        %v712 = vmax.f32 %v699, %v706
        %v713 = vmax.f32 %v700, %v707
        %v714 = vmax.f32 %v701, %v708
        %v715 = vmax.f32 %v702, %v709
        %v716 = vmax.f32 %v703, %v710
        %s717 = scalar_lea.vmem %s227, 1824
        %v718 = vld [vmem:[%s717] sm:$0xff]
        %v719 = vld [vmem:[%s717 + $0x8] sm:$0xff]
        %v720 = vld [vmem:[%s717 + $0x10] sm:$0xff]
        %v721 = vld [vmem:[%s717 + $0x18] sm:$0xff]
        %v722 = vld [vmem:[%s717 + $0x20] sm:$0xff]
        %v723 = vld [vmem:[%s717 + $0x28] sm:$0xff]
        %v724 = vmax.f32 %v711, %v718
        %v725 = vmax.f32 %v712, %v719
        %v726 = vmax.f32 %v713, %v720
        %v727 = vmax.f32 %v714, %v721
        %v728 = vmax.f32 %v715, %v722
        %v729 = vmax.f32 %v716, %v723
        %s730 = scalar_lea.vmem %s227, 1872
        %v731 = vld [vmem:[%s730] sm:$0xff]
        %v732 = vld [vmem:[%s730 + $0x8] sm:$0xff]
        %v733 = vld [vmem:[%s730 + $0x10] sm:$0xff]
        %v734 = vld [vmem:[%s730 + $0x18] sm:$0xff]
        %v735 = vld [vmem:[%s730 + $0x20] sm:$0xff]
        %v736 = vld [vmem:[%s730 + $0x28] sm:$0xff]
        %v737 = vmax.f32 %v724, %v731
        %v738 = vmax.f32 %v725, %v732
        %v739 = vmax.f32 %v726, %v733
        %v740 = vmax.f32 %v727, %v734
        %v741 = vmax.f32 %v728, %v735
        %v742 = vmax.f32 %v729, %v736
        %s743 = scalar_lea.vmem %s227, 1920
        %v744 = vld [vmem:[%s743] sm:$0xff]
        %v745 = vld [vmem:[%s743 + $0x8] sm:$0xff]
        %v746 = vld [vmem:[%s743 + $0x10] sm:$0xff]
        %v747 = vld [vmem:[%s743 + $0x18] sm:$0xff]
        %v748 = vld [vmem:[%s743 + $0x20] sm:$0xff]
        %v749 = vld [vmem:[%s743 + $0x28] sm:$0xff]
        %v750 = vmax.f32 %v737, %v744
        %v751 = vmax.f32 %v738, %v745
        %v752 = vmax.f32 %v739, %v746
        %v753 = vmax.f32 %v740, %v747
        %v754 = vmax.f32 %v741, %v748
        %v755 = vmax.f32 %v742, %v749
        %s756 = scalar_lea.vmem %s227, 1968
        %v757 = vld [vmem:[%s756] sm:$0xff]
        %v758 = vld [vmem:[%s756 + $0x8] sm:$0xff]
        %v759 = vld [vmem:[%s756 + $0x10] sm:$0xff]
        %v760 = vld [vmem:[%s756 + $0x18] sm:$0xff]
        %v761 = vld [vmem:[%s756 + $0x20] sm:$0xff]
        %v762 = vld [vmem:[%s756 + $0x28] sm:$0xff]
        %v763 = vmax.f32 %v750, %v757
        %v764 = vmax.f32 %v751, %v758
        %v765 = vmax.f32 %v752, %v759
        %v766 = vmax.f32 %v753, %v760
        %v767 = vmax.f32 %v754, %v761
        %v768 = vmax.f32 %v755, %v762
        %s769 = scalar_lea.vmem %s227, 2016
        %v770 = vld [vmem:[%s769] sm:$0xff]
        %v771 = vld [vmem:[%s769 + $0x8] sm:$0xff]
        %v772 = vld [vmem:[%s769 + $0x10] sm:$0xff]
        %v773 = vld [vmem:[%s769 + $0x18] sm:$0xff]
        %v774 = vld [vmem:[%s769 + $0x20] sm:$0xff]
        %v775 = vld [vmem:[%s769 + $0x28] sm:$0xff]
        %v776 = vmax.f32 %v763, %v770
        %v777 = vmax.f32 %v764, %v771
        %v778 = vmax.f32 %v765, %v772
        %v779 = vmax.f32 %v766, %v773
        %v780 = vmax.f32 %v767, %v774
        %v781 = vmax.f32 %v768, %v775
        %s782 = scalar_lea.vmem %s227, 2064
        %v783 = vld [vmem:[%s782] sm:$0xff]
        %v784 = vld [vmem:[%s782 + $0x8] sm:$0xff]
        %v785 = vld [vmem:[%s782 + $0x10] sm:$0xff]
        %v786 = vld [vmem:[%s782 + $0x18] sm:$0xff]
        %v787 = vld [vmem:[%s782 + $0x20] sm:$0xff]
        %v788 = vld [vmem:[%s782 + $0x28] sm:$0xff]
        %v789 = vmax.f32 %v776, %v783
        %v790 = vmax.f32 %v777, %v784
        %v791 = vmax.f32 %v778, %v785
        %v792 = vmax.f32 %v779, %v786
        %v793 = vmax.f32 %v780, %v787
        %v794 = vmax.f32 %v781, %v788
        %s795 = scalar_lea.vmem %s227, 2112
        %v796 = vld [vmem:[%s795] sm:$0xff]
        %v797 = vld [vmem:[%s795 + $0x8] sm:$0xff]
        %v798 = vld [vmem:[%s795 + $0x10] sm:$0xff]
        %v799 = vld [vmem:[%s795 + $0x18] sm:$0xff]
        %v800 = vld [vmem:[%s795 + $0x20] sm:$0xff]
        %v801 = vld [vmem:[%s795 + $0x28] sm:$0xff]
        %v802 = vmax.f32 %v789, %v796
        %v803 = vmax.f32 %v790, %v797
        %v804 = vmax.f32 %v791, %v798
        %v805 = vmax.f32 %v792, %v799
        %v806 = vmax.f32 %v793, %v800
        %v807 = vmax.f32 %v794, %v801
        %s808 = scalar_lea.vmem %s227, 2160
        %v809 = vld [vmem:[%s808] sm:$0xff]
        %v810 = vld [vmem:[%s808 + $0x8] sm:$0xff]
        %v811 = vld [vmem:[%s808 + $0x10] sm:$0xff]
        %v812 = vld [vmem:[%s808 + $0x18] sm:$0xff]
        %v813 = vld [vmem:[%s808 + $0x20] sm:$0xff]
        %v814 = vld [vmem:[%s808 + $0x28] sm:$0xff]
        %v815 = vmax.f32 %v802, %v809
        %v816 = vmax.f32 %v803, %v810
        %v817 = vmax.f32 %v804, %v811
        %v818 = vmax.f32 %v805, %v812
        %v819 = vmax.f32 %v806, %v813
        %v820 = vmax.f32 %v807, %v814
        %s821 = scalar_lea.vmem %s227, 2208
        %v822 = vld [vmem:[%s821] sm:$0xff]
        %v823 = vld [vmem:[%s821 + $0x8] sm:$0xff]
        %v824 = vld [vmem:[%s821 + $0x10] sm:$0xff]
        %v825 = vld [vmem:[%s821 + $0x18] sm:$0xff]
        %v826 = vld [vmem:[%s821 + $0x20] sm:$0xff]
        %v827 = vld [vmem:[%s821 + $0x28] sm:$0xff]
        %v828 = vmax.f32 %v815, %v822
        %v829 = vmax.f32 %v816, %v823
        %v830 = vmax.f32 %v817, %v824
        %v831 = vmax.f32 %v818, %v825
        %v832 = vmax.f32 %v819, %v826
        %v833 = vmax.f32 %v820, %v827
        %s834 = scalar_lea.vmem %s227, 2256
        %v835 = vld [vmem:[%s834] sm:$0xff]
        %v836 = vld [vmem:[%s834 + $0x8] sm:$0xff]
        %v837 = vld [vmem:[%s834 + $0x10] sm:$0xff]
        %v838 = vld [vmem:[%s834 + $0x18] sm:$0xff]
        %v839 = vld [vmem:[%s834 + $0x20] sm:$0xff]
        %v840 = vld [vmem:[%s834 + $0x28] sm:$0xff]
        %v841 = vmax.f32 %v828, %v835
        %v842 = vmax.f32 %v829, %v836
        %v843 = vmax.f32 %v830, %v837
        %v844 = vmax.f32 %v831, %v838
        %v845 = vmax.f32 %v832, %v839
        %v846 = vmax.f32 %v833, %v840
        %s847 = scalar_lea.vmem %s227, 2304
        %v848 = vld [vmem:[%s847] sm:$0xff]
        %v849 = vld [vmem:[%s847 + $0x8] sm:$0xff]
        %v850 = vld [vmem:[%s847 + $0x10] sm:$0xff]
        %v851 = vld [vmem:[%s847 + $0x18] sm:$0xff]
        %v852 = vld [vmem:[%s847 + $0x20] sm:$0xff]
        %v853 = vld [vmem:[%s847 + $0x28] sm:$0xff]
        %v854 = vmax.f32 %v841, %v848
        %v855 = vmax.f32 %v842, %v849
        %v856 = vmax.f32 %v843, %v850
        %v857 = vmax.f32 %v844, %v851
        %v858 = vmax.f32 %v845, %v852
        %v859 = vmax.f32 %v846, %v853
        %v860 = vld [vmem:[%s214] sm:$0xff]
        %v861 = vld [vmem:[%s214 + $0x8] sm:$0xff]
        %v862 = vld [vmem:[%s214 + $0x10] sm:$0x3f]
        %v863 = vld [vmem:[%s214 + $0x18] sm:$0xff]
        %v864 = vld [vmem:[%s214 + $0x20] sm:$0xff]
        %v865 = vld [vmem:[%s214 + $0x28] sm:$0x3f]
        %v866 = vld [vmem:[%s214 + $0x30] sm:$0xff]
        %v867 = vld [vmem:[%s214 + $0x38] sm:$0xff]
        %v868 = vld [vmem:[%s214 + $0x40] sm:$0x3f]
        %v869 = vsub.f32 %v230, %v854
        %v870 = vsub.f32 %v231, %v855
        %v871 = vsub.f32 %v232, %v856
        %v872 = vsub.f32 %v233, %v857
        %v873 = vsub.f32 %v234, %v858
        %v874 = vsub.f32 %v235, %v859
        %v875 = vmul.f32 %v869, 1.442695
        %v876 = vpow.pop %v875
        %v877 = vmul.f32 %v870, 1.442695
        %v878 = vpow.pop %v877
        %v879 = vmul.f32 %v871, 1.442695
        %v880 = vpow.pop %v879
        %v881 = vmul.f32 %v872, 1.442695
        %v882 = vpow.pop %v881
        %v883 = vmul.f32 %v873, 1.442695
        %v884 = vpow.pop %v883
        %v885 = vmul.f32 %v874, 1.442695
        %v886 = vpow.pop %v885
        %v887 = vadd.f32 %v876, 0.0
        %v888 = vadd.f32 %v878, 0.0
        %v889 = vadd.f32 %v880, 0.0
        %v890 = vadd.f32 %v882, 0.0
        %v891 = vadd.f32 %v884, 0.0
        %v892 = vadd.f32 %v886, 0.0
        %v893 = vmul.f32 %v876, %v860
        %v894 = vmul.f32 %v878, %v861
        %v895 = vmul.f32 %v880, %v863
        %v896 = vmul.f32 %v882, %v864
        %v897 = vmul.f32 %v884, %v866
        %v898 = vmul.f32 %v886, %v867
        %v899 = vadd.f32 %v893, 0.0
        %v900 = vadd.f32 %v894, 0.0
        %v901 = vadd.f32 %v895, 0.0
        %v902 = vadd.f32 %v896, 0.0
        %v903 = vadd.f32 %v897, 0.0
        %v904 = vadd.f32 %v898, 0.0
        %v905 = vsub.f32 %v315, %v854
        %v906 = vsub.f32 %v316, %v855
        %v907 = vsub.f32 %v317, %v856
        %v908 = vsub.f32 %v318, %v857
        %v909 = vsub.f32 %v319, %v858
        %v910 = vsub.f32 %v320, %v859
        %v911 = vmul.f32 %v905, 1.442695
        %v912 = vpow.pop %v911
        %v913 = vmul.f32 %v906, 1.442695
        %v914 = vpow.pop %v913
        %v915 = vmul.f32 %v907, 1.442695
        %v916 = vpow.pop %v915
        %v917 = vmul.f32 %v908, 1.442695
        %v918 = vpow.pop %v917
        %v919 = vmul.f32 %v909, 1.442695
        %v920 = vpow.pop %v919
        %v921 = vmul.f32 %v910, 1.442695
        %v922 = vpow.pop %v921
        %v923 = vadd.f32 %v887, %v912
        %v924 = vadd.f32 %v888, %v914
        %v925 = vadd.f32 %v889, %v916
        %v926 = vadd.f32 %v890, %v918
        %v927 = vadd.f32 %v891, %v920
        %v928 = vadd.f32 %v892, %v922
        %vm938 = vcmask 1046528
        %v939 = vrot.slane %v860, 1
        %v940 = vrot.slane %v861, 1
        %v941 = vsel %vm938, %v939, %v940
        %v942 = vrot.slane %v862, 1
        %v943 = vsel %vm938, %v940, %v942
        %v944 = vrot.slane %v863, 1
        %v945 = vrot.slane %v864, 1
        %v946 = vsel %vm938, %v944, %v945
        %v947 = vrot.slane %v865, 1
        %v948 = vsel %vm938, %v945, %v947
        %v949 = vrot.slane %v866, 1
        %v950 = vrot.slane %v867, 1
        %v951 = vsel %vm938, %v949, %v950
        %v952 = vrot.slane %v868, 1
        %v953 = vsel %vm938, %v950, %v952
        %v960 = vmul.f32 %v912, %v941
        %v961 = vmul.f32 %v914, %v943
        %v962 = vmul.f32 %v916, %v946
        %v963 = vmul.f32 %v918, %v948
        %v964 = vmul.f32 %v920, %v951
        %v965 = vmul.f32 %v922, %v953
        %v966 = vadd.f32 %v899, %v960
        %v967 = vadd.f32 %v900, %v961
        %v968 = vadd.f32 %v901, %v962
        %v969 = vadd.f32 %v902, %v963
        %v970 = vadd.f32 %v903, %v964
        %v971 = vadd.f32 %v904, %v965
        %v972 = vsub.f32 %v406, %v854
        %v973 = vsub.f32 %v407, %v855
        %v974 = vsub.f32 %v408, %v856
        %v975 = vsub.f32 %v409, %v857
        %v976 = vsub.f32 %v410, %v858
        %v977 = vsub.f32 %v411, %v859
        %v978 = vmul.f32 %v972, 1.442695
        %v979 = vpow.pop %v978
        %v980 = vmul.f32 %v973, 1.442695
        %v981 = vpow.pop %v980
        %v982 = vmul.f32 %v974, 1.442695
        %v983 = vpow.pop %v982
        %v984 = vmul.f32 %v975, 1.442695
        %v985 = vpow.pop %v984
        %v986 = vmul.f32 %v976, 1.442695
        %v987 = vpow.pop %v986
        %v988 = vmul.f32 %v977, 1.442695
        %v989 = vpow.pop %v988
        %v990 = vadd.f32 %v923, %v979
        %v991 = vadd.f32 %v924, %v981
        %v992 = vadd.f32 %v925, %v983
        %v993 = vadd.f32 %v926, %v985
        %v994 = vadd.f32 %v927, %v987
        %v995 = vadd.f32 %v928, %v989
        %vm996 = vcmask 1045504
        %v997 = vrot.slane %v860, 2
        %v998 = vrot.slane %v861, 2
        %v999 = vsel %vm996, %v997, %v998
        %v1000 = vrot.slane %v862, 2
        %v1001 = vsel %vm996, %v998, %v1000
        %v1002 = vrot.slane %v863, 2
        %v1003 = vrot.slane %v864, 2
        %v1004 = vsel %vm996, %v1002, %v1003
        %v1005 = vrot.slane %v865, 2
        %v1006 = vsel %vm996, %v1003, %v1005
        %v1007 = vrot.slane %v866, 2
        %v1008 = vrot.slane %v867, 2
        %v1009 = vsel %vm996, %v1007, %v1008
        %v1010 = vrot.slane %v868, 2
        %v1011 = vsel %vm996, %v1008, %v1010
        %v1018 = vmul.f32 %v979, %v999
        %v1019 = vmul.f32 %v981, %v1001
        %v1020 = vmul.f32 %v983, %v1004
        %v1021 = vmul.f32 %v985, %v1006
        %v1022 = vmul.f32 %v987, %v1009
        %v1023 = vmul.f32 %v989, %v1011
        %v1024 = vadd.f32 %v966, %v1018
        %v1025 = vadd.f32 %v967, %v1019
        %v1026 = vadd.f32 %v968, %v1020
        %v1027 = vadd.f32 %v969, %v1021
        %v1028 = vadd.f32 %v970, %v1022
        %v1029 = vadd.f32 %v971, %v1023
        %v1030 = vsub.f32 %v497, %v854
        %v1031 = vsub.f32 %v498, %v855
        %v1032 = vsub.f32 %v499, %v856
        %v1033 = vsub.f32 %v500, %v857
        %v1034 = vsub.f32 %v501, %v858
        %v1035 = vsub.f32 %v502, %v859
        %v1036 = vmul.f32 %v1030, 1.442695
        %v1037 = vpow.pop %v1036
        %v1038 = vmul.f32 %v1031, 1.442695
        %v1039 = vpow.pop %v1038
        %v1040 = vmul.f32 %v1032, 1.442695
        %v1041 = vpow.pop %v1040
        %v1042 = vmul.f32 %v1033, 1.442695
        %v1043 = vpow.pop %v1042
        %v1044 = vmul.f32 %v1034, 1.442695
        %v1045 = vpow.pop %v1044
        %v1046 = vmul.f32 %v1035, 1.442695
        %v1047 = vpow.pop %v1046
        %v1048 = vadd.f32 %v990, %v1037
        %v1049 = vadd.f32 %v991, %v1039
        %v1050 = vadd.f32 %v992, %v1041
        %v1051 = vadd.f32 %v993, %v1043
        %v1052 = vadd.f32 %v994, %v1045
        %v1053 = vadd.f32 %v995, %v1047
        %vm1054 = vcmask 1044480
        %v1055 = vrot.slane %v860, 3
        %v1056 = vrot.slane %v861, 3
        %v1057 = vsel %vm1054, %v1055, %v1056
        %v1058 = vrot.slane %v862, 3
        %v1059 = vsel %vm1054, %v1056, %v1058
        %v1060 = vrot.slane %v863, 3
        %v1061 = vrot.slane %v864, 3
        %v1062 = vsel %vm1054, %v1060, %v1061
        %v1063 = vrot.slane %v865, 3
        %v1064 = vsel %vm1054, %v1061, %v1063
        %v1065 = vrot.slane %v866, 3
        %v1066 = vrot.slane %v867, 3
        %v1067 = vsel %vm1054, %v1065, %v1066
        %v1068 = vrot.slane %v868, 3
        %v1069 = vsel %vm1054, %v1066, %v1068
        %v1076 = vmul.f32 %v1037, %v1057
        %v1077 = vmul.f32 %v1039, %v1059
        %v1078 = vmul.f32 %v1041, %v1062
        %v1079 = vmul.f32 %v1043, %v1064
        %v1080 = vmul.f32 %v1045, %v1067
        %v1081 = vmul.f32 %v1047, %v1069
        %v1082 = vadd.f32 %v1024, %v1076
        %v1083 = vadd.f32 %v1025, %v1077
        %v1084 = vadd.f32 %v1026, %v1078
        %v1085 = vadd.f32 %v1027, %v1079
        %v1086 = vadd.f32 %v1028, %v1080
        %v1087 = vadd.f32 %v1029, %v1081
        %v1088 = vsub.f32 %v588, %v854
        %v1089 = vsub.f32 %v589, %v855
        %v1090 = vsub.f32 %v590, %v856
        %v1091 = vsub.f32 %v591, %v857
        %v1092 = vsub.f32 %v592, %v858
        %v1093 = vsub.f32 %v593, %v859
        %v1094 = vmul.f32 %v1088, 1.442695
        %v1095 = vpow.pop %v1094
        %v1096 = vmul.f32 %v1089, 1.442695
        %v1097 = vpow.pop %v1096
        %v1098 = vmul.f32 %v1090, 1.442695
        %v1099 = vpow.pop %v1098
        %v1100 = vmul.f32 %v1091, 1.442695
        %v1101 = vpow.pop %v1100
        %v1102 = vmul.f32 %v1092, 1.442695
        %v1103 = vpow.pop %v1102
        %v1104 = vmul.f32 %v1093, 1.442695
        %v1105 = vpow.pop %v1104
        %v1106 = vadd.f32 %v1048, %v1095
        %v1107 = vadd.f32 %v1049, %v1097
        %v1108 = vadd.f32 %v1050, %v1099
        %v1109 = vadd.f32 %v1051, %v1101
        %v1110 = vadd.f32 %v1052, %v1103
        %v1111 = vadd.f32 %v1053, %v1105
        %vm1112 = vcmask 1043456
        %v1113 = vrot.slane %v860, 4
        %v1114 = vrot.slane %v861, 4
        %v1115 = vsel %vm1112, %v1113, %v1114
        %v1116 = vrot.slane %v862, 4
        %v1117 = vsel %vm1112, %v1114, %v1116
        %v1118 = vrot.slane %v863, 4
        %v1119 = vrot.slane %v864, 4
        %v1120 = vsel %vm1112, %v1118, %v1119
        %v1121 = vrot.slane %v865, 4
        %v1122 = vsel %vm1112, %v1119, %v1121
        %v1123 = vrot.slane %v866, 4
        %v1124 = vrot.slane %v867, 4
        %v1125 = vsel %vm1112, %v1123, %v1124
        %v1126 = vrot.slane %v868, 4
        %v1127 = vsel %vm1112, %v1124, %v1126
        %v1134 = vmul.f32 %v1095, %v1115
        %v1135 = vmul.f32 %v1097, %v1117
        %v1136 = vmul.f32 %v1099, %v1120
        %v1137 = vmul.f32 %v1101, %v1122
        %v1138 = vmul.f32 %v1103, %v1125
        %v1139 = vmul.f32 %v1105, %v1127
        %v1140 = vadd.f32 %v1082, %v1134
        %v1141 = vadd.f32 %v1083, %v1135
        %v1142 = vadd.f32 %v1084, %v1136
        %v1143 = vadd.f32 %v1085, %v1137
        %v1144 = vadd.f32 %v1086, %v1138
        %v1145 = vadd.f32 %v1087, %v1139
        %v1146 = vsub.f32 %v679, %v854
        %v1147 = vsub.f32 %v680, %v855
        %v1148 = vsub.f32 %v681, %v856
        %v1149 = vsub.f32 %v682, %v857
        %v1150 = vsub.f32 %v683, %v858
        %v1151 = vsub.f32 %v684, %v859
        %v1152 = vmul.f32 %v1146, 1.442695
        %v1153 = vpow.pop %v1152
        %v1154 = vmul.f32 %v1147, 1.442695
        %v1155 = vpow.pop %v1154
        %v1156 = vmul.f32 %v1148, 1.442695
        %v1157 = vpow.pop %v1156
        %v1158 = vmul.f32 %v1149, 1.442695
        %v1159 = vpow.pop %v1158
        %v1160 = vmul.f32 %v1150, 1.442695
        %v1161 = vpow.pop %v1160
        %v1162 = vmul.f32 %v1151, 1.442695
        %v1163 = vpow.pop %v1162
        %v1164 = vadd.f32 %v1106, %v1153
        %v1165 = vadd.f32 %v1107, %v1155
        %v1166 = vadd.f32 %v1108, %v1157
        %v1167 = vadd.f32 %v1109, %v1159
        %v1168 = vadd.f32 %v1110, %v1161
        %v1169 = vadd.f32 %v1111, %v1163
        %vm1170 = vcmask 1042432
        %v1171 = vrot.slane %v860, 5
        %v1172 = vrot.slane %v861, 5
        %v1173 = vsel %vm1170, %v1171, %v1172
        %v1174 = vrot.slane %v862, 5
        %v1175 = vsel %vm1170, %v1172, %v1174
        %v1176 = vrot.slane %v863, 5
        %v1177 = vrot.slane %v864, 5
        %v1178 = vsel %vm1170, %v1176, %v1177
        %v1179 = vrot.slane %v865, 5
        %v1180 = vsel %vm1170, %v1177, %v1179
        %v1181 = vrot.slane %v866, 5
        %v1182 = vrot.slane %v867, 5
        %v1183 = vsel %vm1170, %v1181, %v1182
        %v1184 = vrot.slane %v868, 5
        %v1185 = vsel %vm1170, %v1182, %v1184
        %v1192 = vmul.f32 %v1153, %v1173
        %v1193 = vmul.f32 %v1155, %v1175
        %v1194 = vmul.f32 %v1157, %v1178
        %v1195 = vmul.f32 %v1159, %v1180
        %v1196 = vmul.f32 %v1161, %v1183
        %v1197 = vmul.f32 %v1163, %v1185
        %v1198 = vadd.f32 %v1140, %v1192
        %v1199 = vadd.f32 %v1141, %v1193
        %v1200 = vadd.f32 %v1142, %v1194
        %v1201 = vadd.f32 %v1143, %v1195
        %v1202 = vadd.f32 %v1144, %v1196
        %v1203 = vadd.f32 %v1145, %v1197
        %v1204 = vsub.f32 %v770, %v854
        %v1205 = vsub.f32 %v771, %v855
        %v1206 = vsub.f32 %v772, %v856
        %v1207 = vsub.f32 %v773, %v857
        %v1208 = vsub.f32 %v774, %v858
        %v1209 = vsub.f32 %v775, %v859
        %v1210 = vmul.f32 %v1204, 1.442695
        %v1211 = vpow.pop %v1210
        %v1212 = vmul.f32 %v1205, 1.442695
        %v1213 = vpow.pop %v1212
        %v1214 = vmul.f32 %v1206, 1.442695
        %v1215 = vpow.pop %v1214
        %v1216 = vmul.f32 %v1207, 1.442695
        %v1217 = vpow.pop %v1216
        %v1218 = vmul.f32 %v1208, 1.442695
        %v1219 = vpow.pop %v1218
        %v1220 = vmul.f32 %v1209, 1.442695
        %v1221 = vpow.pop %v1220
        %v1222 = vadd.f32 %v1164, %v1211
        %v1223 = vadd.f32 %v1165, %v1213
        %v1224 = vadd.f32 %v1166, %v1215
        %v1225 = vadd.f32 %v1167, %v1217
        %v1226 = vadd.f32 %v1168, %v1219
        %v1227 = vadd.f32 %v1169, %v1221
        %vm1228 = vcmask 1041408
        %v1229 = vrot.slane %v860, 6
        %v1230 = vrot.slane %v861, 6
        %v1231 = vsel %vm1228, %v1229, %v1230
        %v1232 = vrot.slane %v862, 6
        %v1233 = vsel %vm1228, %v1230, %v1232
        %v1234 = vrot.slane %v863, 6
        %v1235 = vrot.slane %v864, 6
        %v1236 = vsel %vm1228, %v1234, %v1235
        %v1237 = vrot.slane %v865, 6
        %v1238 = vsel %vm1228, %v1235, %v1237
        %v1239 = vrot.slane %v866, 6
        %v1240 = vrot.slane %v867, 6
        %v1241 = vsel %vm1228, %v1239, %v1240
        %v1242 = vrot.slane %v868, 6
        %v1243 = vsel %vm1228, %v1240, %v1242
        %v1250 = vmul.f32 %v1211, %v1231
        %v1251 = vmul.f32 %v1213, %v1233
        %v1252 = vmul.f32 %v1215, %v1236
        %v1253 = vmul.f32 %v1217, %v1238
        %v1254 = vmul.f32 %v1219, %v1241
        %v1255 = vmul.f32 %v1221, %v1243
        %v1256 = vadd.f32 %v1198, %v1250
        %v1257 = vadd.f32 %v1199, %v1251
        %v1258 = vadd.f32 %v1200, %v1252
        %v1259 = vadd.f32 %v1201, %v1253
        %v1260 = vadd.f32 %v1202, %v1254
        %v1261 = vadd.f32 %v1203, %v1255
        %v1262 = vsub.f32 %v237, %v854
        %v1263 = vsub.f32 %v238, %v855
        %v1264 = vsub.f32 %v239, %v856
        %v1265 = vsub.f32 %v240, %v857
        %v1266 = vsub.f32 %v241, %v858
        %v1267 = vsub.f32 %v242, %v859
        %v1268 = vmul.f32 %v1262, 1.442695
        %v1269 = vpow.pop %v1268
        %v1270 = vmul.f32 %v1263, 1.442695
        %v1271 = vpow.pop %v1270
        %v1272 = vmul.f32 %v1264, 1.442695
        %v1273 = vpow.pop %v1272
        %v1274 = vmul.f32 %v1265, 1.442695
        %v1275 = vpow.pop %v1274
        %v1276 = vmul.f32 %v1266, 1.442695
        %v1277 = vpow.pop %v1276
        %v1278 = vmul.f32 %v1267, 1.442695
        %v1279 = vpow.pop %v1278
        %v1280 = vadd.f32 %v1222, %v1269
        %v1281 = vadd.f32 %v1223, %v1271
        %v1282 = vadd.f32 %v1224, %v1273
        %v1283 = vadd.f32 %v1225, %v1275
        %v1284 = vadd.f32 %v1226, %v1277
        %v1285 = vadd.f32 %v1227, %v1279
        %1286 = vrot.lane.b32.xlu0 %v860, 127
        %v1287 = vpop.permute.xlu0 %1286
        %1288 = vrot.lane.b32.xlu0 %v861, 127
        %v1289 = vpop.permute.xlu0 %1288
        %1290 = vrot.lane.b32.xlu0 %v863, 127
        %v1291 = vpop.permute.xlu0 %1290
        %1292 = vrot.lane.b32.xlu0 %v864, 127
        %v1293 = vpop.permute.xlu0 %1292
        %1294 = vrot.lane.b32.xlu0 %v866, 127
        %v1295 = vpop.permute.xlu0 %1294
        %1296 = vrot.lane.b32.xlu0 %v867, 127
        %v1297 = vpop.permute.xlu0 %1296
        %v1304 = vmul.f32 %v1269, %v1287
        %v1305 = vmul.f32 %v1271, %v1289
        %v1306 = vmul.f32 %v1273, %v1291
        %v1307 = vmul.f32 %v1275, %v1293
        %v1308 = vmul.f32 %v1277, %v1295
        %v1309 = vmul.f32 %v1279, %v1297
        %v1310 = vadd.f32 %v1256, %v1304
        %v1311 = vadd.f32 %v1257, %v1305
        %v1312 = vadd.f32 %v1258, %v1306
        %v1313 = vadd.f32 %v1259, %v1307
        %v1314 = vadd.f32 %v1260, %v1308
        %v1315 = vadd.f32 %v1261, %v1309
        %v1316 = vsub.f32 %v328, %v854
        %v1317 = vsub.f32 %v329, %v855
        %v1318 = vsub.f32 %v330, %v856
        %v1319 = vsub.f32 %v331, %v857
        %v1320 = vsub.f32 %v332, %v858
        %v1321 = vsub.f32 %v333, %v859
        %v1322 = vmul.f32 %v1316, 1.442695
        %v1323 = vpow.pop %v1322
        %v1324 = vmul.f32 %v1317, 1.442695
        %v1325 = vpow.pop %v1324
        %v1326 = vmul.f32 %v1318, 1.442695
        %v1327 = vpow.pop %v1326
        %v1328 = vmul.f32 %v1319, 1.442695
        %v1329 = vpow.pop %v1328
        %v1330 = vmul.f32 %v1320, 1.442695
        %v1331 = vpow.pop %v1330
        %v1332 = vmul.f32 %v1321, 1.442695
        %v1333 = vpow.pop %v1332
        %v1334 = vadd.f32 %v1280, %v1323
        %v1335 = vadd.f32 %v1281, %v1325
        %v1336 = vadd.f32 %v1282, %v1327
        %v1337 = vadd.f32 %v1283, %v1329
        %v1338 = vadd.f32 %v1284, %v1331
        %v1339 = vadd.f32 %v1285, %v1333
        %1340 = vrot.lane.b32.xlu0 %v941, 127
        %v1341 = vpop.permute.xlu0 %1340
        %1342 = vrot.lane.b32.xlu0 %v943, 127
        %v1343 = vpop.permute.xlu0 %1342
        %1344 = vrot.lane.b32.xlu0 %v946, 127
        %v1345 = vpop.permute.xlu0 %1344
        %1346 = vrot.lane.b32.xlu0 %v948, 127
        %v1347 = vpop.permute.xlu0 %1346
        %1348 = vrot.lane.b32.xlu0 %v951, 127
        %v1349 = vpop.permute.xlu0 %1348
        %1350 = vrot.lane.b32.xlu0 %v953, 127
        %v1351 = vpop.permute.xlu0 %1350
        %v1358 = vmul.f32 %v1323, %v1341
        %v1359 = vmul.f32 %v1325, %v1343
        %v1360 = vmul.f32 %v1327, %v1345
        %v1361 = vmul.f32 %v1329, %v1347
        %v1362 = vmul.f32 %v1331, %v1349
        %v1363 = vmul.f32 %v1333, %v1351
        %v1364 = vadd.f32 %v1310, %v1358
        %v1365 = vadd.f32 %v1311, %v1359
        %v1366 = vadd.f32 %v1312, %v1360
        %v1367 = vadd.f32 %v1313, %v1361
        %v1368 = vadd.f32 %v1314, %v1362
        %v1369 = vadd.f32 %v1315, %v1363
        %v1370 = vsub.f32 %v419, %v854
        %v1371 = vsub.f32 %v420, %v855
        %v1372 = vsub.f32 %v421, %v856
        %v1373 = vsub.f32 %v422, %v857
        %v1374 = vsub.f32 %v423, %v858
        %v1375 = vsub.f32 %v424, %v859
        %v1376 = vmul.f32 %v1370, 1.442695
        %v1377 = vpow.pop %v1376
        %v1378 = vmul.f32 %v1371, 1.442695
        %v1379 = vpow.pop %v1378
        %v1380 = vmul.f32 %v1372, 1.442695
        %v1381 = vpow.pop %v1380
        %v1382 = vmul.f32 %v1373, 1.442695
        %v1383 = vpow.pop %v1382
        %v1384 = vmul.f32 %v1374, 1.442695
        %v1385 = vpow.pop %v1384
        %v1386 = vmul.f32 %v1375, 1.442695
        %v1387 = vpow.pop %v1386
        %v1388 = vadd.f32 %v1334, %v1377
        %v1389 = vadd.f32 %v1335, %v1379
        %v1390 = vadd.f32 %v1336, %v1381
        %v1391 = vadd.f32 %v1337, %v1383
        %v1392 = vadd.f32 %v1338, %v1385
        %v1393 = vadd.f32 %v1339, %v1387
        %1394 = vrot.lane.b32.xlu0 %v999, 127
        %v1395 = vpop.permute.xlu0 %1394
        %1396 = vrot.lane.b32.xlu0 %v1001, 127
        %v1397 = vpop.permute.xlu0 %1396
        %1398 = vrot.lane.b32.xlu0 %v1004, 127
        %v1399 = vpop.permute.xlu0 %1398
        %1400 = vrot.lane.b32.xlu0 %v1006, 127
        %v1401 = vpop.permute.xlu0 %1400
        %1402 = vrot.lane.b32.xlu0 %v1009, 127
        %v1403 = vpop.permute.xlu0 %1402
        %1404 = vrot.lane.b32.xlu0 %v1011, 127
        %v1405 = vpop.permute.xlu0 %1404
        %v1412 = vmul.f32 %v1377, %v1395
        %v1413 = vmul.f32 %v1379, %v1397
        %v1414 = vmul.f32 %v1381, %v1399
        %v1415 = vmul.f32 %v1383, %v1401
        %v1416 = vmul.f32 %v1385, %v1403
        %v1417 = vmul.f32 %v1387, %v1405
        %v1418 = vadd.f32 %v1364, %v1412
        %v1419 = vadd.f32 %v1365, %v1413
        %v1420 = vadd.f32 %v1366, %v1414
        %v1421 = vadd.f32 %v1367, %v1415
        %v1422 = vadd.f32 %v1368, %v1416
        %v1423 = vadd.f32 %v1369, %v1417
        %v1424 = vsub.f32 %v510, %v854
        %v1425 = vsub.f32 %v511, %v855
        %v1426 = vsub.f32 %v512, %v856
        %v1427 = vsub.f32 %v513, %v857
        %v1428 = vsub.f32 %v514, %v858
        %v1429 = vsub.f32 %v515, %v859
        %v1430 = vmul.f32 %v1424, 1.442695
        %v1431 = vpow.pop %v1430
        %v1432 = vmul.f32 %v1425, 1.442695
        %v1433 = vpow.pop %v1432
        %v1434 = vmul.f32 %v1426, 1.442695
        %v1435 = vpow.pop %v1434
        %v1436 = vmul.f32 %v1427, 1.442695
        %v1437 = vpow.pop %v1436
        %v1438 = vmul.f32 %v1428, 1.442695
        %v1439 = vpow.pop %v1438
        %v1440 = vmul.f32 %v1429, 1.442695
        %v1441 = vpow.pop %v1440
        %v1442 = vadd.f32 %v1388, %v1431
        %v1443 = vadd.f32 %v1389, %v1433
        %v1444 = vadd.f32 %v1390, %v1435
        %v1445 = vadd.f32 %v1391, %v1437
        %v1446 = vadd.f32 %v1392, %v1439
        %v1447 = vadd.f32 %v1393, %v1441
        %1448 = vrot.lane.b32.xlu0 %v1057, 127
        %v1449 = vpop.permute.xlu0 %1448
        %1450 = vrot.lane.b32.xlu0 %v1059, 127
        %v1451 = vpop.permute.xlu0 %1450
        %1452 = vrot.lane.b32.xlu0 %v1062, 127
        %v1453 = vpop.permute.xlu0 %1452
        %1454 = vrot.lane.b32.xlu0 %v1064, 127
        %v1455 = vpop.permute.xlu0 %1454
        %1456 = vrot.lane.b32.xlu0 %v1067, 127
        %v1457 = vpop.permute.xlu0 %1456
        %1458 = vrot.lane.b32.xlu0 %v1069, 127
        %v1459 = vpop.permute.xlu0 %1458
        %v1466 = vmul.f32 %v1431, %v1449
        %v1467 = vmul.f32 %v1433, %v1451
        %v1468 = vmul.f32 %v1435, %v1453
        %v1469 = vmul.f32 %v1437, %v1455
        %v1470 = vmul.f32 %v1439, %v1457
        %v1471 = vmul.f32 %v1441, %v1459
        %v1472 = vadd.f32 %v1418, %v1466
        %v1473 = vadd.f32 %v1419, %v1467
        %v1474 = vadd.f32 %v1420, %v1468
        %v1475 = vadd.f32 %v1421, %v1469
        %v1476 = vadd.f32 %v1422, %v1470
        %v1477 = vadd.f32 %v1423, %v1471
        %v1478 = vsub.f32 %v601, %v854
        %v1479 = vsub.f32 %v602, %v855
        %v1480 = vsub.f32 %v603, %v856
        %v1481 = vsub.f32 %v604, %v857
        %v1482 = vsub.f32 %v605, %v858
        %v1483 = vsub.f32 %v606, %v859
        %v1484 = vmul.f32 %v1478, 1.442695
        %v1485 = vpow.pop %v1484
        %v1486 = vmul.f32 %v1479, 1.442695
        %v1487 = vpow.pop %v1486
        %v1488 = vmul.f32 %v1480, 1.442695
        %v1489 = vpow.pop %v1488
        %v1490 = vmul.f32 %v1481, 1.442695
        %v1491 = vpow.pop %v1490
        %v1492 = vmul.f32 %v1482, 1.442695
        %v1493 = vpow.pop %v1492
        %v1494 = vmul.f32 %v1483, 1.442695
        %v1495 = vpow.pop %v1494
        %v1496 = vadd.f32 %v1442, %v1485
        %v1497 = vadd.f32 %v1443, %v1487
        %v1498 = vadd.f32 %v1444, %v1489
        %v1499 = vadd.f32 %v1445, %v1491
        %v1500 = vadd.f32 %v1446, %v1493
        %v1501 = vadd.f32 %v1447, %v1495
        %1502 = vrot.lane.b32.xlu0 %v1115, 127
        %v1503 = vpop.permute.xlu0 %1502
        %1504 = vrot.lane.b32.xlu0 %v1117, 127
        %v1505 = vpop.permute.xlu0 %1504
        %1506 = vrot.lane.b32.xlu0 %v1120, 127
        %v1507 = vpop.permute.xlu0 %1506
        %1508 = vrot.lane.b32.xlu0 %v1122, 127
        %v1509 = vpop.permute.xlu0 %1508
        %1510 = vrot.lane.b32.xlu0 %v1125, 127
        %v1511 = vpop.permute.xlu0 %1510
        %1512 = vrot.lane.b32.xlu0 %v1127, 127
        %v1513 = vpop.permute.xlu0 %1512
        %v1520 = vmul.f32 %v1485, %v1503
        %v1521 = vmul.f32 %v1487, %v1505
        %v1522 = vmul.f32 %v1489, %v1507
        %v1523 = vmul.f32 %v1491, %v1509
        %v1524 = vmul.f32 %v1493, %v1511
        %v1525 = vmul.f32 %v1495, %v1513
        %v1526 = vadd.f32 %v1472, %v1520
        %v1527 = vadd.f32 %v1473, %v1521
        %v1528 = vadd.f32 %v1474, %v1522
        %v1529 = vadd.f32 %v1475, %v1523
        %v1530 = vadd.f32 %v1476, %v1524
        %v1531 = vadd.f32 %v1477, %v1525
        %v1532 = vsub.f32 %v692, %v854
        %v1533 = vsub.f32 %v693, %v855
        %v1534 = vsub.f32 %v694, %v856
        %v1535 = vsub.f32 %v695, %v857
        %v1536 = vsub.f32 %v696, %v858
        %v1537 = vsub.f32 %v697, %v859
        %v1538 = vmul.f32 %v1532, 1.442695
        %v1539 = vpow.pop %v1538
        %v1540 = vmul.f32 %v1533, 1.442695
        %v1541 = vpow.pop %v1540
        %v1542 = vmul.f32 %v1534, 1.442695
        %v1543 = vpow.pop %v1542
        %v1544 = vmul.f32 %v1535, 1.442695
        %v1545 = vpow.pop %v1544
        %v1546 = vmul.f32 %v1536, 1.442695
        %v1547 = vpow.pop %v1546
        %v1548 = vmul.f32 %v1537, 1.442695
        %v1549 = vpow.pop %v1548
        %v1550 = vadd.f32 %v1496, %v1539
        %v1551 = vadd.f32 %v1497, %v1541
        %v1552 = vadd.f32 %v1498, %v1543
        %v1553 = vadd.f32 %v1499, %v1545
        %v1554 = vadd.f32 %v1500, %v1547
        %v1555 = vadd.f32 %v1501, %v1549
        %1556 = vrot.lane.b32.xlu0 %v1173, 127
        %v1557 = vpop.permute.xlu0 %1556
        %1558 = vrot.lane.b32.xlu0 %v1175, 127
        %v1559 = vpop.permute.xlu0 %1558
        %1560 = vrot.lane.b32.xlu0 %v1178, 127
        %v1561 = vpop.permute.xlu0 %1560
        %1562 = vrot.lane.b32.xlu0 %v1180, 127
        %v1563 = vpop.permute.xlu0 %1562
        %1564 = vrot.lane.b32.xlu0 %v1183, 127
        %v1565 = vpop.permute.xlu0 %1564
        %1566 = vrot.lane.b32.xlu0 %v1185, 127
        %v1567 = vpop.permute.xlu0 %1566
        %v1574 = vmul.f32 %v1539, %v1557
        %v1575 = vmul.f32 %v1541, %v1559
        %v1576 = vmul.f32 %v1543, %v1561
        %v1577 = vmul.f32 %v1545, %v1563
        %v1578 = vmul.f32 %v1547, %v1565
        %v1579 = vmul.f32 %v1549, %v1567
        %v1580 = vadd.f32 %v1526, %v1574
        %v1581 = vadd.f32 %v1527, %v1575
        %v1582 = vadd.f32 %v1528, %v1576
        %v1583 = vadd.f32 %v1529, %v1577
        %v1584 = vadd.f32 %v1530, %v1578
        %v1585 = vadd.f32 %v1531, %v1579
        %v1586 = vsub.f32 %v783, %v854
        %v1587 = vsub.f32 %v784, %v855
        %v1588 = vsub.f32 %v785, %v856
        %v1589 = vsub.f32 %v786, %v857
        %v1590 = vsub.f32 %v787, %v858
        %v1591 = vsub.f32 %v788, %v859
        %v1592 = vmul.f32 %v1586, 1.442695
        %v1593 = vpow.pop %v1592
        %v1594 = vmul.f32 %v1587, 1.442695
        %v1595 = vpow.pop %v1594
        %v1596 = vmul.f32 %v1588, 1.442695
        %v1597 = vpow.pop %v1596
        %v1598 = vmul.f32 %v1589, 1.442695
        %v1599 = vpow.pop %v1598
        %v1600 = vmul.f32 %v1590, 1.442695
        %v1601 = vpow.pop %v1600
        %v1602 = vmul.f32 %v1591, 1.442695
        %v1603 = vpow.pop %v1602
        %v1604 = vadd.f32 %v1550, %v1593
        %v1605 = vadd.f32 %v1551, %v1595
        %v1606 = vadd.f32 %v1552, %v1597
        %v1607 = vadd.f32 %v1553, %v1599
        %v1608 = vadd.f32 %v1554, %v1601
        %v1609 = vadd.f32 %v1555, %v1603
        %1610 = vrot.lane.b32.xlu0 %v1231, 127
        %v1611 = vpop.permute.xlu0 %1610
        %1612 = vrot.lane.b32.xlu0 %v1233, 127
        %v1613 = vpop.permute.xlu0 %1612
        %1614 = vrot.lane.b32.xlu0 %v1236, 127
        %v1615 = vpop.permute.xlu0 %1614
        %1616 = vrot.lane.b32.xlu0 %v1238, 127
        %v1617 = vpop.permute.xlu0 %1616
        %1618 = vrot.lane.b32.xlu0 %v1241, 127
        %v1619 = vpop.permute.xlu0 %1618
        %1620 = vrot.lane.b32.xlu0 %v1243, 127
        %v1621 = vpop.permute.xlu0 %1620
        %v1628 = vmul.f32 %v1593, %v1611
        %v1629 = vmul.f32 %v1595, %v1613
        %v1630 = vmul.f32 %v1597, %v1615
        %v1631 = vmul.f32 %v1599, %v1617
        %v1632 = vmul.f32 %v1601, %v1619
        %v1633 = vmul.f32 %v1603, %v1621
        %v1634 = vadd.f32 %v1580, %v1628
        %v1635 = vadd.f32 %v1581, %v1629
        %v1636 = vadd.f32 %v1582, %v1630
        %v1637 = vadd.f32 %v1583, %v1631
        %v1638 = vadd.f32 %v1584, %v1632
        %v1639 = vadd.f32 %v1585, %v1633
        %v1640 = vsub.f32 %v250, %v854
        %v1641 = vsub.f32 %v251, %v855
        %v1642 = vsub.f32 %v252, %v856
        %v1643 = vsub.f32 %v253, %v857
        %v1644 = vsub.f32 %v254, %v858
        %v1645 = vsub.f32 %v255, %v859
        %v1646 = vmul.f32 %v1640, 1.442695
        %v1647 = vpow.pop %v1646
        %v1648 = vmul.f32 %v1641, 1.442695
        %v1649 = vpow.pop %v1648
        %v1650 = vmul.f32 %v1642, 1.442695
        %v1651 = vpow.pop %v1650
        %v1652 = vmul.f32 %v1643, 1.442695
        %v1653 = vpow.pop %v1652
        %v1654 = vmul.f32 %v1644, 1.442695
        %v1655 = vpow.pop %v1654
        %v1656 = vmul.f32 %v1645, 1.442695
        %v1657 = vpow.pop %v1656
        %v1658 = vadd.f32 %v1604, %v1647
        %v1659 = vadd.f32 %v1605, %v1649
        %v1660 = vadd.f32 %v1606, %v1651
        %v1661 = vadd.f32 %v1607, %v1653
        %v1662 = vadd.f32 %v1608, %v1655
        %v1663 = vadd.f32 %v1609, %v1657
        %1664 = vrot.lane.b32.xlu0 %v860, 126
        %v1665 = vpop.permute.xlu0 %1664
        %1666 = vrot.lane.b32.xlu0 %v861, 126
        %v1667 = vpop.permute.xlu0 %1666
        %1668 = vrot.lane.b32.xlu0 %v863, 126
        %v1669 = vpop.permute.xlu0 %1668
        %1670 = vrot.lane.b32.xlu0 %v864, 126
        %v1671 = vpop.permute.xlu0 %1670
        %1672 = vrot.lane.b32.xlu0 %v866, 126
        %v1673 = vpop.permute.xlu0 %1672
        %1674 = vrot.lane.b32.xlu0 %v867, 126
        %v1675 = vpop.permute.xlu0 %1674
        %v1682 = vmul.f32 %v1647, %v1665
        %v1683 = vmul.f32 %v1649, %v1667
        %v1684 = vmul.f32 %v1651, %v1669
        %v1685 = vmul.f32 %v1653, %v1671
        %v1686 = vmul.f32 %v1655, %v1673
        %v1687 = vmul.f32 %v1657, %v1675
        %v1688 = vadd.f32 %v1634, %v1682
        %v1689 = vadd.f32 %v1635, %v1683
        %v1690 = vadd.f32 %v1636, %v1684
        %v1691 = vadd.f32 %v1637, %v1685
        %v1692 = vadd.f32 %v1638, %v1686
        %v1693 = vadd.f32 %v1639, %v1687
        %v1694 = vsub.f32 %v341, %v854
        %v1695 = vsub.f32 %v342, %v855
        %v1696 = vsub.f32 %v343, %v856
        %v1697 = vsub.f32 %v344, %v857
        %v1698 = vsub.f32 %v345, %v858
        %v1699 = vsub.f32 %v346, %v859
        %v1700 = vmul.f32 %v1694, 1.442695
        %v1701 = vpow.pop %v1700
        %v1702 = vmul.f32 %v1695, 1.442695
        %v1703 = vpow.pop %v1702
        %v1704 = vmul.f32 %v1696, 1.442695
        %v1705 = vpow.pop %v1704
        %v1706 = vmul.f32 %v1697, 1.442695
        %v1707 = vpow.pop %v1706
        %v1708 = vmul.f32 %v1698, 1.442695
        %v1709 = vpow.pop %v1708
        %v1710 = vmul.f32 %v1699, 1.442695
        %v1711 = vpow.pop %v1710
        %v1712 = vadd.f32 %v1658, %v1701
        %v1713 = vadd.f32 %v1659, %v1703
        %v1714 = vadd.f32 %v1660, %v1705
        %v1715 = vadd.f32 %v1661, %v1707
        %v1716 = vadd.f32 %v1662, %v1709
        %v1717 = vadd.f32 %v1663, %v1711
        %1718 = vrot.lane.b32.xlu0 %v941, 126
        %v1719 = vpop.permute.xlu0 %1718
        %1720 = vrot.lane.b32.xlu0 %v943, 126
        %v1721 = vpop.permute.xlu0 %1720
        %1722 = vrot.lane.b32.xlu0 %v946, 126
        %v1723 = vpop.permute.xlu0 %1722
        %1724 = vrot.lane.b32.xlu0 %v948, 126
        %v1725 = vpop.permute.xlu0 %1724
        %1726 = vrot.lane.b32.xlu0 %v951, 126
        %v1727 = vpop.permute.xlu0 %1726
        %1728 = vrot.lane.b32.xlu0 %v953, 126
        %v1729 = vpop.permute.xlu0 %1728
        %v1736 = vmul.f32 %v1701, %v1719
        %v1737 = vmul.f32 %v1703, %v1721
        %v1738 = vmul.f32 %v1705, %v1723
        %v1739 = vmul.f32 %v1707, %v1725
        %v1740 = vmul.f32 %v1709, %v1727
        %v1741 = vmul.f32 %v1711, %v1729
        %v1742 = vadd.f32 %v1688, %v1736
        %v1743 = vadd.f32 %v1689, %v1737
        %v1744 = vadd.f32 %v1690, %v1738
        %v1745 = vadd.f32 %v1691, %v1739
        %v1746 = vadd.f32 %v1692, %v1740
        %v1747 = vadd.f32 %v1693, %v1741
        %v1748 = vsub.f32 %v432, %v854
        %v1749 = vsub.f32 %v433, %v855
        %v1750 = vsub.f32 %v434, %v856
        %v1751 = vsub.f32 %v435, %v857
        %v1752 = vsub.f32 %v436, %v858
        %v1753 = vsub.f32 %v437, %v859
        %v1754 = vmul.f32 %v1748, 1.442695
        %v1755 = vpow.pop %v1754
        %v1756 = vmul.f32 %v1749, 1.442695
        %v1757 = vpow.pop %v1756
        %v1758 = vmul.f32 %v1750, 1.442695
        %v1759 = vpow.pop %v1758
        %v1760 = vmul.f32 %v1751, 1.442695
        %v1761 = vpow.pop %v1760
        %v1762 = vmul.f32 %v1752, 1.442695
        %v1763 = vpow.pop %v1762
        %v1764 = vmul.f32 %v1753, 1.442695
        %v1765 = vpow.pop %v1764
        %v1766 = vadd.f32 %v1712, %v1755
        %v1767 = vadd.f32 %v1713, %v1757
        %v1768 = vadd.f32 %v1714, %v1759
        %v1769 = vadd.f32 %v1715, %v1761
        %v1770 = vadd.f32 %v1716, %v1763
        %v1771 = vadd.f32 %v1717, %v1765
        %1772 = vrot.lane.b32.xlu0 %v999, 126
        %v1773 = vpop.permute.xlu0 %1772
        %1774 = vrot.lane.b32.xlu0 %v1001, 126
        %v1775 = vpop.permute.xlu0 %1774
        %1776 = vrot.lane.b32.xlu0 %v1004, 126
        %v1777 = vpop.permute.xlu0 %1776
        %1778 = vrot.lane.b32.xlu0 %v1006, 126
        %v1779 = vpop.permute.xlu0 %1778
        %1780 = vrot.lane.b32.xlu0 %v1009, 126
        %v1781 = vpop.permute.xlu0 %1780
        %1782 = vrot.lane.b32.xlu0 %v1011, 126
        %v1783 = vpop.permute.xlu0 %1782
        %v1790 = vmul.f32 %v1755, %v1773
        %v1791 = vmul.f32 %v1757, %v1775
        %v1792 = vmul.f32 %v1759, %v1777
        %v1793 = vmul.f32 %v1761, %v1779
        %v1794 = vmul.f32 %v1763, %v1781
        %v1795 = vmul.f32 %v1765, %v1783
        %v1796 = vadd.f32 %v1742, %v1790
        %v1797 = vadd.f32 %v1743, %v1791
        %v1798 = vadd.f32 %v1744, %v1792
        %v1799 = vadd.f32 %v1745, %v1793
        %v1800 = vadd.f32 %v1746, %v1794
        %v1801 = vadd.f32 %v1747, %v1795
        %v1802 = vsub.f32 %v523, %v854
        %v1803 = vsub.f32 %v524, %v855
        %v1804 = vsub.f32 %v525, %v856
        %v1805 = vsub.f32 %v526, %v857
        %v1806 = vsub.f32 %v527, %v858
        %v1807 = vsub.f32 %v528, %v859
        %v1808 = vmul.f32 %v1802, 1.442695
        %v1809 = vpow.pop %v1808
        %v1810 = vmul.f32 %v1803, 1.442695
        %v1811 = vpow.pop %v1810
        %v1812 = vmul.f32 %v1804, 1.442695
        %v1813 = vpow.pop %v1812
        %v1814 = vmul.f32 %v1805, 1.442695
        %v1815 = vpow.pop %v1814
        %v1816 = vmul.f32 %v1806, 1.442695
        %v1817 = vpow.pop %v1816
        %v1818 = vmul.f32 %v1807, 1.442695
        %v1819 = vpow.pop %v1818
        %v1820 = vadd.f32 %v1766, %v1809
        %v1821 = vadd.f32 %v1767, %v1811
        %v1822 = vadd.f32 %v1768, %v1813
        %v1823 = vadd.f32 %v1769, %v1815
        %v1824 = vadd.f32 %v1770, %v1817
        %v1825 = vadd.f32 %v1771, %v1819
        %1826 = vrot.lane.b32.xlu0 %v1057, 126
        %v1827 = vpop.permute.xlu0 %1826
        %1828 = vrot.lane.b32.xlu0 %v1059, 126
        %v1829 = vpop.permute.xlu0 %1828
        %1830 = vrot.lane.b32.xlu0 %v1062, 126
        %v1831 = vpop.permute.xlu0 %1830
        %1832 = vrot.lane.b32.xlu0 %v1064, 126
        %v1833 = vpop.permute.xlu0 %1832
        %1834 = vrot.lane.b32.xlu0 %v1067, 126
        %v1835 = vpop.permute.xlu0 %1834
        %1836 = vrot.lane.b32.xlu0 %v1069, 126
        %v1837 = vpop.permute.xlu0 %1836
        %v1844 = vmul.f32 %v1809, %v1827
        %v1845 = vmul.f32 %v1811, %v1829
        %v1846 = vmul.f32 %v1813, %v1831
        %v1847 = vmul.f32 %v1815, %v1833
        %v1848 = vmul.f32 %v1817, %v1835
        %v1849 = vmul.f32 %v1819, %v1837
        %v1850 = vadd.f32 %v1796, %v1844
        %v1851 = vadd.f32 %v1797, %v1845
        %v1852 = vadd.f32 %v1798, %v1846
        %v1853 = vadd.f32 %v1799, %v1847
        %v1854 = vadd.f32 %v1800, %v1848
        %v1855 = vadd.f32 %v1801, %v1849
        %v1856 = vsub.f32 %v614, %v854
        %v1857 = vsub.f32 %v615, %v855
        %v1858 = vsub.f32 %v616, %v856
        %v1859 = vsub.f32 %v617, %v857
        %v1860 = vsub.f32 %v618, %v858
        %v1861 = vsub.f32 %v619, %v859
        %v1862 = vmul.f32 %v1856, 1.442695
        %v1863 = vpow.pop %v1862
        %v1864 = vmul.f32 %v1857, 1.442695
        %v1865 = vpow.pop %v1864
        %v1866 = vmul.f32 %v1858, 1.442695
        %v1867 = vpow.pop %v1866
        %v1868 = vmul.f32 %v1859, 1.442695
        %v1869 = vpow.pop %v1868
        %v1870 = vmul.f32 %v1860, 1.442695
        %v1871 = vpow.pop %v1870
        %v1872 = vmul.f32 %v1861, 1.442695
        %v1873 = vpow.pop %v1872
        %v1874 = vadd.f32 %v1820, %v1863
        %v1875 = vadd.f32 %v1821, %v1865
        %v1876 = vadd.f32 %v1822, %v1867
        %v1877 = vadd.f32 %v1823, %v1869
        %v1878 = vadd.f32 %v1824, %v1871
        %v1879 = vadd.f32 %v1825, %v1873
        %1880 = vrot.lane.b32.xlu0 %v1115, 126
        %v1881 = vpop.permute.xlu0 %1880
        %1882 = vrot.lane.b32.xlu0 %v1117, 126
        %v1883 = vpop.permute.xlu0 %1882
        %1884 = vrot.lane.b32.xlu0 %v1120, 126
        %v1885 = vpop.permute.xlu0 %1884
        %1886 = vrot.lane.b32.xlu0 %v1122, 126
        %v1887 = vpop.permute.xlu0 %1886
        %1888 = vrot.lane.b32.xlu0 %v1125, 126
        %v1889 = vpop.permute.xlu0 %1888
        %1890 = vrot.lane.b32.xlu0 %v1127, 126
        %v1891 = vpop.permute.xlu0 %1890
        %v1898 = vmul.f32 %v1863, %v1881
        %v1899 = vmul.f32 %v1865, %v1883
        %v1900 = vmul.f32 %v1867, %v1885
        %v1901 = vmul.f32 %v1869, %v1887
        %v1902 = vmul.f32 %v1871, %v1889
        %v1903 = vmul.f32 %v1873, %v1891
        %v1904 = vadd.f32 %v1850, %v1898
        %v1905 = vadd.f32 %v1851, %v1899
        %v1906 = vadd.f32 %v1852, %v1900
        %v1907 = vadd.f32 %v1853, %v1901
        %v1908 = vadd.f32 %v1854, %v1902
        %v1909 = vadd.f32 %v1855, %v1903
        %v1910 = vsub.f32 %v705, %v854
        %v1911 = vsub.f32 %v706, %v855
        %v1912 = vsub.f32 %v707, %v856
        %v1913 = vsub.f32 %v708, %v857
        %v1914 = vsub.f32 %v709, %v858
        %v1915 = vsub.f32 %v710, %v859
        %v1916 = vmul.f32 %v1910, 1.442695
        %v1917 = vpow.pop %v1916
        %v1918 = vmul.f32 %v1911, 1.442695
        %v1919 = vpow.pop %v1918
        %v1920 = vmul.f32 %v1912, 1.442695
        %v1921 = vpow.pop %v1920
        %v1922 = vmul.f32 %v1913, 1.442695
        %v1923 = vpow.pop %v1922
        %v1924 = vmul.f32 %v1914, 1.442695
        %v1925 = vpow.pop %v1924
        %v1926 = vmul.f32 %v1915, 1.442695
        %v1927 = vpow.pop %v1926
        %v1928 = vadd.f32 %v1874, %v1917
        %v1929 = vadd.f32 %v1875, %v1919
        %v1930 = vadd.f32 %v1876, %v1921
        %v1931 = vadd.f32 %v1877, %v1923
        %v1932 = vadd.f32 %v1878, %v1925
        %v1933 = vadd.f32 %v1879, %v1927
        %1934 = vrot.lane.b32.xlu0 %v1173, 126
        %v1935 = vpop.permute.xlu0 %1934
        %1936 = vrot.lane.b32.xlu0 %v1175, 126
        %v1937 = vpop.permute.xlu0 %1936
        %1938 = vrot.lane.b32.xlu0 %v1178, 126
        %v1939 = vpop.permute.xlu0 %1938
        %1940 = vrot.lane.b32.xlu0 %v1180, 126
        %v1941 = vpop.permute.xlu0 %1940
        %1942 = vrot.lane.b32.xlu0 %v1183, 126
        %v1943 = vpop.permute.xlu0 %1942
        %1944 = vrot.lane.b32.xlu0 %v1185, 126
        %v1945 = vpop.permute.xlu0 %1944
        %v1952 = vmul.f32 %v1917, %v1935
        %v1953 = vmul.f32 %v1919, %v1937
        %v1954 = vmul.f32 %v1921, %v1939
        %v1955 = vmul.f32 %v1923, %v1941
        %v1956 = vmul.f32 %v1925, %v1943
        %v1957 = vmul.f32 %v1927, %v1945
        %v1958 = vadd.f32 %v1904, %v1952
        %v1959 = vadd.f32 %v1905, %v1953
        %v1960 = vadd.f32 %v1906, %v1954
        %v1961 = vadd.f32 %v1907, %v1955
        %v1962 = vadd.f32 %v1908, %v1956
        %v1963 = vadd.f32 %v1909, %v1957
        %v1964 = vsub.f32 %v796, %v854
        %v1965 = vsub.f32 %v797, %v855
        %v1966 = vsub.f32 %v798, %v856
        %v1967 = vsub.f32 %v799, %v857
        %v1968 = vsub.f32 %v800, %v858
        %v1969 = vsub.f32 %v801, %v859
        %v1970 = vmul.f32 %v1964, 1.442695
        %v1971 = vpow.pop %v1970
        %v1972 = vmul.f32 %v1965, 1.442695
        %v1973 = vpow.pop %v1972
        %v1974 = vmul.f32 %v1966, 1.442695
        %v1975 = vpow.pop %v1974
        %v1976 = vmul.f32 %v1967, 1.442695
        %v1977 = vpow.pop %v1976
        %v1978 = vmul.f32 %v1968, 1.442695
        %v1979 = vpow.pop %v1978
        %v1980 = vmul.f32 %v1969, 1.442695
        %v1981 = vpow.pop %v1980
        %v1982 = vadd.f32 %v1928, %v1971
        %v1983 = vadd.f32 %v1929, %v1973
        %v1984 = vadd.f32 %v1930, %v1975
        %v1985 = vadd.f32 %v1931, %v1977
        %v1986 = vadd.f32 %v1932, %v1979
        %v1987 = vadd.f32 %v1933, %v1981
        %1988 = vrot.lane.b32.xlu0 %v1231, 126
        %v1989 = vpop.permute.xlu0 %1988
        %1990 = vrot.lane.b32.xlu0 %v1233, 126
        %v1991 = vpop.permute.xlu0 %1990
        %1992 = vrot.lane.b32.xlu0 %v1236, 126
        %v1993 = vpop.permute.xlu0 %1992
        %1994 = vrot.lane.b32.xlu0 %v1238, 126
        %v1995 = vpop.permute.xlu0 %1994
        %1996 = vrot.lane.b32.xlu0 %v1241, 126
        %v1997 = vpop.permute.xlu0 %1996
        %1998 = vrot.lane.b32.xlu0 %v1243, 126
        %v1999 = vpop.permute.xlu0 %1998
        %v2006 = vmul.f32 %v1971, %v1989
        %v2007 = vmul.f32 %v1973, %v1991
        %v2008 = vmul.f32 %v1975, %v1993
        %v2009 = vmul.f32 %v1977, %v1995
        %v2010 = vmul.f32 %v1979, %v1997
        %v2011 = vmul.f32 %v1981, %v1999
        %v2012 = vadd.f32 %v1958, %v2006
        %v2013 = vadd.f32 %v1959, %v2007
        %v2014 = vadd.f32 %v1960, %v2008
        %v2015 = vadd.f32 %v1961, %v2009
        %v2016 = vadd.f32 %v1962, %v2010
        %v2017 = vadd.f32 %v1963, %v2011
        %v2018 = vsub.f32 %v263, %v854
        %v2019 = vsub.f32 %v264, %v855
        %v2020 = vsub.f32 %v265, %v856
        %v2021 = vsub.f32 %v266, %v857
        %v2022 = vsub.f32 %v267, %v858
        %v2023 = vsub.f32 %v268, %v859
        %v2024 = vmul.f32 %v2018, 1.442695
        %v2025 = vpow.pop %v2024
        %v2026 = vmul.f32 %v2019, 1.442695
        %v2027 = vpow.pop %v2026
        %v2028 = vmul.f32 %v2020, 1.442695
        %v2029 = vpow.pop %v2028
        %v2030 = vmul.f32 %v2021, 1.442695
        %v2031 = vpow.pop %v2030
        %v2032 = vmul.f32 %v2022, 1.442695
        %v2033 = vpow.pop %v2032
        %v2034 = vmul.f32 %v2023, 1.442695
        %v2035 = vpow.pop %v2034
        %v2036 = vadd.f32 %v1982, %v2025
        %v2037 = vadd.f32 %v1983, %v2027
        %v2038 = vadd.f32 %v1984, %v2029
        %v2039 = vadd.f32 %v1985, %v2031
        %v2040 = vadd.f32 %v1986, %v2033
        %v2041 = vadd.f32 %v1987, %v2035
        %2042 = vrot.lane.b32.xlu0 %v860, 125
        %v2043 = vpop.permute.xlu0 %2042
        %2044 = vrot.lane.b32.xlu0 %v861, 125
        %v2045 = vpop.permute.xlu0 %2044
        %2046 = vrot.lane.b32.xlu0 %v863, 125
        %v2047 = vpop.permute.xlu0 %2046
        %2048 = vrot.lane.b32.xlu0 %v864, 125
        %v2049 = vpop.permute.xlu0 %2048
        %2050 = vrot.lane.b32.xlu0 %v866, 125
        %v2051 = vpop.permute.xlu0 %2050
        %2052 = vrot.lane.b32.xlu0 %v867, 125
        %v2053 = vpop.permute.xlu0 %2052
        %v2060 = vmul.f32 %v2025, %v2043
        %v2061 = vmul.f32 %v2027, %v2045
        %v2062 = vmul.f32 %v2029, %v2047
        %v2063 = vmul.f32 %v2031, %v2049
        %v2064 = vmul.f32 %v2033, %v2051
        %v2065 = vmul.f32 %v2035, %v2053
        %v2066 = vadd.f32 %v2012, %v2060
        %v2067 = vadd.f32 %v2013, %v2061
        %v2068 = vadd.f32 %v2014, %v2062
        %v2069 = vadd.f32 %v2015, %v2063
        %v2070 = vadd.f32 %v2016, %v2064
        %v2071 = vadd.f32 %v2017, %v2065
        %v2072 = vsub.f32 %v354, %v854
        %v2073 = vsub.f32 %v355, %v855
        %v2074 = vsub.f32 %v356, %v856
        %v2075 = vsub.f32 %v357, %v857
        %v2076 = vsub.f32 %v358, %v858
        %v2077 = vsub.f32 %v359, %v859
        %v2078 = vmul.f32 %v2072, 1.442695
        %v2079 = vpow.pop %v2078
        %v2080 = vmul.f32 %v2073, 1.442695
        %v2081 = vpow.pop %v2080
        %v2082 = vmul.f32 %v2074, 1.442695
        %v2083 = vpow.pop %v2082
        %v2084 = vmul.f32 %v2075, 1.442695
        %v2085 = vpow.pop %v2084
        %v2086 = vmul.f32 %v2076, 1.442695
        %v2087 = vpow.pop %v2086
        %v2088 = vmul.f32 %v2077, 1.442695
        %v2089 = vpow.pop %v2088
        %v2090 = vadd.f32 %v2036, %v2079
        %v2091 = vadd.f32 %v2037, %v2081
        %v2092 = vadd.f32 %v2038, %v2083
        %v2093 = vadd.f32 %v2039, %v2085
        %v2094 = vadd.f32 %v2040, %v2087
        %v2095 = vadd.f32 %v2041, %v2089
        %2096 = vrot.lane.b32.xlu0 %v941, 125
        %v2097 = vpop.permute.xlu0 %2096
        %2098 = vrot.lane.b32.xlu0 %v943, 125
        %v2099 = vpop.permute.xlu0 %2098
        %2100 = vrot.lane.b32.xlu0 %v946, 125
        %v2101 = vpop.permute.xlu0 %2100
        %2102 = vrot.lane.b32.xlu0 %v948, 125
        %v2103 = vpop.permute.xlu0 %2102
        %2104 = vrot.lane.b32.xlu0 %v951, 125
        %v2105 = vpop.permute.xlu0 %2104
        %2106 = vrot.lane.b32.xlu0 %v953, 125
        %v2107 = vpop.permute.xlu0 %2106
        %v2114 = vmul.f32 %v2079, %v2097
        %v2115 = vmul.f32 %v2081, %v2099
        %v2116 = vmul.f32 %v2083, %v2101
        %v2117 = vmul.f32 %v2085, %v2103
        %v2118 = vmul.f32 %v2087, %v2105
        %v2119 = vmul.f32 %v2089, %v2107
        %v2120 = vadd.f32 %v2066, %v2114
        %v2121 = vadd.f32 %v2067, %v2115
        %v2122 = vadd.f32 %v2068, %v2116
        %v2123 = vadd.f32 %v2069, %v2117
        %v2124 = vadd.f32 %v2070, %v2118
        %v2125 = vadd.f32 %v2071, %v2119
        %v2126 = vsub.f32 %v445, %v854
        %v2127 = vsub.f32 %v446, %v855
        %v2128 = vsub.f32 %v447, %v856
        %v2129 = vsub.f32 %v448, %v857
        %v2130 = vsub.f32 %v449, %v858
        %v2131 = vsub.f32 %v450, %v859
        %v2132 = vmul.f32 %v2126, 1.442695
        %v2133 = vpow.pop %v2132
        %v2134 = vmul.f32 %v2127, 1.442695
        %v2135 = vpow.pop %v2134
        %v2136 = vmul.f32 %v2128, 1.442695
        %v2137 = vpow.pop %v2136
        %v2138 = vmul.f32 %v2129, 1.442695
        %v2139 = vpow.pop %v2138
        %v2140 = vmul.f32 %v2130, 1.442695
        %v2141 = vpow.pop %v2140
        %v2142 = vmul.f32 %v2131, 1.442695
        %v2143 = vpow.pop %v2142
        %v2144 = vadd.f32 %v2090, %v2133
        %v2145 = vadd.f32 %v2091, %v2135
        %v2146 = vadd.f32 %v2092, %v2137
        %v2147 = vadd.f32 %v2093, %v2139
        %v2148 = vadd.f32 %v2094, %v2141
        %v2149 = vadd.f32 %v2095, %v2143
        %2150 = vrot.lane.b32.xlu0 %v999, 125
        %v2151 = vpop.permute.xlu0 %2150
        %2152 = vrot.lane.b32.xlu0 %v1001, 125
        %v2153 = vpop.permute.xlu0 %2152
        %2154 = vrot.lane.b32.xlu0 %v1004, 125
        %v2155 = vpop.permute.xlu0 %2154
        %2156 = vrot.lane.b32.xlu0 %v1006, 125
        %v2157 = vpop.permute.xlu0 %2156
        %2158 = vrot.lane.b32.xlu0 %v1009, 125
        %v2159 = vpop.permute.xlu0 %2158
        %2160 = vrot.lane.b32.xlu0 %v1011, 125
        %v2161 = vpop.permute.xlu0 %2160
        %v2168 = vmul.f32 %v2133, %v2151
        %v2169 = vmul.f32 %v2135, %v2153
        %v2170 = vmul.f32 %v2137, %v2155
        %v2171 = vmul.f32 %v2139, %v2157
        %v2172 = vmul.f32 %v2141, %v2159
        %v2173 = vmul.f32 %v2143, %v2161
        %v2174 = vadd.f32 %v2120, %v2168
        %v2175 = vadd.f32 %v2121, %v2169
        %v2176 = vadd.f32 %v2122, %v2170
        %v2177 = vadd.f32 %v2123, %v2171
        %v2178 = vadd.f32 %v2124, %v2172
        %v2179 = vadd.f32 %v2125, %v2173
        %v2180 = vsub.f32 %v536, %v854
        %v2181 = vsub.f32 %v537, %v855
        %v2182 = vsub.f32 %v538, %v856
        %v2183 = vsub.f32 %v539, %v857
        %v2184 = vsub.f32 %v540, %v858
        %v2185 = vsub.f32 %v541, %v859
        %v2186 = vmul.f32 %v2180, 1.442695
        %v2187 = vpow.pop %v2186
        %v2188 = vmul.f32 %v2181, 1.442695
        %v2189 = vpow.pop %v2188
        %v2190 = vmul.f32 %v2182, 1.442695
        %v2191 = vpow.pop %v2190
        %v2192 = vmul.f32 %v2183, 1.442695
        %v2193 = vpow.pop %v2192
        %v2194 = vmul.f32 %v2184, 1.442695
        %v2195 = vpow.pop %v2194
        %v2196 = vmul.f32 %v2185, 1.442695
        %v2197 = vpow.pop %v2196
        %v2198 = vadd.f32 %v2144, %v2187
        %v2199 = vadd.f32 %v2145, %v2189
        %v2200 = vadd.f32 %v2146, %v2191
        %v2201 = vadd.f32 %v2147, %v2193
        %v2202 = vadd.f32 %v2148, %v2195
        %v2203 = vadd.f32 %v2149, %v2197
        %2204 = vrot.lane.b32.xlu0 %v1057, 125
        %v2205 = vpop.permute.xlu0 %2204
        %2206 = vrot.lane.b32.xlu0 %v1059, 125
        %v2207 = vpop.permute.xlu0 %2206
        %2208 = vrot.lane.b32.xlu0 %v1062, 125
        %v2209 = vpop.permute.xlu0 %2208
        %2210 = vrot.lane.b32.xlu0 %v1064, 125
        %v2211 = vpop.permute.xlu0 %2210
        %2212 = vrot.lane.b32.xlu0 %v1067, 125
        %v2213 = vpop.permute.xlu0 %2212
        %2214 = vrot.lane.b32.xlu0 %v1069, 125
        %v2215 = vpop.permute.xlu0 %2214
        %v2222 = vmul.f32 %v2187, %v2205
        %v2223 = vmul.f32 %v2189, %v2207
        %v2224 = vmul.f32 %v2191, %v2209
        %v2225 = vmul.f32 %v2193, %v2211
        %v2226 = vmul.f32 %v2195, %v2213
        %v2227 = vmul.f32 %v2197, %v2215
        %v2228 = vadd.f32 %v2174, %v2222
        %v2229 = vadd.f32 %v2175, %v2223
        %v2230 = vadd.f32 %v2176, %v2224
        %v2231 = vadd.f32 %v2177, %v2225
        %v2232 = vadd.f32 %v2178, %v2226
        %v2233 = vadd.f32 %v2179, %v2227
        %v2234 = vsub.f32 %v627, %v854
        %v2235 = vsub.f32 %v628, %v855
        %v2236 = vsub.f32 %v629, %v856
        %v2237 = vsub.f32 %v630, %v857
        %v2238 = vsub.f32 %v631, %v858
        %v2239 = vsub.f32 %v632, %v859
        %v2240 = vmul.f32 %v2234, 1.442695
        %v2241 = vpow.pop %v2240
        %v2242 = vmul.f32 %v2235, 1.442695
        %v2243 = vpow.pop %v2242
        %v2244 = vmul.f32 %v2236, 1.442695
        %v2245 = vpow.pop %v2244
        %v2246 = vmul.f32 %v2237, 1.442695
        %v2247 = vpow.pop %v2246
        %v2248 = vmul.f32 %v2238, 1.442695
        %v2249 = vpow.pop %v2248
        %v2250 = vmul.f32 %v2239, 1.442695
        %v2251 = vpow.pop %v2250
        %v2252 = vadd.f32 %v2198, %v2241
        %v2253 = vadd.f32 %v2199, %v2243
        %v2254 = vadd.f32 %v2200, %v2245
        %v2255 = vadd.f32 %v2201, %v2247
        %v2256 = vadd.f32 %v2202, %v2249
        %v2257 = vadd.f32 %v2203, %v2251
        %2258 = vrot.lane.b32.xlu0 %v1115, 125
        %v2259 = vpop.permute.xlu0 %2258
        %2260 = vrot.lane.b32.xlu0 %v1117, 125
        %v2261 = vpop.permute.xlu0 %2260
        %2262 = vrot.lane.b32.xlu0 %v1120, 125
        %v2263 = vpop.permute.xlu0 %2262
        %2264 = vrot.lane.b32.xlu0 %v1122, 125
        %v2265 = vpop.permute.xlu0 %2264
        %2266 = vrot.lane.b32.xlu0 %v1125, 125
        %v2267 = vpop.permute.xlu0 %2266
        %2268 = vrot.lane.b32.xlu0 %v1127, 125
        %v2269 = vpop.permute.xlu0 %2268
        %v2276 = vmul.f32 %v2241, %v2259
        %v2277 = vmul.f32 %v2243, %v2261
        %v2278 = vmul.f32 %v2245, %v2263
        %v2279 = vmul.f32 %v2247, %v2265
        %v2280 = vmul.f32 %v2249, %v2267
        %v2281 = vmul.f32 %v2251, %v2269
        %v2282 = vadd.f32 %v2228, %v2276
        %v2283 = vadd.f32 %v2229, %v2277
        %v2284 = vadd.f32 %v2230, %v2278
        %v2285 = vadd.f32 %v2231, %v2279
        %v2286 = vadd.f32 %v2232, %v2280
        %v2287 = vadd.f32 %v2233, %v2281
        %v2288 = vsub.f32 %v718, %v854
        %v2289 = vsub.f32 %v719, %v855
        %v2290 = vsub.f32 %v720, %v856
        %v2291 = vsub.f32 %v721, %v857
        %v2292 = vsub.f32 %v722, %v858
        %v2293 = vsub.f32 %v723, %v859
        %v2294 = vmul.f32 %v2288, 1.442695
        %v2295 = vpow.pop %v2294
        %v2296 = vmul.f32 %v2289, 1.442695
        %v2297 = vpow.pop %v2296
        %v2298 = vmul.f32 %v2290, 1.442695
        %v2299 = vpow.pop %v2298
        %v2300 = vmul.f32 %v2291, 1.442695
        %v2301 = vpow.pop %v2300
        %v2302 = vmul.f32 %v2292, 1.442695
        %v2303 = vpow.pop %v2302
        %v2304 = vmul.f32 %v2293, 1.442695
        %v2305 = vpow.pop %v2304
        %v2306 = vadd.f32 %v2252, %v2295
        %v2307 = vadd.f32 %v2253, %v2297
        %v2308 = vadd.f32 %v2254, %v2299
        %v2309 = vadd.f32 %v2255, %v2301
        %v2310 = vadd.f32 %v2256, %v2303
        %v2311 = vadd.f32 %v2257, %v2305
        %2312 = vrot.lane.b32.xlu0 %v1173, 125
        %v2313 = vpop.permute.xlu0 %2312
        %2314 = vrot.lane.b32.xlu0 %v1175, 125
        %v2315 = vpop.permute.xlu0 %2314
        %2316 = vrot.lane.b32.xlu0 %v1178, 125
        %v2317 = vpop.permute.xlu0 %2316
        %2318 = vrot.lane.b32.xlu0 %v1180, 125
        %v2319 = vpop.permute.xlu0 %2318
        %2320 = vrot.lane.b32.xlu0 %v1183, 125
        %v2321 = vpop.permute.xlu0 %2320
        %2322 = vrot.lane.b32.xlu0 %v1185, 125
        %v2323 = vpop.permute.xlu0 %2322
        %v2330 = vmul.f32 %v2295, %v2313
        %v2331 = vmul.f32 %v2297, %v2315
        %v2332 = vmul.f32 %v2299, %v2317
        %v2333 = vmul.f32 %v2301, %v2319
        %v2334 = vmul.f32 %v2303, %v2321
        %v2335 = vmul.f32 %v2305, %v2323
        %v2336 = vadd.f32 %v2282, %v2330
        %v2337 = vadd.f32 %v2283, %v2331
        %v2338 = vadd.f32 %v2284, %v2332
        %v2339 = vadd.f32 %v2285, %v2333
        %v2340 = vadd.f32 %v2286, %v2334
        %v2341 = vadd.f32 %v2287, %v2335
        %v2342 = vsub.f32 %v809, %v854
        %v2343 = vsub.f32 %v810, %v855
        %v2344 = vsub.f32 %v811, %v856
        %v2345 = vsub.f32 %v812, %v857
        %v2346 = vsub.f32 %v813, %v858
        %v2347 = vsub.f32 %v814, %v859
        %v2348 = vmul.f32 %v2342, 1.442695
        %v2349 = vpow.pop %v2348
        %v2350 = vmul.f32 %v2343, 1.442695
        %v2351 = vpow.pop %v2350
        %v2352 = vmul.f32 %v2344, 1.442695
        %v2353 = vpow.pop %v2352
        %v2354 = vmul.f32 %v2345, 1.442695
        %v2355 = vpow.pop %v2354
        %v2356 = vmul.f32 %v2346, 1.442695
        %v2357 = vpow.pop %v2356
        %v2358 = vmul.f32 %v2347, 1.442695
        %v2359 = vpow.pop %v2358
        %v2360 = vadd.f32 %v2306, %v2349
        %v2361 = vadd.f32 %v2307, %v2351
        %v2362 = vadd.f32 %v2308, %v2353
        %v2363 = vadd.f32 %v2309, %v2355
        %v2364 = vadd.f32 %v2310, %v2357
        %v2365 = vadd.f32 %v2311, %v2359
        %2366 = vrot.lane.b32.xlu0 %v1231, 125
        %v2367 = vpop.permute.xlu0 %2366
        %2368 = vrot.lane.b32.xlu0 %v1233, 125
        %v2369 = vpop.permute.xlu0 %2368
        %2370 = vrot.lane.b32.xlu0 %v1236, 125
        %v2371 = vpop.permute.xlu0 %2370
        %2372 = vrot.lane.b32.xlu0 %v1238, 125
        %v2373 = vpop.permute.xlu0 %2372
        %2374 = vrot.lane.b32.xlu0 %v1241, 125
        %v2375 = vpop.permute.xlu0 %2374
        %2376 = vrot.lane.b32.xlu0 %v1243, 125
        %v2377 = vpop.permute.xlu0 %2376
        %v2384 = vmul.f32 %v2349, %v2367
        %v2385 = vmul.f32 %v2351, %v2369
        %v2386 = vmul.f32 %v2353, %v2371
        %v2387 = vmul.f32 %v2355, %v2373
        %v2388 = vmul.f32 %v2357, %v2375
        %v2389 = vmul.f32 %v2359, %v2377
        %v2390 = vadd.f32 %v2336, %v2384
        %v2391 = vadd.f32 %v2337, %v2385
        %v2392 = vadd.f32 %v2338, %v2386
        %v2393 = vadd.f32 %v2339, %v2387
        %v2394 = vadd.f32 %v2340, %v2388
        %v2395 = vadd.f32 %v2341, %v2389
        %v2396 = vsub.f32 %v276, %v854
        %v2397 = vsub.f32 %v277, %v855
        %v2398 = vsub.f32 %v278, %v856
        %v2399 = vsub.f32 %v279, %v857
        %v2400 = vsub.f32 %v280, %v858
        %v2401 = vsub.f32 %v281, %v859
        %v2402 = vmul.f32 %v2396, 1.442695
        %v2403 = vpow.pop %v2402
        %v2404 = vmul.f32 %v2397, 1.442695
        %v2405 = vpow.pop %v2404
        %v2406 = vmul.f32 %v2398, 1.442695
        %v2407 = vpow.pop %v2406
        %v2408 = vmul.f32 %v2399, 1.442695
        %v2409 = vpow.pop %v2408
        %v2410 = vmul.f32 %v2400, 1.442695
        %v2411 = vpow.pop %v2410
        %v2412 = vmul.f32 %v2401, 1.442695
        %v2413 = vpow.pop %v2412
        %v2414 = vadd.f32 %v2360, %v2403
        %v2415 = vadd.f32 %v2361, %v2405
        %v2416 = vadd.f32 %v2362, %v2407
        %v2417 = vadd.f32 %v2363, %v2409
        %v2418 = vadd.f32 %v2364, %v2411
        %v2419 = vadd.f32 %v2365, %v2413
        %2420 = vrot.lane.b32.xlu0 %v860, 124
        %v2421 = vpop.permute.xlu0 %2420
        %2422 = vrot.lane.b32.xlu0 %v861, 124
        %v2423 = vpop.permute.xlu0 %2422
        %2424 = vrot.lane.b32.xlu0 %v863, 124
        %v2425 = vpop.permute.xlu0 %2424
        %2426 = vrot.lane.b32.xlu0 %v864, 124
        %v2427 = vpop.permute.xlu0 %2426
        %2428 = vrot.lane.b32.xlu0 %v866, 124
        %v2429 = vpop.permute.xlu0 %2428
        %2430 = vrot.lane.b32.xlu0 %v867, 124
        %v2431 = vpop.permute.xlu0 %2430
        %v2438 = vmul.f32 %v2403, %v2421
        %v2439 = vmul.f32 %v2405, %v2423
        %v2440 = vmul.f32 %v2407, %v2425
        %v2441 = vmul.f32 %v2409, %v2427
        %v2442 = vmul.f32 %v2411, %v2429
        %v2443 = vmul.f32 %v2413, %v2431
        %v2444 = vadd.f32 %v2390, %v2438
        %v2445 = vadd.f32 %v2391, %v2439
        %v2446 = vadd.f32 %v2392, %v2440
        %v2447 = vadd.f32 %v2393, %v2441
        %v2448 = vadd.f32 %v2394, %v2442
        %v2449 = vadd.f32 %v2395, %v2443
        %v2450 = vsub.f32 %v367, %v854
        %v2451 = vsub.f32 %v368, %v855
        %v2452 = vsub.f32 %v369, %v856
        %v2453 = vsub.f32 %v370, %v857
        %v2454 = vsub.f32 %v371, %v858
        %v2455 = vsub.f32 %v372, %v859
        %v2456 = vmul.f32 %v2450, 1.442695
        %v2457 = vpow.pop %v2456
        %v2458 = vmul.f32 %v2451, 1.442695
        %v2459 = vpow.pop %v2458
        %v2460 = vmul.f32 %v2452, 1.442695
        %v2461 = vpow.pop %v2460
        %v2462 = vmul.f32 %v2453, 1.442695
        %v2463 = vpow.pop %v2462
        %v2464 = vmul.f32 %v2454, 1.442695
        %v2465 = vpow.pop %v2464
        %v2466 = vmul.f32 %v2455, 1.442695
        %v2467 = vpow.pop %v2466
        %v2468 = vadd.f32 %v2414, %v2457
        %v2469 = vadd.f32 %v2415, %v2459
        %v2470 = vadd.f32 %v2416, %v2461
        %v2471 = vadd.f32 %v2417, %v2463
        %v2472 = vadd.f32 %v2418, %v2465
        %v2473 = vadd.f32 %v2419, %v2467
        %2474 = vrot.lane.b32.xlu0 %v941, 124
        %v2475 = vpop.permute.xlu0 %2474
        %2476 = vrot.lane.b32.xlu0 %v943, 124
        %v2477 = vpop.permute.xlu0 %2476
        %2478 = vrot.lane.b32.xlu0 %v946, 124
        %v2479 = vpop.permute.xlu0 %2478
        %2480 = vrot.lane.b32.xlu0 %v948, 124
        %v2481 = vpop.permute.xlu0 %2480
        %2482 = vrot.lane.b32.xlu0 %v951, 124
        %v2483 = vpop.permute.xlu0 %2482
        %2484 = vrot.lane.b32.xlu0 %v953, 124
        %v2485 = vpop.permute.xlu0 %2484
        %v2492 = vmul.f32 %v2457, %v2475
        %v2493 = vmul.f32 %v2459, %v2477
        %v2494 = vmul.f32 %v2461, %v2479
        %v2495 = vmul.f32 %v2463, %v2481
        %v2496 = vmul.f32 %v2465, %v2483
        %v2497 = vmul.f32 %v2467, %v2485
        %v2498 = vadd.f32 %v2444, %v2492
        %v2499 = vadd.f32 %v2445, %v2493
        %v2500 = vadd.f32 %v2446, %v2494
        %v2501 = vadd.f32 %v2447, %v2495
        %v2502 = vadd.f32 %v2448, %v2496
        %v2503 = vadd.f32 %v2449, %v2497
        %v2504 = vsub.f32 %v458, %v854
        %v2505 = vsub.f32 %v459, %v855
        %v2506 = vsub.f32 %v460, %v856
        %v2507 = vsub.f32 %v461, %v857
        %v2508 = vsub.f32 %v462, %v858
        %v2509 = vsub.f32 %v463, %v859
        %v2510 = vmul.f32 %v2504, 1.442695
        %v2511 = vpow.pop %v2510
        %v2512 = vmul.f32 %v2505, 1.442695
        %v2513 = vpow.pop %v2512
        %v2514 = vmul.f32 %v2506, 1.442695
        %v2515 = vpow.pop %v2514
        %v2516 = vmul.f32 %v2507, 1.442695
        %v2517 = vpow.pop %v2516
        %v2518 = vmul.f32 %v2508, 1.442695
        %v2519 = vpow.pop %v2518
        %v2520 = vmul.f32 %v2509, 1.442695
        %v2521 = vpow.pop %v2520
        %v2522 = vadd.f32 %v2468, %v2511
        %v2523 = vadd.f32 %v2469, %v2513
        %v2524 = vadd.f32 %v2470, %v2515
        %v2525 = vadd.f32 %v2471, %v2517
        %v2526 = vadd.f32 %v2472, %v2519
        %v2527 = vadd.f32 %v2473, %v2521
        %2528 = vrot.lane.b32.xlu0 %v999, 124
        %v2529 = vpop.permute.xlu0 %2528
        %2530 = vrot.lane.b32.xlu0 %v1001, 124
        %v2531 = vpop.permute.xlu0 %2530
        %2532 = vrot.lane.b32.xlu0 %v1004, 124
        %v2533 = vpop.permute.xlu0 %2532
        %2534 = vrot.lane.b32.xlu0 %v1006, 124
        %v2535 = vpop.permute.xlu0 %2534
        %2536 = vrot.lane.b32.xlu0 %v1009, 124
        %v2537 = vpop.permute.xlu0 %2536
        %2538 = vrot.lane.b32.xlu0 %v1011, 124
        %v2539 = vpop.permute.xlu0 %2538
        %v2546 = vmul.f32 %v2511, %v2529
        %v2547 = vmul.f32 %v2513, %v2531
        %v2548 = vmul.f32 %v2515, %v2533
        %v2549 = vmul.f32 %v2517, %v2535
        %v2550 = vmul.f32 %v2519, %v2537
        %v2551 = vmul.f32 %v2521, %v2539
        %v2552 = vadd.f32 %v2498, %v2546
        %v2553 = vadd.f32 %v2499, %v2547
        %v2554 = vadd.f32 %v2500, %v2548
        %v2555 = vadd.f32 %v2501, %v2549
        %v2556 = vadd.f32 %v2502, %v2550
        %v2557 = vadd.f32 %v2503, %v2551
        %v2558 = vsub.f32 %v549, %v854
        %v2559 = vsub.f32 %v550, %v855
        %v2560 = vsub.f32 %v551, %v856
        %v2561 = vsub.f32 %v552, %v857
        %v2562 = vsub.f32 %v553, %v858
        %v2563 = vsub.f32 %v554, %v859
        %v2564 = vmul.f32 %v2558, 1.442695
        %v2565 = vpow.pop %v2564
        %v2566 = vmul.f32 %v2559, 1.442695
        %v2567 = vpow.pop %v2566
        %v2568 = vmul.f32 %v2560, 1.442695
        %v2569 = vpow.pop %v2568
        %v2570 = vmul.f32 %v2561, 1.442695
        %v2571 = vpow.pop %v2570
        %v2572 = vmul.f32 %v2562, 1.442695
        %v2573 = vpow.pop %v2572
        %v2574 = vmul.f32 %v2563, 1.442695
        %v2575 = vpow.pop %v2574
        %v2576 = vadd.f32 %v2522, %v2565
        %v2577 = vadd.f32 %v2523, %v2567
        %v2578 = vadd.f32 %v2524, %v2569
        %v2579 = vadd.f32 %v2525, %v2571
        %v2580 = vadd.f32 %v2526, %v2573
        %v2581 = vadd.f32 %v2527, %v2575
        %2582 = vrot.lane.b32.xlu0 %v1057, 124
        %v2583 = vpop.permute.xlu0 %2582
        %2584 = vrot.lane.b32.xlu0 %v1059, 124
        %v2585 = vpop.permute.xlu0 %2584
        %2586 = vrot.lane.b32.xlu0 %v1062, 124
        %v2587 = vpop.permute.xlu0 %2586
        %2588 = vrot.lane.b32.xlu0 %v1064, 124
        %v2589 = vpop.permute.xlu0 %2588
        %2590 = vrot.lane.b32.xlu0 %v1067, 124
        %v2591 = vpop.permute.xlu0 %2590
        %2592 = vrot.lane.b32.xlu0 %v1069, 124
        %v2593 = vpop.permute.xlu0 %2592
        %v2600 = vmul.f32 %v2565, %v2583
        %v2601 = vmul.f32 %v2567, %v2585
        %v2602 = vmul.f32 %v2569, %v2587
        %v2603 = vmul.f32 %v2571, %v2589
        %v2604 = vmul.f32 %v2573, %v2591
        %v2605 = vmul.f32 %v2575, %v2593
        %v2606 = vadd.f32 %v2552, %v2600
        %v2607 = vadd.f32 %v2553, %v2601
        %v2608 = vadd.f32 %v2554, %v2602
        %v2609 = vadd.f32 %v2555, %v2603
        %v2610 = vadd.f32 %v2556, %v2604
        %v2611 = vadd.f32 %v2557, %v2605
        %v2612 = vsub.f32 %v640, %v854
        %v2613 = vsub.f32 %v641, %v855
        %v2614 = vsub.f32 %v642, %v856
        %v2615 = vsub.f32 %v643, %v857
        %v2616 = vsub.f32 %v644, %v858
        %v2617 = vsub.f32 %v645, %v859
        %v2618 = vmul.f32 %v2612, 1.442695
        %v2619 = vpow.pop %v2618
        %v2620 = vmul.f32 %v2613, 1.442695
        %v2621 = vpow.pop %v2620
        %v2622 = vmul.f32 %v2614, 1.442695
        %v2623 = vpow.pop %v2622
        %v2624 = vmul.f32 %v2615, 1.442695
        %v2625 = vpow.pop %v2624
        %v2626 = vmul.f32 %v2616, 1.442695
        %v2627 = vpow.pop %v2626
        %v2628 = vmul.f32 %v2617, 1.442695
        %v2629 = vpow.pop %v2628
        %v2630 = vadd.f32 %v2576, %v2619
        %v2631 = vadd.f32 %v2577, %v2621
        %v2632 = vadd.f32 %v2578, %v2623
        %v2633 = vadd.f32 %v2579, %v2625
        %v2634 = vadd.f32 %v2580, %v2627
        %v2635 = vadd.f32 %v2581, %v2629
        %2636 = vrot.lane.b32.xlu0 %v1115, 124
        %v2637 = vpop.permute.xlu0 %2636
        %2638 = vrot.lane.b32.xlu0 %v1117, 124
        %v2639 = vpop.permute.xlu0 %2638
        %2640 = vrot.lane.b32.xlu0 %v1120, 124
        %v2641 = vpop.permute.xlu0 %2640
        %2642 = vrot.lane.b32.xlu0 %v1122, 124
        %v2643 = vpop.permute.xlu0 %2642
        %2644 = vrot.lane.b32.xlu0 %v1125, 124
        %v2645 = vpop.permute.xlu0 %2644
        %2646 = vrot.lane.b32.xlu0 %v1127, 124
        %v2647 = vpop.permute.xlu0 %2646
        %v2654 = vmul.f32 %v2619, %v2637
        %v2655 = vmul.f32 %v2621, %v2639
        %v2656 = vmul.f32 %v2623, %v2641
        %v2657 = vmul.f32 %v2625, %v2643
        %v2658 = vmul.f32 %v2627, %v2645
        %v2659 = vmul.f32 %v2629, %v2647
        %v2660 = vadd.f32 %v2606, %v2654
        %v2661 = vadd.f32 %v2607, %v2655
        %v2662 = vadd.f32 %v2608, %v2656
        %v2663 = vadd.f32 %v2609, %v2657
        %v2664 = vadd.f32 %v2610, %v2658
        %v2665 = vadd.f32 %v2611, %v2659
        %v2666 = vsub.f32 %v731, %v854
        %v2667 = vsub.f32 %v732, %v855
        %v2668 = vsub.f32 %v733, %v856
        %v2669 = vsub.f32 %v734, %v857
        %v2670 = vsub.f32 %v735, %v858
        %v2671 = vsub.f32 %v736, %v859
        %v2672 = vmul.f32 %v2666, 1.442695
        %v2673 = vpow.pop %v2672
        %v2674 = vmul.f32 %v2667, 1.442695
        %v2675 = vpow.pop %v2674
        %v2676 = vmul.f32 %v2668, 1.442695
        %v2677 = vpow.pop %v2676
        %v2678 = vmul.f32 %v2669, 1.442695
        %v2679 = vpow.pop %v2678
        %v2680 = vmul.f32 %v2670, 1.442695
        %v2681 = vpow.pop %v2680
        %v2682 = vmul.f32 %v2671, 1.442695
        %v2683 = vpow.pop %v2682
        %v2684 = vadd.f32 %v2630, %v2673
        %v2685 = vadd.f32 %v2631, %v2675
        %v2686 = vadd.f32 %v2632, %v2677
        %v2687 = vadd.f32 %v2633, %v2679
        %v2688 = vadd.f32 %v2634, %v2681
        %v2689 = vadd.f32 %v2635, %v2683
        %2690 = vrot.lane.b32.xlu0 %v1173, 124
        %v2691 = vpop.permute.xlu0 %2690
        %2692 = vrot.lane.b32.xlu0 %v1175, 124
        %v2693 = vpop.permute.xlu0 %2692
        %2694 = vrot.lane.b32.xlu0 %v1178, 124
        %v2695 = vpop.permute.xlu0 %2694
        %2696 = vrot.lane.b32.xlu0 %v1180, 124
        %v2697 = vpop.permute.xlu0 %2696
        %2698 = vrot.lane.b32.xlu0 %v1183, 124
        %v2699 = vpop.permute.xlu0 %2698
        %2700 = vrot.lane.b32.xlu0 %v1185, 124
        %v2701 = vpop.permute.xlu0 %2700
        %v2708 = vmul.f32 %v2673, %v2691
        %v2709 = vmul.f32 %v2675, %v2693
        %v2710 = vmul.f32 %v2677, %v2695
        %v2711 = vmul.f32 %v2679, %v2697
        %v2712 = vmul.f32 %v2681, %v2699
        %v2713 = vmul.f32 %v2683, %v2701
        %v2714 = vadd.f32 %v2660, %v2708
        %v2715 = vadd.f32 %v2661, %v2709
        %v2716 = vadd.f32 %v2662, %v2710
        %v2717 = vadd.f32 %v2663, %v2711
        %v2718 = vadd.f32 %v2664, %v2712
        %v2719 = vadd.f32 %v2665, %v2713
        %v2720 = vsub.f32 %v822, %v854
        %v2721 = vsub.f32 %v823, %v855
        %v2722 = vsub.f32 %v824, %v856
        %v2723 = vsub.f32 %v825, %v857
        %v2724 = vsub.f32 %v826, %v858
        %v2725 = vsub.f32 %v827, %v859
        %v2726 = vmul.f32 %v2720, 1.442695
        %v2727 = vpow.pop %v2726
        %v2728 = vmul.f32 %v2721, 1.442695
        %v2729 = vpow.pop %v2728
        %v2730 = vmul.f32 %v2722, 1.442695
        %v2731 = vpow.pop %v2730
        %v2732 = vmul.f32 %v2723, 1.442695
        %v2733 = vpow.pop %v2732
        %v2734 = vmul.f32 %v2724, 1.442695
        %v2735 = vpow.pop %v2734
        %v2736 = vmul.f32 %v2725, 1.442695
        %v2737 = vpow.pop %v2736
        %v2738 = vadd.f32 %v2684, %v2727
        %v2739 = vadd.f32 %v2685, %v2729
        %v2740 = vadd.f32 %v2686, %v2731
        %v2741 = vadd.f32 %v2687, %v2733
        %v2742 = vadd.f32 %v2688, %v2735
        %v2743 = vadd.f32 %v2689, %v2737
        %2744 = vrot.lane.b32.xlu0 %v1231, 124
        %v2745 = vpop.permute.xlu0 %2744
        %2746 = vrot.lane.b32.xlu0 %v1233, 124
        %v2747 = vpop.permute.xlu0 %2746
        %2748 = vrot.lane.b32.xlu0 %v1236, 124
        %v2749 = vpop.permute.xlu0 %2748
        %2750 = vrot.lane.b32.xlu0 %v1238, 124
        %v2751 = vpop.permute.xlu0 %2750
        %2752 = vrot.lane.b32.xlu0 %v1241, 124
        %v2753 = vpop.permute.xlu0 %2752
        %2754 = vrot.lane.b32.xlu0 %v1243, 124
        %v2755 = vpop.permute.xlu0 %2754
        %v2762 = vmul.f32 %v2727, %v2745
        %v2763 = vmul.f32 %v2729, %v2747
        %v2764 = vmul.f32 %v2731, %v2749
        %v2765 = vmul.f32 %v2733, %v2751
        %v2766 = vmul.f32 %v2735, %v2753
        %v2767 = vmul.f32 %v2737, %v2755
        %v2768 = vadd.f32 %v2714, %v2762
        %v2769 = vadd.f32 %v2715, %v2763
        %v2770 = vadd.f32 %v2716, %v2764
        %v2771 = vadd.f32 %v2717, %v2765
        %v2772 = vadd.f32 %v2718, %v2766
        %v2773 = vadd.f32 %v2719, %v2767
        %v2774 = vsub.f32 %v289, %v854
        %v2775 = vsub.f32 %v290, %v855
        %v2776 = vsub.f32 %v291, %v856
        %v2777 = vsub.f32 %v292, %v857
        %v2778 = vsub.f32 %v293, %v858
        %v2779 = vsub.f32 %v294, %v859
        %v2780 = vmul.f32 %v2774, 1.442695
        %v2781 = vpow.pop %v2780
        %v2782 = vmul.f32 %v2775, 1.442695
        %v2783 = vpow.pop %v2782
        %v2784 = vmul.f32 %v2776, 1.442695
        %v2785 = vpow.pop %v2784
        %v2786 = vmul.f32 %v2777, 1.442695
        %v2787 = vpow.pop %v2786
        %v2788 = vmul.f32 %v2778, 1.442695
        %v2789 = vpow.pop %v2788
        %v2790 = vmul.f32 %v2779, 1.442695
        %v2791 = vpow.pop %v2790
        %v2792 = vadd.f32 %v2738, %v2781
        %v2793 = vadd.f32 %v2739, %v2783
        %v2794 = vadd.f32 %v2740, %v2785
        %v2795 = vadd.f32 %v2741, %v2787
        %v2796 = vadd.f32 %v2742, %v2789
        %v2797 = vadd.f32 %v2743, %v2791
        %2798 = vrot.lane.b32.xlu0 %v860, 123
        %v2799 = vpop.permute.xlu0 %2798
        %2800 = vrot.lane.b32.xlu0 %v861, 123
        %v2801 = vpop.permute.xlu0 %2800
        %2802 = vrot.lane.b32.xlu0 %v863, 123
        %v2803 = vpop.permute.xlu0 %2802
        %2804 = vrot.lane.b32.xlu0 %v864, 123
        %v2805 = vpop.permute.xlu0 %2804
        %2806 = vrot.lane.b32.xlu0 %v866, 123
        %v2807 = vpop.permute.xlu0 %2806
        %2808 = vrot.lane.b32.xlu0 %v867, 123
        %v2809 = vpop.permute.xlu0 %2808
        %v2816 = vmul.f32 %v2781, %v2799
        %v2817 = vmul.f32 %v2783, %v2801
        %v2818 = vmul.f32 %v2785, %v2803
        %v2819 = vmul.f32 %v2787, %v2805
        %v2820 = vmul.f32 %v2789, %v2807
        %v2821 = vmul.f32 %v2791, %v2809
        %v2822 = vadd.f32 %v2768, %v2816
        %v2823 = vadd.f32 %v2769, %v2817
        %v2824 = vadd.f32 %v2770, %v2818
        %v2825 = vadd.f32 %v2771, %v2819
        %v2826 = vadd.f32 %v2772, %v2820
        %v2827 = vadd.f32 %v2773, %v2821
        %v2828 = vsub.f32 %v380, %v854
        %v2829 = vsub.f32 %v381, %v855
        %v2830 = vsub.f32 %v382, %v856
        %v2831 = vsub.f32 %v383, %v857
        %v2832 = vsub.f32 %v384, %v858
        %v2833 = vsub.f32 %v385, %v859
        %v2834 = vmul.f32 %v2828, 1.442695
        %v2835 = vpow.pop %v2834
        %v2836 = vmul.f32 %v2829, 1.442695
        %v2837 = vpow.pop %v2836
        %v2838 = vmul.f32 %v2830, 1.442695
        %v2839 = vpow.pop %v2838
        %v2840 = vmul.f32 %v2831, 1.442695
        %v2841 = vpow.pop %v2840
        %v2842 = vmul.f32 %v2832, 1.442695
        %v2843 = vpow.pop %v2842
        %v2844 = vmul.f32 %v2833, 1.442695
        %v2845 = vpow.pop %v2844
        %v2846 = vadd.f32 %v2792, %v2835
        %v2847 = vadd.f32 %v2793, %v2837
        %v2848 = vadd.f32 %v2794, %v2839
        %v2849 = vadd.f32 %v2795, %v2841
        %v2850 = vadd.f32 %v2796, %v2843
        %v2851 = vadd.f32 %v2797, %v2845
        %2852 = vrot.lane.b32.xlu0 %v941, 123
        %v2853 = vpop.permute.xlu0 %2852
        %2854 = vrot.lane.b32.xlu0 %v943, 123
        %v2855 = vpop.permute.xlu0 %2854
        %2856 = vrot.lane.b32.xlu0 %v946, 123
        %v2857 = vpop.permute.xlu0 %2856
        %2858 = vrot.lane.b32.xlu0 %v948, 123
        %v2859 = vpop.permute.xlu0 %2858
        %2860 = vrot.lane.b32.xlu0 %v951, 123
        %v2861 = vpop.permute.xlu0 %2860
        %2862 = vrot.lane.b32.xlu0 %v953, 123
        %v2863 = vpop.permute.xlu0 %2862
        %v2870 = vmul.f32 %v2835, %v2853
        %v2871 = vmul.f32 %v2837, %v2855
        %v2872 = vmul.f32 %v2839, %v2857
        %v2873 = vmul.f32 %v2841, %v2859
        %v2874 = vmul.f32 %v2843, %v2861
        %v2875 = vmul.f32 %v2845, %v2863
        %v2876 = vadd.f32 %v2822, %v2870
        %v2877 = vadd.f32 %v2823, %v2871
        %v2878 = vadd.f32 %v2824, %v2872
        %v2879 = vadd.f32 %v2825, %v2873
        %v2880 = vadd.f32 %v2826, %v2874
        %v2881 = vadd.f32 %v2827, %v2875
        %v2882 = vsub.f32 %v471, %v854
        %v2883 = vsub.f32 %v472, %v855
        %v2884 = vsub.f32 %v473, %v856
        %v2885 = vsub.f32 %v474, %v857
        %v2886 = vsub.f32 %v475, %v858
        %v2887 = vsub.f32 %v476, %v859
        %v2888 = vmul.f32 %v2882, 1.442695
        %v2889 = vpow.pop %v2888
        %v2890 = vmul.f32 %v2883, 1.442695
        %v2891 = vpow.pop %v2890
        %v2892 = vmul.f32 %v2884, 1.442695
        %v2893 = vpow.pop %v2892
        %v2894 = vmul.f32 %v2885, 1.442695
        %v2895 = vpow.pop %v2894
        %v2896 = vmul.f32 %v2886, 1.442695
        %v2897 = vpow.pop %v2896
        %v2898 = vmul.f32 %v2887, 1.442695
        %v2899 = vpow.pop %v2898
        %v2900 = vadd.f32 %v2846, %v2889
        %v2901 = vadd.f32 %v2847, %v2891
        %v2902 = vadd.f32 %v2848, %v2893
        %v2903 = vadd.f32 %v2849, %v2895
        %v2904 = vadd.f32 %v2850, %v2897
        %v2905 = vadd.f32 %v2851, %v2899
        %2906 = vrot.lane.b32.xlu0 %v999, 123
        %v2907 = vpop.permute.xlu0 %2906
        %2908 = vrot.lane.b32.xlu0 %v1001, 123
        %v2909 = vpop.permute.xlu0 %2908
        %2910 = vrot.lane.b32.xlu0 %v1004, 123
        %v2911 = vpop.permute.xlu0 %2910
        %2912 = vrot.lane.b32.xlu0 %v1006, 123
        %v2913 = vpop.permute.xlu0 %2912
        %2914 = vrot.lane.b32.xlu0 %v1009, 123
        %v2915 = vpop.permute.xlu0 %2914
        %2916 = vrot.lane.b32.xlu0 %v1011, 123
        %v2917 = vpop.permute.xlu0 %2916
        %v2924 = vmul.f32 %v2889, %v2907
        %v2925 = vmul.f32 %v2891, %v2909
        %v2926 = vmul.f32 %v2893, %v2911
        %v2927 = vmul.f32 %v2895, %v2913
        %v2928 = vmul.f32 %v2897, %v2915
        %v2929 = vmul.f32 %v2899, %v2917
        %v2930 = vadd.f32 %v2876, %v2924
        %v2931 = vadd.f32 %v2877, %v2925
        %v2932 = vadd.f32 %v2878, %v2926
        %v2933 = vadd.f32 %v2879, %v2927
        %v2934 = vadd.f32 %v2880, %v2928
        %v2935 = vadd.f32 %v2881, %v2929
        %v2936 = vsub.f32 %v562, %v854
        %v2937 = vsub.f32 %v563, %v855
        %v2938 = vsub.f32 %v564, %v856
        %v2939 = vsub.f32 %v565, %v857
        %v2940 = vsub.f32 %v566, %v858
        %v2941 = vsub.f32 %v567, %v859
        %v2942 = vmul.f32 %v2936, 1.442695
        %v2943 = vpow.pop %v2942
        %v2944 = vmul.f32 %v2937, 1.442695
        %v2945 = vpow.pop %v2944
        %v2946 = vmul.f32 %v2938, 1.442695
        %v2947 = vpow.pop %v2946
        %v2948 = vmul.f32 %v2939, 1.442695
        %v2949 = vpow.pop %v2948
        %v2950 = vmul.f32 %v2940, 1.442695
        %v2951 = vpow.pop %v2950
        %v2952 = vmul.f32 %v2941, 1.442695
        %v2953 = vpow.pop %v2952
        %v2954 = vadd.f32 %v2900, %v2943
        %v2955 = vadd.f32 %v2901, %v2945
        %v2956 = vadd.f32 %v2902, %v2947
        %v2957 = vadd.f32 %v2903, %v2949
        %v2958 = vadd.f32 %v2904, %v2951
        %v2959 = vadd.f32 %v2905, %v2953
        %2960 = vrot.lane.b32.xlu0 %v1057, 123
        %v2961 = vpop.permute.xlu0 %2960
        %2962 = vrot.lane.b32.xlu0 %v1059, 123
        %v2963 = vpop.permute.xlu0 %2962
        %2964 = vrot.lane.b32.xlu0 %v1062, 123
        %v2965 = vpop.permute.xlu0 %2964
        %2966 = vrot.lane.b32.xlu0 %v1064, 123
        %v2967 = vpop.permute.xlu0 %2966
        %2968 = vrot.lane.b32.xlu0 %v1067, 123
        %v2969 = vpop.permute.xlu0 %2968
        %2970 = vrot.lane.b32.xlu0 %v1069, 123
        %v2971 = vpop.permute.xlu0 %2970
        %v2978 = vmul.f32 %v2943, %v2961
        %v2979 = vmul.f32 %v2945, %v2963
        %v2980 = vmul.f32 %v2947, %v2965
        %v2981 = vmul.f32 %v2949, %v2967
        %v2982 = vmul.f32 %v2951, %v2969
        %v2983 = vmul.f32 %v2953, %v2971
        %v2984 = vadd.f32 %v2930, %v2978
        %v2985 = vadd.f32 %v2931, %v2979
        %v2986 = vadd.f32 %v2932, %v2980
        %v2987 = vadd.f32 %v2933, %v2981
        %v2988 = vadd.f32 %v2934, %v2982
        %v2989 = vadd.f32 %v2935, %v2983
        %v2990 = vsub.f32 %v653, %v854
        %v2991 = vsub.f32 %v654, %v855
        %v2992 = vsub.f32 %v655, %v856
        %v2993 = vsub.f32 %v656, %v857
        %v2994 = vsub.f32 %v657, %v858
        %v2995 = vsub.f32 %v658, %v859
        %v2996 = vmul.f32 %v2990, 1.442695
        %v2997 = vpow.pop %v2996
        %v2998 = vmul.f32 %v2991, 1.442695
        %v2999 = vpow.pop %v2998
        %v3000 = vmul.f32 %v2992, 1.442695
        %v3001 = vpow.pop %v3000
        %v3002 = vmul.f32 %v2993, 1.442695
        %v3003 = vpow.pop %v3002
        %v3004 = vmul.f32 %v2994, 1.442695
        %v3005 = vpow.pop %v3004
        %v3006 = vmul.f32 %v2995, 1.442695
        %v3007 = vpow.pop %v3006
        %v3008 = vadd.f32 %v2954, %v2997
        %v3009 = vadd.f32 %v2955, %v2999
        %v3010 = vadd.f32 %v2956, %v3001
        %v3011 = vadd.f32 %v2957, %v3003
        %v3012 = vadd.f32 %v2958, %v3005
        %v3013 = vadd.f32 %v2959, %v3007
        %3014 = vrot.lane.b32.xlu0 %v1115, 123
        %v3015 = vpop.permute.xlu0 %3014
        %3016 = vrot.lane.b32.xlu0 %v1117, 123
        %v3017 = vpop.permute.xlu0 %3016
        %3018 = vrot.lane.b32.xlu0 %v1120, 123
        %v3019 = vpop.permute.xlu0 %3018
        %3020 = vrot.lane.b32.xlu0 %v1122, 123
        %v3021 = vpop.permute.xlu0 %3020
        %3022 = vrot.lane.b32.xlu0 %v1125, 123
        %v3023 = vpop.permute.xlu0 %3022
        %3024 = vrot.lane.b32.xlu0 %v1127, 123
        %v3025 = vpop.permute.xlu0 %3024
        %v3032 = vmul.f32 %v2997, %v3015
        %v3033 = vmul.f32 %v2999, %v3017
        %v3034 = vmul.f32 %v3001, %v3019
        %v3035 = vmul.f32 %v3003, %v3021
        %v3036 = vmul.f32 %v3005, %v3023
        %v3037 = vmul.f32 %v3007, %v3025
        %v3038 = vadd.f32 %v2984, %v3032
        %v3039 = vadd.f32 %v2985, %v3033
        %v3040 = vadd.f32 %v2986, %v3034
        %v3041 = vadd.f32 %v2987, %v3035
        %v3042 = vadd.f32 %v2988, %v3036
        %v3043 = vadd.f32 %v2989, %v3037
        %v3044 = vsub.f32 %v744, %v854
        %v3045 = vsub.f32 %v745, %v855
        %v3046 = vsub.f32 %v746, %v856
        %v3047 = vsub.f32 %v747, %v857
        %v3048 = vsub.f32 %v748, %v858
        %v3049 = vsub.f32 %v749, %v859
        %v3050 = vmul.f32 %v3044, 1.442695
        %v3051 = vpow.pop %v3050
        %v3052 = vmul.f32 %v3045, 1.442695
        %v3053 = vpow.pop %v3052
        %v3054 = vmul.f32 %v3046, 1.442695
        %v3055 = vpow.pop %v3054
        %v3056 = vmul.f32 %v3047, 1.442695
        %v3057 = vpow.pop %v3056
        %v3058 = vmul.f32 %v3048, 1.442695
        %v3059 = vpow.pop %v3058
        %v3060 = vmul.f32 %v3049, 1.442695
        %v3061 = vpow.pop %v3060
        %v3062 = vadd.f32 %v3008, %v3051
        %v3063 = vadd.f32 %v3009, %v3053
        %v3064 = vadd.f32 %v3010, %v3055
        %v3065 = vadd.f32 %v3011, %v3057
        %v3066 = vadd.f32 %v3012, %v3059
        %v3067 = vadd.f32 %v3013, %v3061
        %3068 = vrot.lane.b32.xlu0 %v1173, 123
        %v3069 = vpop.permute.xlu0 %3068
        %3070 = vrot.lane.b32.xlu0 %v1175, 123
        %v3071 = vpop.permute.xlu0 %3070
        %3072 = vrot.lane.b32.xlu0 %v1178, 123
        %v3073 = vpop.permute.xlu0 %3072
        %3074 = vrot.lane.b32.xlu0 %v1180, 123
        %v3075 = vpop.permute.xlu0 %3074
        %3076 = vrot.lane.b32.xlu0 %v1183, 123
        %v3077 = vpop.permute.xlu0 %3076
        %3078 = vrot.lane.b32.xlu0 %v1185, 123
        %v3079 = vpop.permute.xlu0 %3078
        %v3086 = vmul.f32 %v3051, %v3069
        %v3087 = vmul.f32 %v3053, %v3071
        %v3088 = vmul.f32 %v3055, %v3073
        %v3089 = vmul.f32 %v3057, %v3075
        %v3090 = vmul.f32 %v3059, %v3077
        %v3091 = vmul.f32 %v3061, %v3079
        %v3092 = vadd.f32 %v3038, %v3086
        %v3093 = vadd.f32 %v3039, %v3087
        %v3094 = vadd.f32 %v3040, %v3088
        %v3095 = vadd.f32 %v3041, %v3089
        %v3096 = vadd.f32 %v3042, %v3090
        %v3097 = vadd.f32 %v3043, %v3091
        %v3098 = vsub.f32 %v835, %v854
        %v3099 = vsub.f32 %v836, %v855
        %v3100 = vsub.f32 %v837, %v856
        %v3101 = vsub.f32 %v838, %v857
        %v3102 = vsub.f32 %v839, %v858
        %v3103 = vsub.f32 %v840, %v859
        %v3104 = vmul.f32 %v3098, 1.442695
        %v3105 = vpow.pop %v3104
        %v3106 = vmul.f32 %v3099, 1.442695
        %v3107 = vpow.pop %v3106
        %v3108 = vmul.f32 %v3100, 1.442695
        %v3109 = vpow.pop %v3108
        %v3110 = vmul.f32 %v3101, 1.442695
        %v3111 = vpow.pop %v3110
        %v3112 = vmul.f32 %v3102, 1.442695
        %v3113 = vpow.pop %v3112
        %v3114 = vmul.f32 %v3103, 1.442695
        %v3115 = vpow.pop %v3114
        %v3116 = vadd.f32 %v3062, %v3105
        %v3117 = vadd.f32 %v3063, %v3107
        %v3118 = vadd.f32 %v3064, %v3109
        %v3119 = vadd.f32 %v3065, %v3111
        %v3120 = vadd.f32 %v3066, %v3113
        %v3121 = vadd.f32 %v3067, %v3115
        %3122 = vrot.lane.b32.xlu0 %v1231, 123
        %v3123 = vpop.permute.xlu0 %3122
        %3124 = vrot.lane.b32.xlu0 %v1233, 123
        %v3125 = vpop.permute.xlu0 %3124
        %3126 = vrot.lane.b32.xlu0 %v1236, 123
        %v3127 = vpop.permute.xlu0 %3126
        %3128 = vrot.lane.b32.xlu0 %v1238, 123
        %v3129 = vpop.permute.xlu0 %3128
        %3130 = vrot.lane.b32.xlu0 %v1241, 123
        %v3131 = vpop.permute.xlu0 %3130
        %3132 = vrot.lane.b32.xlu0 %v1243, 123
        %v3133 = vpop.permute.xlu0 %3132
        %v3140 = vmul.f32 %v3105, %v3123
        %v3141 = vmul.f32 %v3107, %v3125
        %v3142 = vmul.f32 %v3109, %v3127
        %v3143 = vmul.f32 %v3111, %v3129
        %v3144 = vmul.f32 %v3113, %v3131
        %v3145 = vmul.f32 %v3115, %v3133
        %v3146 = vadd.f32 %v3092, %v3140
        %v3147 = vadd.f32 %v3093, %v3141
        %v3148 = vadd.f32 %v3094, %v3142
        %v3149 = vadd.f32 %v3095, %v3143
        %v3150 = vadd.f32 %v3096, %v3144
        %v3151 = vadd.f32 %v3097, %v3145
        %v3152 = vsub.f32 %v302, %v854
        %v3153 = vsub.f32 %v303, %v855
        %v3154 = vsub.f32 %v304, %v856
        %v3155 = vsub.f32 %v305, %v857
        %v3156 = vsub.f32 %v306, %v858
        %v3157 = vsub.f32 %v307, %v859
        %v3158 = vmul.f32 %v3152, 1.442695
        %v3159 = vpow.pop %v3158
        %v3160 = vmul.f32 %v3153, 1.442695
        %v3161 = vpow.pop %v3160
        %v3162 = vmul.f32 %v3154, 1.442695
        %v3163 = vpow.pop %v3162
        %v3164 = vmul.f32 %v3155, 1.442695
        %v3165 = vpow.pop %v3164
        %v3166 = vmul.f32 %v3156, 1.442695
        %v3167 = vpow.pop %v3166
        %v3168 = vmul.f32 %v3157, 1.442695
        %v3169 = vpow.pop %v3168
        %v3170 = vadd.f32 %v3116, %v3159
        %v3171 = vadd.f32 %v3117, %v3161
        %v3172 = vadd.f32 %v3118, %v3163
        %v3173 = vadd.f32 %v3119, %v3165
        %v3174 = vadd.f32 %v3120, %v3167
        %v3175 = vadd.f32 %v3121, %v3169
        %3176 = vrot.lane.b32.xlu0 %v860, 122
        %v3177 = vpop.permute.xlu0 %3176
        %3178 = vrot.lane.b32.xlu0 %v861, 122
        %v3179 = vpop.permute.xlu0 %3178
        %3180 = vrot.lane.b32.xlu0 %v863, 122
        %v3181 = vpop.permute.xlu0 %3180
        %3182 = vrot.lane.b32.xlu0 %v864, 122
        %v3183 = vpop.permute.xlu0 %3182
        %3184 = vrot.lane.b32.xlu0 %v866, 122
        %v3185 = vpop.permute.xlu0 %3184
        %3186 = vrot.lane.b32.xlu0 %v867, 122
        %v3187 = vpop.permute.xlu0 %3186
        %v3194 = vmul.f32 %v3159, %v3177
        %v3195 = vmul.f32 %v3161, %v3179
        %v3196 = vmul.f32 %v3163, %v3181
        %v3197 = vmul.f32 %v3165, %v3183
        %v3198 = vmul.f32 %v3167, %v3185
        %v3199 = vmul.f32 %v3169, %v3187
        %v3200 = vadd.f32 %v3146, %v3194
        %v3201 = vadd.f32 %v3147, %v3195
        %v3202 = vadd.f32 %v3148, %v3196
        %v3203 = vadd.f32 %v3149, %v3197
        %v3204 = vadd.f32 %v3150, %v3198
        %v3205 = vadd.f32 %v3151, %v3199
        %v3206 = vsub.f32 %v393, %v854
        %v3207 = vsub.f32 %v394, %v855
        %v3208 = vsub.f32 %v395, %v856
        %v3209 = vsub.f32 %v396, %v857
        %v3210 = vsub.f32 %v397, %v858
        %v3211 = vsub.f32 %v398, %v859
        %v3212 = vmul.f32 %v3206, 1.442695
        %v3213 = vpow.pop %v3212
        %v3214 = vmul.f32 %v3207, 1.442695
        %v3215 = vpow.pop %v3214
        %v3216 = vmul.f32 %v3208, 1.442695
        %v3217 = vpow.pop %v3216
        %v3218 = vmul.f32 %v3209, 1.442695
        %v3219 = vpow.pop %v3218
        %v3220 = vmul.f32 %v3210, 1.442695
        %v3221 = vpow.pop %v3220
        %v3222 = vmul.f32 %v3211, 1.442695
        %v3223 = vpow.pop %v3222
        %v3224 = vadd.f32 %v3170, %v3213
        %v3225 = vadd.f32 %v3171, %v3215
        %v3226 = vadd.f32 %v3172, %v3217
        %v3227 = vadd.f32 %v3173, %v3219
        %v3228 = vadd.f32 %v3174, %v3221
        %v3229 = vadd.f32 %v3175, %v3223
        %3230 = vrot.lane.b32.xlu0 %v941, 122
        %v3231 = vpop.permute.xlu0 %3230
        %3232 = vrot.lane.b32.xlu0 %v943, 122
        %v3233 = vpop.permute.xlu0 %3232
        %3234 = vrot.lane.b32.xlu0 %v946, 122
        %v3235 = vpop.permute.xlu0 %3234
        %3236 = vrot.lane.b32.xlu0 %v948, 122
        %v3237 = vpop.permute.xlu0 %3236
        %3238 = vrot.lane.b32.xlu0 %v951, 122
        %v3239 = vpop.permute.xlu0 %3238
        %3240 = vrot.lane.b32.xlu0 %v953, 122
        %v3241 = vpop.permute.xlu0 %3240
        %v3248 = vmul.f32 %v3213, %v3231
        %v3249 = vmul.f32 %v3215, %v3233
        %v3250 = vmul.f32 %v3217, %v3235
        %v3251 = vmul.f32 %v3219, %v3237
        %v3252 = vmul.f32 %v3221, %v3239
        %v3253 = vmul.f32 %v3223, %v3241
        %v3254 = vadd.f32 %v3200, %v3248
        %v3255 = vadd.f32 %v3201, %v3249
        %v3256 = vadd.f32 %v3202, %v3250
        %v3257 = vadd.f32 %v3203, %v3251
        %v3258 = vadd.f32 %v3204, %v3252
        %v3259 = vadd.f32 %v3205, %v3253
        %v3260 = vsub.f32 %v484, %v854
        %v3261 = vsub.f32 %v485, %v855
        %v3262 = vsub.f32 %v486, %v856
        %v3263 = vsub.f32 %v487, %v857
        %v3264 = vsub.f32 %v488, %v858
        %v3265 = vsub.f32 %v489, %v859
        %v3266 = vmul.f32 %v3260, 1.442695
        %v3267 = vpow.pop %v3266
        %v3268 = vmul.f32 %v3261, 1.442695
        %v3269 = vpow.pop %v3268
        %v3270 = vmul.f32 %v3262, 1.442695
        %v3271 = vpow.pop %v3270
        %v3272 = vmul.f32 %v3263, 1.442695
        %v3273 = vpow.pop %v3272
        %v3274 = vmul.f32 %v3264, 1.442695
        %v3275 = vpow.pop %v3274
        %v3276 = vmul.f32 %v3265, 1.442695
        %v3277 = vpow.pop %v3276
        %v3278 = vadd.f32 %v3224, %v3267
        %v3279 = vadd.f32 %v3225, %v3269
        %v3280 = vadd.f32 %v3226, %v3271
        %v3281 = vadd.f32 %v3227, %v3273
        %v3282 = vadd.f32 %v3228, %v3275
        %v3283 = vadd.f32 %v3229, %v3277
        %3284 = vrot.lane.b32.xlu0 %v999, 122
        %v3285 = vpop.permute.xlu0 %3284
        %3286 = vrot.lane.b32.xlu0 %v1001, 122
        %v3287 = vpop.permute.xlu0 %3286
        %3288 = vrot.lane.b32.xlu0 %v1004, 122
        %v3289 = vpop.permute.xlu0 %3288
        %3290 = vrot.lane.b32.xlu0 %v1006, 122
        %v3291 = vpop.permute.xlu0 %3290
        %3292 = vrot.lane.b32.xlu0 %v1009, 122
        %v3293 = vpop.permute.xlu0 %3292
        %3294 = vrot.lane.b32.xlu0 %v1011, 122
        %v3295 = vpop.permute.xlu0 %3294
        %v3302 = vmul.f32 %v3267, %v3285
        %v3303 = vmul.f32 %v3269, %v3287
        %v3304 = vmul.f32 %v3271, %v3289
        %v3305 = vmul.f32 %v3273, %v3291
        %v3306 = vmul.f32 %v3275, %v3293
        %v3307 = vmul.f32 %v3277, %v3295
        %v3308 = vadd.f32 %v3254, %v3302
        %v3309 = vadd.f32 %v3255, %v3303
        %v3310 = vadd.f32 %v3256, %v3304
        %v3311 = vadd.f32 %v3257, %v3305
        %v3312 = vadd.f32 %v3258, %v3306
        %v3313 = vadd.f32 %v3259, %v3307
        %v3314 = vsub.f32 %v575, %v854
        %v3315 = vsub.f32 %v576, %v855
        %v3316 = vsub.f32 %v577, %v856
        %v3317 = vsub.f32 %v578, %v857
        %v3318 = vsub.f32 %v579, %v858
        %v3319 = vsub.f32 %v580, %v859
        %v3320 = vmul.f32 %v3314, 1.442695
        %v3321 = vpow.pop %v3320
        %v3322 = vmul.f32 %v3315, 1.442695
        %v3323 = vpow.pop %v3322
        %v3324 = vmul.f32 %v3316, 1.442695
        %v3325 = vpow.pop %v3324
        %v3326 = vmul.f32 %v3317, 1.442695
        %v3327 = vpow.pop %v3326
        %v3328 = vmul.f32 %v3318, 1.442695
        %v3329 = vpow.pop %v3328
        %v3330 = vmul.f32 %v3319, 1.442695
        %v3331 = vpow.pop %v3330
        %v3332 = vadd.f32 %v3278, %v3321
        %v3333 = vadd.f32 %v3279, %v3323
        %v3334 = vadd.f32 %v3280, %v3325
        %v3335 = vadd.f32 %v3281, %v3327
        %v3336 = vadd.f32 %v3282, %v3329
        %v3337 = vadd.f32 %v3283, %v3331
        %3338 = vrot.lane.b32.xlu0 %v1057, 122
        %v3339 = vpop.permute.xlu0 %3338
        %3340 = vrot.lane.b32.xlu0 %v1059, 122
        %v3341 = vpop.permute.xlu0 %3340
        %3342 = vrot.lane.b32.xlu0 %v1062, 122
        %v3343 = vpop.permute.xlu0 %3342
        %3344 = vrot.lane.b32.xlu0 %v1064, 122
        %v3345 = vpop.permute.xlu0 %3344
        %3346 = vrot.lane.b32.xlu0 %v1067, 122
        %v3347 = vpop.permute.xlu0 %3346
        %3348 = vrot.lane.b32.xlu0 %v1069, 122
        %v3349 = vpop.permute.xlu0 %3348
        %v3356 = vmul.f32 %v3321, %v3339
        %v3357 = vmul.f32 %v3323, %v3341
        %v3358 = vmul.f32 %v3325, %v3343
        %v3359 = vmul.f32 %v3327, %v3345
        %v3360 = vmul.f32 %v3329, %v3347
        %v3361 = vmul.f32 %v3331, %v3349
        %v3362 = vadd.f32 %v3308, %v3356
        %v3363 = vadd.f32 %v3309, %v3357
        %v3364 = vadd.f32 %v3310, %v3358
        %v3365 = vadd.f32 %v3311, %v3359
        %v3366 = vadd.f32 %v3312, %v3360
        %v3367 = vadd.f32 %v3313, %v3361
        %v3368 = vsub.f32 %v666, %v854
        %v3369 = vsub.f32 %v667, %v855
        %v3370 = vsub.f32 %v668, %v856
        %v3371 = vsub.f32 %v669, %v857
        %v3372 = vsub.f32 %v670, %v858
        %v3373 = vsub.f32 %v671, %v859
        %v3374 = vmul.f32 %v3368, 1.442695
        %v3375 = vpow.pop %v3374
        %v3376 = vmul.f32 %v3369, 1.442695
        %v3377 = vpow.pop %v3376
        %v3378 = vmul.f32 %v3370, 1.442695
        %v3379 = vpow.pop %v3378
        %v3380 = vmul.f32 %v3371, 1.442695
        %v3381 = vpow.pop %v3380
        %v3382 = vmul.f32 %v3372, 1.442695
        %v3383 = vpow.pop %v3382
        %v3384 = vmul.f32 %v3373, 1.442695
        %v3385 = vpow.pop %v3384
        %v3386 = vadd.f32 %v3332, %v3375
        %v3387 = vadd.f32 %v3333, %v3377
        %v3388 = vadd.f32 %v3334, %v3379
        %v3389 = vadd.f32 %v3335, %v3381
        %v3390 = vadd.f32 %v3336, %v3383
        %v3391 = vadd.f32 %v3337, %v3385
        %3392 = vrot.lane.b32.xlu0 %v1115, 122
        %v3393 = vpop.permute.xlu0 %3392
        %3394 = vrot.lane.b32.xlu0 %v1117, 122
        %v3395 = vpop.permute.xlu0 %3394
        %3396 = vrot.lane.b32.xlu0 %v1120, 122
        %v3397 = vpop.permute.xlu0 %3396
        %3398 = vrot.lane.b32.xlu0 %v1122, 122
        %v3399 = vpop.permute.xlu0 %3398
        %3400 = vrot.lane.b32.xlu0 %v1125, 122
        %v3401 = vpop.permute.xlu0 %3400
        %3402 = vrot.lane.b32.xlu0 %v1127, 122
        %v3403 = vpop.permute.xlu0 %3402
        %v3410 = vmul.f32 %v3375, %v3393
        %v3411 = vmul.f32 %v3377, %v3395
        %v3412 = vmul.f32 %v3379, %v3397
        %v3413 = vmul.f32 %v3381, %v3399
        %v3414 = vmul.f32 %v3383, %v3401
        %v3415 = vmul.f32 %v3385, %v3403
        %v3416 = vadd.f32 %v3362, %v3410
        %v3417 = vadd.f32 %v3363, %v3411
        %v3418 = vadd.f32 %v3364, %v3412
        %v3419 = vadd.f32 %v3365, %v3413
        %v3420 = vadd.f32 %v3366, %v3414
        %v3421 = vadd.f32 %v3367, %v3415
        %v3422 = vsub.f32 %v757, %v854
        %v3423 = vsub.f32 %v758, %v855
        %v3424 = vsub.f32 %v759, %v856
        %v3425 = vsub.f32 %v760, %v857
        %v3426 = vsub.f32 %v761, %v858
        %v3427 = vsub.f32 %v762, %v859
        %v3428 = vmul.f32 %v3422, 1.442695
        %v3429 = vpow.pop %v3428
        %v3430 = vmul.f32 %v3423, 1.442695
        %v3431 = vpow.pop %v3430
        %v3432 = vmul.f32 %v3424, 1.442695
        %v3433 = vpow.pop %v3432
        %v3434 = vmul.f32 %v3425, 1.442695
        %v3435 = vpow.pop %v3434
        %v3436 = vmul.f32 %v3426, 1.442695
        %v3437 = vpow.pop %v3436
        %v3438 = vmul.f32 %v3427, 1.442695
        %v3439 = vpow.pop %v3438
        %v3440 = vadd.f32 %v3386, %v3429
        %v3441 = vadd.f32 %v3387, %v3431
        %v3442 = vadd.f32 %v3388, %v3433
        %v3443 = vadd.f32 %v3389, %v3435
        %v3444 = vadd.f32 %v3390, %v3437
        %v3445 = vadd.f32 %v3391, %v3439
        %3446 = vrot.lane.b32.xlu0 %v1173, 122
        %v3447 = vpop.permute.xlu0 %3446
        %3448 = vrot.lane.b32.xlu0 %v1175, 122
        %v3449 = vpop.permute.xlu0 %3448
        %3450 = vrot.lane.b32.xlu0 %v1178, 122
        %v3451 = vpop.permute.xlu0 %3450
        %3452 = vrot.lane.b32.xlu0 %v1180, 122
        %v3453 = vpop.permute.xlu0 %3452
        %3454 = vrot.lane.b32.xlu0 %v1183, 122
        %v3455 = vpop.permute.xlu0 %3454
        %3456 = vrot.lane.b32.xlu0 %v1185, 122
        %v3457 = vpop.permute.xlu0 %3456
        %v3464 = vmul.f32 %v3429, %v3447
        %v3465 = vmul.f32 %v3431, %v3449
        %v3466 = vmul.f32 %v3433, %v3451
        %v3467 = vmul.f32 %v3435, %v3453
        %v3468 = vmul.f32 %v3437, %v3455
        %v3469 = vmul.f32 %v3439, %v3457
        %v3470 = vadd.f32 %v3416, %v3464
        %v3471 = vadd.f32 %v3417, %v3465
        %v3472 = vadd.f32 %v3418, %v3466
        %v3473 = vadd.f32 %v3419, %v3467
        %v3474 = vadd.f32 %v3420, %v3468
        %v3475 = vadd.f32 %v3421, %v3469
        %v3476 = vsub.f32 %v848, %v854
        %v3477 = vsub.f32 %v849, %v855
        %v3478 = vsub.f32 %v850, %v856
        %v3479 = vsub.f32 %v851, %v857
        %v3480 = vsub.f32 %v852, %v858
        %v3481 = vsub.f32 %v853, %v859
        %v3482 = vmul.f32 %v3476, 1.442695
        %v3483 = vpow.pop %v3482
        %v3484 = vmul.f32 %v3477, 1.442695
        %v3485 = vpow.pop %v3484
        %v3486 = vmul.f32 %v3478, 1.442695
        %v3487 = vpow.pop %v3486
        %v3488 = vmul.f32 %v3479, 1.442695
        %v3489 = vpow.pop %v3488
        %v3490 = vmul.f32 %v3480, 1.442695
        %v3491 = vpow.pop %v3490
        %v3492 = vmul.f32 %v3481, 1.442695
        %v3493 = vpow.pop %v3492
        %v3494 = vadd.f32 %v3440, %v3483
        %v3495 = vadd.f32 %v3441, %v3485
        %v3496 = vadd.f32 %v3442, %v3487
        %v3497 = vadd.f32 %v3443, %v3489
        %v3498 = vadd.f32 %v3444, %v3491
        %v3499 = vadd.f32 %v3445, %v3493
        %3500 = vrot.lane.b32.xlu0 %v1231, 122
        %v3501 = vpop.permute.xlu0 %3500
        %3502 = vrot.lane.b32.xlu0 %v1233, 122
        %v3503 = vpop.permute.xlu0 %3502
        %3504 = vrot.lane.b32.xlu0 %v1236, 122
        %v3505 = vpop.permute.xlu0 %3504
        %3506 = vrot.lane.b32.xlu0 %v1238, 122
        %v3507 = vpop.permute.xlu0 %3506
        %3508 = vrot.lane.b32.xlu0 %v1241, 122
        %v3509 = vpop.permute.xlu0 %3508
        %3510 = vrot.lane.b32.xlu0 %v1243, 122
        %v3511 = vpop.permute.xlu0 %3510
        %v3518 = vmul.f32 %v3483, %v3501
        %v3519 = vmul.f32 %v3485, %v3503
        %v3520 = vmul.f32 %v3487, %v3505
        %v3521 = vmul.f32 %v3489, %v3507
        %v3522 = vmul.f32 %v3491, %v3509
        %v3523 = vmul.f32 %v3493, %v3511
        %v3524 = vadd.f32 %v3470, %v3518
        %v3525 = vadd.f32 %v3471, %v3519
        %v3526 = vadd.f32 %v3472, %v3520
        %v3527 = vadd.f32 %v3473, %v3521
        %v3528 = vadd.f32 %v3474, %v3522
        %v3529 = vadd.f32 %v3475, %v3523
        %v3530 = vrcp.pop %v3494
        %v3531 = vmul.f32 %v3494, %v3530
        %v3532 = vsub.f32 1.0, %v3531
        %v3533 = vmul.f32 %v3530, %v3532
        %v3534 = vadd.f32 %v3530, %v3533
        %vm3535 = vweird.f32 %v3494
        %vm3536 = vweird.f32 %v3530
        %vm3537 = vmor %vm3535, %vm3536
        %v3538 = vsel %vm3537, %v3530, %v3534
        %v3539 = vand.u32 2147483647, %v3494
        %vm3540 = vcmp.eq.f32.partialorder %v3539, 8.507059e+37
        %v3541 = vand.u32 %v3494, 2147483648
        %v3542 = vor.u32 1.1754944e-38, %v3541
        %v3543 = vsel %vm3540, %v3542, %v3538
        %v3544 = vrcp.pop %v3495
        %v3545 = vmul.f32 %v3495, %v3544
        %v3546 = vsub.f32 1.0, %v3545
        %v3547 = vmul.f32 %v3544, %v3546
        %v3548 = vadd.f32 %v3544, %v3547
        %vm3549 = vweird.f32 %v3495
        %vm3550 = vweird.f32 %v3544
        %vm3551 = vmor %vm3549, %vm3550
        %v3552 = vsel %vm3551, %v3544, %v3548
        %v3553 = vand.u32 2147483647, %v3495
        %vm3554 = vcmp.eq.f32.partialorder %v3553, 8.507059e+37
        %v3555 = vand.u32 %v3495, 2147483648
        %v3556 = vor.u32 1.1754944e-38, %v3555
        %v3557 = vsel %vm3554, %v3556, %v3552
        %v3558 = vrcp.pop %v3496
        %v3559 = vmul.f32 %v3496, %v3558
        %v3560 = vsub.f32 1.0, %v3559
        %v3561 = vmul.f32 %v3558, %v3560
        %v3562 = vadd.f32 %v3558, %v3561
        %vm3563 = vweird.f32 %v3496
        %vm3564 = vweird.f32 %v3558
        %vm3565 = vmor %vm3563, %vm3564
        %v3566 = vsel %vm3565, %v3558, %v3562
        %v3567 = vand.u32 2147483647, %v3496
        %vm3568 = vcmp.eq.f32.partialorder %v3567, 8.507059e+37
        %v3569 = vand.u32 %v3496, 2147483648
        %v3570 = vor.u32 1.1754944e-38, %v3569
        %v3571 = vsel %vm3568, %v3570, %v3566
        %v3572 = vrcp.pop %v3497
        %v3573 = vmul.f32 %v3497, %v3572
        %v3574 = vsub.f32 1.0, %v3573
        %v3575 = vmul.f32 %v3572, %v3574
        %v3576 = vadd.f32 %v3572, %v3575
        %vm3577 = vweird.f32 %v3497
        %vm3578 = vweird.f32 %v3572
        %vm3579 = vmor %vm3577, %vm3578
        %v3580 = vsel %vm3579, %v3572, %v3576
        %v3581 = vand.u32 2147483647, %v3497
        %vm3582 = vcmp.eq.f32.partialorder %v3581, 8.507059e+37
        %v3583 = vand.u32 %v3497, 2147483648
        %v3584 = vor.u32 1.1754944e-38, %v3583
        %v3585 = vsel %vm3582, %v3584, %v3580
        %v3586 = vrcp.pop %v3498
        %v3587 = vmul.f32 %v3498, %v3586
        %v3588 = vsub.f32 1.0, %v3587
        %v3589 = vmul.f32 %v3586, %v3588
        %v3590 = vadd.f32 %v3586, %v3589
        %vm3591 = vweird.f32 %v3498
        %vm3592 = vweird.f32 %v3586
        %vm3593 = vmor %vm3591, %vm3592
        %v3594 = vsel %vm3593, %v3586, %v3590
        %v3595 = vand.u32 2147483647, %v3498
        %vm3596 = vcmp.eq.f32.partialorder %v3595, 8.507059e+37
        %v3597 = vand.u32 %v3498, 2147483648
        %v3598 = vor.u32 1.1754944e-38, %v3597
        %v3599 = vsel %vm3596, %v3598, %v3594
        %v3600 = vrcp.pop %v3499
        %v3601 = vmul.f32 %v3499, %v3600
        %v3602 = vsub.f32 1.0, %v3601
        %v3603 = vmul.f32 %v3600, %v3602
        %v3604 = vadd.f32 %v3600, %v3603
        %vm3605 = vweird.f32 %v3499
        %vm3606 = vweird.f32 %v3600
        %vm3607 = vmor %vm3605, %vm3606
        %v3608 = vsel %vm3607, %v3600, %v3604
        %v3609 = vand.u32 2147483647, %v3499
        %vm3610 = vcmp.eq.f32.partialorder %v3609, 8.507059e+37
        %v3611 = vand.u32 %v3499, 2147483648
        %v3612 = vor.u32 1.1754944e-38, %v3611
        %v3613 = vsel %vm3610, %v3612, %v3608
        %v3614 = vmul.f32 %v3524, %v3543
        %v3615 = vmul.f32 %v3525, %v3557
        %v3616 = vmul.f32 %v3526, %v3571
        %v3617 = vmul.f32 %v3527, %v3585
        %v3618 = vmul.f32 %v3528, %v3599
        %v3619 = vmul.f32 %v3529, %v3613
        %vm3620 = vcmask 130048
        %3621 = vst.msk [vmem:[%s205] sm:$0xff] %vm3620, %v3614
        %3622 = vst.msk [vmem:[%s205 + $0x8] sm:$0xff] %vm3620, %v3615
        %3623 = vst.msk [vmem:[%s205 + $0x10] sm:$0xff] %vm3620, %v3616
        %3624 = vst.msk [vmem:[%s205 + $0x18] sm:$0xff] %vm3620, %v3617
        %3625 = vst.msk [vmem:[%s205 + $0x20] sm:$0xff] %vm3620, %v3618
        %3626 = vst.msk [vmem:[%s205 + $0x28] sm:$0xff] %vm3620, %v3619
        %s3627 = sand.u32 %s105, 1
        %s3628 = scalar_lea.sflag [#allocation3], %s3627
        %s3629 = sand.u32 %s105, 1
        %s3630 = smul.addr %s3629, 48
        %s3631 = scalar_lea.vmem [#allocation2], %s3630
        // Predicated region
        $region29: #{tpu_custom_call.1} parent=27 // pred_check
          %p3632 = pneg %p115
        $region30: #{tpu_custom_call.1} parent=27 // pred_check_branch
          %3634 = sbr.rel (%p3632) target = $region32
        $region31: #{tpu_custom_call.1} parent=27 // pred_region
          %s3635 = smul.u32 2, %s23
          %3637 = vsyncadd %s3628, 0
          %s3638 = smul.addr %s22, 6
          %s3639 = sadd.s32 %s3635, %s3638
          %s3640 = smul.addr %s21, 6
          %s3641 = sadd.s32 %s3639, %s3640
          %s3642 = smul.addr %s3641, 8
          %s3643 = scalar_lea.hbm %s2, %s3642
          %s3644 = sshll.u32 %s3631, 4
          %s3645 = int_to_ptr.vmem [resolvable:$true] %s3644
          %s3646 = sshll.u32 %s3643, 4
          %s3647 = int_to_ptr.hbm [resolvable:$true] %s3646
          %3652 = dma.vmem_to_hbm [thread:$0]  %s3645, 768, %s3647, %s3628, 128, 128, 8
        $region32: #{tpu_custom_call.1} parent=27 // pred_fallthru
          _
      $region28: #{tpu_custom_call.1} parent=5 // pred_fallthru
        _
      %p3653 = scmp.le.s32.totalorder 2, %s11
      // Predicated region
      $region33: #{tpu_custom_call.1} parent=5 // pred_check
        %p3654 = pneg %p3653
      $region34: #{tpu_custom_call.1} parent=5 // pred_check_branch
        %3656 = sbr.rel (%p3654) target = $region36
      $region35: #{tpu_custom_call.1} parent=5 // pred_region
        %s3657 = ssub.s32 %s11, 2
        // Predicated region
        $region37: #{tpu_custom_call.1} parent=35 // pred_check
          %p3658 = pneg %p121
        $region38: #{tpu_custom_call.1} parent=35 // pred_check_branch
          %3660 = sbr.rel (%p3658) target = $region40
        $region39: #{tpu_custom_call.1} parent=35 // pred_region
          %s3661 = sand.u32 %s106, 1
          %s3662 = scalar_lea.sflag [#allocation3], %s3661
          %s3663 = sand.u32 %s106, 1
          %s3664 = smul.addr %s3663, 48
          %s3665 = scalar_lea.vmem [#allocation2], %s3664
          %3667 = dma.done %s3662, 768
        $region40: #{tpu_custom_call.1} parent=35 // pred_fallthru
          _
      $region36: #{tpu_custom_call.1} parent=5 // pred_fallthru
        _
    $region6: #{tpu_custom_call.1} parent=1 // loop_footer
      %s15 = sadd.s32 1, %s11
    $region7: #{tpu_custom_call.1} parent=1 // loop_footer_branch
      %10 = sbr.rel target = $region3
    $region8: #{tpu_custom_call.1} parent=1 // loop_exit
      _
    %3668 = vsyncpa [#allocation3], 1
    %s3669 = scalar_lea.sflag [#allocation3], 1
    %3670 = vsyncpa %s3669, 1

</llo_original>
